<compile_context>
chip_gen: v5e
topology: v5e:2x2
jax: 0.10.0
libtpu: 0.0.40
codegen_flags: <defaults>
</compile_context>

<pallas_src>
import math
import functools

import jax
import jax.numpy as jnp
from jax import lax
from jax.experimental import pallas as pl
from jax.experimental.pallas import tpu as pltpu

F32 = jnp.float32
BF16 = jnp.bfloat16
_VMEM = pl.BlockSpec(memory_space=pltpu.MemorySpace.VMEM)


def _layernorm(v, g, b, eps=1e-5):
    mu = jnp.mean(v, axis=-1, keepdims=True)
    var = jnp.mean(jnp.square(v - mu), axis=-1, keepdims=True)
    return (v - mu) * lax.rsqrt(var + eps) * g + b


# ------------------------------------------------------------ fused kernel --
def _fused_forward_kernel(nh, L, Lg, A, with_week, *refs):
    # refs = (*inputs, o_ref, gx_scr, hid_scr)
    o_ref = refs[-3]
    gx_scr = refs[-2]
    hid_scr = refs[-1]
    ins = list(refs[:-3])
    pos = [0]

    def nxt():
        r = ins[pos[0]]
        pos[0] += 1
        return r

    x_ref = nxt()
    wk_ref = nxt() if with_week else None
    row_ref = nxt()
    tap_w_ref, tap_b_ref = nxt(), nxt()
    in_w_ref, in_b_ref = nxt(), nxt()
    out_w_ref, out_b_ref = nxt(), nxt()
    ln1_g_ref, ln1_b_ref = nxt(), nxt()
    ff_w1_ref, ff_b1_ref = nxt(), nxt()
    ff_w2_ref, ff_b2_ref = nxt(), nxt()
    ln2_g_ref, ln2_b_ref = nxt(), nxt()
    gru_refs = [(nxt(), nxt(), nxt(), nxt()) for _ in range(Lg)]
    head_w_ref, head_b_ref = nxt(), nxt()

    S, B, Din = x_ref.shape
    H = row_ref.shape[-1]
    M = S * B
    hd = H // nh
    Hd = gru_refs[0][1].shape[0]          # whh: [Hd, 3*Hd]

    # ---------------- embedding: (input Linear ∘ 3-tap conv) = ONE matmul ----
    x2 = x_ref[...].reshape(M, Din).astype(BF16)
    taps = (jnp.dot(x2, tap_w_ref[...], preferred_element_type=F32)
            + tap_b_ref[...]).reshape(S, B, 3 * H)
    p_prev = taps[:, :, 0:H]          # contribution of h[t-1] to y[t]
    p_mid = taps[:, :, H:2 * H]       # center tap (conv bias folded in)
    p_next = taps[:, :, 2 * H:3 * H]  # contribution of h[t+1] to y[t]

    zrow = jnp.zeros((1, B, H), F32)
    y = (p_mid
         + jnp.concatenate([zrow, p_prev[:S - 1]], axis=0)       # shift down
         + jnp.concatenate([p_next[1:], zrow], axis=0)           # shift up
         + row_ref[...][None, :, :])   # region + week-ahead + positional [B,H]
    if with_week:
        y = y + wk_ref[...]            # folded TimeAwareEmbedding, gathered in glue

    # ---------------- transformer encoder: L fused post-norm layers ----------
    h2 = y.reshape(M, H)
    for l in range(L):
        xb = h2.astype(BF16)
        # QKV projection (1/sqrt(hd) already folded into the Q block offline)
        qkv = (jnp.dot(xb, in_w_ref[l], preferred_element_type=F32)
               + in_b_ref[l])
        q3 = qkv[:, 0:H].reshape(S, B, H).astype(BF16)
        k3 = qkv[:, H:2 * H].reshape(S, B, H).astype(BF16)
        v3 = qkv[:, 2 * H:3 * H].reshape(S, B, H).astype(BF16)

        # multi-head attention over B, batched over S.
        # NOTE: per-head static loop with single-batch-dim einsums is kept for
        # robust Mosaic dot_general lowering (2-batch-dim einsum avoided).
        ctx_heads = []
        for hh in range(nh):
            lo, hi = hh * hd, (hh + 1) * hd
            s = jnp.einsum("sbd,scd->sbc", q3[:, :, lo:hi], k3[:, :, lo:hi],
                           preferred_element_type=F32)
            s = s - jnp.max(s, axis=-1, keepdims=True)
            p = jnp.exp(s)
            p = p / jnp.sum(p, axis=-1, keepdims=True)
            ctx_heads.append(
                jnp.einsum("sbc,scd->sbd", p.astype(BF16), v3[:, :, lo:hi],
                           preferred_element_type=F32))
        ctx = jnp.concatenate(ctx_heads, axis=-1).reshape(M, H)

        attn = (jnp.dot(ctx.astype(BF16), out_w_ref[l],
                        preferred_element_type=F32) + out_b_ref[l])
        y1 = _layernorm(h2 + attn, ln1_g_ref[l], ln1_b_ref[l])

        hf = jnp.maximum(
            jnp.dot(y1.astype(BF16), ff_w1_ref[l],
                    preferred_element_type=F32) + ff_b1_ref[l], 0.0)
        ff = jnp.dot(hf.astype(BF16), ff_w2_ref[l],
                     preferred_element_type=F32) + ff_b2_ref[l]
        h2 = _layernorm(y1 + ff, ln2_g_ref[l], ln2_b_ref[l])

    # ---------------- GRU decoder: batch = S, time = B ------------------------
    # layer 0 input rows are in (s, b) order; deeper layers use (t, s) order so
    # per-step reads are contiguous leading-axis slabs from the scratch.
    layer_in = h2                                   # [M, H]
    head_steps = []
    for l in range(Lg):
        wih_ref, whh_ref, bih_ref, bhh_ref = gru_refs[l]
        # hoist ALL input projections of this layer into one matmul
        gx_all = (jnp.dot(layer_in.astype(BF16), wih_ref[...],
                          preferred_element_type=F32) + bih_ref[...])
        gx_scr[...] = gx_all                        # [S*B, 3Hd]

        whh = whh_ref[...]
        bhh = bhh_ref[...]
        h = jnp.zeros((S, Hd), F32)
        for t in range(B):
            if l == 0:
                gx = gx_scr[pl.ds(t, S, stride=B), :]   # rows (s, t) for all s
            else:
                gx = gx_scr[pl.ds(t * S, S), :]         # contiguous slab
            gh = jnp.dot(h.astype(BF16), whh,
                         preferred_element_type=F32) + bhh
            r = jax.nn.sigmoid(gx[:, 0:Hd] + gh[:, 0:Hd])
            z = jax.nn.sigmoid(gx[:, Hd:2 * Hd] + gh[:, Hd:2 * Hd])
            n = jnp.tanh(gx[:, 2 * Hd:3 * Hd] + r * gh[:, 2 * Hd:3 * Hd])
            h = (1.0 - z) * n + z * h
            if l < Lg - 1:
                hid_scr[pl.ds(t * S, S), :] = h         # (t, s)-ordered input
            if l == Lg - 1 and t >= B - A:
                head_steps.append(h)
        if l < Lg - 1:
            layer_in = hid_scr[...]                     # [B*S, Hd]

    # ---------------- head: (fc1 ∘ fc2) folded into one [A*Hd, O] matmul ------
    hs = jnp.concatenate(head_steps, axis=-1)           # [S, A*Hd]
    o_ref[...] = (jnp.dot(hs.astype(BF16), head_w_ref[...],
                          preferred_element_type=F32)
                  + head_b_ref[...]).astype(o_ref.dtype)


# ----------------------------------------------------------------- wrapper --
def forward(prep, x, region_id, week_id, week_ahead_id, cfg):
    S, B, Din = x.shape
    H = cfg["encoder_hidden_dim"]
    L = cfg["encoder_num_layers"]
    nh = cfg["encoder_heads"]
    Fd = cfg["dim_feedforward"]
    A = cfg["num_aheads"]
    Hd = cfg["decoder_hidden_dim"]
    Lg = cfg["decoder_num_layers"]
    O = cfg["hidden_dim"]
    with_week = bool(cfg["with_week_id"])
    assert B >= A, "GRU time axis (B) must be >= num_aheads"

    # TODO(synk): embedding lookups (gathers) kept in JAX glue, not Pallas DMA-gather.
    rs = jnp.take(prep["region_tbl"], region_id, axis=0)          # [B, H]
    wa = jnp.take(prep["wa_tbl"], week_ahead_id, axis=0)          # [B, H] (fc folded)
    pe = positional_encoding(B, H)                                # [B, H]
    row = (rs + wa + pe).astype(F32)

    args = [x]
    if with_week:
        wk = jnp.take(prep["week_tbl"], week_id.reshape(-1),
                      axis=0).reshape(S, B, H)                    # fc folded
        args.append(wk)
    args += [row, prep["tap_w"], prep["tap_b"],
             prep["in_w"], prep["in_b"], prep["out_w"], prep["out_b"],
             prep["ln1_g"], prep["ln1_b"], prep["ff_w1"], prep["ff_b1"],
             prep["ff_w2"], prep["ff_b2"], prep["ln2_g"], prep["ln2_b"]]
    for gl in prep["gru_layers"]:
        args += [gl["wih"], gl["whh"], gl["bih"], gl["bhh"]]
    args += [prep["head_w"], prep["head_b"]]

    # advisory cost estimate (bytes, not element counts)
    M = S * B
    hd = H // nh
    flops = 2 * M * Din * 3 * H
    flops += L * (2 * M * H * 3 * H + 4 * nh * S * B * B * hd
                  + 2 * M * H * H + 4 * M * H * Fd)
    in_dim = H
    for _ in range(Lg):
        flops += 2 * M * in_dim * 3 * Hd + B * 2 * S * Hd * 3 * Hd
        in_dim = Hd
    flops += 2 * S * A * Hd * O
    transcendentals = L * nh * S * B * B + Lg * B * 3 * S * Hd
    bytes_accessed = (sum(int(a.size) * a.dtype.itemsize for a in args)
                      + S * O * 4)

    kern = functools.partial(_fused_forward_kernel, nh, L, Lg, A, with_week)

    # TODO(synk): v7x 2-TC split (parallel grid over S, with conv halo) and
    # FFN-over-Fd tiling only pay off at realistic S/H; at these shapes a
    # single fully-resident VMEM block is optimal, so no grid is used.
    return pl.pallas_call(
        kern,
        out_shape=jax.ShapeDtypeStruct((S, O), F32),
        in_specs=[_VMEM] * len(args),
        out_specs=_VMEM,
        scratch_shapes=[
            pltpu.VMEM((S * B, 3 * Hd), F32),   # hoisted GRU input projections
            pltpu.VMEM((S * B, Hd), F32),       # hidden states for layers > 0
        ],
        cost_estimate=pl.CostEstimate(
            flops=int(flops), transcendentals=int(transcendentals),
            bytes_accessed=int(bytes_accessed)),
    )(*args)


# ------------------------------------------------------------------- glue ---
def positional_encoding(n, d):
    pos = jnp.arange(n, dtype=F32)[:, None]
    div = jnp.exp(jnp.arange(0, d, 2, dtype=F32) * (-math.log(10000.0) / d))
    sin = jnp.sin(pos * div)
    cos = jnp.cos(pos * div)
    return jnp.stack([sin, cos], axis=-1).reshape(n, d)   # interleaved sin/cos


# --------------------------------------------------------------- parameters -
def init_params(key, cfg):
    """Raw parameters mirroring the PyTorch module (all f32)."""
    H = cfg["encoder_hidden_dim"]
    Din = cfg["encoder_input_dim"]
    Hd = cfg["decoder_hidden_dim"]
    A = cfg["num_aheads"]
    O = cfg["hidden_dim"]
    Fd = cfg["dim_feedforward"]
    L = cfg["encoder_num_layers"]

    keys = iter(jax.random.split(key, 128))

    def w(shape, scale=0.05):
        return (scale * jax.random.normal(next(keys), shape)).astype(F32)

    gru = []
    in_dim = H
    for _ in range(cfg["decoder_num_layers"]):
        gru.append(dict(wih=w((in_dim, 3 * Hd)), whh=w((Hd, 3 * Hd)),
                        bih=w((3 * Hd,), 0.02), bhh=w((3 * Hd,), 0.02)))
        in_dim = Hd

    return dict(
        emb_w=w((Din, H)), emb_b=w((H,), 0.02),
        conv_w=w((3, H, H)), conv_b=w((H,), 0.02),   # conv_w[k] = W[:, :, k].T
        region_tbl=w((cfg["num_regions"], H), 0.1),
        week_tbl=w((53 + 1, H), 0.1),
        time_fc_w=w((H, H)), time_fc_b=w((H,), 0.02),
        wa_tbl=w((A + 1, H), 0.1),
        wa_fc_w=w((H, H)), wa_fc_b=w((H,), 0.02),
        in_w=w((L, H, 3 * H)), in_b=w((L, 3 * H), 0.02),
        out_w=w((L, H, H)), out_b=w((L, H), 0.02),
        ln1_g=jnp.ones((L, H), F32), ln1_b=jnp.zeros((L, H), F32),
        ff_w1=w((L, H, Fd)), ff_b1=w((L, Fd), 0.02),
        ff_w2=w((L, Fd, H)), ff_b2=w((L, H), 0.02),
        ln2_g=jnp.ones((L, H), F32), ln2_b=jnp.zeros((L, H), F32),
        gru_layers=gru,
        fc1_w=w((Hd, 1)), fc1_b=w((1,), 0.02),
        fc2_w=w((A, O)), fc2_b=w((O,), 0.02),
    )


def prepare_params(p, cfg):
    """Offline constant folding: zero runtime cost, fewer kernel matmuls."""
    H = cfg["encoder_hidden_dim"]
    nh = cfg["encoder_heads"]
    hd = H // nh
    scale = 1.0 / math.sqrt(hd)
    A = cfg["num_aheads"]
    Hd = cfg["decoder_hidden_dim"]

    # (input Linear ∘ Conv1d taps) -> one [Din, 3H] matmul
    tap_w = jnp.concatenate([p["emb_w"] @ p["conv_w"][k] for k in range(3)],
                            axis=-1)
    tap_b = jnp.concatenate([p["emb_b"] @ p["conv_w"][k] for k in range(3)],
                            axis=-1)
    tap_b = tap_b.at[H:2 * H].add(p["conv_b"])       # conv bias -> center tap

    # TimeAwareEmbedding Linear layers folded into the embedding tables
    week_tbl = p["week_tbl"] @ p["time_fc_w"] + p["time_fc_b"]
    wa_tbl = p["wa_tbl"] @ p["wa_fc_w"] + p["wa_fc_b"]

    # 1/sqrt(head_dim) folded into the Q block of the in-projection (W and b)
    q_scale = jnp.concatenate([jnp.full((H,), scale, F32),
                               jnp.ones((2 * H,), F32)])
    in_w = p["in_w"] * q_scale[None, None, :]
    in_b = p["in_b"] * q_scale[None, :]

    # fc1 (Hd->1) ∘ fc2 (A->O) folded into one [A*Hd, O] head matmul + bias
    head_w = (p["fc2_w"][:, None, :] * p["fc1_w"][None, :, 0:1]
              ).reshape(A * Hd, -1)
    head_b = (p["fc2_b"] + p["fc1_b"][0] * jnp.sum(p["fc2_w"], axis=0))[None, :]

    return dict(
        tap_w=tap_w.astype(BF16), tap_b=tap_b[None, :],
        region_tbl=p["region_tbl"], week_tbl=week_tbl, wa_tbl=wa_tbl,
        in_w=in_w.astype(BF16), in_b=in_b[:, None, :],
        out_w=p["out_w"].astype(BF16), out_b=p["out_b"][:, None, :],
        ln1_g=p["ln1_g"][:, None, :], ln1_b=p["ln1_b"][:, None, :],
        ff_w1=p["ff_w1"].astype(BF16), ff_b1=p["ff_b1"][:, None, :],
        ff_w2=p["ff_w2"].astype(BF16), ff_b2=p["ff_b2"][:, None, :],
        ln2_g=p["ln2_g"][:, None, :], ln2_b=p["ln2_b"][:, None, :],
        gru_layers=[dict(wih=g["wih"].astype(BF16), whh=g["whh"].astype(BF16),
                         bih=g["bih"][None, :], bhh=g["bhh"][None, :])
                    for g in p["gru_layers"]],
        head_w=head_w.astype(BF16), head_b=head_b,
    )


# --------------------------------------------------------------------------
if __name__ == "__main__":
    cfg = dict(
        encoder_input_dim=4,
        encoder_hidden_dim=32,
        encoder_num_layers=2,
        encoder_heads=4,
        num_regions=8,
        num_aheads=4,
        with_week_id=True,
        decoder_hidden_dim=32,
        decoder_num_layers=1,
        hidden_dim=16,            # decoder output_dim
        dim_feedforward=2048,     # nn.TransformerEncoderLayer default
    )
    S, B = 8, 8   # seq_len, batch (B must be >= num_aheads)

    key = jax.random.PRNGKey(0)
    kp, kx, kw, kwa = jax.random.split(key, 4)
    raw_params = init_params(kp, cfg)
    params = prepare_params(raw_params, cfg)

    x = jax.random.normal(kx, (S, B, cfg["encoder_input_dim"]), dtype=F32)
    region_id = (jnp.arange(B, dtype=jnp.int32) % cfg["num_regions"])
    week_id = jax.random.randint(kw, (S, B), 0, 54, dtype=jnp.int32)
    week_ahead_id = jax.random.randint(kwa, (B,), 0, cfg["num_aheads"] + 1,
                                       dtype=jnp.int32)

    fwd = jax.jit(functools.partial(forward, cfg=cfg))
    out = fwd(params, x, region_id, week_id, week_ahead_id)
    out = jax.block_until_ready(out)

    assert out.shape == (S, cfg["hidden_dim"]), out.shape
    assert bool(jnp.all(jnp.isfinite(out)))
    print("KERNEL_OK")
</pallas_src>

<mosaic_0001>
module attributes {stable_mosaic.version = 11 : i64} {
  func.func @_fused_forward_kernel(%arg0: memref<8x8x4xf32, #tpu.memory_space<vmem>>, %arg1: memref<8x8x32xf32, #tpu.memory_space<vmem>>, %arg2: memref<8x32xf32, #tpu.memory_space<vmem>>, %arg3: memref<4x96xbf16, #tpu.memory_space<vmem>>, %arg4: memref<1x96xf32, #tpu.memory_space<vmem>>, %arg5: memref<2x32x96xbf16, #tpu.memory_space<vmem>>, %arg6: memref<2x1x96xf32, #tpu.memory_space<vmem>>, %arg7: memref<2x32x32xbf16, #tpu.memory_space<vmem>>, %arg8: memref<2x1x32xf32, #tpu.memory_space<vmem>>, %arg9: memref<2x1x32xf32, #tpu.memory_space<vmem>>, %arg10: memref<2x1x32xf32, #tpu.memory_space<vmem>>, %arg11: memref<2x32x2048xbf16, #tpu.memory_space<vmem>>, %arg12: memref<2x1x2048xf32, #tpu.memory_space<vmem>>, %arg13: memref<2x2048x32xbf16, #tpu.memory_space<vmem>>, %arg14: memref<2x1x32xf32, #tpu.memory_space<vmem>>, %arg15: memref<2x1x32xf32, #tpu.memory_space<vmem>>, %arg16: memref<2x1x32xf32, #tpu.memory_space<vmem>>, %arg17: memref<32x96xbf16, #tpu.memory_space<vmem>>, %arg18: memref<32x96xbf16, #tpu.memory_space<vmem>>, %arg19: memref<1x96xf32, #tpu.memory_space<vmem>>, %arg20: memref<1x96xf32, #tpu.memory_space<vmem>>, %arg21: memref<128x16xbf16, #tpu.memory_space<vmem>>, %arg22: memref<1x16xf32, #tpu.memory_space<vmem>>, %arg23: memref<8x16xf32, #tpu.memory_space<vmem>>, %arg24: memref<64x96xf32, #tpu.memory_space<vmem>>, %arg25: memref<64x32xf32, #tpu.memory_space<vmem>>) attributes {dimension_semantics = [], scalar_prefetch = 0 : i64, scratch_operands = 2 : i64, tpu.core_type = #tpu.core_type<tc>} {
    %c0 = arith.constant 0 : index
    %c0_0 = arith.constant 0 : index
    %c0_1 = arith.constant 0 : index
    %0 = vector.load %arg0[%c0, %c0_0, %c0_1] : memref<8x8x4xf32, #tpu.memory_space<vmem>>, vector<8x8x4xf32>
    %1 = vector.shape_cast %0 : vector<8x8x4xf32> to vector<64x4xf32>
    %2 = arith.truncf %1 : vector<64x4xf32> to vector<64x4xbf16>
    %c0_2 = arith.constant 0 : index
    %c0_3 = arith.constant 0 : index
    %3 = vector.load %arg3[%c0_2, %c0_3] : memref<4x96xbf16, #tpu.memory_space<vmem>>, vector<4x96xbf16>
    %cst = arith.constant dense<0.000000e+00> : vector<64x96xf32>
    %4 = tpu.matmul %2, %3, %cst {dimension_numbers = #tpu.dot_dimension_numbers<[1], [0], [0], [1], [0, 0, 1, 1], [], []>} : vector<64x4xbf16>, vector<4x96xbf16>, vector<64x96xf32> -> vector<64x96xf32>
    %c0_4 = arith.constant 0 : index
    %c0_5 = arith.constant 0 : index
    %5 = vector.load %arg4[%c0_4, %c0_5] : memref<1x96xf32, #tpu.memory_space<vmem>>, vector<1x96xf32>
    %6 = vector.broadcast %5 : vector<1x96xf32> to vector<64x96xf32>
    %7 = arith.addf %4, %6 : vector<64x96xf32>
    %8 = vector.shape_cast %7 : vector<64x96xf32> to vector<8x8x96xf32>
    %9 = vector.extract_strided_slice %8 {offsets = [0, 0, 0], sizes = [8, 8, 32], strides = [1, 1, 1]} : vector<8x8x96xf32> to vector<8x8x32xf32>
    %10 = vector.extract_strided_slice %8 {offsets = [0, 0, 32], sizes = [8, 8, 32], strides = [1, 1, 1]} : vector<8x8x96xf32> to vector<8x8x32xf32>
    %11 = vector.extract_strided_slice %8 {offsets = [0, 0, 64], sizes = [8, 8, 32], strides = [1, 1, 1]} : vector<8x8x96xf32> to vector<8x8x32xf32>
    %cst_6 = arith.constant 0.000000e+00 : f32
    %12 = vector.broadcast %cst_6 : f32 to vector<1x8x32xf32>
    %13 = vector.extract_strided_slice %9 {offsets = [0, 0, 0], sizes = [7, 8, 32], strides = [1, 1, 1]} : vector<8x8x32xf32> to vector<7x8x32xf32>
    %14 = tpu.concatenate %12, %13 in 0 : vector<1x8x32xf32>, vector<7x8x32xf32> -> vector<8x8x32xf32>
    %15 = arith.addf %10, %14 : vector<8x8x32xf32>
    %16 = vector.extract_strided_slice %11 {offsets = [1, 0, 0], sizes = [7, 8, 32], strides = [1, 1, 1]} : vector<8x8x32xf32> to vector<7x8x32xf32>
    %17 = tpu.concatenate %16, %12 in 0 : vector<7x8x32xf32>, vector<1x8x32xf32> -> vector<8x8x32xf32>
    %18 = arith.addf %15, %17 : vector<8x8x32xf32>
    %c0_7 = arith.constant 0 : index
    %c0_8 = arith.constant 0 : index
    %19 = vector.load %arg2[%c0_7, %c0_8] : memref<8x32xf32, #tpu.memory_space<vmem>>, vector<8x32xf32>
    %20 = vector.shape_cast %19 : vector<8x32xf32> to vector<1x8x32xf32>
    %21 = vector.broadcast %20 : vector<1x8x32xf32> to vector<8x8x32xf32>
    %22 = arith.addf %18, %21 : vector<8x8x32xf32>
    %c0_9 = arith.constant 0 : index
    %c0_10 = arith.constant 0 : index
    %c0_11 = arith.constant 0 : index
    %23 = vector.load %arg1[%c0_9, %c0_10, %c0_11] : memref<8x8x32xf32, #tpu.memory_space<vmem>>, vector<8x8x32xf32>
    %24 = arith.addf %22, %23 : vector<8x8x32xf32>
    %25 = vector.shape_cast %24 : vector<8x8x32xf32> to vector<64x32xf32>
    %26 = arith.truncf %25 : vector<64x32xf32> to vector<64x32xbf16>
    %c0_12 = arith.constant 0 : index
    %c0_13 = arith.constant 0 : index
    %c0_14 = arith.constant 0 : index
    %27 = vector.load %arg5[%c0_12, %c0_13, %c0_14] : memref<2x32x96xbf16, #tpu.memory_space<vmem>>, vector<1x32x96xbf16>
    %28 = vector.shape_cast %27 : vector<1x32x96xbf16> to vector<32x96xbf16>
    %cst_15 = arith.constant dense<0.000000e+00> : vector<64x96xf32>
    %29 = tpu.matmul %26, %28, %cst_15 {dimension_numbers = #tpu.dot_dimension_numbers<[1], [0], [0], [1], [0, 0, 1, 1], [], []>} : vector<64x32xbf16>, vector<32x96xbf16>, vector<64x96xf32> -> vector<64x96xf32>
    %c0_16 = arith.constant 0 : index
    %c0_17 = arith.constant 0 : index
    %c0_18 = arith.constant 0 : index
    %30 = vector.load %arg6[%c0_16, %c0_17, %c0_18] : memref<2x1x96xf32, #tpu.memory_space<vmem>>, vector<1x1x96xf32>
    %31 = vector.shape_cast %30 : vector<1x1x96xf32> to vector<1x96xf32>
    %32 = vector.broadcast %31 : vector<1x96xf32> to vector<64x96xf32>
    %33 = arith.addf %29, %32 : vector<64x96xf32>
    %34 = vector.extract_strided_slice %33 {offsets = [0, 0], sizes = [64, 32], strides = [1, 1]} : vector<64x96xf32> to vector<64x32xf32>
    %35 = vector.shape_cast %34 : vector<64x32xf32> to vector<8x8x32xf32>
    %36 = arith.truncf %35 : vector<8x8x32xf32> to vector<8x8x32xbf16>
    %37 = vector.extract_strided_slice %33 {offsets = [0, 32], sizes = [64, 32], strides = [1, 1]} : vector<64x96xf32> to vector<64x32xf32>
    %38 = vector.shape_cast %37 : vector<64x32xf32> to vector<8x8x32xf32>
    %39 = arith.truncf %38 : vector<8x8x32xf32> to vector<8x8x32xbf16>
    %40 = vector.extract_strided_slice %33 {offsets = [0, 64], sizes = [64, 32], strides = [1, 1]} : vector<64x96xf32> to vector<64x32xf32>
    %41 = vector.shape_cast %40 : vector<64x32xf32> to vector<8x8x32xf32>
    %42 = arith.truncf %41 : vector<8x8x32xf32> to vector<8x8x32xbf16>
    %43 = vector.extract_strided_slice %36 {offsets = [0, 0, 0], sizes = [8, 8, 8], strides = [1, 1, 1]} : vector<8x8x32xbf16> to vector<8x8x8xbf16>
    %44 = vector.extract_strided_slice %39 {offsets = [0, 0, 0], sizes = [8, 8, 8], strides = [1, 1, 1]} : vector<8x8x32xbf16> to vector<8x8x8xbf16>
    "tpu.trace_start"() <{level = 10 : i32, message = "sbd,scd->sbc"}> : () -> ()
    %cst_19 = arith.constant dense<0.000000e+00> : vector<8x8x8xf32>
    %45 = tpu.matmul %43, %44, %cst_19 {dimension_numbers = #tpu.dot_dimension_numbers<[2], [2], [1], [1], [0, 0, 0, 1, 1, 1], [0], [0]>} : vector<8x8x8xbf16>, vector<8x8x8xbf16>, vector<8x8x8xf32> -> vector<8x8x8xf32>
    "tpu.trace_stop"() : () -> ()
    %cst_20 = arith.constant dense<0xFF800000> : vector<8x8xf32>
    %46 = vector.multi_reduction <maximumf>, %45, %cst_20 [2] : vector<8x8x8xf32> to vector<8x8xf32>
    %47 = vector.shape_cast %46 : vector<8x8xf32> to vector<8x8x1xf32>
    %48 = vector.broadcast %47 : vector<8x8x1xf32> to vector<8x8x8xf32>
    %49 = arith.subf %45, %48 : vector<8x8x8xf32>
    %50 = math.exp %49 : vector<8x8x8xf32>
    %cst_21 = arith.constant dense<0.000000e+00> : vector<8x8xf32>
    %51 = vector.multi_reduction <add>, %50, %cst_21 [2] : vector<8x8x8xf32> to vector<8x8xf32>
    %52 = vector.shape_cast %51 : vector<8x8xf32> to vector<8x8x1xf32>
    %53 = vector.broadcast %52 : vector<8x8x1xf32> to vector<8x8x8xf32>
    %54 = arith.divf %50, %53 : vector<8x8x8xf32>
    %55 = arith.truncf %54 : vector<8x8x8xf32> to vector<8x8x8xbf16>
    %56 = vector.extract_strided_slice %42 {offsets = [0, 0, 0], sizes = [8, 8, 8], strides = [1, 1, 1]} : vector<8x8x32xbf16> to vector<8x8x8xbf16>
    "tpu.trace_start"() <{level = 10 : i32, message = "sbc,scd->sbd"}> : () -> ()
    %cst_22 = arith.constant dense<0.000000e+00> : vector<8x8x8xf32>
    %57 = tpu.matmul %55, %56, %cst_22 {dimension_numbers = #tpu.dot_dimension_numbers<[2], [1], [1], [2], [0, 0, 0, 1, 1, 2], [0], [0]>} : vector<8x8x8xbf16>, vector<8x8x8xbf16>, vector<8x8x8xf32> -> vector<8x8x8xf32>
    "tpu.trace_stop"() : () -> ()
    %58 = vector.extract_strided_slice %36 {offsets = [0, 0, 8], sizes = [8, 8, 8], strides = [1, 1, 1]} : vector<8x8x32xbf16> to vector<8x8x8xbf16>
    %59 = vector.extract_strided_slice %39 {offsets = [0, 0, 8], sizes = [8, 8, 8], strides = [1, 1, 1]} : vector<8x8x32xbf16> to vector<8x8x8xbf16>
    "tpu.trace_start"() <{level = 10 : i32, message = "sbd,scd->sbc"}> : () -> ()
    %cst_23 = arith.constant dense<0.000000e+00> : vector<8x8x8xf32>
    %60 = tpu.matmul %58, %59, %cst_23 {dimension_numbers = #tpu.dot_dimension_numbers<[2], [2], [1], [1], [0, 0, 0, 1, 1, 1], [0], [0]>} : vector<8x8x8xbf16>, vector<8x8x8xbf16>, vector<8x8x8xf32> -> vector<8x8x8xf32>
    "tpu.trace_stop"() : () -> ()
    %cst_24 = arith.constant dense<0xFF800000> : vector<8x8xf32>
    %61 = vector.multi_reduction <maximumf>, %60, %cst_24 [2] : vector<8x8x8xf32> to vector<8x8xf32>
    %62 = vector.shape_cast %61 : vector<8x8xf32> to vector<8x8x1xf32>
    %63 = vector.broadcast %62 : vector<8x8x1xf32> to vector<8x8x8xf32>
    %64 = arith.subf %60, %63 : vector<8x8x8xf32>
    %65 = math.exp %64 : vector<8x8x8xf32>
    %cst_25 = arith.constant dense<0.000000e+00> : vector<8x8xf32>
    %66 = vector.multi_reduction <add>, %65, %cst_25 [2] : vector<8x8x8xf32> to vector<8x8xf32>
    %67 = vector.shape_cast %66 : vector<8x8xf32> to vector<8x8x1xf32>
    %68 = vector.broadcast %67 : vector<8x8x1xf32> to vector<8x8x8xf32>
    %69 = arith.divf %65, %68 : vector<8x8x8xf32>
    %70 = arith.truncf %69 : vector<8x8x8xf32> to vector<8x8x8xbf16>
    %71 = vector.extract_strided_slice %42 {offsets = [0, 0, 8], sizes = [8, 8, 8], strides = [1, 1, 1]} : vector<8x8x32xbf16> to vector<8x8x8xbf16>
    "tpu.trace_start"() <{level = 10 : i32, message = "sbc,scd->sbd"}> : () -> ()
    %cst_26 = arith.constant dense<0.000000e+00> : vector<8x8x8xf32>
    %72 = tpu.matmul %70, %71, %cst_26 {dimension_numbers = #tpu.dot_dimension_numbers<[2], [1], [1], [2], [0, 0, 0, 1, 1, 2], [0], [0]>} : vector<8x8x8xbf16>, vector<8x8x8xbf16>, vector<8x8x8xf32> -> vector<8x8x8xf32>
    "tpu.trace_stop"() : () -> ()
    %73 = vector.extract_strided_slice %36 {offsets = [0, 0, 16], sizes = [8, 8, 8], strides = [1, 1, 1]} : vector<8x8x32xbf16> to vector<8x8x8xbf16>
    %74 = vector.extract_strided_slice %39 {offsets = [0, 0, 16], sizes = [8, 8, 8], strides = [1, 1, 1]} : vector<8x8x32xbf16> to vector<8x8x8xbf16>
    "tpu.trace_start"() <{level = 10 : i32, message = "sbd,scd->sbc"}> : () -> ()
    %cst_27 = arith.constant dense<0.000000e+00> : vector<8x8x8xf32>
    %75 = tpu.matmul %73, %74, %cst_27 {dimension_numbers = #tpu.dot_dimension_numbers<[2], [2], [1], [1], [0, 0, 0, 1, 1, 1], [0], [0]>} : vector<8x8x8xbf16>, vector<8x8x8xbf16>, vector<8x8x8xf32> -> vector<8x8x8xf32>
    "tpu.trace_stop"() : () -> ()
    %cst_28 = arith.constant dense<0xFF800000> : vector<8x8xf32>
    %76 = vector.multi_reduction <maximumf>, %75, %cst_28 [2] : vector<8x8x8xf32> to vector<8x8xf32>
    %77 = vector.shape_cast %76 : vector<8x8xf32> to vector<8x8x1xf32>
    %78 = vector.broadcast %77 : vector<8x8x1xf32> to vector<8x8x8xf32>
    %79 = arith.subf %75, %78 : vector<8x8x8xf32>
    %80 = math.exp %79 : vector<8x8x8xf32>
    %cst_29 = arith.constant dense<0.000000e+00> : vector<8x8xf32>
    %81 = vector.multi_reduction <add>, %80, %cst_29 [2] : vector<8x8x8xf32> to vector<8x8xf32>
    %82 = vector.shape_cast %81 : vector<8x8xf32> to vector<8x8x1xf32>
    %83 = vector.broadcast %82 : vector<8x8x1xf32> to vector<8x8x8xf32>
    %84 = arith.divf %80, %83 : vector<8x8x8xf32>
    %85 = arith.truncf %84 : vector<8x8x8xf32> to vector<8x8x8xbf16>
    %86 = vector.extract_strided_slice %42 {offsets = [0, 0, 16], sizes = [8, 8, 8], strides = [1, 1, 1]} : vector<8x8x32xbf16> to vector<8x8x8xbf16>
    "tpu.trace_start"() <{level = 10 : i32, message = "sbc,scd->sbd"}> : () -> ()
    %cst_30 = arith.constant dense<0.000000e+00> : vector<8x8x8xf32>
    %87 = tpu.matmul %85, %86, %cst_30 {dimension_numbers = #tpu.dot_dimension_numbers<[2], [1], [1], [2], [0, 0, 0, 1, 1, 2], [0], [0]>} : vector<8x8x8xbf16>, vector<8x8x8xbf16>, vector<8x8x8xf32> -> vector<8x8x8xf32>
    "tpu.trace_stop"() : () -> ()
    %88 = vector.extract_strided_slice %36 {offsets = [0, 0, 24], sizes = [8, 8, 8], strides = [1, 1, 1]} : vector<8x8x32xbf16> to vector<8x8x8xbf16>
    %89 = vector.extract_strided_slice %39 {offsets = [0, 0, 24], sizes = [8, 8, 8], strides = [1, 1, 1]} : vector<8x8x32xbf16> to vector<8x8x8xbf16>
    "tpu.trace_start"() <{level = 10 : i32, message = "sbd,scd->sbc"}> : () -> ()
    %cst_31 = arith.constant dense<0.000000e+00> : vector<8x8x8xf32>
    %90 = tpu.matmul %88, %89, %cst_31 {dimension_numbers = #tpu.dot_dimension_numbers<[2], [2], [1], [1], [0, 0, 0, 1, 1, 1], [0], [0]>} : vector<8x8x8xbf16>, vector<8x8x8xbf16>, vector<8x8x8xf32> -> vector<8x8x8xf32>
    "tpu.trace_stop"() : () -> ()
    %cst_32 = arith.constant dense<0xFF800000> : vector<8x8xf32>
    %91 = vector.multi_reduction <maximumf>, %90, %cst_32 [2] : vector<8x8x8xf32> to vector<8x8xf32>
    %92 = vector.shape_cast %91 : vector<8x8xf32> to vector<8x8x1xf32>
    %93 = vector.broadcast %92 : vector<8x8x1xf32> to vector<8x8x8xf32>
    %94 = arith.subf %90, %93 : vector<8x8x8xf32>
    %95 = math.exp %94 : vector<8x8x8xf32>
    %cst_33 = arith.constant dense<0.000000e+00> : vector<8x8xf32>
    %96 = vector.multi_reduction <add>, %95, %cst_33 [2] : vector<8x8x8xf32> to vector<8x8xf32>
    %97 = vector.shape_cast %96 : vector<8x8xf32> to vector<8x8x1xf32>
    %98 = vector.broadcast %97 : vector<8x8x1xf32> to vector<8x8x8xf32>
    %99 = arith.divf %95, %98 : vector<8x8x8xf32>
    %100 = arith.truncf %99 : vector<8x8x8xf32> to vector<8x8x8xbf16>
    %101 = vector.extract_strided_slice %42 {offsets = [0, 0, 24], sizes = [8, 8, 8], strides = [1, 1, 1]} : vector<8x8x32xbf16> to vector<8x8x8xbf16>
    "tpu.trace_start"() <{level = 10 : i32, message = "sbc,scd->sbd"}> : () -> ()
    %cst_34 = arith.constant dense<0.000000e+00> : vector<8x8x8xf32>
    %102 = tpu.matmul %100, %101, %cst_34 {dimension_numbers = #tpu.dot_dimension_numbers<[2], [1], [1], [2], [0, 0, 0, 1, 1, 2], [0], [0]>} : vector<8x8x8xbf16>, vector<8x8x8xbf16>, vector<8x8x8xf32> -> vector<8x8x8xf32>
    "tpu.trace_stop"() : () -> ()
    %103 = tpu.concatenate %57, %72, %87, %102 in 2 : vector<8x8x8xf32>, vector<8x8x8xf32>, vector<8x8x8xf32>, vector<8x8x8xf32> -> vector<8x8x32xf32>
    %104 = vector.shape_cast %103 : vector<8x8x32xf32> to vector<64x32xf32>
    %105 = arith.truncf %104 : vector<64x32xf32> to vector<64x32xbf16>
    %c0_35 = arith.constant 0 : index
    %c0_36 = arith.constant 0 : index
    %c0_37 = arith.constant 0 : index
    %106 = vector.load %arg7[%c0_35, %c0_36, %c0_37] : memref<2x32x32xbf16, #tpu.memory_space<vmem>>, vector<1x32x32xbf16>
    %107 = vector.shape_cast %106 : vector<1x32x32xbf16> to vector<32x32xbf16>
    %cst_38 = arith.constant dense<0.000000e+00> : vector<64x32xf32>
    %108 = tpu.matmul %105, %107, %cst_38 {dimension_numbers = #tpu.dot_dimension_numbers<[1], [0], [0], [1], [0, 0, 1, 1], [], []>} : vector<64x32xbf16>, vector<32x32xbf16>, vector<64x32xf32> -> vector<64x32xf32>
    %c0_39 = arith.constant 0 : index
    %c0_40 = arith.constant 0 : index
    %c0_41 = arith.constant 0 : index
    %109 = vector.load %arg8[%c0_39, %c0_40, %c0_41] : memref<2x1x32xf32, #tpu.memory_space<vmem>>, vector<1x1x32xf32>
    %110 = vector.shape_cast %109 : vector<1x1x32xf32> to vector<1x32xf32>
    %111 = vector.broadcast %110 : vector<1x32xf32> to vector<64x32xf32>
    %112 = arith.addf %108, %111 : vector<64x32xf32>
    %113 = arith.addf %25, %112 : vector<64x32xf32>
    %c0_42 = arith.constant 0 : index
    %c0_43 = arith.constant 0 : index
    %c0_44 = arith.constant 0 : index
    %114 = vector.load %arg9[%c0_42, %c0_43, %c0_44] : memref<2x1x32xf32, #tpu.memory_space<vmem>>, vector<1x1x32xf32>
    %115 = vector.shape_cast %114 : vector<1x1x32xf32> to vector<1x32xf32>
    %c0_45 = arith.constant 0 : index
    %c0_46 = arith.constant 0 : index
    %c0_47 = arith.constant 0 : index
    %116 = vector.load %arg10[%c0_45, %c0_46, %c0_47] : memref<2x1x32xf32, #tpu.memory_space<vmem>>, vector<1x1x32xf32>
    %117 = vector.shape_cast %116 : vector<1x1x32xf32> to vector<1x32xf32>
    %cst_48 = arith.constant dense<0.000000e+00> : vector<64xf32>
    %118 = vector.multi_reduction <add>, %113, %cst_48 [1] : vector<64x32xf32> to vector<64xf32>
    %119 = vector.shape_cast %118 : vector<64xf32> to vector<64x1xf32>
    %cst_49 = arith.constant 3.200000e+01 : f32
    %120 = vector.broadcast %cst_49 : f32 to vector<64x1xf32>
    %121 = arith.divf %119, %120 : vector<64x1xf32>
    %122 = vector.broadcast %121 : vector<64x1xf32> to vector<64x32xf32>
    %123 = arith.subf %113, %122 : vector<64x32xf32>
    %124 = arith.mulf %123, %123 : vector<64x32xf32>
    %cst_50 = arith.constant dense<0.000000e+00> : vector<64xf32>
    %125 = vector.multi_reduction <add>, %124, %cst_50 [1] : vector<64x32xf32> to vector<64xf32>
    %126 = vector.shape_cast %125 : vector<64xf32> to vector<64x1xf32>
    %cst_51 = arith.constant 3.200000e+01 : f32
    %127 = vector.broadcast %cst_51 : f32 to vector<64x1xf32>
    %128 = arith.divf %126, %127 : vector<64x1xf32>
    %129 = vector.broadcast %121 : vector<64x1xf32> to vector<64x32xf32>
    %130 = arith.subf %113, %129 : vector<64x32xf32>
    %cst_52 = arith.constant 9.99999974E-6 : f32
    %131 = vector.broadcast %cst_52 : f32 to vector<64x1xf32>
    %132 = arith.addf %128, %131 : vector<64x1xf32>
    %133 = math.rsqrt %132 : vector<64x1xf32>
    %134 = vector.broadcast %133 : vector<64x1xf32> to vector<64x32xf32>
    %135 = arith.mulf %130, %134 : vector<64x32xf32>
    %136 = vector.broadcast %115 : vector<1x32xf32> to vector<64x32xf32>
    %137 = arith.mulf %135, %136 : vector<64x32xf32>
    %138 = vector.broadcast %117 : vector<1x32xf32> to vector<64x32xf32>
    %139 = arith.addf %137, %138 : vector<64x32xf32>
    %140 = arith.truncf %139 : vector<64x32xf32> to vector<64x32xbf16>
    %c0_53 = arith.constant 0 : index
    %c0_54 = arith.constant 0 : index
    %c0_55 = arith.constant 0 : index
    %141 = vector.load %arg11[%c0_53, %c0_54, %c0_55] : memref<2x32x2048xbf16, #tpu.memory_space<vmem>>, vector<1x32x2048xbf16>
    %142 = vector.shape_cast %141 : vector<1x32x2048xbf16> to vector<32x2048xbf16>
    %cst_56 = arith.constant dense<0.000000e+00> : vector<64x2048xf32>
    %143 = tpu.matmul %140, %142, %cst_56 {dimension_numbers = #tpu.dot_dimension_numbers<[1], [0], [0], [1], [0, 0, 1, 1], [], []>} : vector<64x32xbf16>, vector<32x2048xbf16>, vector<64x2048xf32> -> vector<64x2048xf32>
    %c0_57 = arith.constant 0 : index
    %c0_58 = arith.constant 0 : index
    %c0_59 = arith.constant 0 : index
    %144 = vector.load %arg12[%c0_57, %c0_58, %c0_59] : memref<2x1x2048xf32, #tpu.memory_space<vmem>>, vector<1x1x2048xf32>
    %145 = vector.shape_cast %144 : vector<1x1x2048xf32> to vector<1x2048xf32>
    %146 = vector.broadcast %145 : vector<1x2048xf32> to vector<64x2048xf32>
    %147 = arith.addf %143, %146 : vector<64x2048xf32>
    %cst_60 = arith.constant 0.000000e+00 : f32
    %148 = vector.broadcast %cst_60 : f32 to vector<64x2048xf32>
    %149 = arith.maximumf %147, %148 : vector<64x2048xf32>
    %150 = arith.truncf %149 : vector<64x2048xf32> to vector<64x2048xbf16>
    %c0_61 = arith.constant 0 : index
    %c0_62 = arith.constant 0 : index
    %c0_63 = arith.constant 0 : index
    %151 = vector.load %arg13[%c0_61, %c0_62, %c0_63] : memref<2x2048x32xbf16, #tpu.memory_space<vmem>>, vector<1x2048x32xbf16>
    %152 = vector.shape_cast %151 : vector<1x2048x32xbf16> to vector<2048x32xbf16>
    %cst_64 = arith.constant dense<0.000000e+00> : vector<64x32xf32>
    %153 = tpu.matmul %150, %152, %cst_64 {dimension_numbers = #tpu.dot_dimension_numbers<[1], [0], [0], [1], [0, 0, 1, 1], [], []>} : vector<64x2048xbf16>, vector<2048x32xbf16>, vector<64x32xf32> -> vector<64x32xf32>
    %c0_65 = arith.constant 0 : index
    %c0_66 = arith.constant 0 : index
    %c0_67 = arith.constant 0 : index
    %154 = vector.load %arg14[%c0_65, %c0_66, %c0_67] : memref<2x1x32xf32, #tpu.memory_space<vmem>>, vector<1x1x32xf32>
    %155 = vector.shape_cast %154 : vector<1x1x32xf32> to vector<1x32xf32>
    %156 = vector.broadcast %155 : vector<1x32xf32> to vector<64x32xf32>
    %157 = arith.addf %153, %156 : vector<64x32xf32>
    %158 = arith.addf %139, %157 : vector<64x32xf32>
    %c0_68 = arith.constant 0 : index
    %c0_69 = arith.constant 0 : index
    %c0_70 = arith.constant 0 : index
    %159 = vector.load %arg15[%c0_68, %c0_69, %c0_70] : memref<2x1x32xf32, #tpu.memory_space<vmem>>, vector<1x1x32xf32>
    %160 = vector.shape_cast %159 : vector<1x1x32xf32> to vector<1x32xf32>
    %c0_71 = arith.constant 0 : index
    %c0_72 = arith.constant 0 : index
    %c0_73 = arith.constant 0 : index
    %161 = vector.load %arg16[%c0_71, %c0_72, %c0_73] : memref<2x1x32xf32, #tpu.memory_space<vmem>>, vector<1x1x32xf32>
    %162 = vector.shape_cast %161 : vector<1x1x32xf32> to vector<1x32xf32>
    %cst_74 = arith.constant dense<0.000000e+00> : vector<64xf32>
    %163 = vector.multi_reduction <add>, %158, %cst_74 [1] : vector<64x32xf32> to vector<64xf32>
    %164 = vector.shape_cast %163 : vector<64xf32> to vector<64x1xf32>
    %cst_75 = arith.constant 3.200000e+01 : f32
    %165 = vector.broadcast %cst_75 : f32 to vector<64x1xf32>
    %166 = arith.divf %164, %165 : vector<64x1xf32>
    %167 = vector.broadcast %166 : vector<64x1xf32> to vector<64x32xf32>
    %168 = arith.subf %158, %167 : vector<64x32xf32>
    %169 = arith.mulf %168, %168 : vector<64x32xf32>
    %cst_76 = arith.constant dense<0.000000e+00> : vector<64xf32>
    %170 = vector.multi_reduction <add>, %169, %cst_76 [1] : vector<64x32xf32> to vector<64xf32>
    %171 = vector.shape_cast %170 : vector<64xf32> to vector<64x1xf32>
    %cst_77 = arith.constant 3.200000e+01 : f32
    %172 = vector.broadcast %cst_77 : f32 to vector<64x1xf32>
    %173 = arith.divf %171, %172 : vector<64x1xf32>
    %174 = vector.broadcast %166 : vector<64x1xf32> to vector<64x32xf32>
    %175 = arith.subf %158, %174 : vector<64x32xf32>
    %cst_78 = arith.constant 9.99999974E-6 : f32
    %176 = vector.broadcast %cst_78 : f32 to vector<64x1xf32>
    %177 = arith.addf %173, %176 : vector<64x1xf32>
    %178 = math.rsqrt %177 : vector<64x1xf32>
    %179 = vector.broadcast %178 : vector<64x1xf32> to vector<64x32xf32>
    %180 = arith.mulf %175, %179 : vector<64x32xf32>
    %181 = vector.broadcast %160 : vector<1x32xf32> to vector<64x32xf32>
    %182 = arith.mulf %180, %181 : vector<64x32xf32>
    %183 = vector.broadcast %162 : vector<1x32xf32> to vector<64x32xf32>
    %184 = arith.addf %182, %183 : vector<64x32xf32>
    %185 = arith.truncf %184 : vector<64x32xf32> to vector<64x32xbf16>
    %c1 = arith.constant 1 : index
    %c0_79 = arith.constant 0 : index
    %c0_80 = arith.constant 0 : index
    %186 = vector.load %arg5[%c1, %c0_79, %c0_80] : memref<2x32x96xbf16, #tpu.memory_space<vmem>>, vector<1x32x96xbf16>
    %187 = vector.shape_cast %186 : vector<1x32x96xbf16> to vector<32x96xbf16>
    %cst_81 = arith.constant dense<0.000000e+00> : vector<64x96xf32>
    %188 = tpu.matmul %185, %187, %cst_81 {dimension_numbers = #tpu.dot_dimension_numbers<[1], [0], [0], [1], [0, 0, 1, 1], [], []>} : vector<64x32xbf16>, vector<32x96xbf16>, vector<64x96xf32> -> vector<64x96xf32>
    %c1_82 = arith.constant 1 : index
    %c0_83 = arith.constant 0 : index
    %c0_84 = arith.constant 0 : index
    %189 = vector.load %arg6[%c1_82, %c0_83, %c0_84] : memref<2x1x96xf32, #tpu.memory_space<vmem>>, vector<1x1x96xf32>
    %190 = vector.shape_cast %189 : vector<1x1x96xf32> to vector<1x96xf32>
    %191 = vector.broadcast %190 : vector<1x96xf32> to vector<64x96xf32>
    %192 = arith.addf %188, %191 : vector<64x96xf32>
    %193 = vector.extract_strided_slice %192 {offsets = [0, 0], sizes = [64, 32], strides = [1, 1]} : vector<64x96xf32> to vector<64x32xf32>
    %194 = vector.shape_cast %193 : vector<64x32xf32> to vector<8x8x32xf32>
    %195 = arith.truncf %194 : vector<8x8x32xf32> to vector<8x8x32xbf16>
    %196 = vector.extract_strided_slice %192 {offsets = [0, 32], sizes = [64, 32], strides = [1, 1]} : vector<64x96xf32> to vector<64x32xf32>
    %197 = vector.shape_cast %196 : vector<64x32xf32> to vector<8x8x32xf32>
    %198 = arith.truncf %197 : vector<8x8x32xf32> to vector<8x8x32xbf16>
    %199 = vector.extract_strided_slice %192 {offsets = [0, 64], sizes = [64, 32], strides = [1, 1]} : vector<64x96xf32> to vector<64x32xf32>
    %200 = vector.shape_cast %199 : vector<64x32xf32> to vector<8x8x32xf32>
    %201 = arith.truncf %200 : vector<8x8x32xf32> to vector<8x8x32xbf16>
    %202 = vector.extract_strided_slice %195 {offsets = [0, 0, 0], sizes = [8, 8, 8], strides = [1, 1, 1]} : vector<8x8x32xbf16> to vector<8x8x8xbf16>
    %203 = vector.extract_strided_slice %198 {offsets = [0, 0, 0], sizes = [8, 8, 8], strides = [1, 1, 1]} : vector<8x8x32xbf16> to vector<8x8x8xbf16>
    "tpu.trace_start"() <{level = 10 : i32, message = "sbd,scd->sbc"}> : () -> ()
    %cst_85 = arith.constant dense<0.000000e+00> : vector<8x8x8xf32>
    %204 = tpu.matmul %202, %203, %cst_85 {dimension_numbers = #tpu.dot_dimension_numbers<[2], [2], [1], [1], [0, 0, 0, 1, 1, 1], [0], [0]>} : vector<8x8x8xbf16>, vector<8x8x8xbf16>, vector<8x8x8xf32> -> vector<8x8x8xf32>
    "tpu.trace_stop"() : () -> ()
    %cst_86 = arith.constant dense<0xFF800000> : vector<8x8xf32>
    %205 = vector.multi_reduction <maximumf>, %204, %cst_86 [2] : vector<8x8x8xf32> to vector<8x8xf32>
    %206 = vector.shape_cast %205 : vector<8x8xf32> to vector<8x8x1xf32>
    %207 = vector.broadcast %206 : vector<8x8x1xf32> to vector<8x8x8xf32>
    %208 = arith.subf %204, %207 : vector<8x8x8xf32>
    %209 = math.exp %208 : vector<8x8x8xf32>
    %cst_87 = arith.constant dense<0.000000e+00> : vector<8x8xf32>
    %210 = vector.multi_reduction <add>, %209, %cst_87 [2] : vector<8x8x8xf32> to vector<8x8xf32>
    %211 = vector.shape_cast %210 : vector<8x8xf32> to vector<8x8x1xf32>
    %212 = vector.broadcast %211 : vector<8x8x1xf32> to vector<8x8x8xf32>
    %213 = arith.divf %209, %212 : vector<8x8x8xf32>
    %214 = arith.truncf %213 : vector<8x8x8xf32> to vector<8x8x8xbf16>
    %215 = vector.extract_strided_slice %201 {offsets = [0, 0, 0], sizes = [8, 8, 8], strides = [1, 1, 1]} : vector<8x8x32xbf16> to vector<8x8x8xbf16>
    "tpu.trace_start"() <{level = 10 : i32, message = "sbc,scd->sbd"}> : () -> ()
    %cst_88 = arith.constant dense<0.000000e+00> : vector<8x8x8xf32>
    %216 = tpu.matmul %214, %215, %cst_88 {dimension_numbers = #tpu.dot_dimension_numbers<[2], [1], [1], [2], [0, 0, 0, 1, 1, 2], [0], [0]>} : vector<8x8x8xbf16>, vector<8x8x8xbf16>, vector<8x8x8xf32> -> vector<8x8x8xf32>
    "tpu.trace_stop"() : () -> ()
    %217 = vector.extract_strided_slice %195 {offsets = [0, 0, 8], sizes = [8, 8, 8], strides = [1, 1, 1]} : vector<8x8x32xbf16> to vector<8x8x8xbf16>
    %218 = vector.extract_strided_slice %198 {offsets = [0, 0, 8], sizes = [8, 8, 8], strides = [1, 1, 1]} : vector<8x8x32xbf16> to vector<8x8x8xbf16>
    "tpu.trace_start"() <{level = 10 : i32, message = "sbd,scd->sbc"}> : () -> ()
    %cst_89 = arith.constant dense<0.000000e+00> : vector<8x8x8xf32>
    %219 = tpu.matmul %217, %218, %cst_89 {dimension_numbers = #tpu.dot_dimension_numbers<[2], [2], [1], [1], [0, 0, 0, 1, 1, 1], [0], [0]>} : vector<8x8x8xbf16>, vector<8x8x8xbf16>, vector<8x8x8xf32> -> vector<8x8x8xf32>
    "tpu.trace_stop"() : () -> ()
    %cst_90 = arith.constant dense<0xFF800000> : vector<8x8xf32>
    %220 = vector.multi_reduction <maximumf>, %219, %cst_90 [2] : vector<8x8x8xf32> to vector<8x8xf32>
    %221 = vector.shape_cast %220 : vector<8x8xf32> to vector<8x8x1xf32>
    %222 = vector.broadcast %221 : vector<8x8x1xf32> to vector<8x8x8xf32>
    %223 = arith.subf %219, %222 : vector<8x8x8xf32>
    %224 = math.exp %223 : vector<8x8x8xf32>
    %cst_91 = arith.constant dense<0.000000e+00> : vector<8x8xf32>
    %225 = vector.multi_reduction <add>, %224, %cst_91 [2] : vector<8x8x8xf32> to vector<8x8xf32>
    %226 = vector.shape_cast %225 : vector<8x8xf32> to vector<8x8x1xf32>
    %227 = vector.broadcast %226 : vector<8x8x1xf32> to vector<8x8x8xf32>
    %228 = arith.divf %224, %227 : vector<8x8x8xf32>
    %229 = arith.truncf %228 : vector<8x8x8xf32> to vector<8x8x8xbf16>
    %230 = vector.extract_strided_slice %201 {offsets = [0, 0, 8], sizes = [8, 8, 8], strides = [1, 1, 1]} : vector<8x8x32xbf16> to vector<8x8x8xbf16>
    "tpu.trace_start"() <{level = 10 : i32, message = "sbc,scd->sbd"}> : () -> ()
    %cst_92 = arith.constant dense<0.000000e+00> : vector<8x8x8xf32>
    %231 = tpu.matmul %229, %230, %cst_92 {dimension_numbers = #tpu.dot_dimension_numbers<[2], [1], [1], [2], [0, 0, 0, 1, 1, 2], [0], [0]>} : vector<8x8x8xbf16>, vector<8x8x8xbf16>, vector<8x8x8xf32> -> vector<8x8x8xf32>
    "tpu.trace_stop"() : () -> ()
    %232 = vector.extract_strided_slice %195 {offsets = [0, 0, 16], sizes = [8, 8, 8], strides = [1, 1, 1]} : vector<8x8x32xbf16> to vector<8x8x8xbf16>
    %233 = vector.extract_strided_slice %198 {offsets = [0, 0, 16], sizes = [8, 8, 8], strides = [1, 1, 1]} : vector<8x8x32xbf16> to vector<8x8x8xbf16>
    "tpu.trace_start"() <{level = 10 : i32, message = "sbd,scd->sbc"}> : () -> ()
    %cst_93 = arith.constant dense<0.000000e+00> : vector<8x8x8xf32>
    %234 = tpu.matmul %232, %233, %cst_93 {dimension_numbers = #tpu.dot_dimension_numbers<[2], [2], [1], [1], [0, 0, 0, 1, 1, 1], [0], [0]>} : vector<8x8x8xbf16>, vector<8x8x8xbf16>, vector<8x8x8xf32> -> vector<8x8x8xf32>
    "tpu.trace_stop"() : () -> ()
    %cst_94 = arith.constant dense<0xFF800000> : vector<8x8xf32>
    %235 = vector.multi_reduction <maximumf>, %234, %cst_94 [2] : vector<8x8x8xf32> to vector<8x8xf32>
    %236 = vector.shape_cast %235 : vector<8x8xf32> to vector<8x8x1xf32>
    %237 = vector.broadcast %236 : vector<8x8x1xf32> to vector<8x8x8xf32>
    %238 = arith.subf %234, %237 : vector<8x8x8xf32>
    %239 = math.exp %238 : vector<8x8x8xf32>
    %cst_95 = arith.constant dense<0.000000e+00> : vector<8x8xf32>
    %240 = vector.multi_reduction <add>, %239, %cst_95 [2] : vector<8x8x8xf32> to vector<8x8xf32>
    %241 = vector.shape_cast %240 : vector<8x8xf32> to vector<8x8x1xf32>
    %242 = vector.broadcast %241 : vector<8x8x1xf32> to vector<8x8x8xf32>
    %243 = arith.divf %239, %242 : vector<8x8x8xf32>
    %244 = arith.truncf %243 : vector<8x8x8xf32> to vector<8x8x8xbf16>
    %245 = vector.extract_strided_slice %201 {offsets = [0, 0, 16], sizes = [8, 8, 8], strides = [1, 1, 1]} : vector<8x8x32xbf16> to vector<8x8x8xbf16>
    "tpu.trace_start"() <{level = 10 : i32, message = "sbc,scd->sbd"}> : () -> ()
    %cst_96 = arith.constant dense<0.000000e+00> : vector<8x8x8xf32>
    %246 = tpu.matmul %244, %245, %cst_96 {dimension_numbers = #tpu.dot_dimension_numbers<[2], [1], [1], [2], [0, 0, 0, 1, 1, 2], [0], [0]>} : vector<8x8x8xbf16>, vector<8x8x8xbf16>, vector<8x8x8xf32> -> vector<8x8x8xf32>
    "tpu.trace_stop"() : () -> ()
    %247 = vector.extract_strided_slice %195 {offsets = [0, 0, 24], sizes = [8, 8, 8], strides = [1, 1, 1]} : vector<8x8x32xbf16> to vector<8x8x8xbf16>
    %248 = vector.extract_strided_slice %198 {offsets = [0, 0, 24], sizes = [8, 8, 8], strides = [1, 1, 1]} : vector<8x8x32xbf16> to vector<8x8x8xbf16>
    "tpu.trace_start"() <{level = 10 : i32, message = "sbd,scd->sbc"}> : () -> ()
    %cst_97 = arith.constant dense<0.000000e+00> : vector<8x8x8xf32>
    %249 = tpu.matmul %247, %248, %cst_97 {dimension_numbers = #tpu.dot_dimension_numbers<[2], [2], [1], [1], [0, 0, 0, 1, 1, 1], [0], [0]>} : vector<8x8x8xbf16>, vector<8x8x8xbf16>, vector<8x8x8xf32> -> vector<8x8x8xf32>
    "tpu.trace_stop"() : () -> ()
    %cst_98 = arith.constant dense<0xFF800000> : vector<8x8xf32>
    %250 = vector.multi_reduction <maximumf>, %249, %cst_98 [2] : vector<8x8x8xf32> to vector<8x8xf32>
    %251 = vector.shape_cast %250 : vector<8x8xf32> to vector<8x8x1xf32>
    %252 = vector.broadcast %251 : vector<8x8x1xf32> to vector<8x8x8xf32>
    %253 = arith.subf %249, %252 : vector<8x8x8xf32>
    %254 = math.exp %253 : vector<8x8x8xf32>
    %cst_99 = arith.constant dense<0.000000e+00> : vector<8x8xf32>
    %255 = vector.multi_reduction <add>, %254, %cst_99 [2] : vector<8x8x8xf32> to vector<8x8xf32>
    %256 = vector.shape_cast %255 : vector<8x8xf32> to vector<8x8x1xf32>
    %257 = vector.broadcast %256 : vector<8x8x1xf32> to vector<8x8x8xf32>
    %258 = arith.divf %254, %257 : vector<8x8x8xf32>
    %259 = arith.truncf %258 : vector<8x8x8xf32> to vector<8x8x8xbf16>
    %260 = vector.extract_strided_slice %201 {offsets = [0, 0, 24], sizes = [8, 8, 8], strides = [1, 1, 1]} : vector<8x8x32xbf16> to vector<8x8x8xbf16>
    "tpu.trace_start"() <{level = 10 : i32, message = "sbc,scd->sbd"}> : () -> ()
    %cst_100 = arith.constant dense<0.000000e+00> : vector<8x8x8xf32>
    %261 = tpu.matmul %259, %260, %cst_100 {dimension_numbers = #tpu.dot_dimension_numbers<[2], [1], [1], [2], [0, 0, 0, 1, 1, 2], [0], [0]>} : vector<8x8x8xbf16>, vector<8x8x8xbf16>, vector<8x8x8xf32> -> vector<8x8x8xf32>
    "tpu.trace_stop"() : () -> ()
    %262 = tpu.concatenate %216, %231, %246, %261 in 2 : vector<8x8x8xf32>, vector<8x8x8xf32>, vector<8x8x8xf32>, vector<8x8x8xf32> -> vector<8x8x32xf32>
    %263 = vector.shape_cast %262 : vector<8x8x32xf32> to vector<64x32xf32>
    %264 = arith.truncf %263 : vector<64x32xf32> to vector<64x32xbf16>
    %c1_101 = arith.constant 1 : index
    %c0_102 = arith.constant 0 : index
    %c0_103 = arith.constant 0 : index
    %265 = vector.load %arg7[%c1_101, %c0_102, %c0_103] : memref<2x32x32xbf16, #tpu.memory_space<vmem>>, vector<1x32x32xbf16>
    %266 = vector.shape_cast %265 : vector<1x32x32xbf16> to vector<32x32xbf16>
    %cst_104 = arith.constant dense<0.000000e+00> : vector<64x32xf32>
    %267 = tpu.matmul %264, %266, %cst_104 {dimension_numbers = #tpu.dot_dimension_numbers<[1], [0], [0], [1], [0, 0, 1, 1], [], []>} : vector<64x32xbf16>, vector<32x32xbf16>, vector<64x32xf32> -> vector<64x32xf32>
    %c1_105 = arith.constant 1 : index
    %c0_106 = arith.constant 0 : index
    %c0_107 = arith.constant 0 : index
    %268 = vector.load %arg8[%c1_105, %c0_106, %c0_107] : memref<2x1x32xf32, #tpu.memory_space<vmem>>, vector<1x1x32xf32>
    %269 = vector.shape_cast %268 : vector<1x1x32xf32> to vector<1x32xf32>
    %270 = vector.broadcast %269 : vector<1x32xf32> to vector<64x32xf32>
    %271 = arith.addf %267, %270 : vector<64x32xf32>
    %272 = arith.addf %184, %271 : vector<64x32xf32>
    %c1_108 = arith.constant 1 : index
    %c0_109 = arith.constant 0 : index
    %c0_110 = arith.constant 0 : index
    %273 = vector.load %arg9[%c1_108, %c0_109, %c0_110] : memref<2x1x32xf32, #tpu.memory_space<vmem>>, vector<1x1x32xf32>
    %274 = vector.shape_cast %273 : vector<1x1x32xf32> to vector<1x32xf32>
    %c1_111 = arith.constant 1 : index
    %c0_112 = arith.constant 0 : index
    %c0_113 = arith.constant 0 : index
    %275 = vector.load %arg10[%c1_111, %c0_112, %c0_113] : memref<2x1x32xf32, #tpu.memory_space<vmem>>, vector<1x1x32xf32>
    %276 = vector.shape_cast %275 : vector<1x1x32xf32> to vector<1x32xf32>
    %cst_114 = arith.constant dense<0.000000e+00> : vector<64xf32>
    %277 = vector.multi_reduction <add>, %272, %cst_114 [1] : vector<64x32xf32> to vector<64xf32>
    %278 = vector.shape_cast %277 : vector<64xf32> to vector<64x1xf32>
    %cst_115 = arith.constant 3.200000e+01 : f32
    %279 = vector.broadcast %cst_115 : f32 to vector<64x1xf32>
    %280 = arith.divf %278, %279 : vector<64x1xf32>
    %281 = vector.broadcast %280 : vector<64x1xf32> to vector<64x32xf32>
    %282 = arith.subf %272, %281 : vector<64x32xf32>
    %283 = arith.mulf %282, %282 : vector<64x32xf32>
    %cst_116 = arith.constant dense<0.000000e+00> : vector<64xf32>
    %284 = vector.multi_reduction <add>, %283, %cst_116 [1] : vector<64x32xf32> to vector<64xf32>
    %285 = vector.shape_cast %284 : vector<64xf32> to vector<64x1xf32>
    %cst_117 = arith.constant 3.200000e+01 : f32
    %286 = vector.broadcast %cst_117 : f32 to vector<64x1xf32>
    %287 = arith.divf %285, %286 : vector<64x1xf32>
    %288 = vector.broadcast %280 : vector<64x1xf32> to vector<64x32xf32>
    %289 = arith.subf %272, %288 : vector<64x32xf32>
    %cst_118 = arith.constant 9.99999974E-6 : f32
    %290 = vector.broadcast %cst_118 : f32 to vector<64x1xf32>
    %291 = arith.addf %287, %290 : vector<64x1xf32>
    %292 = math.rsqrt %291 : vector<64x1xf32>
    %293 = vector.broadcast %292 : vector<64x1xf32> to vector<64x32xf32>
    %294 = arith.mulf %289, %293 : vector<64x32xf32>
    %295 = vector.broadcast %274 : vector<1x32xf32> to vector<64x32xf32>
    %296 = arith.mulf %294, %295 : vector<64x32xf32>
    %297 = vector.broadcast %276 : vector<1x32xf32> to vector<64x32xf32>
    %298 = arith.addf %296, %297 : vector<64x32xf32>
    %299 = arith.truncf %298 : vector<64x32xf32> to vector<64x32xbf16>
    %c1_119 = arith.constant 1 : index
    %c0_120 = arith.constant 0 : index
    %c0_121 = arith.constant 0 : index
    %300 = vector.load %arg11[%c1_119, %c0_120, %c0_121] : memref<2x32x2048xbf16, #tpu.memory_space<vmem>>, vector<1x32x2048xbf16>
    %301 = vector.shape_cast %300 : vector<1x32x2048xbf16> to vector<32x2048xbf16>
    %cst_122 = arith.constant dense<0.000000e+00> : vector<64x2048xf32>
    %302 = tpu.matmul %299, %301, %cst_122 {dimension_numbers = #tpu.dot_dimension_numbers<[1], [0], [0], [1], [0, 0, 1, 1], [], []>} : vector<64x32xbf16>, vector<32x2048xbf16>, vector<64x2048xf32> -> vector<64x2048xf32>
    %c1_123 = arith.constant 1 : index
    %c0_124 = arith.constant 0 : index
    %c0_125 = arith.constant 0 : index
    %303 = vector.load %arg12[%c1_123, %c0_124, %c0_125] : memref<2x1x2048xf32, #tpu.memory_space<vmem>>, vector<1x1x2048xf32>
    %304 = vector.shape_cast %303 : vector<1x1x2048xf32> to vector<1x2048xf32>
    %305 = vector.broadcast %304 : vector<1x2048xf32> to vector<64x2048xf32>
    %306 = arith.addf %302, %305 : vector<64x2048xf32>
    %cst_126 = arith.constant 0.000000e+00 : f32
    %307 = vector.broadcast %cst_126 : f32 to vector<64x2048xf32>
    %308 = arith.maximumf %306, %307 : vector<64x2048xf32>
    %309 = arith.truncf %308 : vector<64x2048xf32> to vector<64x2048xbf16>
    %c1_127 = arith.constant 1 : index
    %c0_128 = arith.constant 0 : index
    %c0_129 = arith.constant 0 : index
    %310 = vector.load %arg13[%c1_127, %c0_128, %c0_129] : memref<2x2048x32xbf16, #tpu.memory_space<vmem>>, vector<1x2048x32xbf16>
    %311 = vector.shape_cast %310 : vector<1x2048x32xbf16> to vector<2048x32xbf16>
    %cst_130 = arith.constant dense<0.000000e+00> : vector<64x32xf32>
    %312 = tpu.matmul %309, %311, %cst_130 {dimension_numbers = #tpu.dot_dimension_numbers<[1], [0], [0], [1], [0, 0, 1, 1], [], []>} : vector<64x2048xbf16>, vector<2048x32xbf16>, vector<64x32xf32> -> vector<64x32xf32>
    %c1_131 = arith.constant 1 : index
    %c0_132 = arith.constant 0 : index
    %c0_133 = arith.constant 0 : index
    %313 = vector.load %arg14[%c1_131, %c0_132, %c0_133] : memref<2x1x32xf32, #tpu.memory_space<vmem>>, vector<1x1x32xf32>
    %314 = vector.shape_cast %313 : vector<1x1x32xf32> to vector<1x32xf32>
    %315 = vector.broadcast %314 : vector<1x32xf32> to vector<64x32xf32>
    %316 = arith.addf %312, %315 : vector<64x32xf32>
    %317 = arith.addf %298, %316 : vector<64x32xf32>
    %c1_134 = arith.constant 1 : index
    %c0_135 = arith.constant 0 : index
    %c0_136 = arith.constant 0 : index
    %318 = vector.load %arg15[%c1_134, %c0_135, %c0_136] : memref<2x1x32xf32, #tpu.memory_space<vmem>>, vector<1x1x32xf32>
    %319 = vector.shape_cast %318 : vector<1x1x32xf32> to vector<1x32xf32>
    %c1_137 = arith.constant 1 : index
    %c0_138 = arith.constant 0 : index
    %c0_139 = arith.constant 0 : index
    %320 = vector.load %arg16[%c1_137, %c0_138, %c0_139] : memref<2x1x32xf32, #tpu.memory_space<vmem>>, vector<1x1x32xf32>
    %321 = vector.shape_cast %320 : vector<1x1x32xf32> to vector<1x32xf32>
    %cst_140 = arith.constant dense<0.000000e+00> : vector<64xf32>
    %322 = vector.multi_reduction <add>, %317, %cst_140 [1] : vector<64x32xf32> to vector<64xf32>
    %323 = vector.shape_cast %322 : vector<64xf32> to vector<64x1xf32>
    %cst_141 = arith.constant 3.200000e+01 : f32
    %324 = vector.broadcast %cst_141 : f32 to vector<64x1xf32>
    %325 = arith.divf %323, %324 : vector<64x1xf32>
    %326 = vector.broadcast %325 : vector<64x1xf32> to vector<64x32xf32>
    %327 = arith.subf %317, %326 : vector<64x32xf32>
    %328 = arith.mulf %327, %327 : vector<64x32xf32>
    %cst_142 = arith.constant dense<0.000000e+00> : vector<64xf32>
    %329 = vector.multi_reduction <add>, %328, %cst_142 [1] : vector<64x32xf32> to vector<64xf32>
    %330 = vector.shape_cast %329 : vector<64xf32> to vector<64x1xf32>
    %cst_143 = arith.constant 3.200000e+01 : f32
    %331 = vector.broadcast %cst_143 : f32 to vector<64x1xf32>
    %332 = arith.divf %330, %331 : vector<64x1xf32>
    %333 = vector.broadcast %325 : vector<64x1xf32> to vector<64x32xf32>
    %334 = arith.subf %317, %333 : vector<64x32xf32>
    %cst_144 = arith.constant 9.99999974E-6 : f32
    %335 = vector.broadcast %cst_144 : f32 to vector<64x1xf32>
    %336 = arith.addf %332, %335 : vector<64x1xf32>
    %337 = math.rsqrt %336 : vector<64x1xf32>
    %338 = vector.broadcast %337 : vector<64x1xf32> to vector<64x32xf32>
    %339 = arith.mulf %334, %338 : vector<64x32xf32>
    %340 = vector.broadcast %319 : vector<1x32xf32> to vector<64x32xf32>
    %341 = arith.mulf %339, %340 : vector<64x32xf32>
    %342 = vector.broadcast %321 : vector<1x32xf32> to vector<64x32xf32>
    %343 = arith.addf %341, %342 : vector<64x32xf32>
    %344 = arith.truncf %343 : vector<64x32xf32> to vector<64x32xbf16>
    %c0_145 = arith.constant 0 : index
    %c0_146 = arith.constant 0 : index
    %345 = vector.load %arg17[%c0_145, %c0_146] : memref<32x96xbf16, #tpu.memory_space<vmem>>, vector<32x96xbf16>
    %cst_147 = arith.constant dense<0.000000e+00> : vector<64x96xf32>
    %346 = tpu.matmul %344, %345, %cst_147 {dimension_numbers = #tpu.dot_dimension_numbers<[1], [0], [0], [1], [0, 0, 1, 1], [], []>} : vector<64x32xbf16>, vector<32x96xbf16>, vector<64x96xf32> -> vector<64x96xf32>
    %c0_148 = arith.constant 0 : index
    %c0_149 = arith.constant 0 : index
    %347 = vector.load %arg19[%c0_148, %c0_149] : memref<1x96xf32, #tpu.memory_space<vmem>>, vector<1x96xf32>
    %348 = vector.broadcast %347 : vector<1x96xf32> to vector<64x96xf32>
    %349 = arith.addf %346, %348 : vector<64x96xf32>
    %c0_150 = arith.constant 0 : index
    %c0_151 = arith.constant 0 : index
    %350 = vector.load %arg24[%c0_150, %c0_151] : memref<64x96xf32, #tpu.memory_space<vmem>>, vector<64x96xf32>
    tpu.vector_store %arg24[%c0_150, %c0_151], %349 {strides = array<i32>} : memref<64x96xf32, #tpu.memory_space<vmem>>, vector<64x96xf32>,
    %c0_152 = arith.constant 0 : index
    %c0_153 = arith.constant 0 : index
    %351 = vector.load %arg18[%c0_152, %c0_153] : memref<32x96xbf16, #tpu.memory_space<vmem>>, vector<32x96xbf16>
    %c0_154 = arith.constant 0 : index
    %c0_155 = arith.constant 0 : index
    %352 = vector.load %arg20[%c0_154, %c0_155] : memref<1x96xf32, #tpu.memory_space<vmem>>, vector<1x96xf32>
    %cst_156 = arith.constant 0.000000e+00 : f32
    %353 = vector.broadcast %cst_156 : f32 to vector<8x32xf32>
    %c0_157 = arith.constant 0 : index
    %c0_158 = arith.constant 0 : index
    %354 = tpu.strided_load %arg24[%c0_157, %c0_158] {strides = array<i32: 8, 1>} : memref<64x96xf32, #tpu.memory_space<vmem>>, vector<8x96xf32>
    %355 = arith.truncf %353 : vector<8x32xf32> to vector<8x32xbf16>
    %cst_159 = arith.constant dense<0.000000e+00> : vector<8x96xf32>
    %356 = tpu.matmul %355, %351, %cst_159 {dimension_numbers = #tpu.dot_dimension_numbers<[1], [0], [0], [1], [0, 0, 1, 1], [], []>} : vector<8x32xbf16>, vector<32x96xbf16>, vector<8x96xf32> -> vector<8x96xf32>
    %357 = vector.broadcast %352 : vector<1x96xf32> to vector<8x96xf32>
    %358 = arith.addf %356, %357 : vector<8x96xf32>
    %359 = vector.extract_strided_slice %354 {offsets = [0, 0], sizes = [8, 32], strides = [1, 1]} : vector<8x96xf32> to vector<8x32xf32>
    %360 = vector.extract_strided_slice %358 {offsets = [0, 0], sizes = [8, 32], strides = [1, 1]} : vector<8x96xf32> to vector<8x32xf32>
    %361 = arith.addf %359, %360 : vector<8x32xf32>
    %362 = arith.negf %361 : vector<8x32xf32>
    %363 = math.exp %362 : vector<8x32xf32>
    %cst_160 = arith.constant 1.000000e+00 : f32
    %364 = vector.broadcast %cst_160 : f32 to vector<8x32xf32>
    %365 = arith.addf %364, %363 : vector<8x32xf32>
    %366 = arith.divf %364, %365 : vector<8x32xf32>
    %367 = vector.extract_strided_slice %354 {offsets = [0, 32], sizes = [8, 32], strides = [1, 1]} : vector<8x96xf32> to vector<8x32xf32>
    %368 = vector.extract_strided_slice %358 {offsets = [0, 32], sizes = [8, 32], strides = [1, 1]} : vector<8x96xf32> to vector<8x32xf32>
    %369 = arith.addf %367, %368 : vector<8x32xf32>
    %370 = arith.negf %369 : vector<8x32xf32>
    %371 = math.exp %370 : vector<8x32xf32>
    %cst_161 = arith.constant 1.000000e+00 : f32
    %372 = vector.broadcast %cst_161 : f32 to vector<8x32xf32>
    %373 = arith.addf %372, %371 : vector<8x32xf32>
    %374 = arith.divf %372, %373 : vector<8x32xf32>
    %375 = vector.extract_strided_slice %354 {offsets = [0, 64], sizes = [8, 32], strides = [1, 1]} : vector<8x96xf32> to vector<8x32xf32>
    %376 = vector.extract_strided_slice %358 {offsets = [0, 64], sizes = [8, 32], strides = [1, 1]} : vector<8x96xf32> to vector<8x32xf32>
    %377 = arith.mulf %366, %376 : vector<8x32xf32>
    %378 = arith.addf %375, %377 : vector<8x32xf32>
    %379 = math.tanh %378 : vector<8x32xf32>
    %cst_162 = arith.constant 1.000000e+00 : f32
    %380 = vector.broadcast %cst_162 : f32 to vector<8x32xf32>
    %381 = arith.subf %380, %374 : vector<8x32xf32>
    %382 = arith.mulf %381, %379 : vector<8x32xf32>
    %383 = arith.mulf %374, %353 : vector<8x32xf32>
    %384 = arith.addf %382, %383 : vector<8x32xf32>
    %c1_163 = arith.constant 1 : index
    %c0_164 = arith.constant 0 : index
    %385 = tpu.strided_load %arg24[%c1_163, %c0_164] {strides = array<i32: 8, 1>} : memref<64x96xf32, #tpu.memory_space<vmem>>, vector<8x96xf32>
    %386 = arith.truncf %384 : vector<8x32xf32> to vector<8x32xbf16>
    %cst_165 = arith.constant dense<0.000000e+00> : vector<8x96xf32>
    %387 = tpu.matmul %386, %351, %cst_165 {dimension_numbers = #tpu.dot_dimension_numbers<[1], [0], [0], [1], [0, 0, 1, 1], [], []>} : vector<8x32xbf16>, vector<32x96xbf16>, vector<8x96xf32> -> vector<8x96xf32>
    %388 = vector.broadcast %352 : vector<1x96xf32> to vector<8x96xf32>
    %389 = arith.addf %387, %388 : vector<8x96xf32>
    %390 = vector.extract_strided_slice %385 {offsets = [0, 0], sizes = [8, 32], strides = [1, 1]} : vector<8x96xf32> to vector<8x32xf32>
    %391 = vector.extract_strided_slice %389 {offsets = [0, 0], sizes = [8, 32], strides = [1, 1]} : vector<8x96xf32> to vector<8x32xf32>
    %392 = arith.addf %390, %391 : vector<8x32xf32>
    %393 = arith.negf %392 : vector<8x32xf32>
    %394 = math.exp %393 : vector<8x32xf32>
    %cst_166 = arith.constant 1.000000e+00 : f32
    %395 = vector.broadcast %cst_166 : f32 to vector<8x32xf32>
    %396 = arith.addf %395, %394 : vector<8x32xf32>
    %397 = arith.divf %395, %396 : vector<8x32xf32>
    %398 = vector.extract_strided_slice %385 {offsets = [0, 32], sizes = [8, 32], strides = [1, 1]} : vector<8x96xf32> to vector<8x32xf32>
    %399 = vector.extract_strided_slice %389 {offsets = [0, 32], sizes = [8, 32], strides = [1, 1]} : vector<8x96xf32> to vector<8x32xf32>
    %400 = arith.addf %398, %399 : vector<8x32xf32>
    %401 = arith.negf %400 : vector<8x32xf32>
    %402 = math.exp %401 : vector<8x32xf32>
    %cst_167 = arith.constant 1.000000e+00 : f32
    %403 = vector.broadcast %cst_167 : f32 to vector<8x32xf32>
    %404 = arith.addf %403, %402 : vector<8x32xf32>
    %405 = arith.divf %403, %404 : vector<8x32xf32>
    %406 = vector.extract_strided_slice %385 {offsets = [0, 64], sizes = [8, 32], strides = [1, 1]} : vector<8x96xf32> to vector<8x32xf32>
    %407 = vector.extract_strided_slice %389 {offsets = [0, 64], sizes = [8, 32], strides = [1, 1]} : vector<8x96xf32> to vector<8x32xf32>
    %408 = arith.mulf %397, %407 : vector<8x32xf32>
    %409 = arith.addf %406, %408 : vector<8x32xf32>
    %410 = math.tanh %409 : vector<8x32xf32>
    %cst_168 = arith.constant 1.000000e+00 : f32
    %411 = vector.broadcast %cst_168 : f32 to vector<8x32xf32>
    %412 = arith.subf %411, %405 : vector<8x32xf32>
    %413 = arith.mulf %412, %410 : vector<8x32xf32>
    %414 = arith.mulf %405, %384 : vector<8x32xf32>
    %415 = arith.addf %413, %414 : vector<8x32xf32>
    %c2 = arith.constant 2 : index
    %c0_169 = arith.constant 0 : index
    %416 = tpu.strided_load %arg24[%c2, %c0_169] {strides = array<i32: 8, 1>} : memref<64x96xf32, #tpu.memory_space<vmem>>, vector<8x96xf32>
    %417 = arith.truncf %415 : vector<8x32xf32> to vector<8x32xbf16>
    %cst_170 = arith.constant dense<0.000000e+00> : vector<8x96xf32>
    %418 = tpu.matmul %417, %351, %cst_170 {dimension_numbers = #tpu.dot_dimension_numbers<[1], [0], [0], [1], [0, 0, 1, 1], [], []>} : vector<8x32xbf16>, vector<32x96xbf16>, vector<8x96xf32> -> vector<8x96xf32>
    %419 = vector.broadcast %352 : vector<1x96xf32> to vector<8x96xf32>
    %420 = arith.addf %418, %419 : vector<8x96xf32>
    %421 = vector.extract_strided_slice %416 {offsets = [0, 0], sizes = [8, 32], strides = [1, 1]} : vector<8x96xf32> to vector<8x32xf32>
    %422 = vector.extract_strided_slice %420 {offsets = [0, 0], sizes = [8, 32], strides = [1, 1]} : vector<8x96xf32> to vector<8x32xf32>
    %423 = arith.addf %421, %422 : vector<8x32xf32>
    %424 = arith.negf %423 : vector<8x32xf32>
    %425 = math.exp %424 : vector<8x32xf32>
    %cst_171 = arith.constant 1.000000e+00 : f32
    %426 = vector.broadcast %cst_171 : f32 to vector<8x32xf32>
    %427 = arith.addf %426, %425 : vector<8x32xf32>
    %428 = arith.divf %426, %427 : vector<8x32xf32>
    %429 = vector.extract_strided_slice %416 {offsets = [0, 32], sizes = [8, 32], strides = [1, 1]} : vector<8x96xf32> to vector<8x32xf32>
    %430 = vector.extract_strided_slice %420 {offsets = [0, 32], sizes = [8, 32], strides = [1, 1]} : vector<8x96xf32> to vector<8x32xf32>
    %431 = arith.addf %429, %430 : vector<8x32xf32>
    %432 = arith.negf %431 : vector<8x32xf32>
    %433 = math.exp %432 : vector<8x32xf32>
    %cst_172 = arith.constant 1.000000e+00 : f32
    %434 = vector.broadcast %cst_172 : f32 to vector<8x32xf32>
    %435 = arith.addf %434, %433 : vector<8x32xf32>
    %436 = arith.divf %434, %435 : vector<8x32xf32>
    %437 = vector.extract_strided_slice %416 {offsets = [0, 64], sizes = [8, 32], strides = [1, 1]} : vector<8x96xf32> to vector<8x32xf32>
    %438 = vector.extract_strided_slice %420 {offsets = [0, 64], sizes = [8, 32], strides = [1, 1]} : vector<8x96xf32> to vector<8x32xf32>
    %439 = arith.mulf %428, %438 : vector<8x32xf32>
    %440 = arith.addf %437, %439 : vector<8x32xf32>
    %441 = math.tanh %440 : vector<8x32xf32>
    %cst_173 = arith.constant 1.000000e+00 : f32
    %442 = vector.broadcast %cst_173 : f32 to vector<8x32xf32>
    %443 = arith.subf %442, %436 : vector<8x32xf32>
    %444 = arith.mulf %443, %441 : vector<8x32xf32>
    %445 = arith.mulf %436, %415 : vector<8x32xf32>
    %446 = arith.addf %444, %445 : vector<8x32xf32>
    %c3 = arith.constant 3 : index
    %c0_174 = arith.constant 0 : index
    %447 = tpu.strided_load %arg24[%c3, %c0_174] {strides = array<i32: 8, 1>} : memref<64x96xf32, #tpu.memory_space<vmem>>, vector<8x96xf32>
    %448 = arith.truncf %446 : vector<8x32xf32> to vector<8x32xbf16>
    %cst_175 = arith.constant dense<0.000000e+00> : vector<8x96xf32>
    %449 = tpu.matmul %448, %351, %cst_175 {dimension_numbers = #tpu.dot_dimension_numbers<[1], [0], [0], [1], [0, 0, 1, 1], [], []>} : vector<8x32xbf16>, vector<32x96xbf16>, vector<8x96xf32> -> vector<8x96xf32>
    %450 = vector.broadcast %352 : vector<1x96xf32> to vector<8x96xf32>
    %451 = arith.addf %449, %450 : vector<8x96xf32>
    %452 = vector.extract_strided_slice %447 {offsets = [0, 0], sizes = [8, 32], strides = [1, 1]} : vector<8x96xf32> to vector<8x32xf32>
    %453 = vector.extract_strided_slice %451 {offsets = [0, 0], sizes = [8, 32], strides = [1, 1]} : vector<8x96xf32> to vector<8x32xf32>
    %454 = arith.addf %452, %453 : vector<8x32xf32>
    %455 = arith.negf %454 : vector<8x32xf32>
    %456 = math.exp %455 : vector<8x32xf32>
    %cst_176 = arith.constant 1.000000e+00 : f32
    %457 = vector.broadcast %cst_176 : f32 to vector<8x32xf32>
    %458 = arith.addf %457, %456 : vector<8x32xf32>
    %459 = arith.divf %457, %458 : vector<8x32xf32>
    %460 = vector.extract_strided_slice %447 {offsets = [0, 32], sizes = [8, 32], strides = [1, 1]} : vector<8x96xf32> to vector<8x32xf32>
    %461 = vector.extract_strided_slice %451 {offsets = [0, 32], sizes = [8, 32], strides = [1, 1]} : vector<8x96xf32> to vector<8x32xf32>
    %462 = arith.addf %460, %461 : vector<8x32xf32>
    %463 = arith.negf %462 : vector<8x32xf32>
    %464 = math.exp %463 : vector<8x32xf32>
    %cst_177 = arith.constant 1.000000e+00 : f32
    %465 = vector.broadcast %cst_177 : f32 to vector<8x32xf32>
    %466 = arith.addf %465, %464 : vector<8x32xf32>
    %467 = arith.divf %465, %466 : vector<8x32xf32>
    %468 = vector.extract_strided_slice %447 {offsets = [0, 64], sizes = [8, 32], strides = [1, 1]} : vector<8x96xf32> to vector<8x32xf32>
    %469 = vector.extract_strided_slice %451 {offsets = [0, 64], sizes = [8, 32], strides = [1, 1]} : vector<8x96xf32> to vector<8x32xf32>
    %470 = arith.mulf %459, %469 : vector<8x32xf32>
    %471 = arith.addf %468, %470 : vector<8x32xf32>
    %472 = math.tanh %471 : vector<8x32xf32>
    %cst_178 = arith.constant 1.000000e+00 : f32
    %473 = vector.broadcast %cst_178 : f32 to vector<8x32xf32>
    %474 = arith.subf %473, %467 : vector<8x32xf32>
    %475 = arith.mulf %474, %472 : vector<8x32xf32>
    %476 = arith.mulf %467, %446 : vector<8x32xf32>
    %477 = arith.addf %475, %476 : vector<8x32xf32>
    %c4 = arith.constant 4 : index
    %c0_179 = arith.constant 0 : index
    %478 = tpu.strided_load %arg24[%c4, %c0_179] {strides = array<i32: 8, 1>} : memref<64x96xf32, #tpu.memory_space<vmem>>, vector<8x96xf32>
    %479 = arith.truncf %477 : vector<8x32xf32> to vector<8x32xbf16>
    %cst_180 = arith.constant dense<0.000000e+00> : vector<8x96xf32>
    %480 = tpu.matmul %479, %351, %cst_180 {dimension_numbers = #tpu.dot_dimension_numbers<[1], [0], [0], [1], [0, 0, 1, 1], [], []>} : vector<8x32xbf16>, vector<32x96xbf16>, vector<8x96xf32> -> vector<8x96xf32>
    %481 = vector.broadcast %352 : vector<1x96xf32> to vector<8x96xf32>
    %482 = arith.addf %480, %481 : vector<8x96xf32>
    %483 = vector.extract_strided_slice %478 {offsets = [0, 0], sizes = [8, 32], strides = [1, 1]} : vector<8x96xf32> to vector<8x32xf32>
    %484 = vector.extract_strided_slice %482 {offsets = [0, 0], sizes = [8, 32], strides = [1, 1]} : vector<8x96xf32> to vector<8x32xf32>
    %485 = arith.addf %483, %484 : vector<8x32xf32>
    %486 = arith.negf %485 : vector<8x32xf32>
    %487 = math.exp %486 : vector<8x32xf32>
    %cst_181 = arith.constant 1.000000e+00 : f32
    %488 = vector.broadcast %cst_181 : f32 to vector<8x32xf32>
    %489 = arith.addf %488, %487 : vector<8x32xf32>
    %490 = arith.divf %488, %489 : vector<8x32xf32>
    %491 = vector.extract_strided_slice %478 {offsets = [0, 32], sizes = [8, 32], strides = [1, 1]} : vector<8x96xf32> to vector<8x32xf32>
    %492 = vector.extract_strided_slice %482 {offsets = [0, 32], sizes = [8, 32], strides = [1, 1]} : vector<8x96xf32> to vector<8x32xf32>
    %493 = arith.addf %491, %492 : vector<8x32xf32>
    %494 = arith.negf %493 : vector<8x32xf32>
    %495 = math.exp %494 : vector<8x32xf32>
    %cst_182 = arith.constant 1.000000e+00 : f32
    %496 = vector.broadcast %cst_182 : f32 to vector<8x32xf32>
    %497 = arith.addf %496, %495 : vector<8x32xf32>
    %498 = arith.divf %496, %497 : vector<8x32xf32>
    %499 = vector.extract_strided_slice %478 {offsets = [0, 64], sizes = [8, 32], strides = [1, 1]} : vector<8x96xf32> to vector<8x32xf32>
    %500 = vector.extract_strided_slice %482 {offsets = [0, 64], sizes = [8, 32], strides = [1, 1]} : vector<8x96xf32> to vector<8x32xf32>
    %501 = arith.mulf %490, %500 : vector<8x32xf32>
    %502 = arith.addf %499, %501 : vector<8x32xf32>
    %503 = math.tanh %502 : vector<8x32xf32>
    %cst_183 = arith.constant 1.000000e+00 : f32
    %504 = vector.broadcast %cst_183 : f32 to vector<8x32xf32>
    %505 = arith.subf %504, %498 : vector<8x32xf32>
    %506 = arith.mulf %505, %503 : vector<8x32xf32>
    %507 = arith.mulf %498, %477 : vector<8x32xf32>
    %508 = arith.addf %506, %507 : vector<8x32xf32>
    %c5 = arith.constant 5 : index
    %c0_184 = arith.constant 0 : index
    %509 = tpu.strided_load %arg24[%c5, %c0_184] {strides = array<i32: 8, 1>} : memref<64x96xf32, #tpu.memory_space<vmem>>, vector<8x96xf32>
    %510 = arith.truncf %508 : vector<8x32xf32> to vector<8x32xbf16>
    %cst_185 = arith.constant dense<0.000000e+00> : vector<8x96xf32>
    %511 = tpu.matmul %510, %351, %cst_185 {dimension_numbers = #tpu.dot_dimension_numbers<[1], [0], [0], [1], [0, 0, 1, 1], [], []>} : vector<8x32xbf16>, vector<32x96xbf16>, vector<8x96xf32> -> vector<8x96xf32>
    %512 = vector.broadcast %352 : vector<1x96xf32> to vector<8x96xf32>
    %513 = arith.addf %511, %512 : vector<8x96xf32>
    %514 = vector.extract_strided_slice %509 {offsets = [0, 0], sizes = [8, 32], strides = [1, 1]} : vector<8x96xf32> to vector<8x32xf32>
    %515 = vector.extract_strided_slice %513 {offsets = [0, 0], sizes = [8, 32], strides = [1, 1]} : vector<8x96xf32> to vector<8x32xf32>
    %516 = arith.addf %514, %515 : vector<8x32xf32>
    %517 = arith.negf %516 : vector<8x32xf32>
    %518 = math.exp %517 : vector<8x32xf32>
    %cst_186 = arith.constant 1.000000e+00 : f32
    %519 = vector.broadcast %cst_186 : f32 to vector<8x32xf32>
    %520 = arith.addf %519, %518 : vector<8x32xf32>
    %521 = arith.divf %519, %520 : vector<8x32xf32>
    %522 = vector.extract_strided_slice %509 {offsets = [0, 32], sizes = [8, 32], strides = [1, 1]} : vector<8x96xf32> to vector<8x32xf32>
    %523 = vector.extract_strided_slice %513 {offsets = [0, 32], sizes = [8, 32], strides = [1, 1]} : vector<8x96xf32> to vector<8x32xf32>
    %524 = arith.addf %522, %523 : vector<8x32xf32>
    %525 = arith.negf %524 : vector<8x32xf32>
    %526 = math.exp %525 : vector<8x32xf32>
    %cst_187 = arith.constant 1.000000e+00 : f32
    %527 = vector.broadcast %cst_187 : f32 to vector<8x32xf32>
    %528 = arith.addf %527, %526 : vector<8x32xf32>
    %529 = arith.divf %527, %528 : vector<8x32xf32>
    %530 = vector.extract_strided_slice %509 {offsets = [0, 64], sizes = [8, 32], strides = [1, 1]} : vector<8x96xf32> to vector<8x32xf32>
    %531 = vector.extract_strided_slice %513 {offsets = [0, 64], sizes = [8, 32], strides = [1, 1]} : vector<8x96xf32> to vector<8x32xf32>
    %532 = arith.mulf %521, %531 : vector<8x32xf32>
    %533 = arith.addf %530, %532 : vector<8x32xf32>
    %534 = math.tanh %533 : vector<8x32xf32>
    %cst_188 = arith.constant 1.000000e+00 : f32
    %535 = vector.broadcast %cst_188 : f32 to vector<8x32xf32>
    %536 = arith.subf %535, %529 : vector<8x32xf32>
    %537 = arith.mulf %536, %534 : vector<8x32xf32>
    %538 = arith.mulf %529, %508 : vector<8x32xf32>
    %539 = arith.addf %537, %538 : vector<8x32xf32>
    %c6 = arith.constant 6 : index
    %c0_189 = arith.constant 0 : index
    %540 = tpu.strided_load %arg24[%c6, %c0_189] {strides = array<i32: 8, 1>} : memref<64x96xf32, #tpu.memory_space<vmem>>, vector<8x96xf32>
    %541 = arith.truncf %539 : vector<8x32xf32> to vector<8x32xbf16>
    %cst_190 = arith.constant dense<0.000000e+00> : vector<8x96xf32>
    %542 = tpu.matmul %541, %351, %cst_190 {dimension_numbers = #tpu.dot_dimension_numbers<[1], [0], [0], [1], [0, 0, 1, 1], [], []>} : vector<8x32xbf16>, vector<32x96xbf16>, vector<8x96xf32> -> vector<8x96xf32>
    %543 = vector.broadcast %352 : vector<1x96xf32> to vector<8x96xf32>
    %544 = arith.addf %542, %543 : vector<8x96xf32>
    %545 = vector.extract_strided_slice %540 {offsets = [0, 0], sizes = [8, 32], strides = [1, 1]} : vector<8x96xf32> to vector<8x32xf32>
    %546 = vector.extract_strided_slice %544 {offsets = [0, 0], sizes = [8, 32], strides = [1, 1]} : vector<8x96xf32> to vector<8x32xf32>
    %547 = arith.addf %545, %546 : vector<8x32xf32>
    %548 = arith.negf %547 : vector<8x32xf32>
    %549 = math.exp %548 : vector<8x32xf32>
    %cst_191 = arith.constant 1.000000e+00 : f32
    %550 = vector.broadcast %cst_191 : f32 to vector<8x32xf32>
    %551 = arith.addf %550, %549 : vector<8x32xf32>
    %552 = arith.divf %550, %551 : vector<8x32xf32>
    %553 = vector.extract_strided_slice %540 {offsets = [0, 32], sizes = [8, 32], strides = [1, 1]} : vector<8x96xf32> to vector<8x32xf32>
    %554 = vector.extract_strided_slice %544 {offsets = [0, 32], sizes = [8, 32], strides = [1, 1]} : vector<8x96xf32> to vector<8x32xf32>
    %555 = arith.addf %553, %554 : vector<8x32xf32>
    %556 = arith.negf %555 : vector<8x32xf32>
    %557 = math.exp %556 : vector<8x32xf32>
    %cst_192 = arith.constant 1.000000e+00 : f32
    %558 = vector.broadcast %cst_192 : f32 to vector<8x32xf32>
    %559 = arith.addf %558, %557 : vector<8x32xf32>
    %560 = arith.divf %558, %559 : vector<8x32xf32>
    %561 = vector.extract_strided_slice %540 {offsets = [0, 64], sizes = [8, 32], strides = [1, 1]} : vector<8x96xf32> to vector<8x32xf32>
    %562 = vector.extract_strided_slice %544 {offsets = [0, 64], sizes = [8, 32], strides = [1, 1]} : vector<8x96xf32> to vector<8x32xf32>
    %563 = arith.mulf %552, %562 : vector<8x32xf32>
    %564 = arith.addf %561, %563 : vector<8x32xf32>
    %565 = math.tanh %564 : vector<8x32xf32>
    %cst_193 = arith.constant 1.000000e+00 : f32
    %566 = vector.broadcast %cst_193 : f32 to vector<8x32xf32>
    %567 = arith.subf %566, %560 : vector<8x32xf32>
    %568 = arith.mulf %567, %565 : vector<8x32xf32>
    %569 = arith.mulf %560, %539 : vector<8x32xf32>
    %570 = arith.addf %568, %569 : vector<8x32xf32>
    %c7 = arith.constant 7 : index
    %c0_194 = arith.constant 0 : index
    %571 = tpu.strided_load %arg24[%c7, %c0_194] {strides = array<i32: 8, 1>} : memref<64x96xf32, #tpu.memory_space<vmem>>, vector<8x96xf32>
    %572 = arith.truncf %570 : vector<8x32xf32> to vector<8x32xbf16>
    %cst_195 = arith.constant dense<0.000000e+00> : vector<8x96xf32>
    %573 = tpu.matmul %572, %351, %cst_195 {dimension_numbers = #tpu.dot_dimension_numbers<[1], [0], [0], [1], [0, 0, 1, 1], [], []>} : vector<8x32xbf16>, vector<32x96xbf16>, vector<8x96xf32> -> vector<8x96xf32>
    %574 = vector.broadcast %352 : vector<1x96xf32> to vector<8x96xf32>
    %575 = arith.addf %573, %574 : vector<8x96xf32>
    %576 = vector.extract_strided_slice %571 {offsets = [0, 0], sizes = [8, 32], strides = [1, 1]} : vector<8x96xf32> to vector<8x32xf32>
    %577 = vector.extract_strided_slice %575 {offsets = [0, 0], sizes = [8, 32], strides = [1, 1]} : vector<8x96xf32> to vector<8x32xf32>
    %578 = arith.addf %576, %577 : vector<8x32xf32>
    %579 = arith.negf %578 : vector<8x32xf32>
    %580 = math.exp %579 : vector<8x32xf32>
    %cst_196 = arith.constant 1.000000e+00 : f32
    %581 = vector.broadcast %cst_196 : f32 to vector<8x32xf32>
    %582 = arith.addf %581, %580 : vector<8x32xf32>
    %583 = arith.divf %581, %582 : vector<8x32xf32>
    %584 = vector.extract_strided_slice %571 {offsets = [0, 32], sizes = [8, 32], strides = [1, 1]} : vector<8x96xf32> to vector<8x32xf32>
    %585 = vector.extract_strided_slice %575 {offsets = [0, 32], sizes = [8, 32], strides = [1, 1]} : vector<8x96xf32> to vector<8x32xf32>
    %586 = arith.addf %584, %585 : vector<8x32xf32>
    %587 = arith.negf %586 : vector<8x32xf32>
    %588 = math.exp %587 : vector<8x32xf32>
    %cst_197 = arith.constant 1.000000e+00 : f32
    %589 = vector.broadcast %cst_197 : f32 to vector<8x32xf32>
    %590 = arith.addf %589, %588 : vector<8x32xf32>
    %591 = arith.divf %589, %590 : vector<8x32xf32>
    %592 = vector.extract_strided_slice %571 {offsets = [0, 64], sizes = [8, 32], strides = [1, 1]} : vector<8x96xf32> to vector<8x32xf32>
    %593 = vector.extract_strided_slice %575 {offsets = [0, 64], sizes = [8, 32], strides = [1, 1]} : vector<8x96xf32> to vector<8x32xf32>
    %594 = arith.mulf %583, %593 : vector<8x32xf32>
    %595 = arith.addf %592, %594 : vector<8x32xf32>
    %596 = math.tanh %595 : vector<8x32xf32>
    %cst_198 = arith.constant 1.000000e+00 : f32
    %597 = vector.broadcast %cst_198 : f32 to vector<8x32xf32>
    %598 = arith.subf %597, %591 : vector<8x32xf32>
    %599 = arith.mulf %598, %596 : vector<8x32xf32>
    %600 = arith.mulf %591, %570 : vector<8x32xf32>
    %601 = arith.addf %599, %600 : vector<8x32xf32>
    %602 = tpu.concatenate %508, %539, %570, %601 in 1 : vector<8x32xf32>, vector<8x32xf32>, vector<8x32xf32>, vector<8x32xf32> -> vector<8x128xf32>
    %603 = arith.truncf %602 : vector<8x128xf32> to vector<8x128xbf16>
    %c0_199 = arith.constant 0 : index
    %c0_200 = arith.constant 0 : index
    %604 = vector.load %arg21[%c0_199, %c0_200] : memref<128x16xbf16, #tpu.memory_space<vmem>>, vector<128x16xbf16>
    %cst_201 = arith.constant dense<0.000000e+00> : vector<8x16xf32>
    %605 = tpu.matmul %603, %604, %cst_201 {dimension_numbers = #tpu.dot_dimension_numbers<[1], [0], [0], [1], [0, 0, 1, 1], [], []>} : vector<8x128xbf16>, vector<128x16xbf16>, vector<8x16xf32> -> vector<8x16xf32>
    %c0_202 = arith.constant 0 : index
    %c0_203 = arith.constant 0 : index
    %606 = vector.load %arg22[%c0_202, %c0_203] : memref<1x16xf32, #tpu.memory_space<vmem>>, vector<1x16xf32>
    %607 = vector.broadcast %606 : vector<1x16xf32> to vector<8x16xf32>
    %608 = arith.addf %605, %607 : vector<8x16xf32>
    %c0_204 = arith.constant 0 : index
    %c0_205 = arith.constant 0 : index
    %609 = vector.load %arg23[%c0_204, %c0_205] : memref<8x16xf32, #tpu.memory_space<vmem>>, vector<8x16xf32>
    tpu.vector_store %arg23[%c0_204, %c0_205], %608 {strides = array<i32>} : memref<8x16xf32, #tpu.memory_space<vmem>>, vector<8x16xf32>,
    return
  }
}

</mosaic_0001>

<llo_original>
// kernel: forward.1
$region0: #{forward.1}
  #allocation0 [shape = 'u32[]', space=smem, size = 0x4, offset = 0x4, fixed_abs, tag = 'smem constant byte address 0x4 - core index']
  #allocation1 [shape = 'u32[72,128]{1,0:T(1,128)}', space=vmem, size = 0x9000, scoped, tag = 'internal scratch']
  #allocation2 [shape = 'f32[64,96]{1,0:T(8,128)}', space=vmem, size = 0x8000, scoped, tag = 'scratch operand']
  #allocation3 [shape = 'f32[64,32]{1,0:T(8,128)}', space=vmem, size = 0x8000, scoped, tag = 'scratch operand']
  %s0 = inlined_call_operand.vmem [shape: f32[8,8,4], index: 0, kind: input, shape index: {}]
  %s1 = inlined_call_operand.vmem [shape: f32[8,8,32], index: 1, kind: input, shape index: {}]
  %s2 = inlined_call_operand.vmem [shape: f32[8,32], index: 2, kind: input, shape index: {}]
  %s3 = inlined_call_operand.vmem [shape: bf16[4,96], index: 3, kind: input, shape index: {}]
  %s4 = inlined_call_operand.vmem [shape: f32[1,96], index: 4, kind: input, shape index: {}]
  %s5 = inlined_call_operand.vmem [shape: bf16[2,32,96], index: 5, kind: input, shape index: {}]
  %s6 = inlined_call_operand.vmem [shape: f32[2,1,96], index: 6, kind: input, shape index: {}]
  %s7 = inlined_call_operand.vmem [shape: bf16[2,32,32], index: 7, kind: input, shape index: {}]
  %s8 = inlined_call_operand.vmem [shape: f32[2,1,32], index: 8, kind: input, shape index: {}]
  %s9 = inlined_call_operand.vmem [shape: f32[2,1,32], index: 9, kind: input, shape index: {}]
  %s10 = inlined_call_operand.vmem [shape: f32[2,1,32], index: 10, kind: input, shape index: {}]
  %s11 = inlined_call_operand.vmem [shape: bf16[2,32,2048], index: 11, kind: input, shape index: {}]
  %s12 = inlined_call_operand.vmem [shape: f32[2,1,2048], index: 12, kind: input, shape index: {}]
  %s13 = inlined_call_operand.vmem [shape: bf16[2,2048,32], index: 13, kind: input, shape index: {}]
  %s14 = inlined_call_operand.vmem [shape: f32[2,1,32], index: 14, kind: input, shape index: {}]
  %s15 = inlined_call_operand.vmem [shape: f32[2,1,32], index: 15, kind: input, shape index: {}]
  %s16 = inlined_call_operand.vmem [shape: f32[2,1,32], index: 16, kind: input, shape index: {}]
  %s17 = inlined_call_operand.vmem [shape: bf16[32,96], index: 17, kind: input, shape index: {}]
  %s18 = inlined_call_operand.vmem [shape: bf16[32,96], index: 18, kind: input, shape index: {}]
  %s19 = inlined_call_operand.vmem [shape: f32[1,96], index: 19, kind: input, shape index: {}]
  %s20 = inlined_call_operand.vmem [shape: f32[1,96], index: 20, kind: input, shape index: {}]
  %s21 = inlined_call_operand.vmem [shape: bf16[128,16], index: 21, kind: input, shape index: {}]
  %s22 = inlined_call_operand.vmem [shape: f32[1,16], index: 22, kind: input, shape index: {}]
  %s23 = inlined_call_operand.hbm [shape: f32[8,16], index: 23, kind: output, shape index: {}]
  %s24 = sld [smem:[#allocation0]]
  $region102: #{forward.1} parent=0
    _
  %s26 = ssub.s32 1, %s24
  %s27 = scalar_select 0, %s26, %s24
  $region1: #{forward.1} parent=0
    #allocation4 [shape = 'u8[4096]{0}', space=vmem, size = 0x1000, scoped, tag = 'output window, operand 0, single buffered']
    #allocation5 [shape = 's32[1]{0}', space=sflag, size = 0x4, scoped, tag = 'scoped memory for forward.1']
    %28 = vsyncpa [#allocation5], 0
    // Predicated region
    $region2: #{forward.1} parent=1 // pred_check
      _
    $region3: #{forward.1} parent=1 // pred_check_branch
      %30 = sbr.rel (0) target = $region5
    $region4: #{forward.1} parent=1 // pred_region
      _
    $region5: #{forward.1} parent=1 // pred_fallthru
      _
    // Predicated region
    $region6: #{forward.1} parent=1 // pred_check
      _
    $region7: #{forward.1} parent=1 // pred_check_branch
      %32 = sbr.rel (0) target = $region9
    $region8: #{forward.1} parent=1 // pred_region
      _
    $region9: #{forward.1} parent=1 // pred_fallthru
      _
    // Predicated region
    $region10: #{forward.1} parent=1 // pred_check
      _
    $region11: #{forward.1} parent=1 // pred_check_branch
      %34 = sbr.rel (0) target = $region13
    $region12: #{forward.1} parent=1 // pred_region
      _
    $region13: #{forward.1} parent=1 // pred_fallthru
      _
    // Predicated region
    $region14: #{forward.1} parent=1 // pred_check
      _
    $region15: #{forward.1} parent=1 // pred_check_branch
      %36 = sbr.rel (0) target = $region17
    $region16: #{forward.1} parent=1 // pred_region
      _
    $region17: #{forward.1} parent=1 // pred_fallthru
      _
    // Predicated region
    $region18: #{forward.1} parent=1 // pred_check
      _
    $region19: #{forward.1} parent=1 // pred_check_branch
      %38 = sbr.rel (0) target = $region21
    $region20: #{forward.1} parent=1 // pred_region
      _
    $region21: #{forward.1} parent=1 // pred_fallthru
      _
    // Predicated region
    $region22: #{forward.1} parent=1 // pred_check
      _
    $region23: #{forward.1} parent=1 // pred_check_branch
      %40 = sbr.rel (0) target = $region25
    $region24: #{forward.1} parent=1 // pred_region
      _
    $region25: #{forward.1} parent=1 // pred_fallthru
      _
    // Predicated region
    $region26: #{forward.1} parent=1 // pred_check
      _
    $region27: #{forward.1} parent=1 // pred_check_branch
      %42 = sbr.rel (0) target = $region29
    $region28: #{forward.1} parent=1 // pred_region
      _
    $region29: #{forward.1} parent=1 // pred_fallthru
      _
    // Predicated region
    $region30: #{forward.1} parent=1 // pred_check
      _
    $region31: #{forward.1} parent=1 // pred_check_branch
      %44 = sbr.rel (0) target = $region33
    $region32: #{forward.1} parent=1 // pred_region
      _
    $region33: #{forward.1} parent=1 // pred_fallthru
      _
    // Predicated region
    $region34: #{forward.1} parent=1 // pred_check
      _
    $region35: #{forward.1} parent=1 // pred_check_branch
      %46 = sbr.rel (0) target = $region37
    $region36: #{forward.1} parent=1 // pred_region
      _
    $region37: #{forward.1} parent=1 // pred_fallthru
      _
    // Predicated region
    $region38: #{forward.1} parent=1 // pred_check
      _
    $region39: #{forward.1} parent=1 // pred_check_branch
      %48 = sbr.rel (0) target = $region41
    $region40: #{forward.1} parent=1 // pred_region
      _
    $region41: #{forward.1} parent=1 // pred_fallthru
      _
    // Predicated region
    $region42: #{forward.1} parent=1 // pred_check
      _
    $region43: #{forward.1} parent=1 // pred_check_branch
      %50 = sbr.rel (0) target = $region45
    $region44: #{forward.1} parent=1 // pred_region
      _
    $region45: #{forward.1} parent=1 // pred_fallthru
      _
    // Predicated region
    $region46: #{forward.1} parent=1 // pred_check
      _
    $region47: #{forward.1} parent=1 // pred_check_branch
      %52 = sbr.rel (0) target = $region49
    $region48: #{forward.1} parent=1 // pred_region
      _
    $region49: #{forward.1} parent=1 // pred_fallthru
      _
    // Predicated region
    $region50: #{forward.1} parent=1 // pred_check
      _
    $region51: #{forward.1} parent=1 // pred_check_branch
      %54 = sbr.rel (0) target = $region53
    $region52: #{forward.1} parent=1 // pred_region
      _
    $region53: #{forward.1} parent=1 // pred_fallthru
      _
    // Predicated region
    $region54: #{forward.1} parent=1 // pred_check
      _
    $region55: #{forward.1} parent=1 // pred_check_branch
      %56 = sbr.rel (0) target = $region57
    $region56: #{forward.1} parent=1 // pred_region
      _
    $region57: #{forward.1} parent=1 // pred_fallthru
      _
    // Predicated region
    $region58: #{forward.1} parent=1 // pred_check
      _
    $region59: #{forward.1} parent=1 // pred_check_branch
      %58 = sbr.rel (0) target = $region61
    $region60: #{forward.1} parent=1 // pred_region
      _
    $region61: #{forward.1} parent=1 // pred_fallthru
      _
    // Predicated region
    $region62: #{forward.1} parent=1 // pred_check
      _
    $region63: #{forward.1} parent=1 // pred_check_branch
      %60 = sbr.rel (0) target = $region65
    $region64: #{forward.1} parent=1 // pred_region
      _
    $region65: #{forward.1} parent=1 // pred_fallthru
      _
    // Predicated region
    $region66: #{forward.1} parent=1 // pred_check
      _
    $region67: #{forward.1} parent=1 // pred_check_branch
      %62 = sbr.rel (0) target = $region69
    $region68: #{forward.1} parent=1 // pred_region
      _
    $region69: #{forward.1} parent=1 // pred_fallthru
      _
    // Predicated region
    $region70: #{forward.1} parent=1 // pred_check
      _
    $region71: #{forward.1} parent=1 // pred_check_branch
      %64 = sbr.rel (0) target = $region73
    $region72: #{forward.1} parent=1 // pred_region
      _
    $region73: #{forward.1} parent=1 // pred_fallthru
      _
    // Predicated region
    $region74: #{forward.1} parent=1 // pred_check
      _
    $region75: #{forward.1} parent=1 // pred_check_branch
      %66 = sbr.rel (0) target = $region77
    $region76: #{forward.1} parent=1 // pred_region
      _
    $region77: #{forward.1} parent=1 // pred_fallthru
      _
    // Predicated region
    $region78: #{forward.1} parent=1 // pred_check
      _
    $region79: #{forward.1} parent=1 // pred_check_branch
      %68 = sbr.rel (0) target = $region81
    $region80: #{forward.1} parent=1 // pred_region
      _
    $region81: #{forward.1} parent=1 // pred_fallthru
      _
    // Predicated region
    $region82: #{forward.1} parent=1 // pred_check
      _
    $region83: #{forward.1} parent=1 // pred_check_branch
      %70 = sbr.rel (0) target = $region85
    $region84: #{forward.1} parent=1 // pred_region
      _
    $region85: #{forward.1} parent=1 // pred_fallthru
      _
    // Predicated region
    $region86: #{forward.1} parent=1 // pred_check
      _
    $region87: #{forward.1} parent=1 // pred_check_branch
      %72 = sbr.rel (0) target = $region89
    $region88: #{forward.1} parent=1 // pred_region
      _
    $region89: #{forward.1} parent=1 // pred_fallthru
      _
    // Predicated region
    $region90: #{forward.1} parent=1 // pred_check
      _
    $region91: #{forward.1} parent=1 // pred_check_branch
      %74 = sbr.rel (0) target = $region93
    $region92: #{forward.1} parent=1 // pred_region
      _
    $region93: #{forward.1} parent=1 // pred_fallthru
      _
    %v76 = vld [vmem:[%s0] sm:$0xff]
    %v77 = vld [vmem:[%s0 + $0x8] sm:$0xff]
    %v78 = vld [vmem:[%s0 + $0x10] sm:$0xff]
    %v79 = vld [vmem:[%s0 + $0x18] sm:$0xff]
    %v80 = vld [vmem:[%s0 + $0x20] sm:$0xff]
    %v81 = vld [vmem:[%s0 + $0x28] sm:$0xff]
    %v82 = vld [vmem:[%s0 + $0x30] sm:$0xff]
    %v83 = vld [vmem:[%s0 + $0x38] sm:$0xff]
    %v84 = vpack.c.bf16 %v77, %v76
    %v85 = vpack.c.bf16 %v79, %v78
    %v86 = vpack.c.bf16 %v81, %v80
    %v87 = vpack.c.bf16 %v83, %v82
    %v88 = vld [vmem:[%s3] sm:$0x3]
    %v89 = vld [vmem:[%s4] sm:$0x1]
    %v91 = vperm.slane %v89, 0
    %vm93 = vcmask 31744
    %v95 = vsel %vm93, %v84, 0
    %v98 = vsel %vm93, %v85, 0
    %v101 = vsel %vm93, %v86, 0
    %v104 = vsel %vm93, %v87, 0
    %vm106 = vcmask 1041408
    %v108 = vsel %vm106, %v88, 0
    %110 = vmatpush.bf16.msra.mxu0 0
    %111 = vmatpush.bf16.msra.mxu0 0
    %112 = vmatpush.bf16.msra.mxu0 0
    %113 = vmatpush.bf16.msra.mxu0 0
    %114 = vmatpush.bf16.msra.mxu0 0
    %115 = vmatpush.bf16.msra.mxu0 0
    %116 = vmatpush.bf16.msra.mxu0 0
    %117 = vmatpush.bf16.msra.mxu0 %v108
    %118 = vmatmul.bf16.gmra.mxu0 %v95
    %v119 = vpop.f32.mrf.mxu0
    %v120 = vadd.f32 %v91, %v119
    %v121 = vpop.f32.mrf.mxu0
    %v122 = vadd.f32 %v91, %v121
    %123 = vmatmul.bf16.gmra.mxu0 %v98
    %v124 = vpop.f32.mrf.mxu0
    %v125 = vadd.f32 %v91, %v124
    %v126 = vpop.f32.mrf.mxu0
    %v127 = vadd.f32 %v91, %v126
    %128 = vmatmul.bf16.gmra.mxu0 %v101
    %v129 = vpop.f32.mrf.mxu0
    %v130 = vadd.f32 %v91, %v129
    %v131 = vpop.f32.mrf.mxu0
    %v132 = vadd.f32 %v91, %v131
    %133 = vmatmul.bf16.gmra.mxu0 %v104
    %v134 = vpop.f32.mrf.mxu0
    %v135 = vadd.f32 %v91, %v134
    %v136 = vpop.f32.mrf.mxu0
    %v137 = vadd.f32 %v91, %v136
    %138 = vdwg.mxu0
    %147 = vrot.lane.b32.xlu0 0.0, 32
    %v148 = vpop.permute.xlu0 %147
    %149 = vrot.lane.b32.xlu0 %v120, 32
    %v150 = vpop.permute.xlu0 %149
    %151 = vrot.lane.b32.xlu0 %v122, 32
    %v152 = vpop.permute.xlu0 %151
    %153 = vrot.lane.b32.xlu0 %v125, 32
    %v154 = vpop.permute.xlu0 %153
    %155 = vrot.lane.b32.xlu0 %v127, 32
    %v156 = vpop.permute.xlu0 %155
    %157 = vrot.lane.b32.xlu0 %v130, 32
    %v158 = vpop.permute.xlu0 %157
    %159 = vrot.lane.b32.xlu0 %v132, 32
    %v160 = vpop.permute.xlu0 %159
    %161 = vrot.lane.b32.xlu0 %v135, 32
    %v162 = vpop.permute.xlu0 %161
    %v171 = vadd.f32 %v120, %v148
    %v172 = vadd.f32 %v122, %v150
    %v173 = vadd.f32 %v125, %v152
    %v174 = vadd.f32 %v127, %v154
    %v175 = vadd.f32 %v130, %v156
    %v176 = vadd.f32 %v132, %v158
    %v177 = vadd.f32 %v135, %v160
    %v178 = vadd.f32 %v137, %v162
    %180 = vrot.lane.b32.xlu0 %v122, 96
    %v181 = vpop.permute.xlu0 %180
    %182 = vrot.lane.b32.xlu0 %v125, 96
    %v183 = vpop.permute.xlu0 %182
    %184 = vrot.lane.b32.xlu0 %v127, 96
    %v185 = vpop.permute.xlu0 %184
    %186 = vrot.lane.b32.xlu0 %v130, 96
    %v187 = vpop.permute.xlu0 %186
    %188 = vrot.lane.b32.xlu0 %v132, 96
    %v189 = vpop.permute.xlu0 %188
    %190 = vrot.lane.b32.xlu0 %v135, 96
    %v191 = vpop.permute.xlu0 %190
    %192 = vrot.lane.b32.xlu0 %v137, 96
    %v193 = vpop.permute.xlu0 %192
    %194 = vrot.lane.b32.xlu0 0.0, 96
    %v195 = vpop.permute.xlu0 %194
    %v204 = vadd.f32 %v171, %v181
    %v205 = vadd.f32 %v172, %v183
    %v206 = vadd.f32 %v173, %v185
    %v207 = vadd.f32 %v174, %v187
    %v208 = vadd.f32 %v175, %v189
    %v209 = vadd.f32 %v176, %v191
    %v210 = vadd.f32 %v177, %v193
    %v211 = vadd.f32 %v178, %v195
    %v212 = vld [vmem:[%s2] sm:$0xff]
    %214 = vrot.lane.b32.xlu0 %v212, 32
    %v215 = vpop.permute.xlu0 %214
    %v217 = vadd.f32 %v204, %v215
    %v218 = vadd.f32 %v205, %v215
    %v219 = vadd.f32 %v206, %v215
    %v220 = vadd.f32 %v207, %v215
    %v221 = vadd.f32 %v208, %v215
    %v222 = vadd.f32 %v209, %v215
    %v223 = vadd.f32 %v210, %v215
    %v224 = vadd.f32 %v211, %v215
    %v225 = vld [vmem:[%s1] sm:$0xff]
    %v226 = vld [vmem:[%s1 + $0x8] sm:$0xff]
    %v227 = vld [vmem:[%s1 + $0x10] sm:$0xff]
    %v228 = vld [vmem:[%s1 + $0x18] sm:$0xff]
    %v229 = vld [vmem:[%s1 + $0x20] sm:$0xff]
    %v230 = vld [vmem:[%s1 + $0x28] sm:$0xff]
    %v231 = vld [vmem:[%s1 + $0x30] sm:$0xff]
    %v232 = vld [vmem:[%s1 + $0x38] sm:$0xff]
    %241 = vrot.lane.b32.xlu0 %v225, 32
    %v242 = vpop.permute.xlu0 %241
    %243 = vrot.lane.b32.xlu0 %v226, 32
    %v244 = vpop.permute.xlu0 %243
    %245 = vrot.lane.b32.xlu0 %v227, 32
    %v246 = vpop.permute.xlu0 %245
    %247 = vrot.lane.b32.xlu0 %v228, 32
    %v248 = vpop.permute.xlu0 %247
    %249 = vrot.lane.b32.xlu0 %v229, 32
    %v250 = vpop.permute.xlu0 %249
    %251 = vrot.lane.b32.xlu0 %v230, 32
    %v252 = vpop.permute.xlu0 %251
    %253 = vrot.lane.b32.xlu0 %v231, 32
    %v254 = vpop.permute.xlu0 %253
    %255 = vrot.lane.b32.xlu0 %v232, 32
    %v256 = vpop.permute.xlu0 %255
    %v265 = vadd.f32 %v217, %v242
    %v266 = vadd.f32 %v218, %v244
    %v267 = vadd.f32 %v219, %v246
    %v268 = vadd.f32 %v220, %v248
    %v269 = vadd.f32 %v221, %v250
    %v270 = vadd.f32 %v222, %v252
    %v271 = vadd.f32 %v223, %v254
    %v272 = vadd.f32 %v224, %v256
    %v273 = vpack.c.bf16 %v266, %v265
    %v274 = vpack.c.bf16 %v268, %v267
    %v275 = vpack.c.bf16 %v270, %v269
    %v276 = vpack.c.bf16 %v272, %v271
    %v277 = vld [vmem:[%s5] sm:$0xf]
    %v278 = vld [vmem:[%s5 + $0x4] sm:$0xf]
    %v279 = vld [vmem:[%s5 + $0x8] sm:$0xf]
    %v280 = vld [vmem:[%s5 + $0xc] sm:$0xf]
    %v281 = vld [vmem:[%s6] sm:$0x1]
    %v283 = vperm.slane %v281, 0
    %289 = vrot.lane.b32.xlu0 %v273, 96
    %v290 = vpop.permute.xlu0 %289
    %291 = vrot.lane.b32.xlu0 %v274, 96
    %v292 = vpop.permute.xlu0 %291
    %293 = vrot.lane.b32.xlu0 %v275, 96
    %v294 = vpop.permute.xlu0 %293
    %295 = vrot.lane.b32.xlu0 %v276, 96
    %v296 = vpop.permute.xlu0 %295
    %v301 = vunpack.c.l.b16 %v277
    %v302 = vunpack.c.l.b16 %v278
    %v303 = vunpack.c.l.b16 %v279
    %v304 = vunpack.c.l.b16 %v280
    %v305 = vpack.c.b16 %v302, %v301
    %v306 = vpack.c.b16 %v304, %v303
    %vm309 = vcmask 261120
    %v311 = vsel %vm309, %v290, 0
    %v314 = vsel %vm309, %v292, 0
    %v317 = vsel %vm309, %v294, 0
    %v320 = vsel %vm309, %v296, 0
    %322 = vmatpush.bf16.msra.mxu0 0
    %323 = vmatpush.bf16.msra.mxu0 0
    %324 = vmatpush.bf16.msra.mxu0 0
    %325 = vmatpush.bf16.msra.mxu0 0
    %326 = vmatpush.bf16.msra.mxu0 0
    %327 = vmatpush.bf16.msra.mxu0 0
    %328 = vmatpush.bf16.msra.mxu0 %v306
    %329 = vmatpush.bf16.msra.mxu0 %v305
    %330 = vmatmul.bf16.gmra.mxu0 %v311
    %v331 = vpop.f32.mrf.mxu0
    %v332 = vadd.f32 %v283, %v331
    %v333 = vpop.f32.mrf.mxu0
    %v334 = vadd.f32 %v283, %v333
    %335 = vmatmul.bf16.gmra.mxu0 %v314
    %v336 = vpop.f32.mrf.mxu0
    %v337 = vadd.f32 %v283, %v336
    %v338 = vpop.f32.mrf.mxu0
    %v339 = vadd.f32 %v283, %v338
    %340 = vmatmul.bf16.gmra.mxu0 %v317
    %v341 = vpop.f32.mrf.mxu0
    %v342 = vadd.f32 %v283, %v341
    %v343 = vpop.f32.mrf.mxu0
    %v344 = vadd.f32 %v283, %v343
    %345 = vmatmul.bf16.gmra.mxu0 %v320
    %v346 = vpop.f32.mrf.mxu0
    %v347 = vadd.f32 %v283, %v346
    %v348 = vpop.f32.mrf.mxu0
    %v349 = vadd.f32 %v283, %v348
    %350 = vdwg.mxu0
    %v351 = vpack.c.bf16 %v332, %v332
    %v352 = vpack.c.bf16 %v334, %v334
    %v353 = vpack.c.bf16 %v337, %v337
    %v354 = vpack.c.bf16 %v339, %v339
    %v355 = vpack.c.bf16 %v342, %v342
    %v356 = vpack.c.bf16 %v344, %v344
    %v357 = vpack.c.bf16 %v347, %v347
    %v358 = vpack.c.bf16 %v349, %v349
    %v360 = vunpack.c.l.b16 %v351
    %v361 = vpack.c.b16 %v360, %v360
    %362 = vrot.lane.b32.xlu0 %v361, 96
    %v363 = vpop.permute.xlu0 %362
    %vm364 = vcmask 64512
    %v366 = vsel %vm364, %v351, 0
    %v369 = vsel %vm364, %v363, 0
    %371 = vmatpush.bf16.xpose.msra.mxu0 0
    %372 = vmatpush.bf16.xpose.msra.mxu0 0
    %373 = vmatpush.bf16.xpose.msra.mxu0 0
    %374 = vmatpush.bf16.xpose.msra.mxu0 0
    %375 = vmatpush.bf16.xpose.msra.mxu0 0
    %376 = vmatpush.bf16.xpose.msra.mxu0 0
    %377 = vmatpush.bf16.xpose.msra.mxu0 0
    %378 = vmatpush.bf16.xpose.msra.mxu0 %v369
    %379 = vmatmul.bf16.gmra.mxu0 %v366
    %v380 = vpop.f32.mrf.mxu0
    %v381 = vadd.f32 0.0, %v380
    %v382 = vpop.f32.mrf.mxu0
    %383 = vdwg.mxu0
    %v385 = vunpack.c.l.b16 %v352
    %v386 = vpack.c.b16 %v385, %v385
    %387 = vrot.lane.b32.xlu0 %v386, 96
    %v388 = vpop.permute.xlu0 %387
    %v390 = vsel %vm364, %v352, 0
    %v393 = vsel %vm364, %v388, 0
    %395 = vmatpush.bf16.xpose.msra.mxu0 0
    %396 = vmatpush.bf16.xpose.msra.mxu0 0
    %397 = vmatpush.bf16.xpose.msra.mxu0 0
    %398 = vmatpush.bf16.xpose.msra.mxu0 0
    %399 = vmatpush.bf16.xpose.msra.mxu0 0
    %400 = vmatpush.bf16.xpose.msra.mxu0 0
    %401 = vmatpush.bf16.xpose.msra.mxu0 0
    %402 = vmatpush.bf16.xpose.msra.mxu0 %v393
    %403 = vmatmul.bf16.gmra.mxu0 %v390
    %v404 = vpop.f32.mrf.mxu0
    %v405 = vadd.f32 0.0, %v404
    %v406 = vpop.f32.mrf.mxu0
    %407 = vdwg.mxu0
    %v409 = vunpack.c.l.b16 %v353
    %v410 = vpack.c.b16 %v409, %v409
    %411 = vrot.lane.b32.xlu0 %v410, 96
    %v412 = vpop.permute.xlu0 %411
    %v414 = vsel %vm364, %v353, 0
    %v417 = vsel %vm364, %v412, 0
    %419 = vmatpush.bf16.xpose.msra.mxu0 0
    %420 = vmatpush.bf16.xpose.msra.mxu0 0
    %421 = vmatpush.bf16.xpose.msra.mxu0 0
    %422 = vmatpush.bf16.xpose.msra.mxu0 0
    %423 = vmatpush.bf16.xpose.msra.mxu0 0
    %424 = vmatpush.bf16.xpose.msra.mxu0 0
    %425 = vmatpush.bf16.xpose.msra.mxu0 0
    %426 = vmatpush.bf16.xpose.msra.mxu0 %v417
    %427 = vmatmul.bf16.gmra.mxu0 %v414
    %v428 = vpop.f32.mrf.mxu0
    %v429 = vadd.f32 0.0, %v428
    %v430 = vpop.f32.mrf.mxu0
    %431 = vdwg.mxu0
    %v433 = vunpack.c.l.b16 %v354
    %v434 = vpack.c.b16 %v433, %v433
    %435 = vrot.lane.b32.xlu0 %v434, 96
    %v436 = vpop.permute.xlu0 %435
    %v438 = vsel %vm364, %v354, 0
    %v441 = vsel %vm364, %v436, 0
    %443 = vmatpush.bf16.xpose.msra.mxu0 0
    %444 = vmatpush.bf16.xpose.msra.mxu0 0
    %445 = vmatpush.bf16.xpose.msra.mxu0 0
    %446 = vmatpush.bf16.xpose.msra.mxu0 0
    %447 = vmatpush.bf16.xpose.msra.mxu0 0
    %448 = vmatpush.bf16.xpose.msra.mxu0 0
    %449 = vmatpush.bf16.xpose.msra.mxu0 0
    %450 = vmatpush.bf16.xpose.msra.mxu0 %v441
    %451 = vmatmul.bf16.gmra.mxu0 %v438
    %v452 = vpop.f32.mrf.mxu0
    %v453 = vadd.f32 0.0, %v452
    %v454 = vpop.f32.mrf.mxu0
    %455 = vdwg.mxu0
    %v457 = vunpack.c.l.b16 %v355
    %v458 = vpack.c.b16 %v457, %v457
    %459 = vrot.lane.b32.xlu0 %v458, 96
    %v460 = vpop.permute.xlu0 %459
    %v462 = vsel %vm364, %v355, 0
    %v465 = vsel %vm364, %v460, 0
    %467 = vmatpush.bf16.xpose.msra.mxu0 0
    %468 = vmatpush.bf16.xpose.msra.mxu0 0
    %469 = vmatpush.bf16.xpose.msra.mxu0 0
    %470 = vmatpush.bf16.xpose.msra.mxu0 0
    %471 = vmatpush.bf16.xpose.msra.mxu0 0
    %472 = vmatpush.bf16.xpose.msra.mxu0 0
    %473 = vmatpush.bf16.xpose.msra.mxu0 0
    %474 = vmatpush.bf16.xpose.msra.mxu0 %v465
    %475 = vmatmul.bf16.gmra.mxu0 %v462
    %v476 = vpop.f32.mrf.mxu0
    %v477 = vadd.f32 0.0, %v476
    %v478 = vpop.f32.mrf.mxu0
    %479 = vdwg.mxu0
    %v481 = vunpack.c.l.b16 %v356
    %v482 = vpack.c.b16 %v481, %v481
    %483 = vrot.lane.b32.xlu0 %v482, 96
    %v484 = vpop.permute.xlu0 %483
    %v486 = vsel %vm364, %v356, 0
    %v489 = vsel %vm364, %v484, 0
    %491 = vmatpush.bf16.xpose.msra.mxu0 0
    %492 = vmatpush.bf16.xpose.msra.mxu0 0
    %493 = vmatpush.bf16.xpose.msra.mxu0 0
    %494 = vmatpush.bf16.xpose.msra.mxu0 0
    %495 = vmatpush.bf16.xpose.msra.mxu0 0
    %496 = vmatpush.bf16.xpose.msra.mxu0 0
    %497 = vmatpush.bf16.xpose.msra.mxu0 0
    %498 = vmatpush.bf16.xpose.msra.mxu0 %v489
    %499 = vmatmul.bf16.gmra.mxu0 %v486
    %v500 = vpop.f32.mrf.mxu0
    %v501 = vadd.f32 0.0, %v500
    %v502 = vpop.f32.mrf.mxu0
    %503 = vdwg.mxu0
    %v505 = vunpack.c.l.b16 %v357
    %v506 = vpack.c.b16 %v505, %v505
    %507 = vrot.lane.b32.xlu0 %v506, 96
    %v508 = vpop.permute.xlu0 %507
    %v510 = vsel %vm364, %v357, 0
    %v513 = vsel %vm364, %v508, 0
    %515 = vmatpush.bf16.xpose.msra.mxu0 0
    %516 = vmatpush.bf16.xpose.msra.mxu0 0
    %517 = vmatpush.bf16.xpose.msra.mxu0 0
    %518 = vmatpush.bf16.xpose.msra.mxu0 0
    %519 = vmatpush.bf16.xpose.msra.mxu0 0
    %520 = vmatpush.bf16.xpose.msra.mxu0 0
    %521 = vmatpush.bf16.xpose.msra.mxu0 0
    %522 = vmatpush.bf16.xpose.msra.mxu0 %v513
    %523 = vmatmul.bf16.gmra.mxu0 %v510
    %v524 = vpop.f32.mrf.mxu0
    %v525 = vadd.f32 0.0, %v524
    %v526 = vpop.f32.mrf.mxu0
    %527 = vdwg.mxu0
    %v529 = vunpack.c.l.b16 %v358
    %v530 = vpack.c.b16 %v529, %v529
    %531 = vrot.lane.b32.xlu0 %v530, 96
    %v532 = vpop.permute.xlu0 %531
    %v534 = vsel %vm364, %v358, 0
    %v537 = vsel %vm364, %v532, 0
    %539 = vmatpush.bf16.xpose.msra.mxu0 0
    %540 = vmatpush.bf16.xpose.msra.mxu0 0
    %541 = vmatpush.bf16.xpose.msra.mxu0 0
    %542 = vmatpush.bf16.xpose.msra.mxu0 0
    %543 = vmatpush.bf16.xpose.msra.mxu0 0
    %544 = vmatpush.bf16.xpose.msra.mxu0 0
    %545 = vmatpush.bf16.xpose.msra.mxu0 0
    %546 = vmatpush.bf16.xpose.msra.mxu0 %v537
    %547 = vmatmul.bf16.gmra.mxu0 %v534
    %v548 = vpop.f32.mrf.mxu0
    %v549 = vadd.f32 0.0, %v548
    %v550 = vpop.f32.mrf.mxu0
    %551 = vdwg.mxu0
    %v552 = vsel %vm364, %v381, -inf
    %553 = vmax.xlane.f32.xlu0 %v552
    %v554 = vpop.xlane.xlu0 %553
    %v555 = vsel %vm364, %v405, -inf
    %556 = vmax.xlane.f32.xlu0 %v555
    %v557 = vpop.xlane.xlu0 %556
    %v558 = vsel %vm364, %v429, -inf
    %559 = vmax.xlane.f32.xlu0 %v558
    %v560 = vpop.xlane.xlu0 %559
    %v561 = vsel %vm364, %v453, -inf
    %562 = vmax.xlane.f32.xlu0 %v561
    %v563 = vpop.xlane.xlu0 %562
    %v564 = vsel %vm364, %v477, -inf
    %565 = vmax.xlane.f32.xlu0 %v564
    %v566 = vpop.xlane.xlu0 %565
    %v567 = vsel %vm364, %v501, -inf
    %568 = vmax.xlane.f32.xlu0 %v567
    %v569 = vpop.xlane.xlu0 %568
    %v570 = vsel %vm364, %v525, -inf
    %571 = vmax.xlane.f32.xlu0 %v570
    %v572 = vpop.xlane.xlu0 %571
    %v573 = vsel %vm364, %v549, -inf
    %574 = vmax.xlane.f32.xlu0 %v573
    %v575 = vpop.xlane.xlu0 %574
    %v576 = vsub.f32 %v381, %v554
    %v577 = vsub.f32 %v405, %v557
    %v578 = vsub.f32 %v429, %v560
    %v579 = vsub.f32 %v453, %v563
    %v580 = vsub.f32 %v477, %v566
    %v581 = vsub.f32 %v501, %v569
    %v582 = vsub.f32 %v525, %v572
    %v583 = vsub.f32 %v549, %v575
    %v584 = vmul.f32 %v576, 1.442695
    %v585 = vpow.pop %v584
    %v586 = vmul.f32 %v577, 1.442695
    %v587 = vpow.pop %v586
    %v588 = vmul.f32 %v578, 1.442695
    %v589 = vpow.pop %v588
    %v590 = vmul.f32 %v579, 1.442695
    %v591 = vpow.pop %v590
    %v592 = vmul.f32 %v580, 1.442695
    %v593 = vpow.pop %v592
    %v594 = vmul.f32 %v581, 1.442695
    %v595 = vpow.pop %v594
    %v596 = vmul.f32 %v582, 1.442695
    %v597 = vpow.pop %v596
    %v598 = vmul.f32 %v583, 1.442695
    %v599 = vpow.pop %v598
    %v600 = vsel %vm364, %v585, 0.0
    %601 = vadd.xlane.f32.xlu0 %v600
    %v602 = vpop.xlane.xlu0 %601
    %v603 = vsel %vm364, %v587, 0.0
    %604 = vadd.xlane.f32.xlu0 %v603
    %v605 = vpop.xlane.xlu0 %604
    %v606 = vsel %vm364, %v589, 0.0
    %607 = vadd.xlane.f32.xlu0 %v606
    %v608 = vpop.xlane.xlu0 %607
    %v609 = vsel %vm364, %v591, 0.0
    %610 = vadd.xlane.f32.xlu0 %v609
    %v611 = vpop.xlane.xlu0 %610
    %v612 = vsel %vm364, %v593, 0.0
    %613 = vadd.xlane.f32.xlu0 %v612
    %v614 = vpop.xlane.xlu0 %613
    %v615 = vsel %vm364, %v595, 0.0
    %616 = vadd.xlane.f32.xlu0 %v615
    %v617 = vpop.xlane.xlu0 %616
    %v618 = vsel %vm364, %v597, 0.0
    %619 = vadd.xlane.f32.xlu0 %v618
    %v620 = vpop.xlane.xlu0 %619
    %v621 = vsel %vm364, %v599, 0.0
    %622 = vadd.xlane.f32.xlu0 %v621
    %v623 = vpop.xlane.xlu0 %622
    %v624 = vrcp.pop %v602
    %v625 = vmul.f32 %v602, %v624
    %v626 = vsub.f32 1.0, %v625
    %v627 = vmul.f32 %v624, %v626
    %v628 = vadd.f32 %v624, %v627
    %vm629 = vweird.f32 %v602
    %vm630 = vweird.f32 %v624
    %vm631 = vmor %vm629, %vm630
    %v632 = vsel %vm631, %v624, %v628
    %v633 = vand.u32 2147483647, %v602
    %vm634 = vcmp.eq.f32.partialorder %v633, 8.507059e+37
    %v635 = vand.u32 %v602, 2147483648
    %v636 = vor.u32 1.1754944e-38, %v635
    %v637 = vsel %vm634, %v636, %v632
    %v638 = vmul.f32 %v585, %v637
    %v639 = vrcp.pop %v605
    %v640 = vmul.f32 %v605, %v639
    %v641 = vsub.f32 1.0, %v640
    %v642 = vmul.f32 %v639, %v641
    %v643 = vadd.f32 %v639, %v642
    %vm644 = vweird.f32 %v605
    %vm645 = vweird.f32 %v639
    %vm646 = vmor %vm644, %vm645
    %v647 = vsel %vm646, %v639, %v643
    %v648 = vand.u32 2147483647, %v605
    %vm649 = vcmp.eq.f32.partialorder %v648, 8.507059e+37
    %v650 = vand.u32 %v605, 2147483648
    %v651 = vor.u32 1.1754944e-38, %v650
    %v652 = vsel %vm649, %v651, %v647
    %v653 = vmul.f32 %v587, %v652
    %v654 = vrcp.pop %v608
    %v655 = vmul.f32 %v608, %v654
    %v656 = vsub.f32 1.0, %v655
    %v657 = vmul.f32 %v654, %v656
    %v658 = vadd.f32 %v654, %v657
    %vm659 = vweird.f32 %v608
    %vm660 = vweird.f32 %v654
    %vm661 = vmor %vm659, %vm660
    %v662 = vsel %vm661, %v654, %v658
    %v663 = vand.u32 2147483647, %v608
    %vm664 = vcmp.eq.f32.partialorder %v663, 8.507059e+37
    %v665 = vand.u32 %v608, 2147483648
    %v666 = vor.u32 1.1754944e-38, %v665
    %v667 = vsel %vm664, %v666, %v662
    %v668 = vmul.f32 %v589, %v667
    %v669 = vrcp.pop %v611
    %v670 = vmul.f32 %v611, %v669
    %v671 = vsub.f32 1.0, %v670
    %v672 = vmul.f32 %v669, %v671
    %v673 = vadd.f32 %v669, %v672
    %vm674 = vweird.f32 %v611
    %vm675 = vweird.f32 %v669
    %vm676 = vmor %vm674, %vm675
    %v677 = vsel %vm676, %v669, %v673
    %v678 = vand.u32 2147483647, %v611
    %vm679 = vcmp.eq.f32.partialorder %v678, 8.507059e+37
    %v680 = vand.u32 %v611, 2147483648
    %v681 = vor.u32 1.1754944e-38, %v680
    %v682 = vsel %vm679, %v681, %v677
    %v683 = vmul.f32 %v591, %v682
    %v684 = vrcp.pop %v614
    %v685 = vmul.f32 %v614, %v684
    %v686 = vsub.f32 1.0, %v685
    %v687 = vmul.f32 %v684, %v686
    %v688 = vadd.f32 %v684, %v687
    %vm689 = vweird.f32 %v614
    %vm690 = vweird.f32 %v684
    %vm691 = vmor %vm689, %vm690
    %v692 = vsel %vm691, %v684, %v688
    %v693 = vand.u32 2147483647, %v614
    %vm694 = vcmp.eq.f32.partialorder %v693, 8.507059e+37
    %v695 = vand.u32 %v614, 2147483648
    %v696 = vor.u32 1.1754944e-38, %v695
    %v697 = vsel %vm694, %v696, %v692
    %v698 = vmul.f32 %v593, %v697
    %v699 = vrcp.pop %v617
    %v700 = vmul.f32 %v617, %v699
    %v701 = vsub.f32 1.0, %v700
    %v702 = vmul.f32 %v699, %v701
    %v703 = vadd.f32 %v699, %v702
    %vm704 = vweird.f32 %v617
    %vm705 = vweird.f32 %v699
    %vm706 = vmor %vm704, %vm705
    %v707 = vsel %vm706, %v699, %v703
    %v708 = vand.u32 2147483647, %v617
    %vm709 = vcmp.eq.f32.partialorder %v708, 8.507059e+37
    %v710 = vand.u32 %v617, 2147483648
    %v711 = vor.u32 1.1754944e-38, %v710
    %v712 = vsel %vm709, %v711, %v707
    %v713 = vmul.f32 %v595, %v712
    %v714 = vrcp.pop %v620
    %v715 = vmul.f32 %v620, %v714
    %v716 = vsub.f32 1.0, %v715
    %v717 = vmul.f32 %v714, %v716
    %v718 = vadd.f32 %v714, %v717
    %vm719 = vweird.f32 %v620
    %vm720 = vweird.f32 %v714
    %vm721 = vmor %vm719, %vm720
    %v722 = vsel %vm721, %v714, %v718
    %v723 = vand.u32 2147483647, %v620
    %vm724 = vcmp.eq.f32.partialorder %v723, 8.507059e+37
    %v725 = vand.u32 %v620, 2147483648
    %v726 = vor.u32 1.1754944e-38, %v725
    %v727 = vsel %vm724, %v726, %v722
    %v728 = vmul.f32 %v597, %v727
    %v729 = vrcp.pop %v623
    %v730 = vmul.f32 %v623, %v729
    %v731 = vsub.f32 1.0, %v730
    %v732 = vmul.f32 %v729, %v731
    %v733 = vadd.f32 %v729, %v732
    %vm734 = vweird.f32 %v623
    %vm735 = vweird.f32 %v729
    %vm736 = vmor %vm734, %vm735
    %v737 = vsel %vm736, %v729, %v733
    %v738 = vand.u32 2147483647, %v623
    %vm739 = vcmp.eq.f32.partialorder %v738, 8.507059e+37
    %v740 = vand.u32 %v623, 2147483648
    %v741 = vor.u32 1.1754944e-38, %v740
    %v742 = vsel %vm739, %v741, %v737
    %v743 = vmul.f32 %v599, %v742
    %v744 = vpack.c.bf16 %v638, %v638
    %v745 = vpack.c.bf16 %v653, %v653
    %v746 = vpack.c.bf16 %v668, %v668
    %v747 = vpack.c.bf16 %v683, %v683
    %v748 = vpack.c.bf16 %v698, %v698
    %v749 = vpack.c.bf16 %v713, %v713
    %v750 = vpack.c.bf16 %v728, %v728
    %v751 = vpack.c.bf16 %v743, %v743
    %752 = vrot.lane.b32.xlu0 %v361, 64
    %v753 = vpop.permute.xlu0 %752
    %v755 = vsel %vm364, %v744, 0
    %vm757 = vcmask 1043456
    %v759 = vsel %vm757, %v753, 0
    %761 = vmatpush.bf16.msra.mxu0 0
    %762 = vmatpush.bf16.msra.mxu0 0
    %763 = vmatpush.bf16.msra.mxu0 0
    %764 = vmatpush.bf16.msra.mxu0 0
    %765 = vmatpush.bf16.msra.mxu0 0
    %766 = vmatpush.bf16.msra.mxu0 0
    %767 = vmatpush.bf16.msra.mxu0 0
    %768 = vmatpush.bf16.msra.mxu0 %v759
    %769 = vmatmul.bf16.gmra.mxu0 %v755
    %v770 = vpop.f32.mrf.mxu0
    %v771 = vadd.f32 0.0, %v770
    %v772 = vpop.f32.mrf.mxu0
    %773 = vdwg.mxu0
    %774 = vrot.lane.b32.xlu0 %v386, 64
    %v775 = vpop.permute.xlu0 %774
    %v777 = vsel %vm364, %v745, 0
    %v780 = vsel %vm757, %v775, 0
    %782 = vmatpush.bf16.msra.mxu0 0
    %783 = vmatpush.bf16.msra.mxu0 0
    %784 = vmatpush.bf16.msra.mxu0 0
    %785 = vmatpush.bf16.msra.mxu0 0
    %786 = vmatpush.bf16.msra.mxu0 0
    %787 = vmatpush.bf16.msra.mxu0 0
    %788 = vmatpush.bf16.msra.mxu0 0
    %789 = vmatpush.bf16.msra.mxu0 %v780
    %790 = vmatmul.bf16.gmra.mxu0 %v777
    %v791 = vpop.f32.mrf.mxu0
    %v792 = vadd.f32 0.0, %v791
    %v793 = vpop.f32.mrf.mxu0
    %794 = vdwg.mxu0
    %795 = vrot.lane.b32.xlu0 %v410, 64
    %v796 = vpop.permute.xlu0 %795
    %v798 = vsel %vm364, %v746, 0
    %v801 = vsel %vm757, %v796, 0
    %803 = vmatpush.bf16.msra.mxu0 0
    %804 = vmatpush.bf16.msra.mxu0 0
    %805 = vmatpush.bf16.msra.mxu0 0
    %806 = vmatpush.bf16.msra.mxu0 0
    %807 = vmatpush.bf16.msra.mxu0 0
    %808 = vmatpush.bf16.msra.mxu0 0
    %809 = vmatpush.bf16.msra.mxu0 0
    %810 = vmatpush.bf16.msra.mxu0 %v801
    %811 = vmatmul.bf16.gmra.mxu0 %v798
    %v812 = vpop.f32.mrf.mxu0
    %v813 = vadd.f32 0.0, %v812
    %v814 = vpop.f32.mrf.mxu0
    %815 = vdwg.mxu0
    %816 = vrot.lane.b32.xlu0 %v434, 64
    %v817 = vpop.permute.xlu0 %816
    %v819 = vsel %vm364, %v747, 0
    %v822 = vsel %vm757, %v817, 0
    %824 = vmatpush.bf16.msra.mxu0 0
    %825 = vmatpush.bf16.msra.mxu0 0
    %826 = vmatpush.bf16.msra.mxu0 0
    %827 = vmatpush.bf16.msra.mxu0 0
    %828 = vmatpush.bf16.msra.mxu0 0
    %829 = vmatpush.bf16.msra.mxu0 0
    %830 = vmatpush.bf16.msra.mxu0 0
    %831 = vmatpush.bf16.msra.mxu0 %v822
    %832 = vmatmul.bf16.gmra.mxu0 %v819
    %v833 = vpop.f32.mrf.mxu0
    %v834 = vadd.f32 0.0, %v833
    %v835 = vpop.f32.mrf.mxu0
    %836 = vdwg.mxu0
    %837 = vrot.lane.b32.xlu0 %v458, 64
    %v838 = vpop.permute.xlu0 %837
    %v840 = vsel %vm364, %v748, 0
    %v843 = vsel %vm757, %v838, 0
    %845 = vmatpush.bf16.msra.mxu0 0
    %846 = vmatpush.bf16.msra.mxu0 0
    %847 = vmatpush.bf16.msra.mxu0 0
    %848 = vmatpush.bf16.msra.mxu0 0
    %849 = vmatpush.bf16.msra.mxu0 0
    %850 = vmatpush.bf16.msra.mxu0 0
    %851 = vmatpush.bf16.msra.mxu0 0
    %852 = vmatpush.bf16.msra.mxu0 %v843
    %853 = vmatmul.bf16.gmra.mxu0 %v840
    %v854 = vpop.f32.mrf.mxu0
    %v855 = vadd.f32 0.0, %v854
    %v856 = vpop.f32.mrf.mxu0
    %857 = vdwg.mxu0
    %858 = vrot.lane.b32.xlu0 %v482, 64
    %v859 = vpop.permute.xlu0 %858
    %v861 = vsel %vm364, %v749, 0
    %v864 = vsel %vm757, %v859, 0
    %866 = vmatpush.bf16.msra.mxu0 0
    %867 = vmatpush.bf16.msra.mxu0 0
    %868 = vmatpush.bf16.msra.mxu0 0
    %869 = vmatpush.bf16.msra.mxu0 0
    %870 = vmatpush.bf16.msra.mxu0 0
    %871 = vmatpush.bf16.msra.mxu0 0
    %872 = vmatpush.bf16.msra.mxu0 0
    %873 = vmatpush.bf16.msra.mxu0 %v864
    %874 = vmatmul.bf16.gmra.mxu0 %v861
    %v875 = vpop.f32.mrf.mxu0
    %v876 = vadd.f32 0.0, %v875
    %v877 = vpop.f32.mrf.mxu0
    %878 = vdwg.mxu0
    %879 = vrot.lane.b32.xlu0 %v506, 64
    %v880 = vpop.permute.xlu0 %879
    %v882 = vsel %vm364, %v750, 0
    %v885 = vsel %vm757, %v880, 0
    %887 = vmatpush.bf16.msra.mxu0 0
    %888 = vmatpush.bf16.msra.mxu0 0
    %889 = vmatpush.bf16.msra.mxu0 0
    %890 = vmatpush.bf16.msra.mxu0 0
    %891 = vmatpush.bf16.msra.mxu0 0
    %892 = vmatpush.bf16.msra.mxu0 0
    %893 = vmatpush.bf16.msra.mxu0 0
    %894 = vmatpush.bf16.msra.mxu0 %v885
    %895 = vmatmul.bf16.gmra.mxu0 %v882
    %v896 = vpop.f32.mrf.mxu0
    %v897 = vadd.f32 0.0, %v896
    %v898 = vpop.f32.mrf.mxu0
    %899 = vdwg.mxu0
    %900 = vrot.lane.b32.xlu0 %v530, 64
    %v901 = vpop.permute.xlu0 %900
    %v903 = vsel %vm364, %v751, 0
    %v906 = vsel %vm757, %v901, 0
    %908 = vmatpush.bf16.msra.mxu0 0
    %909 = vmatpush.bf16.msra.mxu0 0
    %910 = vmatpush.bf16.msra.mxu0 0
    %911 = vmatpush.bf16.msra.mxu0 0
    %912 = vmatpush.bf16.msra.mxu0 0
    %913 = vmatpush.bf16.msra.mxu0 0
    %914 = vmatpush.bf16.msra.mxu0 0
    %915 = vmatpush.bf16.msra.mxu0 %v906
    %916 = vmatmul.bf16.gmra.mxu0 %v903
    %v917 = vpop.f32.mrf.mxu0
    %v918 = vadd.f32 0.0, %v917
    %v919 = vpop.f32.mrf.mxu0
    %920 = vdwg.mxu0
    %921 = vrot.lane.b32.xlu0 %v361, 120
    %v922 = vpop.permute.xlu0 %921
    %923 = vrot.lane.b32.xlu0 %v361, 88
    %v924 = vpop.permute.xlu0 %923
    %v926 = vsel %vm364, %v922, 0
    %v929 = vsel %vm364, %v924, 0
    %931 = vmatpush.bf16.xpose.msra.mxu0 0
    %932 = vmatpush.bf16.xpose.msra.mxu0 0
    %933 = vmatpush.bf16.xpose.msra.mxu0 0
    %934 = vmatpush.bf16.xpose.msra.mxu0 0
    %935 = vmatpush.bf16.xpose.msra.mxu0 0
    %936 = vmatpush.bf16.xpose.msra.mxu0 0
    %937 = vmatpush.bf16.xpose.msra.mxu0 0
    %938 = vmatpush.bf16.xpose.msra.mxu0 %v929
    %939 = vmatmul.bf16.gmra.mxu0 %v926
    %v940 = vpop.f32.mrf.mxu0
    %v941 = vadd.f32 0.0, %v940
    %v942 = vpop.f32.mrf.mxu0
    %943 = vdwg.mxu0
    %944 = vrot.lane.b32.xlu0 %v386, 120
    %v945 = vpop.permute.xlu0 %944
    %946 = vrot.lane.b32.xlu0 %v386, 88
    %v947 = vpop.permute.xlu0 %946
    %v949 = vsel %vm364, %v945, 0
    %v952 = vsel %vm364, %v947, 0
    %954 = vmatpush.bf16.xpose.msra.mxu0 0
    %955 = vmatpush.bf16.xpose.msra.mxu0 0
    %956 = vmatpush.bf16.xpose.msra.mxu0 0
    %957 = vmatpush.bf16.xpose.msra.mxu0 0
    %958 = vmatpush.bf16.xpose.msra.mxu0 0
    %959 = vmatpush.bf16.xpose.msra.mxu0 0
    %960 = vmatpush.bf16.xpose.msra.mxu0 0
    %961 = vmatpush.bf16.xpose.msra.mxu0 %v952
    %962 = vmatmul.bf16.gmra.mxu0 %v949
    %v963 = vpop.f32.mrf.mxu0
    %v964 = vadd.f32 0.0, %v963
    %v965 = vpop.f32.mrf.mxu0
    %966 = vdwg.mxu0
    %967 = vrot.lane.b32.xlu0 %v410, 120
    %v968 = vpop.permute.xlu0 %967
    %969 = vrot.lane.b32.xlu0 %v410, 88
    %v970 = vpop.permute.xlu0 %969
    %v972 = vsel %vm364, %v968, 0
    %v975 = vsel %vm364, %v970, 0
    %977 = vmatpush.bf16.xpose.msra.mxu0 0
    %978 = vmatpush.bf16.xpose.msra.mxu0 0
    %979 = vmatpush.bf16.xpose.msra.mxu0 0
    %980 = vmatpush.bf16.xpose.msra.mxu0 0
    %981 = vmatpush.bf16.xpose.msra.mxu0 0
    %982 = vmatpush.bf16.xpose.msra.mxu0 0
    %983 = vmatpush.bf16.xpose.msra.mxu0 0
    %984 = vmatpush.bf16.xpose.msra.mxu0 %v975
    %985 = vmatmul.bf16.gmra.mxu0 %v972
    %v986 = vpop.f32.mrf.mxu0
    %v987 = vadd.f32 0.0, %v986
    %v988 = vpop.f32.mrf.mxu0
    %989 = vdwg.mxu0
    %990 = vrot.lane.b32.xlu0 %v434, 120
    %v991 = vpop.permute.xlu0 %990
    %992 = vrot.lane.b32.xlu0 %v434, 88
    %v993 = vpop.permute.xlu0 %992
    %v995 = vsel %vm364, %v991, 0
    %v998 = vsel %vm364, %v993, 0
    %1000 = vmatpush.bf16.xpose.msra.mxu0 0
    %1001 = vmatpush.bf16.xpose.msra.mxu0 0
    %1002 = vmatpush.bf16.xpose.msra.mxu0 0
    %1003 = vmatpush.bf16.xpose.msra.mxu0 0
    %1004 = vmatpush.bf16.xpose.msra.mxu0 0
    %1005 = vmatpush.bf16.xpose.msra.mxu0 0
    %1006 = vmatpush.bf16.xpose.msra.mxu0 0
    %1007 = vmatpush.bf16.xpose.msra.mxu0 %v998
    %1008 = vmatmul.bf16.gmra.mxu0 %v995
    %v1009 = vpop.f32.mrf.mxu0
    %v1010 = vadd.f32 0.0, %v1009
    %v1011 = vpop.f32.mrf.mxu0
    %1012 = vdwg.mxu0
    %1013 = vrot.lane.b32.xlu0 %v458, 120
    %v1014 = vpop.permute.xlu0 %1013
    %1015 = vrot.lane.b32.xlu0 %v458, 88
    %v1016 = vpop.permute.xlu0 %1015
    %v1018 = vsel %vm364, %v1014, 0
    %v1021 = vsel %vm364, %v1016, 0
    %1023 = vmatpush.bf16.xpose.msra.mxu0 0
    %1024 = vmatpush.bf16.xpose.msra.mxu0 0
    %1025 = vmatpush.bf16.xpose.msra.mxu0 0
    %1026 = vmatpush.bf16.xpose.msra.mxu0 0
    %1027 = vmatpush.bf16.xpose.msra.mxu0 0
    %1028 = vmatpush.bf16.xpose.msra.mxu0 0
    %1029 = vmatpush.bf16.xpose.msra.mxu0 0
    %1030 = vmatpush.bf16.xpose.msra.mxu0 %v1021
    %1031 = vmatmul.bf16.gmra.mxu0 %v1018
    %v1032 = vpop.f32.mrf.mxu0
    %v1033 = vadd.f32 0.0, %v1032
    %v1034 = vpop.f32.mrf.mxu0
    %1035 = vdwg.mxu0
    %1036 = vrot.lane.b32.xlu0 %v482, 120
    %v1037 = vpop.permute.xlu0 %1036
    %1038 = vrot.lane.b32.xlu0 %v482, 88
    %v1039 = vpop.permute.xlu0 %1038
    %v1041 = vsel %vm364, %v1037, 0
    %v1044 = vsel %vm364, %v1039, 0
    %1046 = vmatpush.bf16.xpose.msra.mxu0 0
    %1047 = vmatpush.bf16.xpose.msra.mxu0 0
    %1048 = vmatpush.bf16.xpose.msra.mxu0 0
    %1049 = vmatpush.bf16.xpose.msra.mxu0 0
    %1050 = vmatpush.bf16.xpose.msra.mxu0 0
    %1051 = vmatpush.bf16.xpose.msra.mxu0 0
    %1052 = vmatpush.bf16.xpose.msra.mxu0 0
    %1053 = vmatpush.bf16.xpose.msra.mxu0 %v1044
    %1054 = vmatmul.bf16.gmra.mxu0 %v1041
    %v1055 = vpop.f32.mrf.mxu0
    %v1056 = vadd.f32 0.0, %v1055
    %v1057 = vpop.f32.mrf.mxu0
    %1058 = vdwg.mxu0
    %1059 = vrot.lane.b32.xlu0 %v506, 120
    %v1060 = vpop.permute.xlu0 %1059
    %1061 = vrot.lane.b32.xlu0 %v506, 88
    %v1062 = vpop.permute.xlu0 %1061
    %v1064 = vsel %vm364, %v1060, 0
    %v1067 = vsel %vm364, %v1062, 0
    %1069 = vmatpush.bf16.xpose.msra.mxu0 0
    %1070 = vmatpush.bf16.xpose.msra.mxu0 0
    %1071 = vmatpush.bf16.xpose.msra.mxu0 0
    %1072 = vmatpush.bf16.xpose.msra.mxu0 0
    %1073 = vmatpush.bf16.xpose.msra.mxu0 0
    %1074 = vmatpush.bf16.xpose.msra.mxu0 0
    %1075 = vmatpush.bf16.xpose.msra.mxu0 0
    %1076 = vmatpush.bf16.xpose.msra.mxu0 %v1067
    %1077 = vmatmul.bf16.gmra.mxu0 %v1064
    %v1078 = vpop.f32.mrf.mxu0
    %v1079 = vadd.f32 0.0, %v1078
    %v1080 = vpop.f32.mrf.mxu0
    %1081 = vdwg.mxu0
    %1082 = vrot.lane.b32.xlu0 %v530, 120
    %v1083 = vpop.permute.xlu0 %1082
    %1084 = vrot.lane.b32.xlu0 %v530, 88
    %v1085 = vpop.permute.xlu0 %1084
    %v1087 = vsel %vm364, %v1083, 0
    %v1090 = vsel %vm364, %v1085, 0
    %1092 = vmatpush.bf16.xpose.msra.mxu0 0
    %1093 = vmatpush.bf16.xpose.msra.mxu0 0
    %1094 = vmatpush.bf16.xpose.msra.mxu0 0
    %1095 = vmatpush.bf16.xpose.msra.mxu0 0
    %1096 = vmatpush.bf16.xpose.msra.mxu0 0
    %1097 = vmatpush.bf16.xpose.msra.mxu0 0
    %1098 = vmatpush.bf16.xpose.msra.mxu0 0
    %1099 = vmatpush.bf16.xpose.msra.mxu0 %v1090
    %1100 = vmatmul.bf16.gmra.mxu0 %v1087
    %v1101 = vpop.f32.mrf.mxu0
    %v1102 = vadd.f32 0.0, %v1101
    %v1103 = vpop.f32.mrf.mxu0
    %1104 = vdwg.mxu0
    %v1105 = vsel %vm364, %v941, -inf
    %1106 = vmax.xlane.f32.xlu0 %v1105
    %v1107 = vpop.xlane.xlu0 %1106
    %v1108 = vsel %vm364, %v964, -inf
    %1109 = vmax.xlane.f32.xlu0 %v1108
    %v1110 = vpop.xlane.xlu0 %1109
    %v1111 = vsel %vm364, %v987, -inf
    %1112 = vmax.xlane.f32.xlu0 %v1111
    %v1113 = vpop.xlane.xlu0 %1112
    %v1114 = vsel %vm364, %v1010, -inf
    %1115 = vmax.xlane.f32.xlu0 %v1114
    %v1116 = vpop.xlane.xlu0 %1115
    %v1117 = vsel %vm364, %v1033, -inf
    %1118 = vmax.xlane.f32.xlu0 %v1117
    %v1119 = vpop.xlane.xlu0 %1118
    %v1120 = vsel %vm364, %v1056, -inf
    %1121 = vmax.xlane.f32.xlu0 %v1120
    %v1122 = vpop.xlane.xlu0 %1121
    %v1123 = vsel %vm364, %v1079, -inf
    %1124 = vmax.xlane.f32.xlu0 %v1123
    %v1125 = vpop.xlane.xlu0 %1124
    %v1126 = vsel %vm364, %v1102, -inf
    %1127 = vmax.xlane.f32.xlu0 %v1126
    %v1128 = vpop.xlane.xlu0 %1127
    %v1129 = vsub.f32 %v941, %v1107
    %v1130 = vsub.f32 %v964, %v1110
    %v1131 = vsub.f32 %v987, %v1113
    %v1132 = vsub.f32 %v1010, %v1116
    %v1133 = vsub.f32 %v1033, %v1119
    %v1134 = vsub.f32 %v1056, %v1122
    %v1135 = vsub.f32 %v1079, %v1125
    %v1136 = vsub.f32 %v1102, %v1128
    %v1137 = vmul.f32 %v1129, 1.442695
    %v1138 = vpow.pop %v1137
    %v1139 = vmul.f32 %v1130, 1.442695
    %v1140 = vpow.pop %v1139
    %v1141 = vmul.f32 %v1131, 1.442695
    %v1142 = vpow.pop %v1141
    %v1143 = vmul.f32 %v1132, 1.442695
    %v1144 = vpow.pop %v1143
    %v1145 = vmul.f32 %v1133, 1.442695
    %v1146 = vpow.pop %v1145
    %v1147 = vmul.f32 %v1134, 1.442695
    %v1148 = vpow.pop %v1147
    %v1149 = vmul.f32 %v1135, 1.442695
    %v1150 = vpow.pop %v1149
    %v1151 = vmul.f32 %v1136, 1.442695
    %v1152 = vpow.pop %v1151
    %v1153 = vsel %vm364, %v1138, 0.0
    %1154 = vadd.xlane.f32.xlu0 %v1153
    %v1155 = vpop.xlane.xlu0 %1154
    %v1156 = vsel %vm364, %v1140, 0.0
    %1157 = vadd.xlane.f32.xlu0 %v1156
    %v1158 = vpop.xlane.xlu0 %1157
    %v1159 = vsel %vm364, %v1142, 0.0
    %1160 = vadd.xlane.f32.xlu0 %v1159
    %v1161 = vpop.xlane.xlu0 %1160
    %v1162 = vsel %vm364, %v1144, 0.0
    %1163 = vadd.xlane.f32.xlu0 %v1162
    %v1164 = vpop.xlane.xlu0 %1163
    %v1165 = vsel %vm364, %v1146, 0.0
    %1166 = vadd.xlane.f32.xlu0 %v1165
    %v1167 = vpop.xlane.xlu0 %1166
    %v1168 = vsel %vm364, %v1148, 0.0
    %1169 = vadd.xlane.f32.xlu0 %v1168
    %v1170 = vpop.xlane.xlu0 %1169
    %v1171 = vsel %vm364, %v1150, 0.0
    %1172 = vadd.xlane.f32.xlu0 %v1171
    %v1173 = vpop.xlane.xlu0 %1172
    %v1174 = vsel %vm364, %v1152, 0.0
    %1175 = vadd.xlane.f32.xlu0 %v1174
    %v1176 = vpop.xlane.xlu0 %1175
    %v1177 = vrcp.pop %v1155
    %v1178 = vmul.f32 %v1155, %v1177
    %v1179 = vsub.f32 1.0, %v1178
    %v1180 = vmul.f32 %v1177, %v1179
    %v1181 = vadd.f32 %v1177, %v1180
    %vm1182 = vweird.f32 %v1155
    %vm1183 = vweird.f32 %v1177
    %vm1184 = vmor %vm1182, %vm1183
    %v1185 = vsel %vm1184, %v1177, %v1181
    %v1186 = vand.u32 2147483647, %v1155
    %vm1187 = vcmp.eq.f32.partialorder %v1186, 8.507059e+37
    %v1188 = vand.u32 %v1155, 2147483648
    %v1189 = vor.u32 1.1754944e-38, %v1188
    %v1190 = vsel %vm1187, %v1189, %v1185
    %v1191 = vmul.f32 %v1138, %v1190
    %v1192 = vrcp.pop %v1158
    %v1193 = vmul.f32 %v1158, %v1192
    %v1194 = vsub.f32 1.0, %v1193
    %v1195 = vmul.f32 %v1192, %v1194
    %v1196 = vadd.f32 %v1192, %v1195
    %vm1197 = vweird.f32 %v1158
    %vm1198 = vweird.f32 %v1192
    %vm1199 = vmor %vm1197, %vm1198
    %v1200 = vsel %vm1199, %v1192, %v1196
    %v1201 = vand.u32 2147483647, %v1158
    %vm1202 = vcmp.eq.f32.partialorder %v1201, 8.507059e+37
    %v1203 = vand.u32 %v1158, 2147483648
    %v1204 = vor.u32 1.1754944e-38, %v1203
    %v1205 = vsel %vm1202, %v1204, %v1200
    %v1206 = vmul.f32 %v1140, %v1205
    %v1207 = vrcp.pop %v1161
    %v1208 = vmul.f32 %v1161, %v1207
    %v1209 = vsub.f32 1.0, %v1208
    %v1210 = vmul.f32 %v1207, %v1209
    %v1211 = vadd.f32 %v1207, %v1210
    %vm1212 = vweird.f32 %v1161
    %vm1213 = vweird.f32 %v1207
    %vm1214 = vmor %vm1212, %vm1213
    %v1215 = vsel %vm1214, %v1207, %v1211
    %v1216 = vand.u32 2147483647, %v1161
    %vm1217 = vcmp.eq.f32.partialorder %v1216, 8.507059e+37
    %v1218 = vand.u32 %v1161, 2147483648
    %v1219 = vor.u32 1.1754944e-38, %v1218
    %v1220 = vsel %vm1217, %v1219, %v1215
    %v1221 = vmul.f32 %v1142, %v1220
    %v1222 = vrcp.pop %v1164
    %v1223 = vmul.f32 %v1164, %v1222
    %v1224 = vsub.f32 1.0, %v1223
    %v1225 = vmul.f32 %v1222, %v1224
    %v1226 = vadd.f32 %v1222, %v1225
    %vm1227 = vweird.f32 %v1164
    %vm1228 = vweird.f32 %v1222
    %vm1229 = vmor %vm1227, %vm1228
    %v1230 = vsel %vm1229, %v1222, %v1226
    %v1231 = vand.u32 2147483647, %v1164
    %vm1232 = vcmp.eq.f32.partialorder %v1231, 8.507059e+37
    %v1233 = vand.u32 %v1164, 2147483648
    %v1234 = vor.u32 1.1754944e-38, %v1233
    %v1235 = vsel %vm1232, %v1234, %v1230
    %v1236 = vmul.f32 %v1144, %v1235
    %v1237 = vrcp.pop %v1167
    %v1238 = vmul.f32 %v1167, %v1237
    %v1239 = vsub.f32 1.0, %v1238
    %v1240 = vmul.f32 %v1237, %v1239
    %v1241 = vadd.f32 %v1237, %v1240
    %vm1242 = vweird.f32 %v1167
    %vm1243 = vweird.f32 %v1237
    %vm1244 = vmor %vm1242, %vm1243
    %v1245 = vsel %vm1244, %v1237, %v1241
    %v1246 = vand.u32 2147483647, %v1167
    %vm1247 = vcmp.eq.f32.partialorder %v1246, 8.507059e+37
    %v1248 = vand.u32 %v1167, 2147483648
    %v1249 = vor.u32 1.1754944e-38, %v1248
    %v1250 = vsel %vm1247, %v1249, %v1245
    %v1251 = vmul.f32 %v1146, %v1250
    %v1252 = vrcp.pop %v1170
    %v1253 = vmul.f32 %v1170, %v1252
    %v1254 = vsub.f32 1.0, %v1253
    %v1255 = vmul.f32 %v1252, %v1254
    %v1256 = vadd.f32 %v1252, %v1255
    %vm1257 = vweird.f32 %v1170
    %vm1258 = vweird.f32 %v1252
    %vm1259 = vmor %vm1257, %vm1258
    %v1260 = vsel %vm1259, %v1252, %v1256
    %v1261 = vand.u32 2147483647, %v1170
    %vm1262 = vcmp.eq.f32.partialorder %v1261, 8.507059e+37
    %v1263 = vand.u32 %v1170, 2147483648
    %v1264 = vor.u32 1.1754944e-38, %v1263
    %v1265 = vsel %vm1262, %v1264, %v1260
    %v1266 = vmul.f32 %v1148, %v1265
    %v1267 = vrcp.pop %v1173
    %v1268 = vmul.f32 %v1173, %v1267
    %v1269 = vsub.f32 1.0, %v1268
    %v1270 = vmul.f32 %v1267, %v1269
    %v1271 = vadd.f32 %v1267, %v1270
    %vm1272 = vweird.f32 %v1173
    %vm1273 = vweird.f32 %v1267
    %vm1274 = vmor %vm1272, %vm1273
    %v1275 = vsel %vm1274, %v1267, %v1271
    %v1276 = vand.u32 2147483647, %v1173
    %vm1277 = vcmp.eq.f32.partialorder %v1276, 8.507059e+37
    %v1278 = vand.u32 %v1173, 2147483648
    %v1279 = vor.u32 1.1754944e-38, %v1278
    %v1280 = vsel %vm1277, %v1279, %v1275
    %v1281 = vmul.f32 %v1150, %v1280
    %v1282 = vrcp.pop %v1176
    %v1283 = vmul.f32 %v1176, %v1282
    %v1284 = vsub.f32 1.0, %v1283
    %v1285 = vmul.f32 %v1282, %v1284
    %v1286 = vadd.f32 %v1282, %v1285
    %vm1287 = vweird.f32 %v1176
    %vm1288 = vweird.f32 %v1282
    %vm1289 = vmor %vm1287, %vm1288
    %v1290 = vsel %vm1289, %v1282, %v1286
    %v1291 = vand.u32 2147483647, %v1176
    %vm1292 = vcmp.eq.f32.partialorder %v1291, 8.507059e+37
    %v1293 = vand.u32 %v1176, 2147483648
    %v1294 = vor.u32 1.1754944e-38, %v1293
    %v1295 = vsel %vm1292, %v1294, %v1290
    %v1296 = vmul.f32 %v1152, %v1295
    %v1297 = vpack.c.bf16 %v1191, %v1191
    %v1298 = vpack.c.bf16 %v1206, %v1206
    %v1299 = vpack.c.bf16 %v1221, %v1221
    %v1300 = vpack.c.bf16 %v1236, %v1236
    %v1301 = vpack.c.bf16 %v1251, %v1251
    %v1302 = vpack.c.bf16 %v1266, %v1266
    %v1303 = vpack.c.bf16 %v1281, %v1281
    %v1304 = vpack.c.bf16 %v1296, %v1296
    %1305 = vrot.lane.b32.xlu0 %v361, 56
    %v1306 = vpop.permute.xlu0 %1305
    %v1308 = vsel %vm364, %v1297, 0
    %v1311 = vsel %vm757, %v1306, 0
    %1313 = vmatpush.bf16.msra.mxu0 0
    %1314 = vmatpush.bf16.msra.mxu0 0
    %1315 = vmatpush.bf16.msra.mxu0 0
    %1316 = vmatpush.bf16.msra.mxu0 0
    %1317 = vmatpush.bf16.msra.mxu0 0
    %1318 = vmatpush.bf16.msra.mxu0 0
    %1319 = vmatpush.bf16.msra.mxu0 0
    %1320 = vmatpush.bf16.msra.mxu0 %v1311
    %1321 = vmatmul.bf16.gmra.mxu0 %v1308
    %v1322 = vpop.f32.mrf.mxu0
    %v1323 = vadd.f32 0.0, %v1322
    %v1324 = vpop.f32.mrf.mxu0
    %1325 = vdwg.mxu0
    %1326 = vrot.lane.b32.xlu0 %v386, 56
    %v1327 = vpop.permute.xlu0 %1326
    %v1329 = vsel %vm364, %v1298, 0
    %v1332 = vsel %vm757, %v1327, 0
    %1334 = vmatpush.bf16.msra.mxu0 0
    %1335 = vmatpush.bf16.msra.mxu0 0
    %1336 = vmatpush.bf16.msra.mxu0 0
    %1337 = vmatpush.bf16.msra.mxu0 0
    %1338 = vmatpush.bf16.msra.mxu0 0
    %1339 = vmatpush.bf16.msra.mxu0 0
    %1340 = vmatpush.bf16.msra.mxu0 0
    %1341 = vmatpush.bf16.msra.mxu0 %v1332
    %1342 = vmatmul.bf16.gmra.mxu0 %v1329
    %v1343 = vpop.f32.mrf.mxu0
    %v1344 = vadd.f32 0.0, %v1343
    %v1345 = vpop.f32.mrf.mxu0
    %1346 = vdwg.mxu0
    %1347 = vrot.lane.b32.xlu0 %v410, 56
    %v1348 = vpop.permute.xlu0 %1347
    %v1350 = vsel %vm364, %v1299, 0
    %v1353 = vsel %vm757, %v1348, 0
    %1355 = vmatpush.bf16.msra.mxu0 0
    %1356 = vmatpush.bf16.msra.mxu0 0
    %1357 = vmatpush.bf16.msra.mxu0 0
    %1358 = vmatpush.bf16.msra.mxu0 0
    %1359 = vmatpush.bf16.msra.mxu0 0
    %1360 = vmatpush.bf16.msra.mxu0 0
    %1361 = vmatpush.bf16.msra.mxu0 0
    %1362 = vmatpush.bf16.msra.mxu0 %v1353
    %1363 = vmatmul.bf16.gmra.mxu0 %v1350
    %v1364 = vpop.f32.mrf.mxu0
    %v1365 = vadd.f32 0.0, %v1364
    %v1366 = vpop.f32.mrf.mxu0
    %1367 = vdwg.mxu0
    %1368 = vrot.lane.b32.xlu0 %v434, 56
    %v1369 = vpop.permute.xlu0 %1368
    %v1371 = vsel %vm364, %v1300, 0
    %v1374 = vsel %vm757, %v1369, 0
    %1376 = vmatpush.bf16.msra.mxu0 0
    %1377 = vmatpush.bf16.msra.mxu0 0
    %1378 = vmatpush.bf16.msra.mxu0 0
    %1379 = vmatpush.bf16.msra.mxu0 0
    %1380 = vmatpush.bf16.msra.mxu0 0
    %1381 = vmatpush.bf16.msra.mxu0 0
    %1382 = vmatpush.bf16.msra.mxu0 0
    %1383 = vmatpush.bf16.msra.mxu0 %v1374
    %1384 = vmatmul.bf16.gmra.mxu0 %v1371
    %v1385 = vpop.f32.mrf.mxu0
    %v1386 = vadd.f32 0.0, %v1385
    %v1387 = vpop.f32.mrf.mxu0
    %1388 = vdwg.mxu0
    %1389 = vrot.lane.b32.xlu0 %v458, 56
    %v1390 = vpop.permute.xlu0 %1389
    %v1392 = vsel %vm364, %v1301, 0
    %v1395 = vsel %vm757, %v1390, 0
    %1397 = vmatpush.bf16.msra.mxu0 0
    %1398 = vmatpush.bf16.msra.mxu0 0
    %1399 = vmatpush.bf16.msra.mxu0 0
    %1400 = vmatpush.bf16.msra.mxu0 0
    %1401 = vmatpush.bf16.msra.mxu0 0
    %1402 = vmatpush.bf16.msra.mxu0 0
    %1403 = vmatpush.bf16.msra.mxu0 0
    %1404 = vmatpush.bf16.msra.mxu0 %v1395
    %1405 = vmatmul.bf16.gmra.mxu0 %v1392
    %v1406 = vpop.f32.mrf.mxu0
    %v1407 = vadd.f32 0.0, %v1406
    %v1408 = vpop.f32.mrf.mxu0
    %1409 = vdwg.mxu0
    %1410 = vrot.lane.b32.xlu0 %v482, 56
    %v1411 = vpop.permute.xlu0 %1410
    %v1413 = vsel %vm364, %v1302, 0
    %v1416 = vsel %vm757, %v1411, 0
    %1418 = vmatpush.bf16.msra.mxu0 0
    %1419 = vmatpush.bf16.msra.mxu0 0
    %1420 = vmatpush.bf16.msra.mxu0 0
    %1421 = vmatpush.bf16.msra.mxu0 0
    %1422 = vmatpush.bf16.msra.mxu0 0
    %1423 = vmatpush.bf16.msra.mxu0 0
    %1424 = vmatpush.bf16.msra.mxu0 0
    %1425 = vmatpush.bf16.msra.mxu0 %v1416
    %1426 = vmatmul.bf16.gmra.mxu0 %v1413
    %v1427 = vpop.f32.mrf.mxu0
    %v1428 = vadd.f32 0.0, %v1427
    %v1429 = vpop.f32.mrf.mxu0
    %1430 = vdwg.mxu0
    %1431 = vrot.lane.b32.xlu0 %v506, 56
    %v1432 = vpop.permute.xlu0 %1431
    %v1434 = vsel %vm364, %v1303, 0
    %v1437 = vsel %vm757, %v1432, 0
    %1439 = vmatpush.bf16.msra.mxu0 0
    %1440 = vmatpush.bf16.msra.mxu0 0
    %1441 = vmatpush.bf16.msra.mxu0 0
    %1442 = vmatpush.bf16.msra.mxu0 0
    %1443 = vmatpush.bf16.msra.mxu0 0
    %1444 = vmatpush.bf16.msra.mxu0 0
    %1445 = vmatpush.bf16.msra.mxu0 0
    %1446 = vmatpush.bf16.msra.mxu0 %v1437
    %1447 = vmatmul.bf16.gmra.mxu0 %v1434
    %v1448 = vpop.f32.mrf.mxu0
    %v1449 = vadd.f32 0.0, %v1448
    %v1450 = vpop.f32.mrf.mxu0
    %1451 = vdwg.mxu0
    %1452 = vrot.lane.b32.xlu0 %v530, 56
    %v1453 = vpop.permute.xlu0 %1452
    %v1455 = vsel %vm364, %v1304, 0
    %v1458 = vsel %vm757, %v1453, 0
    %1460 = vmatpush.bf16.msra.mxu0 0
    %1461 = vmatpush.bf16.msra.mxu0 0
    %1462 = vmatpush.bf16.msra.mxu0 0
    %1463 = vmatpush.bf16.msra.mxu0 0
    %1464 = vmatpush.bf16.msra.mxu0 0
    %1465 = vmatpush.bf16.msra.mxu0 0
    %1466 = vmatpush.bf16.msra.mxu0 0
    %1467 = vmatpush.bf16.msra.mxu0 %v1458
    %1468 = vmatmul.bf16.gmra.mxu0 %v1455
    %v1469 = vpop.f32.mrf.mxu0
    %v1470 = vadd.f32 0.0, %v1469
    %v1471 = vpop.f32.mrf.mxu0
    %1472 = vdwg.mxu0
    %1473 = vrot.lane.b32.xlu0 %v361, 112
    %v1474 = vpop.permute.xlu0 %1473
    %1475 = vrot.lane.b32.xlu0 %v361, 80
    %v1476 = vpop.permute.xlu0 %1475
    %v1478 = vsel %vm364, %v1474, 0
    %v1481 = vsel %vm364, %v1476, 0
    %1483 = vmatpush.bf16.xpose.msra.mxu0 0
    %1484 = vmatpush.bf16.xpose.msra.mxu0 0
    %1485 = vmatpush.bf16.xpose.msra.mxu0 0
    %1486 = vmatpush.bf16.xpose.msra.mxu0 0
    %1487 = vmatpush.bf16.xpose.msra.mxu0 0
    %1488 = vmatpush.bf16.xpose.msra.mxu0 0
    %1489 = vmatpush.bf16.xpose.msra.mxu0 0
    %1490 = vmatpush.bf16.xpose.msra.mxu0 %v1481
    %1491 = vmatmul.bf16.gmra.mxu0 %v1478
    %v1492 = vpop.f32.mrf.mxu0
    %v1493 = vadd.f32 0.0, %v1492
    %v1494 = vpop.f32.mrf.mxu0
    %1495 = vdwg.mxu0
    %1496 = vrot.lane.b32.xlu0 %v386, 112
    %v1497 = vpop.permute.xlu0 %1496
    %1498 = vrot.lane.b32.xlu0 %v386, 80
    %v1499 = vpop.permute.xlu0 %1498
    %v1501 = vsel %vm364, %v1497, 0
    %v1504 = vsel %vm364, %v1499, 0
    %1506 = vmatpush.bf16.xpose.msra.mxu0 0
    %1507 = vmatpush.bf16.xpose.msra.mxu0 0
    %1508 = vmatpush.bf16.xpose.msra.mxu0 0
    %1509 = vmatpush.bf16.xpose.msra.mxu0 0
    %1510 = vmatpush.bf16.xpose.msra.mxu0 0
    %1511 = vmatpush.bf16.xpose.msra.mxu0 0
    %1512 = vmatpush.bf16.xpose.msra.mxu0 0
    %1513 = vmatpush.bf16.xpose.msra.mxu0 %v1504
    %1514 = vmatmul.bf16.gmra.mxu0 %v1501
    %v1515 = vpop.f32.mrf.mxu0
    %v1516 = vadd.f32 0.0, %v1515
    %v1517 = vpop.f32.mrf.mxu0
    %1518 = vdwg.mxu0
    %1519 = vrot.lane.b32.xlu0 %v410, 112
    %v1520 = vpop.permute.xlu0 %1519
    %1521 = vrot.lane.b32.xlu0 %v410, 80
    %v1522 = vpop.permute.xlu0 %1521
    %v1524 = vsel %vm364, %v1520, 0
    %v1527 = vsel %vm364, %v1522, 0
    %1529 = vmatpush.bf16.xpose.msra.mxu0 0
    %1530 = vmatpush.bf16.xpose.msra.mxu0 0
    %1531 = vmatpush.bf16.xpose.msra.mxu0 0
    %1532 = vmatpush.bf16.xpose.msra.mxu0 0
    %1533 = vmatpush.bf16.xpose.msra.mxu0 0
    %1534 = vmatpush.bf16.xpose.msra.mxu0 0
    %1535 = vmatpush.bf16.xpose.msra.mxu0 0
    %1536 = vmatpush.bf16.xpose.msra.mxu0 %v1527
    %1537 = vmatmul.bf16.gmra.mxu0 %v1524
    %v1538 = vpop.f32.mrf.mxu0
    %v1539 = vadd.f32 0.0, %v1538
    %v1540 = vpop.f32.mrf.mxu0
    %1541 = vdwg.mxu0
    %1542 = vrot.lane.b32.xlu0 %v434, 112
    %v1543 = vpop.permute.xlu0 %1542
    %1544 = vrot.lane.b32.xlu0 %v434, 80
    %v1545 = vpop.permute.xlu0 %1544
    %v1547 = vsel %vm364, %v1543, 0
    %v1550 = vsel %vm364, %v1545, 0
    %1552 = vmatpush.bf16.xpose.msra.mxu0 0
    %1553 = vmatpush.bf16.xpose.msra.mxu0 0
    %1554 = vmatpush.bf16.xpose.msra.mxu0 0
    %1555 = vmatpush.bf16.xpose.msra.mxu0 0
    %1556 = vmatpush.bf16.xpose.msra.mxu0 0
    %1557 = vmatpush.bf16.xpose.msra.mxu0 0
    %1558 = vmatpush.bf16.xpose.msra.mxu0 0
    %1559 = vmatpush.bf16.xpose.msra.mxu0 %v1550
    %1560 = vmatmul.bf16.gmra.mxu0 %v1547
    %v1561 = vpop.f32.mrf.mxu0
    %v1562 = vadd.f32 0.0, %v1561
    %v1563 = vpop.f32.mrf.mxu0
    %1564 = vdwg.mxu0
    %1565 = vrot.lane.b32.xlu0 %v458, 112
    %v1566 = vpop.permute.xlu0 %1565
    %1567 = vrot.lane.b32.xlu0 %v458, 80
    %v1568 = vpop.permute.xlu0 %1567
    %v1570 = vsel %vm364, %v1566, 0
    %v1573 = vsel %vm364, %v1568, 0
    %1575 = vmatpush.bf16.xpose.msra.mxu0 0
    %1576 = vmatpush.bf16.xpose.msra.mxu0 0
    %1577 = vmatpush.bf16.xpose.msra.mxu0 0
    %1578 = vmatpush.bf16.xpose.msra.mxu0 0
    %1579 = vmatpush.bf16.xpose.msra.mxu0 0
    %1580 = vmatpush.bf16.xpose.msra.mxu0 0
    %1581 = vmatpush.bf16.xpose.msra.mxu0 0
    %1582 = vmatpush.bf16.xpose.msra.mxu0 %v1573
    %1583 = vmatmul.bf16.gmra.mxu0 %v1570
    %v1584 = vpop.f32.mrf.mxu0
    %v1585 = vadd.f32 0.0, %v1584
    %v1586 = vpop.f32.mrf.mxu0
    %1587 = vdwg.mxu0
    %1588 = vrot.lane.b32.xlu0 %v482, 112
    %v1589 = vpop.permute.xlu0 %1588
    %1590 = vrot.lane.b32.xlu0 %v482, 80
    %v1591 = vpop.permute.xlu0 %1590
    %v1593 = vsel %vm364, %v1589, 0
    %v1596 = vsel %vm364, %v1591, 0
    %1598 = vmatpush.bf16.xpose.msra.mxu0 0
    %1599 = vmatpush.bf16.xpose.msra.mxu0 0
    %1600 = vmatpush.bf16.xpose.msra.mxu0 0
    %1601 = vmatpush.bf16.xpose.msra.mxu0 0
    %1602 = vmatpush.bf16.xpose.msra.mxu0 0
    %1603 = vmatpush.bf16.xpose.msra.mxu0 0
    %1604 = vmatpush.bf16.xpose.msra.mxu0 0
    %1605 = vmatpush.bf16.xpose.msra.mxu0 %v1596
    %1606 = vmatmul.bf16.gmra.mxu0 %v1593
    %v1607 = vpop.f32.mrf.mxu0
    %v1608 = vadd.f32 0.0, %v1607
    %v1609 = vpop.f32.mrf.mxu0
    %1610 = vdwg.mxu0
    %1611 = vrot.lane.b32.xlu0 %v506, 112
    %v1612 = vpop.permute.xlu0 %1611
    %1613 = vrot.lane.b32.xlu0 %v506, 80
    %v1614 = vpop.permute.xlu0 %1613
    %v1616 = vsel %vm364, %v1612, 0
    %v1619 = vsel %vm364, %v1614, 0
    %1621 = vmatpush.bf16.xpose.msra.mxu0 0
    %1622 = vmatpush.bf16.xpose.msra.mxu0 0
    %1623 = vmatpush.bf16.xpose.msra.mxu0 0
    %1624 = vmatpush.bf16.xpose.msra.mxu0 0
    %1625 = vmatpush.bf16.xpose.msra.mxu0 0
    %1626 = vmatpush.bf16.xpose.msra.mxu0 0
    %1627 = vmatpush.bf16.xpose.msra.mxu0 0
    %1628 = vmatpush.bf16.xpose.msra.mxu0 %v1619
    %1629 = vmatmul.bf16.gmra.mxu0 %v1616
    %v1630 = vpop.f32.mrf.mxu0
    %v1631 = vadd.f32 0.0, %v1630
    %v1632 = vpop.f32.mrf.mxu0
    %1633 = vdwg.mxu0
    %1634 = vrot.lane.b32.xlu0 %v530, 112
    %v1635 = vpop.permute.xlu0 %1634
    %1636 = vrot.lane.b32.xlu0 %v530, 80
    %v1637 = vpop.permute.xlu0 %1636
    %v1639 = vsel %vm364, %v1635, 0
    %v1642 = vsel %vm364, %v1637, 0
    %1644 = vmatpush.bf16.xpose.msra.mxu0 0
    %1645 = vmatpush.bf16.xpose.msra.mxu0 0
    %1646 = vmatpush.bf16.xpose.msra.mxu0 0
    %1647 = vmatpush.bf16.xpose.msra.mxu0 0
    %1648 = vmatpush.bf16.xpose.msra.mxu0 0
    %1649 = vmatpush.bf16.xpose.msra.mxu0 0
    %1650 = vmatpush.bf16.xpose.msra.mxu0 0
    %1651 = vmatpush.bf16.xpose.msra.mxu0 %v1642
    %1652 = vmatmul.bf16.gmra.mxu0 %v1639
    %v1653 = vpop.f32.mrf.mxu0
    %v1654 = vadd.f32 0.0, %v1653
    %v1655 = vpop.f32.mrf.mxu0
    %1656 = vdwg.mxu0
    %v1657 = vsel %vm364, %v1493, -inf
    %1658 = vmax.xlane.f32.xlu0 %v1657
    %v1659 = vpop.xlane.xlu0 %1658
    %v1660 = vsel %vm364, %v1516, -inf
    %1661 = vmax.xlane.f32.xlu0 %v1660
    %v1662 = vpop.xlane.xlu0 %1661
    %v1663 = vsel %vm364, %v1539, -inf
    %1664 = vmax.xlane.f32.xlu0 %v1663
    %v1665 = vpop.xlane.xlu0 %1664
    %v1666 = vsel %vm364, %v1562, -inf
    %1667 = vmax.xlane.f32.xlu0 %v1666
    %v1668 = vpop.xlane.xlu0 %1667
    %v1669 = vsel %vm364, %v1585, -inf
    %1670 = vmax.xlane.f32.xlu0 %v1669
    %v1671 = vpop.xlane.xlu0 %1670
    %v1672 = vsel %vm364, %v1608, -inf
    %1673 = vmax.xlane.f32.xlu0 %v1672
    %v1674 = vpop.xlane.xlu0 %1673
    %v1675 = vsel %vm364, %v1631, -inf
    %1676 = vmax.xlane.f32.xlu0 %v1675
    %v1677 = vpop.xlane.xlu0 %1676
    %v1678 = vsel %vm364, %v1654, -inf
    %1679 = vmax.xlane.f32.xlu0 %v1678
    %v1680 = vpop.xlane.xlu0 %1679
    %v1681 = vsub.f32 %v1493, %v1659
    %v1682 = vsub.f32 %v1516, %v1662
    %v1683 = vsub.f32 %v1539, %v1665
    %v1684 = vsub.f32 %v1562, %v1668
    %v1685 = vsub.f32 %v1585, %v1671
    %v1686 = vsub.f32 %v1608, %v1674
    %v1687 = vsub.f32 %v1631, %v1677
    %v1688 = vsub.f32 %v1654, %v1680
    %v1689 = vmul.f32 %v1681, 1.442695
    %v1690 = vpow.pop %v1689
    %v1691 = vmul.f32 %v1682, 1.442695
    %v1692 = vpow.pop %v1691
    %v1693 = vmul.f32 %v1683, 1.442695
    %v1694 = vpow.pop %v1693
    %v1695 = vmul.f32 %v1684, 1.442695
    %v1696 = vpow.pop %v1695
    %v1697 = vmul.f32 %v1685, 1.442695
    %v1698 = vpow.pop %v1697
    %v1699 = vmul.f32 %v1686, 1.442695
    %v1700 = vpow.pop %v1699
    %v1701 = vmul.f32 %v1687, 1.442695
    %v1702 = vpow.pop %v1701
    %v1703 = vmul.f32 %v1688, 1.442695
    %v1704 = vpow.pop %v1703
    %v1705 = vsel %vm364, %v1690, 0.0
    %1706 = vadd.xlane.f32.xlu0 %v1705
    %v1707 = vpop.xlane.xlu0 %1706
    %v1708 = vsel %vm364, %v1692, 0.0
    %1709 = vadd.xlane.f32.xlu0 %v1708
    %v1710 = vpop.xlane.xlu0 %1709
    %v1711 = vsel %vm364, %v1694, 0.0
    %1712 = vadd.xlane.f32.xlu0 %v1711
    %v1713 = vpop.xlane.xlu0 %1712
    %v1714 = vsel %vm364, %v1696, 0.0
    %1715 = vadd.xlane.f32.xlu0 %v1714
    %v1716 = vpop.xlane.xlu0 %1715
    %v1717 = vsel %vm364, %v1698, 0.0
    %1718 = vadd.xlane.f32.xlu0 %v1717
    %v1719 = vpop.xlane.xlu0 %1718
    %v1720 = vsel %vm364, %v1700, 0.0
    %1721 = vadd.xlane.f32.xlu0 %v1720
    %v1722 = vpop.xlane.xlu0 %1721
    %v1723 = vsel %vm364, %v1702, 0.0
    %1724 = vadd.xlane.f32.xlu0 %v1723
    %v1725 = vpop.xlane.xlu0 %1724
    %v1726 = vsel %vm364, %v1704, 0.0
    %1727 = vadd.xlane.f32.xlu0 %v1726
    %v1728 = vpop.xlane.xlu0 %1727
    %v1729 = vrcp.pop %v1707
    %v1730 = vmul.f32 %v1707, %v1729
    %v1731 = vsub.f32 1.0, %v1730
    %v1732 = vmul.f32 %v1729, %v1731
    %v1733 = vadd.f32 %v1729, %v1732
    %vm1734 = vweird.f32 %v1707
    %vm1735 = vweird.f32 %v1729
    %vm1736 = vmor %vm1734, %vm1735
    %v1737 = vsel %vm1736, %v1729, %v1733
    %v1738 = vand.u32 2147483647, %v1707
    %vm1739 = vcmp.eq.f32.partialorder %v1738, 8.507059e+37
    %v1740 = vand.u32 %v1707, 2147483648
    %v1741 = vor.u32 1.1754944e-38, %v1740
    %v1742 = vsel %vm1739, %v1741, %v1737
    %v1743 = vmul.f32 %v1690, %v1742
    %v1744 = vrcp.pop %v1710
    %v1745 = vmul.f32 %v1710, %v1744
    %v1746 = vsub.f32 1.0, %v1745
    %v1747 = vmul.f32 %v1744, %v1746
    %v1748 = vadd.f32 %v1744, %v1747
    %vm1749 = vweird.f32 %v1710
    %vm1750 = vweird.f32 %v1744
    %vm1751 = vmor %vm1749, %vm1750
    %v1752 = vsel %vm1751, %v1744, %v1748
    %v1753 = vand.u32 2147483647, %v1710
    %vm1754 = vcmp.eq.f32.partialorder %v1753, 8.507059e+37
    %v1755 = vand.u32 %v1710, 2147483648
    %v1756 = vor.u32 1.1754944e-38, %v1755
    %v1757 = vsel %vm1754, %v1756, %v1752
    %v1758 = vmul.f32 %v1692, %v1757
    %v1759 = vrcp.pop %v1713
    %v1760 = vmul.f32 %v1713, %v1759
    %v1761 = vsub.f32 1.0, %v1760
    %v1762 = vmul.f32 %v1759, %v1761
    %v1763 = vadd.f32 %v1759, %v1762
    %vm1764 = vweird.f32 %v1713
    %vm1765 = vweird.f32 %v1759
    %vm1766 = vmor %vm1764, %vm1765
    %v1767 = vsel %vm1766, %v1759, %v1763
    %v1768 = vand.u32 2147483647, %v1713
    %vm1769 = vcmp.eq.f32.partialorder %v1768, 8.507059e+37
    %v1770 = vand.u32 %v1713, 2147483648
    %v1771 = vor.u32 1.1754944e-38, %v1770
    %v1772 = vsel %vm1769, %v1771, %v1767
    %v1773 = vmul.f32 %v1694, %v1772
    %v1774 = vrcp.pop %v1716
    %v1775 = vmul.f32 %v1716, %v1774
    %v1776 = vsub.f32 1.0, %v1775
    %v1777 = vmul.f32 %v1774, %v1776
    %v1778 = vadd.f32 %v1774, %v1777
    %vm1779 = vweird.f32 %v1716
    %vm1780 = vweird.f32 %v1774
    %vm1781 = vmor %vm1779, %vm1780
    %v1782 = vsel %vm1781, %v1774, %v1778
    %v1783 = vand.u32 2147483647, %v1716
    %vm1784 = vcmp.eq.f32.partialorder %v1783, 8.507059e+37
    %v1785 = vand.u32 %v1716, 2147483648
    %v1786 = vor.u32 1.1754944e-38, %v1785
    %v1787 = vsel %vm1784, %v1786, %v1782
    %v1788 = vmul.f32 %v1696, %v1787
    %v1789 = vrcp.pop %v1719
    %v1790 = vmul.f32 %v1719, %v1789
    %v1791 = vsub.f32 1.0, %v1790
    %v1792 = vmul.f32 %v1789, %v1791
    %v1793 = vadd.f32 %v1789, %v1792
    %vm1794 = vweird.f32 %v1719
    %vm1795 = vweird.f32 %v1789
    %vm1796 = vmor %vm1794, %vm1795
    %v1797 = vsel %vm1796, %v1789, %v1793
    %v1798 = vand.u32 2147483647, %v1719
    %vm1799 = vcmp.eq.f32.partialorder %v1798, 8.507059e+37
    %v1800 = vand.u32 %v1719, 2147483648
    %v1801 = vor.u32 1.1754944e-38, %v1800
    %v1802 = vsel %vm1799, %v1801, %v1797
    %v1803 = vmul.f32 %v1698, %v1802
    %v1804 = vrcp.pop %v1722
    %v1805 = vmul.f32 %v1722, %v1804
    %v1806 = vsub.f32 1.0, %v1805
    %v1807 = vmul.f32 %v1804, %v1806
    %v1808 = vadd.f32 %v1804, %v1807
    %vm1809 = vweird.f32 %v1722
    %vm1810 = vweird.f32 %v1804
    %vm1811 = vmor %vm1809, %vm1810
    %v1812 = vsel %vm1811, %v1804, %v1808
    %v1813 = vand.u32 2147483647, %v1722
    %vm1814 = vcmp.eq.f32.partialorder %v1813, 8.507059e+37
    %v1815 = vand.u32 %v1722, 2147483648
    %v1816 = vor.u32 1.1754944e-38, %v1815
    %v1817 = vsel %vm1814, %v1816, %v1812
    %v1818 = vmul.f32 %v1700, %v1817
    %v1819 = vrcp.pop %v1725
    %v1820 = vmul.f32 %v1725, %v1819
    %v1821 = vsub.f32 1.0, %v1820
    %v1822 = vmul.f32 %v1819, %v1821
    %v1823 = vadd.f32 %v1819, %v1822
    %vm1824 = vweird.f32 %v1725
    %vm1825 = vweird.f32 %v1819
    %vm1826 = vmor %vm1824, %vm1825
    %v1827 = vsel %vm1826, %v1819, %v1823
    %v1828 = vand.u32 2147483647, %v1725
    %vm1829 = vcmp.eq.f32.partialorder %v1828, 8.507059e+37
    %v1830 = vand.u32 %v1725, 2147483648
    %v1831 = vor.u32 1.1754944e-38, %v1830
    %v1832 = vsel %vm1829, %v1831, %v1827
    %v1833 = vmul.f32 %v1702, %v1832
    %v1834 = vrcp.pop %v1728
    %v1835 = vmul.f32 %v1728, %v1834
    %v1836 = vsub.f32 1.0, %v1835
    %v1837 = vmul.f32 %v1834, %v1836
    %v1838 = vadd.f32 %v1834, %v1837
    %vm1839 = vweird.f32 %v1728
    %vm1840 = vweird.f32 %v1834
    %vm1841 = vmor %vm1839, %vm1840
    %v1842 = vsel %vm1841, %v1834, %v1838
    %v1843 = vand.u32 2147483647, %v1728
    %vm1844 = vcmp.eq.f32.partialorder %v1843, 8.507059e+37
    %v1845 = vand.u32 %v1728, 2147483648
    %v1846 = vor.u32 1.1754944e-38, %v1845
    %v1847 = vsel %vm1844, %v1846, %v1842
    %v1848 = vmul.f32 %v1704, %v1847
    %v1849 = vpack.c.bf16 %v1743, %v1743
    %v1850 = vpack.c.bf16 %v1758, %v1758
    %v1851 = vpack.c.bf16 %v1773, %v1773
    %v1852 = vpack.c.bf16 %v1788, %v1788
    %v1853 = vpack.c.bf16 %v1803, %v1803
    %v1854 = vpack.c.bf16 %v1818, %v1818
    %v1855 = vpack.c.bf16 %v1833, %v1833
    %v1856 = vpack.c.bf16 %v1848, %v1848
    %1857 = vrot.lane.b32.xlu0 %v361, 48
    %v1858 = vpop.permute.xlu0 %1857
    %v1860 = vsel %vm364, %v1849, 0
    %v1863 = vsel %vm757, %v1858, 0
    %1865 = vmatpush.bf16.msra.mxu0 0
    %1866 = vmatpush.bf16.msra.mxu0 0
    %1867 = vmatpush.bf16.msra.mxu0 0
    %1868 = vmatpush.bf16.msra.mxu0 0
    %1869 = vmatpush.bf16.msra.mxu0 0
    %1870 = vmatpush.bf16.msra.mxu0 0
    %1871 = vmatpush.bf16.msra.mxu0 0
    %1872 = vmatpush.bf16.msra.mxu0 %v1863
    %1873 = vmatmul.bf16.gmra.mxu0 %v1860
    %v1874 = vpop.f32.mrf.mxu0
    %v1875 = vadd.f32 0.0, %v1874
    %v1876 = vpop.f32.mrf.mxu0
    %1877 = vdwg.mxu0
    %1878 = vrot.lane.b32.xlu0 %v386, 48
    %v1879 = vpop.permute.xlu0 %1878
    %v1881 = vsel %vm364, %v1850, 0
    %v1884 = vsel %vm757, %v1879, 0
    %1886 = vmatpush.bf16.msra.mxu0 0
    %1887 = vmatpush.bf16.msra.mxu0 0
    %1888 = vmatpush.bf16.msra.mxu0 0
    %1889 = vmatpush.bf16.msra.mxu0 0
    %1890 = vmatpush.bf16.msra.mxu0 0
    %1891 = vmatpush.bf16.msra.mxu0 0
    %1892 = vmatpush.bf16.msra.mxu0 0
    %1893 = vmatpush.bf16.msra.mxu0 %v1884
    %1894 = vmatmul.bf16.gmra.mxu0 %v1881
    %v1895 = vpop.f32.mrf.mxu0
    %v1896 = vadd.f32 0.0, %v1895
    %v1897 = vpop.f32.mrf.mxu0
    %1898 = vdwg.mxu0
    %1899 = vrot.lane.b32.xlu0 %v410, 48
    %v1900 = vpop.permute.xlu0 %1899
    %v1902 = vsel %vm364, %v1851, 0
    %v1905 = vsel %vm757, %v1900, 0
    %1907 = vmatpush.bf16.msra.mxu0 0
    %1908 = vmatpush.bf16.msra.mxu0 0
    %1909 = vmatpush.bf16.msra.mxu0 0
    %1910 = vmatpush.bf16.msra.mxu0 0
    %1911 = vmatpush.bf16.msra.mxu0 0
    %1912 = vmatpush.bf16.msra.mxu0 0
    %1913 = vmatpush.bf16.msra.mxu0 0
    %1914 = vmatpush.bf16.msra.mxu0 %v1905
    %1915 = vmatmul.bf16.gmra.mxu0 %v1902
    %v1916 = vpop.f32.mrf.mxu0
    %v1917 = vadd.f32 0.0, %v1916
    %v1918 = vpop.f32.mrf.mxu0
    %1919 = vdwg.mxu0
    %1920 = vrot.lane.b32.xlu0 %v434, 48
    %v1921 = vpop.permute.xlu0 %1920
    %v1923 = vsel %vm364, %v1852, 0
    %v1926 = vsel %vm757, %v1921, 0
    %1928 = vmatpush.bf16.msra.mxu0 0
    %1929 = vmatpush.bf16.msra.mxu0 0
    %1930 = vmatpush.bf16.msra.mxu0 0
    %1931 = vmatpush.bf16.msra.mxu0 0
    %1932 = vmatpush.bf16.msra.mxu0 0
    %1933 = vmatpush.bf16.msra.mxu0 0
    %1934 = vmatpush.bf16.msra.mxu0 0
    %1935 = vmatpush.bf16.msra.mxu0 %v1926
    %1936 = vmatmul.bf16.gmra.mxu0 %v1923
    %v1937 = vpop.f32.mrf.mxu0
    %v1938 = vadd.f32 0.0, %v1937
    %v1939 = vpop.f32.mrf.mxu0
    %1940 = vdwg.mxu0
    %1941 = vrot.lane.b32.xlu0 %v458, 48
    %v1942 = vpop.permute.xlu0 %1941
    %v1944 = vsel %vm364, %v1853, 0
    %v1947 = vsel %vm757, %v1942, 0
    %1949 = vmatpush.bf16.msra.mxu0 0
    %1950 = vmatpush.bf16.msra.mxu0 0
    %1951 = vmatpush.bf16.msra.mxu0 0
    %1952 = vmatpush.bf16.msra.mxu0 0
    %1953 = vmatpush.bf16.msra.mxu0 0
    %1954 = vmatpush.bf16.msra.mxu0 0
    %1955 = vmatpush.bf16.msra.mxu0 0
    %1956 = vmatpush.bf16.msra.mxu0 %v1947
    %1957 = vmatmul.bf16.gmra.mxu0 %v1944
    %v1958 = vpop.f32.mrf.mxu0
    %v1959 = vadd.f32 0.0, %v1958
    %v1960 = vpop.f32.mrf.mxu0
    %1961 = vdwg.mxu0
    %1962 = vrot.lane.b32.xlu0 %v482, 48
    %v1963 = vpop.permute.xlu0 %1962
    %v1965 = vsel %vm364, %v1854, 0
    %v1968 = vsel %vm757, %v1963, 0
    %1970 = vmatpush.bf16.msra.mxu0 0
    %1971 = vmatpush.bf16.msra.mxu0 0
    %1972 = vmatpush.bf16.msra.mxu0 0
    %1973 = vmatpush.bf16.msra.mxu0 0
    %1974 = vmatpush.bf16.msra.mxu0 0
    %1975 = vmatpush.bf16.msra.mxu0 0
    %1976 = vmatpush.bf16.msra.mxu0 0
    %1977 = vmatpush.bf16.msra.mxu0 %v1968
    %1978 = vmatmul.bf16.gmra.mxu0 %v1965
    %v1979 = vpop.f32.mrf.mxu0
    %v1980 = vadd.f32 0.0, %v1979
    %v1981 = vpop.f32.mrf.mxu0
    %1982 = vdwg.mxu0
    %1983 = vrot.lane.b32.xlu0 %v506, 48
    %v1984 = vpop.permute.xlu0 %1983
    %v1986 = vsel %vm364, %v1855, 0
    %v1989 = vsel %vm757, %v1984, 0
    %1991 = vmatpush.bf16.msra.mxu0 0
    %1992 = vmatpush.bf16.msra.mxu0 0
    %1993 = vmatpush.bf16.msra.mxu0 0
    %1994 = vmatpush.bf16.msra.mxu0 0
    %1995 = vmatpush.bf16.msra.mxu0 0
    %1996 = vmatpush.bf16.msra.mxu0 0
    %1997 = vmatpush.bf16.msra.mxu0 0
    %1998 = vmatpush.bf16.msra.mxu0 %v1989
    %1999 = vmatmul.bf16.gmra.mxu0 %v1986
    %v2000 = vpop.f32.mrf.mxu0
    %v2001 = vadd.f32 0.0, %v2000
    %v2002 = vpop.f32.mrf.mxu0
    %2003 = vdwg.mxu0
    %2004 = vrot.lane.b32.xlu0 %v530, 48
    %v2005 = vpop.permute.xlu0 %2004
    %v2007 = vsel %vm364, %v1856, 0
    %v2010 = vsel %vm757, %v2005, 0
    %2012 = vmatpush.bf16.msra.mxu0 0
    %2013 = vmatpush.bf16.msra.mxu0 0
    %2014 = vmatpush.bf16.msra.mxu0 0
    %2015 = vmatpush.bf16.msra.mxu0 0
    %2016 = vmatpush.bf16.msra.mxu0 0
    %2017 = vmatpush.bf16.msra.mxu0 0
    %2018 = vmatpush.bf16.msra.mxu0 0
    %2019 = vmatpush.bf16.msra.mxu0 %v2010
    %2020 = vmatmul.bf16.gmra.mxu0 %v2007
    %v2021 = vpop.f32.mrf.mxu0
    %v2022 = vadd.f32 0.0, %v2021
    %v2023 = vpop.f32.mrf.mxu0
    %2024 = vdwg.mxu0
    %2025 = vrot.lane.b32.xlu0 %v361, 104
    %v2026 = vpop.permute.xlu0 %2025
    %2027 = vrot.lane.b32.xlu0 %v361, 72
    %v2028 = vpop.permute.xlu0 %2027
    %v2030 = vsel %vm364, %v2026, 0
    %v2033 = vsel %vm364, %v2028, 0
    %2035 = vmatpush.bf16.xpose.msra.mxu0 0
    %2036 = vmatpush.bf16.xpose.msra.mxu0 0
    %2037 = vmatpush.bf16.xpose.msra.mxu0 0
    %2038 = vmatpush.bf16.xpose.msra.mxu0 0
    %2039 = vmatpush.bf16.xpose.msra.mxu0 0
    %2040 = vmatpush.bf16.xpose.msra.mxu0 0
    %2041 = vmatpush.bf16.xpose.msra.mxu0 0
    %2042 = vmatpush.bf16.xpose.msra.mxu0 %v2033
    %2043 = vmatmul.bf16.gmra.mxu0 %v2030
    %v2044 = vpop.f32.mrf.mxu0
    %v2045 = vadd.f32 0.0, %v2044
    %v2046 = vpop.f32.mrf.mxu0
    %2047 = vdwg.mxu0
    %2048 = vrot.lane.b32.xlu0 %v386, 104
    %v2049 = vpop.permute.xlu0 %2048
    %2050 = vrot.lane.b32.xlu0 %v386, 72
    %v2051 = vpop.permute.xlu0 %2050
    %v2053 = vsel %vm364, %v2049, 0
    %v2056 = vsel %vm364, %v2051, 0
    %2058 = vmatpush.bf16.xpose.msra.mxu0 0
    %2059 = vmatpush.bf16.xpose.msra.mxu0 0
    %2060 = vmatpush.bf16.xpose.msra.mxu0 0
    %2061 = vmatpush.bf16.xpose.msra.mxu0 0
    %2062 = vmatpush.bf16.xpose.msra.mxu0 0
    %2063 = vmatpush.bf16.xpose.msra.mxu0 0
    %2064 = vmatpush.bf16.xpose.msra.mxu0 0
    %2065 = vmatpush.bf16.xpose.msra.mxu0 %v2056
    %2066 = vmatmul.bf16.gmra.mxu0 %v2053
    %v2067 = vpop.f32.mrf.mxu0
    %v2068 = vadd.f32 0.0, %v2067
    %v2069 = vpop.f32.mrf.mxu0
    %2070 = vdwg.mxu0
    %2071 = vrot.lane.b32.xlu0 %v410, 104
    %v2072 = vpop.permute.xlu0 %2071
    %2073 = vrot.lane.b32.xlu0 %v410, 72
    %v2074 = vpop.permute.xlu0 %2073
    %v2076 = vsel %vm364, %v2072, 0
    %v2079 = vsel %vm364, %v2074, 0
    %2081 = vmatpush.bf16.xpose.msra.mxu0 0
    %2082 = vmatpush.bf16.xpose.msra.mxu0 0
    %2083 = vmatpush.bf16.xpose.msra.mxu0 0
    %2084 = vmatpush.bf16.xpose.msra.mxu0 0
    %2085 = vmatpush.bf16.xpose.msra.mxu0 0
    %2086 = vmatpush.bf16.xpose.msra.mxu0 0
    %2087 = vmatpush.bf16.xpose.msra.mxu0 0
    %2088 = vmatpush.bf16.xpose.msra.mxu0 %v2079
    %2089 = vmatmul.bf16.gmra.mxu0 %v2076
    %v2090 = vpop.f32.mrf.mxu0
    %v2091 = vadd.f32 0.0, %v2090
    %v2092 = vpop.f32.mrf.mxu0
    %2093 = vdwg.mxu0
    %2094 = vrot.lane.b32.xlu0 %v434, 104
    %v2095 = vpop.permute.xlu0 %2094
    %2096 = vrot.lane.b32.xlu0 %v434, 72
    %v2097 = vpop.permute.xlu0 %2096
    %v2099 = vsel %vm364, %v2095, 0
    %v2102 = vsel %vm364, %v2097, 0
    %2104 = vmatpush.bf16.xpose.msra.mxu0 0
    %2105 = vmatpush.bf16.xpose.msra.mxu0 0
    %2106 = vmatpush.bf16.xpose.msra.mxu0 0
    %2107 = vmatpush.bf16.xpose.msra.mxu0 0
    %2108 = vmatpush.bf16.xpose.msra.mxu0 0
    %2109 = vmatpush.bf16.xpose.msra.mxu0 0
    %2110 = vmatpush.bf16.xpose.msra.mxu0 0
    %2111 = vmatpush.bf16.xpose.msra.mxu0 %v2102
    %2112 = vmatmul.bf16.gmra.mxu0 %v2099
    %v2113 = vpop.f32.mrf.mxu0
    %v2114 = vadd.f32 0.0, %v2113
    %v2115 = vpop.f32.mrf.mxu0
    %2116 = vdwg.mxu0
    %2117 = vrot.lane.b32.xlu0 %v458, 104
    %v2118 = vpop.permute.xlu0 %2117
    %2119 = vrot.lane.b32.xlu0 %v458, 72
    %v2120 = vpop.permute.xlu0 %2119
    %v2122 = vsel %vm364, %v2118, 0
    %v2125 = vsel %vm364, %v2120, 0
    %2127 = vmatpush.bf16.xpose.msra.mxu0 0
    %2128 = vmatpush.bf16.xpose.msra.mxu0 0
    %2129 = vmatpush.bf16.xpose.msra.mxu0 0
    %2130 = vmatpush.bf16.xpose.msra.mxu0 0
    %2131 = vmatpush.bf16.xpose.msra.mxu0 0
    %2132 = vmatpush.bf16.xpose.msra.mxu0 0
    %2133 = vmatpush.bf16.xpose.msra.mxu0 0
    %2134 = vmatpush.bf16.xpose.msra.mxu0 %v2125
    %2135 = vmatmul.bf16.gmra.mxu0 %v2122
    %v2136 = vpop.f32.mrf.mxu0
    %v2137 = vadd.f32 0.0, %v2136
    %v2138 = vpop.f32.mrf.mxu0
    %2139 = vdwg.mxu0
    %2140 = vrot.lane.b32.xlu0 %v482, 104
    %v2141 = vpop.permute.xlu0 %2140
    %2142 = vrot.lane.b32.xlu0 %v482, 72
    %v2143 = vpop.permute.xlu0 %2142
    %v2145 = vsel %vm364, %v2141, 0
    %v2148 = vsel %vm364, %v2143, 0
    %2150 = vmatpush.bf16.xpose.msra.mxu0 0
    %2151 = vmatpush.bf16.xpose.msra.mxu0 0
    %2152 = vmatpush.bf16.xpose.msra.mxu0 0
    %2153 = vmatpush.bf16.xpose.msra.mxu0 0
    %2154 = vmatpush.bf16.xpose.msra.mxu0 0
    %2155 = vmatpush.bf16.xpose.msra.mxu0 0
    %2156 = vmatpush.bf16.xpose.msra.mxu0 0
    %2157 = vmatpush.bf16.xpose.msra.mxu0 %v2148
    %2158 = vmatmul.bf16.gmra.mxu0 %v2145
    %v2159 = vpop.f32.mrf.mxu0
    %v2160 = vadd.f32 0.0, %v2159
    %v2161 = vpop.f32.mrf.mxu0
    %2162 = vdwg.mxu0
    %2163 = vrot.lane.b32.xlu0 %v506, 104
    %v2164 = vpop.permute.xlu0 %2163
    %2165 = vrot.lane.b32.xlu0 %v506, 72
    %v2166 = vpop.permute.xlu0 %2165
    %v2168 = vsel %vm364, %v2164, 0
    %v2171 = vsel %vm364, %v2166, 0
    %2173 = vmatpush.bf16.xpose.msra.mxu0 0
    %2174 = vmatpush.bf16.xpose.msra.mxu0 0
    %2175 = vmatpush.bf16.xpose.msra.mxu0 0
    %2176 = vmatpush.bf16.xpose.msra.mxu0 0
    %2177 = vmatpush.bf16.xpose.msra.mxu0 0
    %2178 = vmatpush.bf16.xpose.msra.mxu0 0
    %2179 = vmatpush.bf16.xpose.msra.mxu0 0
    %2180 = vmatpush.bf16.xpose.msra.mxu0 %v2171
    %2181 = vmatmul.bf16.gmra.mxu0 %v2168
    %v2182 = vpop.f32.mrf.mxu0
    %v2183 = vadd.f32 0.0, %v2182
    %v2184 = vpop.f32.mrf.mxu0
    %2185 = vdwg.mxu0
    %2186 = vrot.lane.b32.xlu0 %v530, 104
    %v2187 = vpop.permute.xlu0 %2186
    %2188 = vrot.lane.b32.xlu0 %v530, 72
    %v2189 = vpop.permute.xlu0 %2188
    %v2191 = vsel %vm364, %v2187, 0
    %v2194 = vsel %vm364, %v2189, 0
    %2196 = vmatpush.bf16.xpose.msra.mxu0 0
    %2197 = vmatpush.bf16.xpose.msra.mxu0 0
    %2198 = vmatpush.bf16.xpose.msra.mxu0 0
    %2199 = vmatpush.bf16.xpose.msra.mxu0 0
    %2200 = vmatpush.bf16.xpose.msra.mxu0 0
    %2201 = vmatpush.bf16.xpose.msra.mxu0 0
    %2202 = vmatpush.bf16.xpose.msra.mxu0 0
    %2203 = vmatpush.bf16.xpose.msra.mxu0 %v2194
    %2204 = vmatmul.bf16.gmra.mxu0 %v2191
    %v2205 = vpop.f32.mrf.mxu0
    %v2206 = vadd.f32 0.0, %v2205
    %v2207 = vpop.f32.mrf.mxu0
    %2208 = vdwg.mxu0
    %v2209 = vsel %vm364, %v2045, -inf
    %2210 = vmax.xlane.f32.xlu0 %v2209
    %v2211 = vpop.xlane.xlu0 %2210
    %v2212 = vsel %vm364, %v2068, -inf
    %2213 = vmax.xlane.f32.xlu0 %v2212
    %v2214 = vpop.xlane.xlu0 %2213
    %v2215 = vsel %vm364, %v2091, -inf
    %2216 = vmax.xlane.f32.xlu0 %v2215
    %v2217 = vpop.xlane.xlu0 %2216
    %v2218 = vsel %vm364, %v2114, -inf
    %2219 = vmax.xlane.f32.xlu0 %v2218
    %v2220 = vpop.xlane.xlu0 %2219
    %v2221 = vsel %vm364, %v2137, -inf
    %2222 = vmax.xlane.f32.xlu0 %v2221
    %v2223 = vpop.xlane.xlu0 %2222
    %v2224 = vsel %vm364, %v2160, -inf
    %2225 = vmax.xlane.f32.xlu0 %v2224
    %v2226 = vpop.xlane.xlu0 %2225
    %v2227 = vsel %vm364, %v2183, -inf
    %2228 = vmax.xlane.f32.xlu0 %v2227
    %v2229 = vpop.xlane.xlu0 %2228
    %v2230 = vsel %vm364, %v2206, -inf
    %2231 = vmax.xlane.f32.xlu0 %v2230
    %v2232 = vpop.xlane.xlu0 %2231
    %v2233 = vsub.f32 %v2045, %v2211
    %v2234 = vsub.f32 %v2068, %v2214
    %v2235 = vsub.f32 %v2091, %v2217
    %v2236 = vsub.f32 %v2114, %v2220
    %v2237 = vsub.f32 %v2137, %v2223
    %v2238 = vsub.f32 %v2160, %v2226
    %v2239 = vsub.f32 %v2183, %v2229
    %v2240 = vsub.f32 %v2206, %v2232
    %v2241 = vmul.f32 %v2233, 1.442695
    %v2242 = vpow.pop %v2241
    %v2243 = vmul.f32 %v2234, 1.442695
    %v2244 = vpow.pop %v2243
    %v2245 = vmul.f32 %v2235, 1.442695
    %v2246 = vpow.pop %v2245
    %v2247 = vmul.f32 %v2236, 1.442695
    %v2248 = vpow.pop %v2247
    %v2249 = vmul.f32 %v2237, 1.442695
    %v2250 = vpow.pop %v2249
    %v2251 = vmul.f32 %v2238, 1.442695
    %v2252 = vpow.pop %v2251
    %v2253 = vmul.f32 %v2239, 1.442695
    %v2254 = vpow.pop %v2253
    %v2255 = vmul.f32 %v2240, 1.442695
    %v2256 = vpow.pop %v2255
    %v2257 = vsel %vm364, %v2242, 0.0
    %2258 = vadd.xlane.f32.xlu0 %v2257
    %v2259 = vpop.xlane.xlu0 %2258
    %v2260 = vsel %vm364, %v2244, 0.0
    %2261 = vadd.xlane.f32.xlu0 %v2260
    %v2262 = vpop.xlane.xlu0 %2261
    %v2263 = vsel %vm364, %v2246, 0.0
    %2264 = vadd.xlane.f32.xlu0 %v2263
    %v2265 = vpop.xlane.xlu0 %2264
    %v2266 = vsel %vm364, %v2248, 0.0
    %2267 = vadd.xlane.f32.xlu0 %v2266
    %v2268 = vpop.xlane.xlu0 %2267
    %v2269 = vsel %vm364, %v2250, 0.0
    %2270 = vadd.xlane.f32.xlu0 %v2269
    %v2271 = vpop.xlane.xlu0 %2270
    %v2272 = vsel %vm364, %v2252, 0.0
    %2273 = vadd.xlane.f32.xlu0 %v2272
    %v2274 = vpop.xlane.xlu0 %2273
    %v2275 = vsel %vm364, %v2254, 0.0
    %2276 = vadd.xlane.f32.xlu0 %v2275
    %v2277 = vpop.xlane.xlu0 %2276
    %v2278 = vsel %vm364, %v2256, 0.0
    %2279 = vadd.xlane.f32.xlu0 %v2278
    %v2280 = vpop.xlane.xlu0 %2279
    %v2281 = vrcp.pop %v2259
    %v2282 = vmul.f32 %v2259, %v2281
    %v2283 = vsub.f32 1.0, %v2282
    %v2284 = vmul.f32 %v2281, %v2283
    %v2285 = vadd.f32 %v2281, %v2284
    %vm2286 = vweird.f32 %v2259
    %vm2287 = vweird.f32 %v2281
    %vm2288 = vmor %vm2286, %vm2287
    %v2289 = vsel %vm2288, %v2281, %v2285
    %v2290 = vand.u32 2147483647, %v2259
    %vm2291 = vcmp.eq.f32.partialorder %v2290, 8.507059e+37
    %v2292 = vand.u32 %v2259, 2147483648
    %v2293 = vor.u32 1.1754944e-38, %v2292
    %v2294 = vsel %vm2291, %v2293, %v2289
    %v2295 = vmul.f32 %v2242, %v2294
    %v2296 = vrcp.pop %v2262
    %v2297 = vmul.f32 %v2262, %v2296
    %v2298 = vsub.f32 1.0, %v2297
    %v2299 = vmul.f32 %v2296, %v2298
    %v2300 = vadd.f32 %v2296, %v2299
    %vm2301 = vweird.f32 %v2262
    %vm2302 = vweird.f32 %v2296
    %vm2303 = vmor %vm2301, %vm2302
    %v2304 = vsel %vm2303, %v2296, %v2300
    %v2305 = vand.u32 2147483647, %v2262
    %vm2306 = vcmp.eq.f32.partialorder %v2305, 8.507059e+37
    %v2307 = vand.u32 %v2262, 2147483648
    %v2308 = vor.u32 1.1754944e-38, %v2307
    %v2309 = vsel %vm2306, %v2308, %v2304
    %v2310 = vmul.f32 %v2244, %v2309
    %v2311 = vrcp.pop %v2265
    %v2312 = vmul.f32 %v2265, %v2311
    %v2313 = vsub.f32 1.0, %v2312
    %v2314 = vmul.f32 %v2311, %v2313
    %v2315 = vadd.f32 %v2311, %v2314
    %vm2316 = vweird.f32 %v2265
    %vm2317 = vweird.f32 %v2311
    %vm2318 = vmor %vm2316, %vm2317
    %v2319 = vsel %vm2318, %v2311, %v2315
    %v2320 = vand.u32 2147483647, %v2265
    %vm2321 = vcmp.eq.f32.partialorder %v2320, 8.507059e+37
    %v2322 = vand.u32 %v2265, 2147483648
    %v2323 = vor.u32 1.1754944e-38, %v2322
    %v2324 = vsel %vm2321, %v2323, %v2319
    %v2325 = vmul.f32 %v2246, %v2324
    %v2326 = vrcp.pop %v2268
    %v2327 = vmul.f32 %v2268, %v2326
    %v2328 = vsub.f32 1.0, %v2327
    %v2329 = vmul.f32 %v2326, %v2328
    %v2330 = vadd.f32 %v2326, %v2329
    %vm2331 = vweird.f32 %v2268
    %vm2332 = vweird.f32 %v2326
    %vm2333 = vmor %vm2331, %vm2332
    %v2334 = vsel %vm2333, %v2326, %v2330
    %v2335 = vand.u32 2147483647, %v2268
    %vm2336 = vcmp.eq.f32.partialorder %v2335, 8.507059e+37
    %v2337 = vand.u32 %v2268, 2147483648
    %v2338 = vor.u32 1.1754944e-38, %v2337
    %v2339 = vsel %vm2336, %v2338, %v2334
    %v2340 = vmul.f32 %v2248, %v2339
    %v2341 = vrcp.pop %v2271
    %v2342 = vmul.f32 %v2271, %v2341
    %v2343 = vsub.f32 1.0, %v2342
    %v2344 = vmul.f32 %v2341, %v2343
    %v2345 = vadd.f32 %v2341, %v2344
    %vm2346 = vweird.f32 %v2271
    %vm2347 = vweird.f32 %v2341
    %vm2348 = vmor %vm2346, %vm2347
    %v2349 = vsel %vm2348, %v2341, %v2345
    %v2350 = vand.u32 2147483647, %v2271
    %vm2351 = vcmp.eq.f32.partialorder %v2350, 8.507059e+37
    %v2352 = vand.u32 %v2271, 2147483648
    %v2353 = vor.u32 1.1754944e-38, %v2352
    %v2354 = vsel %vm2351, %v2353, %v2349
    %v2355 = vmul.f32 %v2250, %v2354
    %v2356 = vrcp.pop %v2274
    %v2357 = vmul.f32 %v2274, %v2356
    %v2358 = vsub.f32 1.0, %v2357
    %v2359 = vmul.f32 %v2356, %v2358
    %v2360 = vadd.f32 %v2356, %v2359
    %vm2361 = vweird.f32 %v2274
    %vm2362 = vweird.f32 %v2356
    %vm2363 = vmor %vm2361, %vm2362
    %v2364 = vsel %vm2363, %v2356, %v2360
    %v2365 = vand.u32 2147483647, %v2274
    %vm2366 = vcmp.eq.f32.partialorder %v2365, 8.507059e+37
    %v2367 = vand.u32 %v2274, 2147483648
    %v2368 = vor.u32 1.1754944e-38, %v2367
    %v2369 = vsel %vm2366, %v2368, %v2364
    %v2370 = vmul.f32 %v2252, %v2369
    %v2371 = vrcp.pop %v2277
    %v2372 = vmul.f32 %v2277, %v2371
    %v2373 = vsub.f32 1.0, %v2372
    %v2374 = vmul.f32 %v2371, %v2373
    %v2375 = vadd.f32 %v2371, %v2374
    %vm2376 = vweird.f32 %v2277
    %vm2377 = vweird.f32 %v2371
    %vm2378 = vmor %vm2376, %vm2377
    %v2379 = vsel %vm2378, %v2371, %v2375
    %v2380 = vand.u32 2147483647, %v2277
    %vm2381 = vcmp.eq.f32.partialorder %v2380, 8.507059e+37
    %v2382 = vand.u32 %v2277, 2147483648
    %v2383 = vor.u32 1.1754944e-38, %v2382
    %v2384 = vsel %vm2381, %v2383, %v2379
    %v2385 = vmul.f32 %v2254, %v2384
    %v2386 = vrcp.pop %v2280
    %v2387 = vmul.f32 %v2280, %v2386
    %v2388 = vsub.f32 1.0, %v2387
    %v2389 = vmul.f32 %v2386, %v2388
    %v2390 = vadd.f32 %v2386, %v2389
    %vm2391 = vweird.f32 %v2280
    %vm2392 = vweird.f32 %v2386
    %vm2393 = vmor %vm2391, %vm2392
    %v2394 = vsel %vm2393, %v2386, %v2390
    %v2395 = vand.u32 2147483647, %v2280
    %vm2396 = vcmp.eq.f32.partialorder %v2395, 8.507059e+37
    %v2397 = vand.u32 %v2280, 2147483648
    %v2398 = vor.u32 1.1754944e-38, %v2397
    %v2399 = vsel %vm2396, %v2398, %v2394
    %v2400 = vmul.f32 %v2256, %v2399
    %v2401 = vpack.c.bf16 %v2295, %v2295
    %v2402 = vpack.c.bf16 %v2310, %v2310
    %v2403 = vpack.c.bf16 %v2325, %v2325
    %v2404 = vpack.c.bf16 %v2340, %v2340
    %v2405 = vpack.c.bf16 %v2355, %v2355
    %v2406 = vpack.c.bf16 %v2370, %v2370
    %v2407 = vpack.c.bf16 %v2385, %v2385
    %v2408 = vpack.c.bf16 %v2400, %v2400
    %2409 = vrot.lane.b32.xlu0 %v361, 40
    %v2410 = vpop.permute.xlu0 %2409
    %v2412 = vsel %vm364, %v2401, 0
    %v2415 = vsel %vm757, %v2410, 0
    %2417 = vmatpush.bf16.msra.mxu0 0
    %2418 = vmatpush.bf16.msra.mxu0 0
    %2419 = vmatpush.bf16.msra.mxu0 0
    %2420 = vmatpush.bf16.msra.mxu0 0
    %2421 = vmatpush.bf16.msra.mxu0 0
    %2422 = vmatpush.bf16.msra.mxu0 0
    %2423 = vmatpush.bf16.msra.mxu0 0
    %2424 = vmatpush.bf16.msra.mxu0 %v2415
    %2425 = vmatmul.bf16.gmra.mxu0 %v2412
    %v2426 = vpop.f32.mrf.mxu0
    %v2427 = vadd.f32 0.0, %v2426
    %v2428 = vpop.f32.mrf.mxu0
    %2429 = vdwg.mxu0
    %2430 = vrot.lane.b32.xlu0 %v386, 40
    %v2431 = vpop.permute.xlu0 %2430
    %v2433 = vsel %vm364, %v2402, 0
    %v2436 = vsel %vm757, %v2431, 0
    %2438 = vmatpush.bf16.msra.mxu0 0
    %2439 = vmatpush.bf16.msra.mxu0 0
    %2440 = vmatpush.bf16.msra.mxu0 0
    %2441 = vmatpush.bf16.msra.mxu0 0
    %2442 = vmatpush.bf16.msra.mxu0 0
    %2443 = vmatpush.bf16.msra.mxu0 0
    %2444 = vmatpush.bf16.msra.mxu0 0
    %2445 = vmatpush.bf16.msra.mxu0 %v2436
    %2446 = vmatmul.bf16.gmra.mxu0 %v2433
    %v2447 = vpop.f32.mrf.mxu0
    %v2448 = vadd.f32 0.0, %v2447
    %v2449 = vpop.f32.mrf.mxu0
    %2450 = vdwg.mxu0
    %2451 = vrot.lane.b32.xlu0 %v410, 40
    %v2452 = vpop.permute.xlu0 %2451
    %v2454 = vsel %vm364, %v2403, 0
    %v2457 = vsel %vm757, %v2452, 0
    %2459 = vmatpush.bf16.msra.mxu0 0
    %2460 = vmatpush.bf16.msra.mxu0 0
    %2461 = vmatpush.bf16.msra.mxu0 0
    %2462 = vmatpush.bf16.msra.mxu0 0
    %2463 = vmatpush.bf16.msra.mxu0 0
    %2464 = vmatpush.bf16.msra.mxu0 0
    %2465 = vmatpush.bf16.msra.mxu0 0
    %2466 = vmatpush.bf16.msra.mxu0 %v2457
    %2467 = vmatmul.bf16.gmra.mxu0 %v2454
    %v2468 = vpop.f32.mrf.mxu0
    %v2469 = vadd.f32 0.0, %v2468
    %v2470 = vpop.f32.mrf.mxu0
    %2471 = vdwg.mxu0
    %2472 = vrot.lane.b32.xlu0 %v434, 40
    %v2473 = vpop.permute.xlu0 %2472
    %v2475 = vsel %vm364, %v2404, 0
    %v2478 = vsel %vm757, %v2473, 0
    %2480 = vmatpush.bf16.msra.mxu0 0
    %2481 = vmatpush.bf16.msra.mxu0 0
    %2482 = vmatpush.bf16.msra.mxu0 0
    %2483 = vmatpush.bf16.msra.mxu0 0
    %2484 = vmatpush.bf16.msra.mxu0 0
    %2485 = vmatpush.bf16.msra.mxu0 0
    %2486 = vmatpush.bf16.msra.mxu0 0
    %2487 = vmatpush.bf16.msra.mxu0 %v2478
    %2488 = vmatmul.bf16.gmra.mxu0 %v2475
    %v2489 = vpop.f32.mrf.mxu0
    %v2490 = vadd.f32 0.0, %v2489
    %v2491 = vpop.f32.mrf.mxu0
    %2492 = vdwg.mxu0
    %2493 = vrot.lane.b32.xlu0 %v458, 40
    %v2494 = vpop.permute.xlu0 %2493
    %v2496 = vsel %vm364, %v2405, 0
    %v2499 = vsel %vm757, %v2494, 0
    %2501 = vmatpush.bf16.msra.mxu0 0
    %2502 = vmatpush.bf16.msra.mxu0 0
    %2503 = vmatpush.bf16.msra.mxu0 0
    %2504 = vmatpush.bf16.msra.mxu0 0
    %2505 = vmatpush.bf16.msra.mxu0 0
    %2506 = vmatpush.bf16.msra.mxu0 0
    %2507 = vmatpush.bf16.msra.mxu0 0
    %2508 = vmatpush.bf16.msra.mxu0 %v2499
    %2509 = vmatmul.bf16.gmra.mxu0 %v2496
    %v2510 = vpop.f32.mrf.mxu0
    %v2511 = vadd.f32 0.0, %v2510
    %v2512 = vpop.f32.mrf.mxu0
    %2513 = vdwg.mxu0
    %2514 = vrot.lane.b32.xlu0 %v482, 40
    %v2515 = vpop.permute.xlu0 %2514
    %v2517 = vsel %vm364, %v2406, 0
    %v2520 = vsel %vm757, %v2515, 0
    %2522 = vmatpush.bf16.msra.mxu0 0
    %2523 = vmatpush.bf16.msra.mxu0 0
    %2524 = vmatpush.bf16.msra.mxu0 0
    %2525 = vmatpush.bf16.msra.mxu0 0
    %2526 = vmatpush.bf16.msra.mxu0 0
    %2527 = vmatpush.bf16.msra.mxu0 0
    %2528 = vmatpush.bf16.msra.mxu0 0
    %2529 = vmatpush.bf16.msra.mxu0 %v2520
    %2530 = vmatmul.bf16.gmra.mxu0 %v2517
    %v2531 = vpop.f32.mrf.mxu0
    %v2532 = vadd.f32 0.0, %v2531
    %v2533 = vpop.f32.mrf.mxu0
    %2534 = vdwg.mxu0
    %2535 = vrot.lane.b32.xlu0 %v506, 40
    %v2536 = vpop.permute.xlu0 %2535
    %v2538 = vsel %vm364, %v2407, 0
    %v2541 = vsel %vm757, %v2536, 0
    %2543 = vmatpush.bf16.msra.mxu0 0
    %2544 = vmatpush.bf16.msra.mxu0 0
    %2545 = vmatpush.bf16.msra.mxu0 0
    %2546 = vmatpush.bf16.msra.mxu0 0
    %2547 = vmatpush.bf16.msra.mxu0 0
    %2548 = vmatpush.bf16.msra.mxu0 0
    %2549 = vmatpush.bf16.msra.mxu0 0
    %2550 = vmatpush.bf16.msra.mxu0 %v2541
    %2551 = vmatmul.bf16.gmra.mxu0 %v2538
    %v2552 = vpop.f32.mrf.mxu0
    %v2553 = vadd.f32 0.0, %v2552
    %v2554 = vpop.f32.mrf.mxu0
    %2555 = vdwg.mxu0
    %2556 = vrot.lane.b32.xlu0 %v530, 40
    %v2557 = vpop.permute.xlu0 %2556
    %v2559 = vsel %vm364, %v2408, 0
    %v2562 = vsel %vm757, %v2557, 0
    %2564 = vmatpush.bf16.msra.mxu0 0
    %2565 = vmatpush.bf16.msra.mxu0 0
    %2566 = vmatpush.bf16.msra.mxu0 0
    %2567 = vmatpush.bf16.msra.mxu0 0
    %2568 = vmatpush.bf16.msra.mxu0 0
    %2569 = vmatpush.bf16.msra.mxu0 0
    %2570 = vmatpush.bf16.msra.mxu0 0
    %2571 = vmatpush.bf16.msra.mxu0 %v2562
    %2572 = vmatmul.bf16.gmra.mxu0 %v2559
    %v2573 = vpop.f32.mrf.mxu0
    %v2574 = vadd.f32 0.0, %v2573
    %v2575 = vpop.f32.mrf.mxu0
    %2576 = vdwg.mxu0
    %2585 = vrot.lane.b32.xlu0 %v1323, 8
    %v2586 = vpop.permute.xlu0 %2585
    %2587 = vrot.lane.b32.xlu0 %v1344, 8
    %v2588 = vpop.permute.xlu0 %2587
    %2589 = vrot.lane.b32.xlu0 %v1365, 8
    %v2590 = vpop.permute.xlu0 %2589
    %2591 = vrot.lane.b32.xlu0 %v1386, 8
    %v2592 = vpop.permute.xlu0 %2591
    %2593 = vrot.lane.b32.xlu0 %v1407, 8
    %v2594 = vpop.permute.xlu0 %2593
    %2595 = vrot.lane.b32.xlu0 %v1428, 8
    %v2596 = vpop.permute.xlu0 %2595
    %2597 = vrot.lane.b32.xlu0 %v1449, 8
    %v2598 = vpop.permute.xlu0 %2597
    %2599 = vrot.lane.b32.xlu0 %v1470, 8
    %v2600 = vpop.permute.xlu0 %2599
    %2617 = vrot.lane.b32.xlu0 %v1875, 16
    %v2618 = vpop.permute.xlu0 %2617
    %2619 = vrot.lane.b32.xlu0 %v1896, 16
    %v2620 = vpop.permute.xlu0 %2619
    %2621 = vrot.lane.b32.xlu0 %v1917, 16
    %v2622 = vpop.permute.xlu0 %2621
    %2623 = vrot.lane.b32.xlu0 %v1938, 16
    %v2624 = vpop.permute.xlu0 %2623
    %2625 = vrot.lane.b32.xlu0 %v1959, 16
    %v2626 = vpop.permute.xlu0 %2625
    %2627 = vrot.lane.b32.xlu0 %v1980, 16
    %v2628 = vpop.permute.xlu0 %2627
    %2629 = vrot.lane.b32.xlu0 %v2001, 16
    %v2630 = vpop.permute.xlu0 %2629
    %2631 = vrot.lane.b32.xlu0 %v2022, 16
    %v2632 = vpop.permute.xlu0 %2631
    %2649 = vrot.lane.b32.xlu0 %v2427, 24
    %v2650 = vpop.permute.xlu0 %2649
    %2651 = vrot.lane.b32.xlu0 %v2448, 24
    %v2652 = vpop.permute.xlu0 %2651
    %2653 = vrot.lane.b32.xlu0 %v2469, 24
    %v2654 = vpop.permute.xlu0 %2653
    %2655 = vrot.lane.b32.xlu0 %v2490, 24
    %v2656 = vpop.permute.xlu0 %2655
    %2657 = vrot.lane.b32.xlu0 %v2511, 24
    %v2658 = vpop.permute.xlu0 %2657
    %2659 = vrot.lane.b32.xlu0 %v2532, 24
    %v2660 = vpop.permute.xlu0 %2659
    %2661 = vrot.lane.b32.xlu0 %v2553, 24
    %v2662 = vpop.permute.xlu0 %2661
    %2663 = vrot.lane.b32.xlu0 %v2574, 24
    %v2664 = vpop.permute.xlu0 %2663
    %v2673 = vsel %vm364, %v771, %v2586
    %v2674 = vsel %vm364, %v792, %v2588
    %v2675 = vsel %vm364, %v813, %v2590
    %v2676 = vsel %vm364, %v834, %v2592
    %v2677 = vsel %vm364, %v855, %v2594
    %v2678 = vsel %vm364, %v876, %v2596
    %v2679 = vsel %vm364, %v897, %v2598
    %v2680 = vsel %vm364, %v918, %v2600
    %vm2681 = vcmask 130048
    %v2682 = vsel %vm2681, %v2673, %v2618
    %v2683 = vsel %vm2681, %v2674, %v2620
    %v2684 = vsel %vm2681, %v2675, %v2622
    %v2685 = vsel %vm2681, %v2676, %v2624
    %v2686 = vsel %vm2681, %v2677, %v2626
    %v2687 = vsel %vm2681, %v2678, %v2628
    %v2688 = vsel %vm2681, %v2679, %v2630
    %v2689 = vsel %vm2681, %v2680, %v2632
    %vm2690 = vcmask 195584
    %v2691 = vsel %vm2690, %v2682, %v2650
    %v2692 = vsel %vm2690, %v2683, %v2652
    %v2693 = vsel %vm2690, %v2684, %v2654
    %v2694 = vsel %vm2690, %v2685, %v2656
    %v2695 = vsel %vm2690, %v2686, %v2658
    %v2696 = vsel %vm2690, %v2687, %v2660
    %v2697 = vsel %vm2690, %v2688, %v2662
    %v2698 = vsel %vm2690, %v2689, %v2664
    %v2699 = vpack.c.bf16 %v2692, %v2691
    %v2700 = vpack.c.bf16 %v2694, %v2693
    %v2701 = vpack.c.bf16 %v2696, %v2695
    %v2702 = vpack.c.bf16 %v2698, %v2697
    %v2703 = vld [vmem:[%s7] sm:$0xf]
    %v2704 = vld [vmem:[%s7 + $0x4] sm:$0xf]
    %v2705 = vld [vmem:[%s7 + $0x8] sm:$0xf]
    %v2706 = vld [vmem:[%s7 + $0xc] sm:$0xf]
    %v2707 = vld [vmem:[%s8] sm:$0x1]
    %v2709 = vperm.slane %v2707, 0
    %v2715 = vunpack.c.l.b16 %v2703
    %v2716 = vunpack.c.l.b16 %v2704
    %v2717 = vunpack.c.l.b16 %v2705
    %v2718 = vunpack.c.l.b16 %v2706
    %v2719 = vpack.c.b16 %v2716, %v2715
    %v2720 = vpack.c.b16 %v2718, %v2717
    %v2724 = vsel %vm309, %v2699, 0
    %v2727 = vsel %vm309, %v2700, 0
    %v2730 = vsel %vm309, %v2701, 0
    %v2733 = vsel %vm309, %v2702, 0
    %2735 = vmatpush.bf16.msra.mxu0 0
    %2736 = vmatpush.bf16.msra.mxu0 0
    %2737 = vmatpush.bf16.msra.mxu0 0
    %2738 = vmatpush.bf16.msra.mxu0 0
    %2739 = vmatpush.bf16.msra.mxu0 0
    %2740 = vmatpush.bf16.msra.mxu0 0
    %2741 = vmatpush.bf16.msra.mxu0 %v2720
    %2742 = vmatpush.bf16.msra.mxu0 %v2719
    %2743 = vmatmul.bf16.gmra.mxu0 %v2724
    %v2744 = vpop.f32.mrf.mxu0
    %v2745 = vadd.f32 %v2709, %v2744
    %v2746 = vpop.f32.mrf.mxu0
    %v2747 = vadd.f32 %v2709, %v2746
    %2748 = vmatmul.bf16.gmra.mxu0 %v2727
    %v2749 = vpop.f32.mrf.mxu0
    %v2750 = vadd.f32 %v2709, %v2749
    %v2751 = vpop.f32.mrf.mxu0
    %v2752 = vadd.f32 %v2709, %v2751
    %2753 = vmatmul.bf16.gmra.mxu0 %v2730
    %v2754 = vpop.f32.mrf.mxu0
    %v2755 = vadd.f32 %v2709, %v2754
    %v2756 = vpop.f32.mrf.mxu0
    %v2757 = vadd.f32 %v2709, %v2756
    %2758 = vmatmul.bf16.gmra.mxu0 %v2733
    %v2759 = vpop.f32.mrf.mxu0
    %v2760 = vadd.f32 %v2709, %v2759
    %v2761 = vpop.f32.mrf.mxu0
    %v2762 = vadd.f32 %v2709, %v2761
    %2763 = vdwg.mxu0
    %2772 = vrot.lane.b32.xlu0 %v2745, 32
    %v2773 = vpop.permute.xlu0 %2772
    %2774 = vrot.lane.b32.xlu0 %v2747, 32
    %v2775 = vpop.permute.xlu0 %2774
    %2776 = vrot.lane.b32.xlu0 %v2750, 32
    %v2777 = vpop.permute.xlu0 %2776
    %2778 = vrot.lane.b32.xlu0 %v2752, 32
    %v2779 = vpop.permute.xlu0 %2778
    %2780 = vrot.lane.b32.xlu0 %v2755, 32
    %v2781 = vpop.permute.xlu0 %2780
    %2782 = vrot.lane.b32.xlu0 %v2757, 32
    %v2783 = vpop.permute.xlu0 %2782
    %2784 = vrot.lane.b32.xlu0 %v2760, 32
    %v2785 = vpop.permute.xlu0 %2784
    %2786 = vrot.lane.b32.xlu0 %v2762, 32
    %v2787 = vpop.permute.xlu0 %2786
    %v2796 = vadd.f32 %v265, %v2773
    %v2797 = vadd.f32 %v266, %v2775
    %v2798 = vadd.f32 %v267, %v2777
    %v2799 = vadd.f32 %v268, %v2779
    %v2800 = vadd.f32 %v269, %v2781
    %v2801 = vadd.f32 %v270, %v2783
    %v2802 = vadd.f32 %v271, %v2785
    %v2803 = vadd.f32 %v272, %v2787
    %v2804 = vld [vmem:[%s9] sm:$0x1]
    %v2805 = vld [vmem:[%s10] sm:$0x1]
    %2814 = vrot.lane.b32.xlu0 %v2796, 96
    %v2815 = vpop.permute.xlu0 %2814
    %2816 = vrot.lane.b32.xlu0 %v2797, 96
    %v2817 = vpop.permute.xlu0 %2816
    %2818 = vrot.lane.b32.xlu0 %v2798, 96
    %v2819 = vpop.permute.xlu0 %2818
    %2820 = vrot.lane.b32.xlu0 %v2799, 96
    %v2821 = vpop.permute.xlu0 %2820
    %2822 = vrot.lane.b32.xlu0 %v2800, 96
    %v2823 = vpop.permute.xlu0 %2822
    %2824 = vrot.lane.b32.xlu0 %v2801, 96
    %v2825 = vpop.permute.xlu0 %2824
    %2826 = vrot.lane.b32.xlu0 %v2802, 96
    %v2827 = vpop.permute.xlu0 %2826
    %2828 = vrot.lane.b32.xlu0 %v2803, 96
    %v2829 = vpop.permute.xlu0 %2828
    %v2838 = vsel %vm309, %v2815, 0.0
    %2839 = vadd.xlane.f32.xlu0 %v2838
    %v2840 = vpop.xlane.xlu0 %2839
    %v2841 = vsel %vm309, %v2817, 0.0
    %2842 = vadd.xlane.f32.xlu0 %v2841
    %v2843 = vpop.xlane.xlu0 %2842
    %v2844 = vsel %vm309, %v2819, 0.0
    %2845 = vadd.xlane.f32.xlu0 %v2844
    %v2846 = vpop.xlane.xlu0 %2845
    %v2847 = vsel %vm309, %v2821, 0.0
    %2848 = vadd.xlane.f32.xlu0 %v2847
    %v2849 = vpop.xlane.xlu0 %2848
    %v2850 = vsel %vm309, %v2823, 0.0
    %2851 = vadd.xlane.f32.xlu0 %v2850
    %v2852 = vpop.xlane.xlu0 %2851
    %v2853 = vsel %vm309, %v2825, 0.0
    %2854 = vadd.xlane.f32.xlu0 %v2853
    %v2855 = vpop.xlane.xlu0 %2854
    %v2856 = vsel %vm309, %v2827, 0.0
    %2857 = vadd.xlane.f32.xlu0 %v2856
    %v2858 = vpop.xlane.xlu0 %2857
    %v2859 = vsel %vm309, %v2829, 0.0
    %2860 = vadd.xlane.f32.xlu0 %v2859
    %v2861 = vpop.xlane.xlu0 %2860
    %v2862 = vrcp.pop 32.0
    %v2863 = vmul.f32 32.0, %v2862
    %v2864 = vsub.f32 1.0, %v2863
    %v2865 = vmul.f32 %v2862, %v2864
    %v2866 = vadd.f32 %v2862, %v2865
    %vm2867 = vweird.f32 %v2862
    %v2868 = vsel %vm2867, %v2862, %v2866
    %v2869 = vmul.f32 %v2840, %v2868
    %v2870 = vmul.f32 %v2843, %v2868
    %v2871 = vmul.f32 %v2846, %v2868
    %v2872 = vmul.f32 %v2849, %v2868
    %v2873 = vmul.f32 %v2852, %v2868
    %v2874 = vmul.f32 %v2855, %v2868
    %v2875 = vmul.f32 %v2858, %v2868
    %v2876 = vmul.f32 %v2861, %v2868
    %v2877 = vsub.f32 %v2796, %v2869
    %v2878 = vsub.f32 %v2797, %v2870
    %v2879 = vsub.f32 %v2798, %v2871
    %v2880 = vsub.f32 %v2799, %v2872
    %v2881 = vsub.f32 %v2800, %v2873
    %v2882 = vsub.f32 %v2801, %v2874
    %v2883 = vsub.f32 %v2802, %v2875
    %v2884 = vsub.f32 %v2803, %v2876
    %v2885 = vmul.f32 %v2877, %v2877
    %v2886 = vmul.f32 %v2878, %v2878
    %v2887 = vmul.f32 %v2879, %v2879
    %v2888 = vmul.f32 %v2880, %v2880
    %v2889 = vmul.f32 %v2881, %v2881
    %v2890 = vmul.f32 %v2882, %v2882
    %v2891 = vmul.f32 %v2883, %v2883
    %v2892 = vmul.f32 %v2884, %v2884
    %2901 = vrot.lane.b32.xlu0 %v2885, 96
    %v2902 = vpop.permute.xlu0 %2901
    %2903 = vrot.lane.b32.xlu0 %v2886, 96
    %v2904 = vpop.permute.xlu0 %2903
    %2905 = vrot.lane.b32.xlu0 %v2887, 96
    %v2906 = vpop.permute.xlu0 %2905
    %2907 = vrot.lane.b32.xlu0 %v2888, 96
    %v2908 = vpop.permute.xlu0 %2907
    %2909 = vrot.lane.b32.xlu0 %v2889, 96
    %v2910 = vpop.permute.xlu0 %2909
    %2911 = vrot.lane.b32.xlu0 %v2890, 96
    %v2912 = vpop.permute.xlu0 %2911
    %2913 = vrot.lane.b32.xlu0 %v2891, 96
    %v2914 = vpop.permute.xlu0 %2913
    %2915 = vrot.lane.b32.xlu0 %v2892, 96
    %v2916 = vpop.permute.xlu0 %2915
    %v2925 = vsel %vm309, %v2902, 0.0
    %2926 = vadd.xlane.f32.xlu0 %v2925
    %v2927 = vpop.xlane.xlu0 %2926
    %v2928 = vsel %vm309, %v2904, 0.0
    %2929 = vadd.xlane.f32.xlu0 %v2928
    %v2930 = vpop.xlane.xlu0 %2929
    %v2931 = vsel %vm309, %v2906, 0.0
    %2932 = vadd.xlane.f32.xlu0 %v2931
    %v2933 = vpop.xlane.xlu0 %2932
    %v2934 = vsel %vm309, %v2908, 0.0
    %2935 = vadd.xlane.f32.xlu0 %v2934
    %v2936 = vpop.xlane.xlu0 %2935
    %v2937 = vsel %vm309, %v2910, 0.0
    %2938 = vadd.xlane.f32.xlu0 %v2937
    %v2939 = vpop.xlane.xlu0 %2938
    %v2940 = vsel %vm309, %v2912, 0.0
    %2941 = vadd.xlane.f32.xlu0 %v2940
    %v2942 = vpop.xlane.xlu0 %2941
    %v2943 = vsel %vm309, %v2914, 0.0
    %2944 = vadd.xlane.f32.xlu0 %v2943
    %v2945 = vpop.xlane.xlu0 %2944
    %v2946 = vsel %vm309, %v2916, 0.0
    %2947 = vadd.xlane.f32.xlu0 %v2946
    %v2948 = vpop.xlane.xlu0 %2947
    %v2949 = vmul.f32 %v2927, %v2868
    %v2950 = vmul.f32 %v2930, %v2868
    %v2951 = vmul.f32 %v2933, %v2868
    %v2952 = vmul.f32 %v2936, %v2868
    %v2953 = vmul.f32 %v2939, %v2868
    %v2954 = vmul.f32 %v2942, %v2868
    %v2955 = vmul.f32 %v2945, %v2868
    %v2956 = vmul.f32 %v2948, %v2868
    %v2957 = vadd.f32 %v2949, 1e-05
    %v2958 = vadd.f32 %v2950, 1e-05
    %v2959 = vadd.f32 %v2951, 1e-05
    %v2960 = vadd.f32 %v2952, 1e-05
    %v2961 = vadd.f32 %v2953, 1e-05
    %v2962 = vadd.f32 %v2954, 1e-05
    %v2963 = vadd.f32 %v2955, 1e-05
    %v2964 = vadd.f32 %v2956, 1e-05
    %v2965 = vrsqrt.pop %v2957
    %v2966 = vmul.f32 %v2965, %v2957
    %v2967 = vmul.f32 %v2966, %v2965
    %v2968 = vmul.f32 0.5, %v2967
    %v2969 = vsub.f32 1.5, %v2968
    %v2970 = vmul.f32 %v2965, %v2969
    %vm2971 = vweird.f32 %v2957
    %vm2972 = vweird.f32 %v2965
    %vm2973 = vmor %vm2971, %vm2972
    %v2974 = vsel %vm2973, %v2965, %v2970
    %v2975 = vrsqrt.pop %v2958
    %v2976 = vmul.f32 %v2975, %v2958
    %v2977 = vmul.f32 %v2976, %v2975
    %v2978 = vmul.f32 0.5, %v2977
    %v2979 = vsub.f32 1.5, %v2978
    %v2980 = vmul.f32 %v2975, %v2979
    %vm2981 = vweird.f32 %v2958
    %vm2982 = vweird.f32 %v2975
    %vm2983 = vmor %vm2981, %vm2982
    %v2984 = vsel %vm2983, %v2975, %v2980
    %v2985 = vrsqrt.pop %v2959
    %v2986 = vmul.f32 %v2985, %v2959
    %v2987 = vmul.f32 %v2986, %v2985
    %v2988 = vmul.f32 0.5, %v2987
    %v2989 = vsub.f32 1.5, %v2988
    %v2990 = vmul.f32 %v2985, %v2989
    %vm2991 = vweird.f32 %v2959
    %vm2992 = vweird.f32 %v2985
    %vm2993 = vmor %vm2991, %vm2992
    %v2994 = vsel %vm2993, %v2985, %v2990
    %v2995 = vrsqrt.pop %v2960
    %v2996 = vmul.f32 %v2995, %v2960
    %v2997 = vmul.f32 %v2996, %v2995
    %v2998 = vmul.f32 0.5, %v2997
    %v2999 = vsub.f32 1.5, %v2998
    %v3000 = vmul.f32 %v2995, %v2999
    %vm3001 = vweird.f32 %v2960
    %vm3002 = vweird.f32 %v2995
    %vm3003 = vmor %vm3001, %vm3002
    %v3004 = vsel %vm3003, %v2995, %v3000
    %v3005 = vrsqrt.pop %v2961
    %v3006 = vmul.f32 %v3005, %v2961
    %v3007 = vmul.f32 %v3006, %v3005
    %v3008 = vmul.f32 0.5, %v3007
    %v3009 = vsub.f32 1.5, %v3008
    %v3010 = vmul.f32 %v3005, %v3009
    %vm3011 = vweird.f32 %v2961
    %vm3012 = vweird.f32 %v3005
    %vm3013 = vmor %vm3011, %vm3012
    %v3014 = vsel %vm3013, %v3005, %v3010
    %v3015 = vrsqrt.pop %v2962
    %v3016 = vmul.f32 %v3015, %v2962
    %v3017 = vmul.f32 %v3016, %v3015
    %v3018 = vmul.f32 0.5, %v3017
    %v3019 = vsub.f32 1.5, %v3018
    %v3020 = vmul.f32 %v3015, %v3019
    %vm3021 = vweird.f32 %v2962
    %vm3022 = vweird.f32 %v3015
    %vm3023 = vmor %vm3021, %vm3022
    %v3024 = vsel %vm3023, %v3015, %v3020
    %v3025 = vrsqrt.pop %v2963
    %v3026 = vmul.f32 %v3025, %v2963
    %v3027 = vmul.f32 %v3026, %v3025
    %v3028 = vmul.f32 0.5, %v3027
    %v3029 = vsub.f32 1.5, %v3028
    %v3030 = vmul.f32 %v3025, %v3029
    %vm3031 = vweird.f32 %v2963
    %vm3032 = vweird.f32 %v3025
    %vm3033 = vmor %vm3031, %vm3032
    %v3034 = vsel %vm3033, %v3025, %v3030
    %v3035 = vrsqrt.pop %v2964
    %v3036 = vmul.f32 %v3035, %v2964
    %v3037 = vmul.f32 %v3036, %v3035
    %v3038 = vmul.f32 0.5, %v3037
    %v3039 = vsub.f32 1.5, %v3038
    %v3040 = vmul.f32 %v3035, %v3039
    %vm3041 = vweird.f32 %v2964
    %vm3042 = vweird.f32 %v3035
    %vm3043 = vmor %vm3041, %vm3042
    %v3044 = vsel %vm3043, %v3035, %v3040
    %v3045 = vmul.f32 %v2877, %v2974
    %v3046 = vmul.f32 %v2878, %v2984
    %v3047 = vmul.f32 %v2879, %v2994
    %v3048 = vmul.f32 %v2880, %v3004
    %v3049 = vmul.f32 %v2881, %v3014
    %v3050 = vmul.f32 %v2882, %v3024
    %v3051 = vmul.f32 %v2883, %v3034
    %v3052 = vmul.f32 %v2884, %v3044
    %v3054 = vperm.slane %v2804, 0
    %3055 = vrot.lane.b32.xlu0 %v3054, 32
    %v3056 = vpop.permute.xlu0 %3055
    %v3058 = vmul.f32 %v3045, %v3056
    %v3059 = vmul.f32 %v3046, %v3056
    %v3060 = vmul.f32 %v3047, %v3056
    %v3061 = vmul.f32 %v3048, %v3056
    %v3062 = vmul.f32 %v3049, %v3056
    %v3063 = vmul.f32 %v3050, %v3056
    %v3064 = vmul.f32 %v3051, %v3056
    %v3065 = vmul.f32 %v3052, %v3056
    %v3067 = vperm.slane %v2805, 0
    %3068 = vrot.lane.b32.xlu0 %v3067, 32
    %v3069 = vpop.permute.xlu0 %3068
    %v3071 = vadd.f32 %v3058, %v3069
    %v3072 = vadd.f32 %v3059, %v3069
    %v3073 = vadd.f32 %v3060, %v3069
    %v3074 = vadd.f32 %v3061, %v3069
    %v3075 = vadd.f32 %v3062, %v3069
    %v3076 = vadd.f32 %v3063, %v3069
    %v3077 = vadd.f32 %v3064, %v3069
    %v3078 = vadd.f32 %v3065, %v3069
    %v3079 = vpack.c.bf16 %v3072, %v3071
    %v3080 = vpack.c.bf16 %v3074, %v3073
    %v3081 = vpack.c.bf16 %v3076, %v3075
    %v3082 = vpack.c.bf16 %v3078, %v3077
    %v3083 = vld [vmem:[%s11] sm:$0xff]
    %v3084 = vld [vmem:[%s11 + $0x8] sm:$0xff]
    %v3085 = vld [vmem:[%s11 + $0x10] sm:$0xff]
    %v3086 = vld [vmem:[%s11 + $0x18] sm:$0xff]
    %v3087 = vld [vmem:[%s11 + $0x20] sm:$0xff]
    %v3088 = vld [vmem:[%s11 + $0x28] sm:$0xff]
    %v3089 = vld [vmem:[%s11 + $0x30] sm:$0xff]
    %v3090 = vld [vmem:[%s11 + $0x38] sm:$0xff]
    %v3091 = vld [vmem:[%s11 + $0x40] sm:$0xff]
    %v3092 = vld [vmem:[%s11 + $0x48] sm:$0xff]
    %v3093 = vld [vmem:[%s11 + $0x50] sm:$0xff]
    %v3094 = vld [vmem:[%s11 + $0x58] sm:$0xff]
    %v3095 = vld [vmem:[%s11 + $0x60] sm:$0xff]
    %v3096 = vld [vmem:[%s11 + $0x68] sm:$0xff]
    %v3097 = vld [vmem:[%s11 + $0x70] sm:$0xff]
    %v3098 = vld [vmem:[%s11 + $0x78] sm:$0xff]
    %v3099 = vld [vmem:[%s11 + $0x80] sm:$0xff]
    %v3100 = vld [vmem:[%s11 + $0x88] sm:$0xff]
    %v3101 = vld [vmem:[%s11 + $0x90] sm:$0xff]
    %v3102 = vld [vmem:[%s11 + $0x98] sm:$0xff]
    %v3103 = vld [vmem:[%s11 + $0xa0] sm:$0xff]
    %v3104 = vld [vmem:[%s11 + $0xa8] sm:$0xff]
    %v3105 = vld [vmem:[%s11 + $0xb0] sm:$0xff]
    %v3106 = vld [vmem:[%s11 + $0xb8] sm:$0xff]
    %v3107 = vld [vmem:[%s11 + $0xc0] sm:$0xff]
    %v3108 = vld [vmem:[%s11 + $0xc8] sm:$0xff]
    %v3109 = vld [vmem:[%s11 + $0xd0] sm:$0xff]
    %v3110 = vld [vmem:[%s11 + $0xd8] sm:$0xff]
    %v3111 = vld [vmem:[%s11 + $0xe0] sm:$0xff]
    %v3112 = vld [vmem:[%s11 + $0xe8] sm:$0xff]
    %v3113 = vld [vmem:[%s11 + $0xf0] sm:$0xff]
    %v3114 = vld [vmem:[%s11 + $0xf8] sm:$0xff]
    %v3115 = vld [vmem:[%s12] sm:$0xff]
    %v3116 = vld [vmem:[%s12 + $0x8] sm:$0xff]
    %v3119 = vperm.slane %v3115, 0
    %v3120 = vperm.slane %v3115, 1
    %v3121 = vperm.slane %v3115, 2
    %v3122 = vperm.slane %v3115, 3
    %v3123 = vperm.slane %v3115, 4
    %v3124 = vperm.slane %v3115, 5
    %v3125 = vperm.slane %v3115, 6
    %v3126 = vperm.slane %v3115, 7
    %v3127 = vperm.slane %v3116, 0
    %v3128 = vperm.slane %v3116, 1
    %v3129 = vperm.slane %v3116, 2
    %v3130 = vperm.slane %v3116, 3
    %v3131 = vperm.slane %v3116, 4
    %v3132 = vperm.slane %v3116, 5
    %v3133 = vperm.slane %v3116, 6
    %v3134 = vperm.slane %v3116, 7
    %3155 = vrot.lane.b32.xlu0 %v3079, 96
    %v3156 = vpop.permute.xlu0 %3155
    %3157 = vrot.lane.b32.xlu0 %v3080, 96
    %v3158 = vpop.permute.xlu0 %3157
    %3159 = vrot.lane.b32.xlu0 %v3081, 96
    %v3160 = vpop.permute.xlu0 %3159
    %3161 = vrot.lane.b32.xlu0 %v3082, 96
    %v3162 = vpop.permute.xlu0 %3161
    %v3195 = vunpack.c.l.b16 %v3083
    %v3196 = vunpack.c.h.b16 %v3083
    %v3197 = vunpack.c.l.b16 %v3084
    %v3198 = vunpack.c.h.b16 %v3084
    %v3199 = vunpack.c.l.b16 %v3085
    %v3200 = vunpack.c.h.b16 %v3085
    %v3201 = vunpack.c.l.b16 %v3086
    %v3202 = vunpack.c.h.b16 %v3086
    %v3203 = vunpack.c.l.b16 %v3087
    %v3204 = vunpack.c.h.b16 %v3087
    %v3205 = vunpack.c.l.b16 %v3088
    %v3206 = vunpack.c.h.b16 %v3088
    %v3207 = vunpack.c.l.b16 %v3089
    %v3208 = vunpack.c.h.b16 %v3089
    %v3209 = vunpack.c.l.b16 %v3090
    %v3210 = vunpack.c.h.b16 %v3090
    %v3211 = vunpack.c.l.b16 %v3091
    %v3212 = vunpack.c.h.b16 %v3091
    %v3213 = vunpack.c.l.b16 %v3092
    %v3214 = vunpack.c.h.b16 %v3092
    %v3215 = vunpack.c.l.b16 %v3093
    %v3216 = vunpack.c.h.b16 %v3093
    %v3217 = vunpack.c.l.b16 %v3094
    %v3218 = vunpack.c.h.b16 %v3094
    %v3219 = vunpack.c.l.b16 %v3095
    %v3220 = vunpack.c.h.b16 %v3095
    %v3221 = vunpack.c.l.b16 %v3096
    %v3222 = vunpack.c.h.b16 %v3096
    %v3223 = vunpack.c.l.b16 %v3097
    %v3224 = vunpack.c.h.b16 %v3097
    %v3225 = vunpack.c.l.b16 %v3098
    %v3226 = vunpack.c.h.b16 %v3098
    %v3227 = vunpack.c.l.b16 %v3099
    %v3228 = vunpack.c.h.b16 %v3099
    %v3229 = vunpack.c.l.b16 %v3100
    %v3230 = vunpack.c.h.b16 %v3100
    %v3231 = vunpack.c.l.b16 %v3101
    %v3232 = vunpack.c.h.b16 %v3101
    %v3233 = vunpack.c.l.b16 %v3102
    %v3234 = vunpack.c.h.b16 %v3102
    %v3235 = vunpack.c.l.b16 %v3103
    %v3236 = vunpack.c.h.b16 %v3103
    %v3237 = vunpack.c.l.b16 %v3104
    %v3238 = vunpack.c.h.b16 %v3104
    %v3239 = vunpack.c.l.b16 %v3105
    %v3240 = vunpack.c.h.b16 %v3105
    %v3241 = vunpack.c.l.b16 %v3106
    %v3242 = vunpack.c.h.b16 %v3106
    %v3243 = vunpack.c.l.b16 %v3107
    %v3244 = vunpack.c.h.b16 %v3107
    %v3245 = vunpack.c.l.b16 %v3108
    %v3246 = vunpack.c.h.b16 %v3108
    %v3247 = vunpack.c.l.b16 %v3109
    %v3248 = vunpack.c.h.b16 %v3109
    %v3249 = vunpack.c.l.b16 %v3110
    %v3250 = vunpack.c.h.b16 %v3110
    %v3251 = vunpack.c.l.b16 %v3111
    %v3252 = vunpack.c.h.b16 %v3111
    %v3253 = vunpack.c.l.b16 %v3112
    %v3254 = vunpack.c.h.b16 %v3112
    %v3255 = vunpack.c.l.b16 %v3113
    %v3256 = vunpack.c.h.b16 %v3113
    %v3257 = vunpack.c.l.b16 %v3114
    %v3258 = vunpack.c.h.b16 %v3114
    %v3259 = vpack.c.b16 %v3211, %v3195
    %v3260 = vpack.c.b16 %v3212, %v3196
    %v3261 = vpack.c.b16 %v3213, %v3197
    %v3262 = vpack.c.b16 %v3214, %v3198
    %v3263 = vpack.c.b16 %v3215, %v3199
    %v3264 = vpack.c.b16 %v3216, %v3200
    %v3265 = vpack.c.b16 %v3217, %v3201
    %v3266 = vpack.c.b16 %v3218, %v3202
    %v3267 = vpack.c.b16 %v3219, %v3203
    %v3268 = vpack.c.b16 %v3220, %v3204
    %v3269 = vpack.c.b16 %v3221, %v3205
    %v3270 = vpack.c.b16 %v3222, %v3206
    %v3271 = vpack.c.b16 %v3223, %v3207
    %v3272 = vpack.c.b16 %v3224, %v3208
    %v3273 = vpack.c.b16 %v3225, %v3209
    %v3274 = vpack.c.b16 %v3226, %v3210
    %v3275 = vpack.c.b16 %v3243, %v3227
    %v3276 = vpack.c.b16 %v3244, %v3228
    %v3277 = vpack.c.b16 %v3245, %v3229
    %v3278 = vpack.c.b16 %v3246, %v3230
    %v3279 = vpack.c.b16 %v3247, %v3231
    %v3280 = vpack.c.b16 %v3248, %v3232
    %v3281 = vpack.c.b16 %v3249, %v3233
    %v3282 = vpack.c.b16 %v3250, %v3234
    %v3283 = vpack.c.b16 %v3251, %v3235
    %v3284 = vpack.c.b16 %v3252, %v3236
    %v3285 = vpack.c.b16 %v3253, %v3237
    %v3286 = vpack.c.b16 %v3254, %v3238
    %v3287 = vpack.c.b16 %v3255, %v3239
    %v3288 = vpack.c.b16 %v3256, %v3240
    %v3289 = vpack.c.b16 %v3257, %v3241
    %v3290 = vpack.c.b16 %v3258, %v3242
    %v3324 = vsel %vm309, %v3156, 0
    %v3327 = vsel %vm309, %v3158, 0
    %v3330 = vsel %vm309, %v3160, 0
    %v3333 = vsel %vm309, %v3162, 0
    %3335 = vmatpush.bf16.msra.mxu0 0
    %3336 = vmatpush.bf16.msra.mxu0 0
    %3337 = vmatpush.bf16.msra.mxu0 0
    %3338 = vmatpush.bf16.msra.mxu0 0
    %3339 = vmatpush.bf16.msra.mxu0 0
    %3340 = vmatpush.bf16.msra.mxu0 0
    %3341 = vmatpush.bf16.msra.mxu0 %v3275
    %3342 = vmatpush.bf16.msra.mxu0 %v3259
    %3343 = vmatmul.bf16.gmra.mxu0 %v3324
    %v3344 = vpop.f32.mrf.mxu0
    %v3345 = vadd.f32 %v3119, %v3344
    %v3346 = vpop.f32.mrf.mxu0
    %v3347 = vadd.f32 %v3119, %v3346
    %3348 = vmatmul.bf16.gmra.mxu0 %v3327
    %v3349 = vpop.f32.mrf.mxu0
    %v3350 = vadd.f32 %v3119, %v3349
    %v3351 = vpop.f32.mrf.mxu0
    %v3352 = vadd.f32 %v3119, %v3351
    %3353 = vmatmul.bf16.gmra.mxu0 %v3330
    %v3354 = vpop.f32.mrf.mxu0
    %v3355 = vadd.f32 %v3119, %v3354
    %v3356 = vpop.f32.mrf.mxu0
    %v3357 = vadd.f32 %v3119, %v3356
    %3358 = vmatmul.bf16.gmra.mxu0 %v3333
    %v3359 = vpop.f32.mrf.mxu0
    %v3360 = vadd.f32 %v3119, %v3359
    %v3361 = vpop.f32.mrf.mxu0
    %v3362 = vadd.f32 %v3119, %v3361
    %3363 = vdwg.mxu0
    %3364 = vmatpush.bf16.msra.mxu0 0
    %3365 = vmatpush.bf16.msra.mxu0 0
    %3366 = vmatpush.bf16.msra.mxu0 0
    %3367 = vmatpush.bf16.msra.mxu0 0
    %3368 = vmatpush.bf16.msra.mxu0 0
    %3369 = vmatpush.bf16.msra.mxu0 0
    %3370 = vmatpush.bf16.msra.mxu0 %v3276
    %3371 = vmatpush.bf16.msra.mxu0 %v3260
    %3372 = vmatmul.bf16.gmra.mxu0 %v3324
    %v3373 = vpop.f32.mrf.mxu0
    %v3374 = vadd.f32 %v3120, %v3373
    %v3375 = vpop.f32.mrf.mxu0
    %v3376 = vadd.f32 %v3120, %v3375
    %3377 = vmatmul.bf16.gmra.mxu0 %v3327
    %v3378 = vpop.f32.mrf.mxu0
    %v3379 = vadd.f32 %v3120, %v3378
    %v3380 = vpop.f32.mrf.mxu0
    %v3381 = vadd.f32 %v3120, %v3380
    %3382 = vmatmul.bf16.gmra.mxu0 %v3330
    %v3383 = vpop.f32.mrf.mxu0
    %v3384 = vadd.f32 %v3120, %v3383
    %v3385 = vpop.f32.mrf.mxu0
    %v3386 = vadd.f32 %v3120, %v3385
    %3387 = vmatmul.bf16.gmra.mxu0 %v3333
    %v3388 = vpop.f32.mrf.mxu0
    %v3389 = vadd.f32 %v3120, %v3388
    %v3390 = vpop.f32.mrf.mxu0
    %v3391 = vadd.f32 %v3120, %v3390
    %3392 = vdwg.mxu0
    %3393 = vmatpush.bf16.msra.mxu0 0
    %3394 = vmatpush.bf16.msra.mxu0 0
    %3395 = vmatpush.bf16.msra.mxu0 0
    %3396 = vmatpush.bf16.msra.mxu0 0
    %3397 = vmatpush.bf16.msra.mxu0 0
    %3398 = vmatpush.bf16.msra.mxu0 0
    %3399 = vmatpush.bf16.msra.mxu0 %v3277
    %3400 = vmatpush.bf16.msra.mxu0 %v3261
    %3401 = vmatmul.bf16.gmra.mxu0 %v3324
    %v3402 = vpop.f32.mrf.mxu0
    %v3403 = vadd.f32 %v3121, %v3402
    %v3404 = vpop.f32.mrf.mxu0
    %v3405 = vadd.f32 %v3121, %v3404
    %3406 = vmatmul.bf16.gmra.mxu0 %v3327
    %v3407 = vpop.f32.mrf.mxu0
    %v3408 = vadd.f32 %v3121, %v3407
    %v3409 = vpop.f32.mrf.mxu0
    %v3410 = vadd.f32 %v3121, %v3409
    %3411 = vmatmul.bf16.gmra.mxu0 %v3330
    %v3412 = vpop.f32.mrf.mxu0
    %v3413 = vadd.f32 %v3121, %v3412
    %v3414 = vpop.f32.mrf.mxu0
    %v3415 = vadd.f32 %v3121, %v3414
    %3416 = vmatmul.bf16.gmra.mxu0 %v3333
    %v3417 = vpop.f32.mrf.mxu0
    %v3418 = vadd.f32 %v3121, %v3417
    %v3419 = vpop.f32.mrf.mxu0
    %v3420 = vadd.f32 %v3121, %v3419
    %3421 = vdwg.mxu0
    %3422 = vmatpush.bf16.msra.mxu0 0
    %3423 = vmatpush.bf16.msra.mxu0 0
    %3424 = vmatpush.bf16.msra.mxu0 0
    %3425 = vmatpush.bf16.msra.mxu0 0
    %3426 = vmatpush.bf16.msra.mxu0 0
    %3427 = vmatpush.bf16.msra.mxu0 0
    %3428 = vmatpush.bf16.msra.mxu0 %v3278
    %3429 = vmatpush.bf16.msra.mxu0 %v3262
    %3430 = vmatmul.bf16.gmra.mxu0 %v3324
    %v3431 = vpop.f32.mrf.mxu0
    %v3432 = vadd.f32 %v3122, %v3431
    %v3433 = vpop.f32.mrf.mxu0
    %v3434 = vadd.f32 %v3122, %v3433
    %3435 = vmatmul.bf16.gmra.mxu0 %v3327
    %v3436 = vpop.f32.mrf.mxu0
    %v3437 = vadd.f32 %v3122, %v3436
    %v3438 = vpop.f32.mrf.mxu0
    %v3439 = vadd.f32 %v3122, %v3438
    %3440 = vmatmul.bf16.gmra.mxu0 %v3330
    %v3441 = vpop.f32.mrf.mxu0
    %v3442 = vadd.f32 %v3122, %v3441
    %v3443 = vpop.f32.mrf.mxu0
    %v3444 = vadd.f32 %v3122, %v3443
    %3445 = vmatmul.bf16.gmra.mxu0 %v3333
    %v3446 = vpop.f32.mrf.mxu0
    %v3447 = vadd.f32 %v3122, %v3446
    %v3448 = vpop.f32.mrf.mxu0
    %v3449 = vadd.f32 %v3122, %v3448
    %3450 = vdwg.mxu0
    %3451 = vmatpush.bf16.msra.mxu0 0
    %3452 = vmatpush.bf16.msra.mxu0 0
    %3453 = vmatpush.bf16.msra.mxu0 0
    %3454 = vmatpush.bf16.msra.mxu0 0
    %3455 = vmatpush.bf16.msra.mxu0 0
    %3456 = vmatpush.bf16.msra.mxu0 0
    %3457 = vmatpush.bf16.msra.mxu0 %v3279
    %3458 = vmatpush.bf16.msra.mxu0 %v3263
    %3459 = vmatmul.bf16.gmra.mxu0 %v3324
    %v3460 = vpop.f32.mrf.mxu0
    %v3461 = vadd.f32 %v3123, %v3460
    %v3462 = vpop.f32.mrf.mxu0
    %v3463 = vadd.f32 %v3123, %v3462
    %3464 = vmatmul.bf16.gmra.mxu0 %v3327
    %v3465 = vpop.f32.mrf.mxu0
    %v3466 = vadd.f32 %v3123, %v3465
    %v3467 = vpop.f32.mrf.mxu0
    %v3468 = vadd.f32 %v3123, %v3467
    %3469 = vmatmul.bf16.gmra.mxu0 %v3330
    %v3470 = vpop.f32.mrf.mxu0
    %v3471 = vadd.f32 %v3123, %v3470
    %v3472 = vpop.f32.mrf.mxu0
    %v3473 = vadd.f32 %v3123, %v3472
    %3474 = vmatmul.bf16.gmra.mxu0 %v3333
    %v3475 = vpop.f32.mrf.mxu0
    %v3476 = vadd.f32 %v3123, %v3475
    %v3477 = vpop.f32.mrf.mxu0
    %v3478 = vadd.f32 %v3123, %v3477
    %3479 = vdwg.mxu0
    %3480 = vmatpush.bf16.msra.mxu0 0
    %3481 = vmatpush.bf16.msra.mxu0 0
    %3482 = vmatpush.bf16.msra.mxu0 0
    %3483 = vmatpush.bf16.msra.mxu0 0
    %3484 = vmatpush.bf16.msra.mxu0 0
    %3485 = vmatpush.bf16.msra.mxu0 0
    %3486 = vmatpush.bf16.msra.mxu0 %v3280
    %3487 = vmatpush.bf16.msra.mxu0 %v3264
    %3488 = vmatmul.bf16.gmra.mxu0 %v3324
    %v3489 = vpop.f32.mrf.mxu0
    %v3490 = vadd.f32 %v3124, %v3489
    %v3491 = vpop.f32.mrf.mxu0
    %v3492 = vadd.f32 %v3124, %v3491
    %3493 = vmatmul.bf16.gmra.mxu0 %v3327
    %v3494 = vpop.f32.mrf.mxu0
    %v3495 = vadd.f32 %v3124, %v3494
    %v3496 = vpop.f32.mrf.mxu0
    %v3497 = vadd.f32 %v3124, %v3496
    %3498 = vmatmul.bf16.gmra.mxu0 %v3330
    %v3499 = vpop.f32.mrf.mxu0
    %v3500 = vadd.f32 %v3124, %v3499
    %v3501 = vpop.f32.mrf.mxu0
    %v3502 = vadd.f32 %v3124, %v3501
    %3503 = vmatmul.bf16.gmra.mxu0 %v3333
    %v3504 = vpop.f32.mrf.mxu0
    %v3505 = vadd.f32 %v3124, %v3504
    %v3506 = vpop.f32.mrf.mxu0
    %v3507 = vadd.f32 %v3124, %v3506
    %3508 = vdwg.mxu0
    %3509 = vmatpush.bf16.msra.mxu0 0
    %3510 = vmatpush.bf16.msra.mxu0 0
    %3511 = vmatpush.bf16.msra.mxu0 0
    %3512 = vmatpush.bf16.msra.mxu0 0
    %3513 = vmatpush.bf16.msra.mxu0 0
    %3514 = vmatpush.bf16.msra.mxu0 0
    %3515 = vmatpush.bf16.msra.mxu0 %v3281
    %3516 = vmatpush.bf16.msra.mxu0 %v3265
    %3517 = vmatmul.bf16.gmra.mxu0 %v3324
    %v3518 = vpop.f32.mrf.mxu0
    %v3519 = vadd.f32 %v3125, %v3518
    %v3520 = vpop.f32.mrf.mxu0
    %v3521 = vadd.f32 %v3125, %v3520
    %3522 = vmatmul.bf16.gmra.mxu0 %v3327
    %v3523 = vpop.f32.mrf.mxu0
    %v3524 = vadd.f32 %v3125, %v3523
    %v3525 = vpop.f32.mrf.mxu0
    %v3526 = vadd.f32 %v3125, %v3525
    %3527 = vmatmul.bf16.gmra.mxu0 %v3330
    %v3528 = vpop.f32.mrf.mxu0
    %v3529 = vadd.f32 %v3125, %v3528
    %v3530 = vpop.f32.mrf.mxu0
    %v3531 = vadd.f32 %v3125, %v3530
    %3532 = vmatmul.bf16.gmra.mxu0 %v3333
    %v3533 = vpop.f32.mrf.mxu0
    %v3534 = vadd.f32 %v3125, %v3533
    %v3535 = vpop.f32.mrf.mxu0
    %v3536 = vadd.f32 %v3125, %v3535
    %3537 = vdwg.mxu0
    %3538 = vmatpush.bf16.msra.mxu0 0
    %3539 = vmatpush.bf16.msra.mxu0 0
    %3540 = vmatpush.bf16.msra.mxu0 0
    %3541 = vmatpush.bf16.msra.mxu0 0
    %3542 = vmatpush.bf16.msra.mxu0 0
    %3543 = vmatpush.bf16.msra.mxu0 0
    %3544 = vmatpush.bf16.msra.mxu0 %v3282
    %3545 = vmatpush.bf16.msra.mxu0 %v3266
    %3546 = vmatmul.bf16.gmra.mxu0 %v3324
    %v3547 = vpop.f32.mrf.mxu0
    %v3548 = vadd.f32 %v3126, %v3547
    %v3549 = vpop.f32.mrf.mxu0
    %v3550 = vadd.f32 %v3126, %v3549
    %3551 = vmatmul.bf16.gmra.mxu0 %v3327
    %v3552 = vpop.f32.mrf.mxu0
    %v3553 = vadd.f32 %v3126, %v3552
    %v3554 = vpop.f32.mrf.mxu0
    %v3555 = vadd.f32 %v3126, %v3554
    %3556 = vmatmul.bf16.gmra.mxu0 %v3330
    %v3557 = vpop.f32.mrf.mxu0
    %v3558 = vadd.f32 %v3126, %v3557
    %v3559 = vpop.f32.mrf.mxu0
    %v3560 = vadd.f32 %v3126, %v3559
    %3561 = vmatmul.bf16.gmra.mxu0 %v3333
    %v3562 = vpop.f32.mrf.mxu0
    %v3563 = vadd.f32 %v3126, %v3562
    %v3564 = vpop.f32.mrf.mxu0
    %v3565 = vadd.f32 %v3126, %v3564
    %3566 = vdwg.mxu0
    %3567 = vmatpush.bf16.msra.mxu0 0
    %3568 = vmatpush.bf16.msra.mxu0 0
    %3569 = vmatpush.bf16.msra.mxu0 0
    %3570 = vmatpush.bf16.msra.mxu0 0
    %3571 = vmatpush.bf16.msra.mxu0 0
    %3572 = vmatpush.bf16.msra.mxu0 0
    %3573 = vmatpush.bf16.msra.mxu0 %v3283
    %3574 = vmatpush.bf16.msra.mxu0 %v3267
    %3575 = vmatmul.bf16.gmra.mxu0 %v3324
    %v3576 = vpop.f32.mrf.mxu0
    %v3577 = vadd.f32 %v3127, %v3576
    %v3578 = vpop.f32.mrf.mxu0
    %v3579 = vadd.f32 %v3127, %v3578
    %3580 = vmatmul.bf16.gmra.mxu0 %v3327
    %v3581 = vpop.f32.mrf.mxu0
    %v3582 = vadd.f32 %v3127, %v3581
    %v3583 = vpop.f32.mrf.mxu0
    %v3584 = vadd.f32 %v3127, %v3583
    %3585 = vmatmul.bf16.gmra.mxu0 %v3330
    %v3586 = vpop.f32.mrf.mxu0
    %v3587 = vadd.f32 %v3127, %v3586
    %v3588 = vpop.f32.mrf.mxu0
    %v3589 = vadd.f32 %v3127, %v3588
    %3590 = vmatmul.bf16.gmra.mxu0 %v3333
    %v3591 = vpop.f32.mrf.mxu0
    %v3592 = vadd.f32 %v3127, %v3591
    %v3593 = vpop.f32.mrf.mxu0
    %v3594 = vadd.f32 %v3127, %v3593
    %3595 = vdwg.mxu0
    %3596 = vmatpush.bf16.msra.mxu0 0
    %3597 = vmatpush.bf16.msra.mxu0 0
    %3598 = vmatpush.bf16.msra.mxu0 0
    %3599 = vmatpush.bf16.msra.mxu0 0
    %3600 = vmatpush.bf16.msra.mxu0 0
    %3601 = vmatpush.bf16.msra.mxu0 0
    %3602 = vmatpush.bf16.msra.mxu0 %v3284
    %3603 = vmatpush.bf16.msra.mxu0 %v3268
    %3604 = vmatmul.bf16.gmra.mxu0 %v3324
    %v3605 = vpop.f32.mrf.mxu0
    %v3606 = vadd.f32 %v3128, %v3605
    %v3607 = vpop.f32.mrf.mxu0
    %v3608 = vadd.f32 %v3128, %v3607
    %3609 = vmatmul.bf16.gmra.mxu0 %v3327
    %v3610 = vpop.f32.mrf.mxu0
    %v3611 = vadd.f32 %v3128, %v3610
    %v3612 = vpop.f32.mrf.mxu0
    %v3613 = vadd.f32 %v3128, %v3612
    %3614 = vmatmul.bf16.gmra.mxu0 %v3330
    %v3615 = vpop.f32.mrf.mxu0
    %v3616 = vadd.f32 %v3128, %v3615
    %v3617 = vpop.f32.mrf.mxu0
    %v3618 = vadd.f32 %v3128, %v3617
    %3619 = vmatmul.bf16.gmra.mxu0 %v3333
    %v3620 = vpop.f32.mrf.mxu0
    %v3621 = vadd.f32 %v3128, %v3620
    %v3622 = vpop.f32.mrf.mxu0
    %v3623 = vadd.f32 %v3128, %v3622
    %3624 = vdwg.mxu0
    %3625 = vmatpush.bf16.msra.mxu0 0
    %3626 = vmatpush.bf16.msra.mxu0 0
    %3627 = vmatpush.bf16.msra.mxu0 0
    %3628 = vmatpush.bf16.msra.mxu0 0
    %3629 = vmatpush.bf16.msra.mxu0 0
    %3630 = vmatpush.bf16.msra.mxu0 0
    %3631 = vmatpush.bf16.msra.mxu0 %v3285
    %3632 = vmatpush.bf16.msra.mxu0 %v3269
    %3633 = vmatmul.bf16.gmra.mxu0 %v3324
    %v3634 = vpop.f32.mrf.mxu0
    %v3635 = vadd.f32 %v3129, %v3634
    %v3636 = vpop.f32.mrf.mxu0
    %v3637 = vadd.f32 %v3129, %v3636
    %3638 = vmatmul.bf16.gmra.mxu0 %v3327
    %v3639 = vpop.f32.mrf.mxu0
    %v3640 = vadd.f32 %v3129, %v3639
    %v3641 = vpop.f32.mrf.mxu0
    %v3642 = vadd.f32 %v3129, %v3641
    %3643 = vmatmul.bf16.gmra.mxu0 %v3330
    %v3644 = vpop.f32.mrf.mxu0
    %v3645 = vadd.f32 %v3129, %v3644
    %v3646 = vpop.f32.mrf.mxu0
    %v3647 = vadd.f32 %v3129, %v3646
    %3648 = vmatmul.bf16.gmra.mxu0 %v3333
    %v3649 = vpop.f32.mrf.mxu0
    %v3650 = vadd.f32 %v3129, %v3649
    %v3651 = vpop.f32.mrf.mxu0
    %v3652 = vadd.f32 %v3129, %v3651
    %3653 = vdwg.mxu0
    %3654 = vmatpush.bf16.msra.mxu0 0
    %3655 = vmatpush.bf16.msra.mxu0 0
    %3656 = vmatpush.bf16.msra.mxu0 0
    %3657 = vmatpush.bf16.msra.mxu0 0
    %3658 = vmatpush.bf16.msra.mxu0 0
    %3659 = vmatpush.bf16.msra.mxu0 0
    %3660 = vmatpush.bf16.msra.mxu0 %v3286
    %3661 = vmatpush.bf16.msra.mxu0 %v3270
    %3662 = vmatmul.bf16.gmra.mxu0 %v3324
    %v3663 = vpop.f32.mrf.mxu0
    %v3664 = vadd.f32 %v3130, %v3663
    %v3665 = vpop.f32.mrf.mxu0
    %v3666 = vadd.f32 %v3130, %v3665
    %3667 = vmatmul.bf16.gmra.mxu0 %v3327
    %v3668 = vpop.f32.mrf.mxu0
    %v3669 = vadd.f32 %v3130, %v3668
    %v3670 = vpop.f32.mrf.mxu0
    %v3671 = vadd.f32 %v3130, %v3670
    %3672 = vmatmul.bf16.gmra.mxu0 %v3330
    %v3673 = vpop.f32.mrf.mxu0
    %v3674 = vadd.f32 %v3130, %v3673
    %v3675 = vpop.f32.mrf.mxu0
    %v3676 = vadd.f32 %v3130, %v3675
    %3677 = vmatmul.bf16.gmra.mxu0 %v3333
    %v3678 = vpop.f32.mrf.mxu0
    %v3679 = vadd.f32 %v3130, %v3678
    %v3680 = vpop.f32.mrf.mxu0
    %v3681 = vadd.f32 %v3130, %v3680
    %3682 = vdwg.mxu0
    %3683 = vmatpush.bf16.msra.mxu0 0
    %3684 = vmatpush.bf16.msra.mxu0 0
    %3685 = vmatpush.bf16.msra.mxu0 0
    %3686 = vmatpush.bf16.msra.mxu0 0
    %3687 = vmatpush.bf16.msra.mxu0 0
    %3688 = vmatpush.bf16.msra.mxu0 0
    %3689 = vmatpush.bf16.msra.mxu0 %v3287
    %3690 = vmatpush.bf16.msra.mxu0 %v3271
    %3691 = vmatmul.bf16.gmra.mxu0 %v3324
    %v3692 = vpop.f32.mrf.mxu0
    %v3693 = vadd.f32 %v3131, %v3692
    %v3694 = vpop.f32.mrf.mxu0
    %v3695 = vadd.f32 %v3131, %v3694
    %3696 = vmatmul.bf16.gmra.mxu0 %v3327
    %v3697 = vpop.f32.mrf.mxu0
    %v3698 = vadd.f32 %v3131, %v3697
    %v3699 = vpop.f32.mrf.mxu0
    %v3700 = vadd.f32 %v3131, %v3699
    %3701 = vmatmul.bf16.gmra.mxu0 %v3330
    %v3702 = vpop.f32.mrf.mxu0
    %v3703 = vadd.f32 %v3131, %v3702
    %v3704 = vpop.f32.mrf.mxu0
    %v3705 = vadd.f32 %v3131, %v3704
    %3706 = vmatmul.bf16.gmra.mxu0 %v3333
    %v3707 = vpop.f32.mrf.mxu0
    %v3708 = vadd.f32 %v3131, %v3707
    %v3709 = vpop.f32.mrf.mxu0
    %v3710 = vadd.f32 %v3131, %v3709
    %3711 = vdwg.mxu0
    %3712 = vmatpush.bf16.msra.mxu0 0
    %3713 = vmatpush.bf16.msra.mxu0 0
    %3714 = vmatpush.bf16.msra.mxu0 0
    %3715 = vmatpush.bf16.msra.mxu0 0
    %3716 = vmatpush.bf16.msra.mxu0 0
    %3717 = vmatpush.bf16.msra.mxu0 0
    %3718 = vmatpush.bf16.msra.mxu0 %v3288
    %3719 = vmatpush.bf16.msra.mxu0 %v3272
    %3720 = vmatmul.bf16.gmra.mxu0 %v3324
    %v3721 = vpop.f32.mrf.mxu0
    %v3722 = vadd.f32 %v3132, %v3721
    %v3723 = vpop.f32.mrf.mxu0
    %v3724 = vadd.f32 %v3132, %v3723
    %3725 = vmatmul.bf16.gmra.mxu0 %v3327
    %v3726 = vpop.f32.mrf.mxu0
    %v3727 = vadd.f32 %v3132, %v3726
    %v3728 = vpop.f32.mrf.mxu0
    %v3729 = vadd.f32 %v3132, %v3728
    %3730 = vmatmul.bf16.gmra.mxu0 %v3330
    %v3731 = vpop.f32.mrf.mxu0
    %v3732 = vadd.f32 %v3132, %v3731
    %v3733 = vpop.f32.mrf.mxu0
    %v3734 = vadd.f32 %v3132, %v3733
    %3735 = vmatmul.bf16.gmra.mxu0 %v3333
    %v3736 = vpop.f32.mrf.mxu0
    %v3737 = vadd.f32 %v3132, %v3736
    %v3738 = vpop.f32.mrf.mxu0
    %v3739 = vadd.f32 %v3132, %v3738
    %3740 = vdwg.mxu0
    %3741 = vmatpush.bf16.msra.mxu0 0
    %3742 = vmatpush.bf16.msra.mxu0 0
    %3743 = vmatpush.bf16.msra.mxu0 0
    %3744 = vmatpush.bf16.msra.mxu0 0
    %3745 = vmatpush.bf16.msra.mxu0 0
    %3746 = vmatpush.bf16.msra.mxu0 0
    %3747 = vmatpush.bf16.msra.mxu0 %v3289
    %3748 = vmatpush.bf16.msra.mxu0 %v3273
    %3749 = vmatmul.bf16.gmra.mxu0 %v3324
    %v3750 = vpop.f32.mrf.mxu0
    %v3751 = vadd.f32 %v3133, %v3750
    %v3752 = vpop.f32.mrf.mxu0
    %v3753 = vadd.f32 %v3133, %v3752
    %3754 = vmatmul.bf16.gmra.mxu0 %v3327
    %v3755 = vpop.f32.mrf.mxu0
    %v3756 = vadd.f32 %v3133, %v3755
    %v3757 = vpop.f32.mrf.mxu0
    %v3758 = vadd.f32 %v3133, %v3757
    %3759 = vmatmul.bf16.gmra.mxu0 %v3330
    %v3760 = vpop.f32.mrf.mxu0
    %v3761 = vadd.f32 %v3133, %v3760
    %v3762 = vpop.f32.mrf.mxu0
    %v3763 = vadd.f32 %v3133, %v3762
    %3764 = vmatmul.bf16.gmra.mxu0 %v3333
    %v3765 = vpop.f32.mrf.mxu0
    %v3766 = vadd.f32 %v3133, %v3765
    %v3767 = vpop.f32.mrf.mxu0
    %v3768 = vadd.f32 %v3133, %v3767
    %3769 = vdwg.mxu0
    %3770 = vmatpush.bf16.msra.mxu0 0
    %3771 = vmatpush.bf16.msra.mxu0 0
    %3772 = vmatpush.bf16.msra.mxu0 0
    %3773 = vmatpush.bf16.msra.mxu0 0
    %3774 = vmatpush.bf16.msra.mxu0 0
    %3775 = vmatpush.bf16.msra.mxu0 0
    %3776 = vmatpush.bf16.msra.mxu0 %v3290
    %3777 = vmatpush.bf16.msra.mxu0 %v3274
    %3778 = vmatmul.bf16.gmra.mxu0 %v3324
    %v3779 = vpop.f32.mrf.mxu0
    %v3780 = vadd.f32 %v3134, %v3779
    %v3781 = vpop.f32.mrf.mxu0
    %v3782 = vadd.f32 %v3134, %v3781
    %3783 = vmatmul.bf16.gmra.mxu0 %v3327
    %v3784 = vpop.f32.mrf.mxu0
    %v3785 = vadd.f32 %v3134, %v3784
    %v3786 = vpop.f32.mrf.mxu0
    %v3787 = vadd.f32 %v3134, %v3786
    %3788 = vmatmul.bf16.gmra.mxu0 %v3330
    %v3789 = vpop.f32.mrf.mxu0
    %v3790 = vadd.f32 %v3134, %v3789
    %v3791 = vpop.f32.mrf.mxu0
    %v3792 = vadd.f32 %v3134, %v3791
    %3793 = vmatmul.bf16.gmra.mxu0 %v3333
    %v3794 = vpop.f32.mrf.mxu0
    %v3795 = vadd.f32 %v3134, %v3794
    %v3796 = vpop.f32.mrf.mxu0
    %v3797 = vadd.f32 %v3134, %v3796
    %3798 = vdwg.mxu0
    %v3799 = vmax.f32 %v3345, 0.0
    %v3800 = vmax.f32 %v3374, 0.0
    %v3801 = vmax.f32 %v3403, 0.0
    %v3802 = vmax.f32 %v3432, 0.0
    %v3803 = vmax.f32 %v3461, 0.0
    %v3804 = vmax.f32 %v3490, 0.0
    %v3805 = vmax.f32 %v3519, 0.0
    %v3806 = vmax.f32 %v3548, 0.0
    %v3807 = vmax.f32 %v3577, 0.0
    %v3808 = vmax.f32 %v3606, 0.0
    %v3809 = vmax.f32 %v3635, 0.0
    %v3810 = vmax.f32 %v3664, 0.0
    %v3811 = vmax.f32 %v3693, 0.0
    %v3812 = vmax.f32 %v3722, 0.0
    %v3813 = vmax.f32 %v3751, 0.0
    %v3814 = vmax.f32 %v3780, 0.0
    %v3815 = vmax.f32 %v3347, 0.0
    %v3816 = vmax.f32 %v3376, 0.0
    %v3817 = vmax.f32 %v3405, 0.0
    %v3818 = vmax.f32 %v3434, 0.0
    %v3819 = vmax.f32 %v3463, 0.0
    %v3820 = vmax.f32 %v3492, 0.0
    %v3821 = vmax.f32 %v3521, 0.0
    %v3822 = vmax.f32 %v3550, 0.0
    %v3823 = vmax.f32 %v3579, 0.0
    %v3824 = vmax.f32 %v3608, 0.0
    %v3825 = vmax.f32 %v3637, 0.0
    %v3826 = vmax.f32 %v3666, 0.0
    %v3827 = vmax.f32 %v3695, 0.0
    %v3828 = vmax.f32 %v3724, 0.0
    %v3829 = vmax.f32 %v3753, 0.0
    %v3830 = vmax.f32 %v3782, 0.0
    %v3831 = vmax.f32 %v3350, 0.0
    %v3832 = vmax.f32 %v3379, 0.0
    %v3833 = vmax.f32 %v3408, 0.0
    %v3834 = vmax.f32 %v3437, 0.0
    %v3835 = vmax.f32 %v3466, 0.0
    %v3836 = vmax.f32 %v3495, 0.0
    %v3837 = vmax.f32 %v3524, 0.0
    %v3838 = vmax.f32 %v3553, 0.0
    %v3839 = vmax.f32 %v3582, 0.0
    %v3840 = vmax.f32 %v3611, 0.0
    %v3841 = vmax.f32 %v3640, 0.0
    %v3842 = vmax.f32 %v3669, 0.0
    %v3843 = vmax.f32 %v3698, 0.0
    %v3844 = vmax.f32 %v3727, 0.0
    %v3845 = vmax.f32 %v3756, 0.0
    %v3846 = vmax.f32 %v3785, 0.0
    %v3847 = vmax.f32 %v3352, 0.0
    %v3848 = vmax.f32 %v3381, 0.0
    %v3849 = vmax.f32 %v3410, 0.0
    %v3850 = vmax.f32 %v3439, 0.0
    %v3851 = vmax.f32 %v3468, 0.0
    %v3852 = vmax.f32 %v3497, 0.0
    %v3853 = vmax.f32 %v3526, 0.0
    %v3854 = vmax.f32 %v3555, 0.0
    %v3855 = vmax.f32 %v3584, 0.0
    %v3856 = vmax.f32 %v3613, 0.0
    %v3857 = vmax.f32 %v3642, 0.0
    %v3858 = vmax.f32 %v3671, 0.0
    %v3859 = vmax.f32 %v3700, 0.0
    %v3860 = vmax.f32 %v3729, 0.0
    %v3861 = vmax.f32 %v3758, 0.0
    %v3862 = vmax.f32 %v3787, 0.0
    %v3863 = vmax.f32 %v3355, 0.0
    %v3864 = vmax.f32 %v3384, 0.0
    %v3865 = vmax.f32 %v3413, 0.0
    %v3866 = vmax.f32 %v3442, 0.0
    %v3867 = vmax.f32 %v3471, 0.0
    %v3868 = vmax.f32 %v3500, 0.0
    %v3869 = vmax.f32 %v3529, 0.0
    %v3870 = vmax.f32 %v3558, 0.0
    %v3871 = vmax.f32 %v3587, 0.0
    %v3872 = vmax.f32 %v3616, 0.0
    %v3873 = vmax.f32 %v3645, 0.0
    %v3874 = vmax.f32 %v3674, 0.0
    %v3875 = vmax.f32 %v3703, 0.0
    %v3876 = vmax.f32 %v3732, 0.0
    %v3877 = vmax.f32 %v3761, 0.0
    %v3878 = vmax.f32 %v3790, 0.0
    %v3879 = vmax.f32 %v3357, 0.0
    %v3880 = vmax.f32 %v3386, 0.0
    %v3881 = vmax.f32 %v3415, 0.0
    %v3882 = vmax.f32 %v3444, 0.0
    %v3883 = vmax.f32 %v3473, 0.0
    %v3884 = vmax.f32 %v3502, 0.0
    %v3885 = vmax.f32 %v3531, 0.0
    %v3886 = vmax.f32 %v3560, 0.0
    %v3887 = vmax.f32 %v3589, 0.0
    %v3888 = vmax.f32 %v3618, 0.0
    %v3889 = vmax.f32 %v3647, 0.0
    %v3890 = vmax.f32 %v3676, 0.0
    %v3891 = vmax.f32 %v3705, 0.0
    %v3892 = vmax.f32 %v3734, 0.0
    %v3893 = vmax.f32 %v3763, 0.0
    %v3894 = vmax.f32 %v3792, 0.0
    %v3895 = vmax.f32 %v3360, 0.0
    %v3896 = vmax.f32 %v3389, 0.0
    %v3897 = vmax.f32 %v3418, 0.0
    %v3898 = vmax.f32 %v3447, 0.0
    %v3899 = vmax.f32 %v3476, 0.0
    %v3900 = vmax.f32 %v3505, 0.0
    %v3901 = vmax.f32 %v3534, 0.0
    %v3902 = vmax.f32 %v3563, 0.0
    %v3903 = vmax.f32 %v3592, 0.0
    %v3904 = vmax.f32 %v3621, 0.0
    %v3905 = vmax.f32 %v3650, 0.0
    %v3906 = vmax.f32 %v3679, 0.0
    %v3907 = vmax.f32 %v3708, 0.0
    %v3908 = vmax.f32 %v3737, 0.0
    %v3909 = vmax.f32 %v3766, 0.0
    %v3910 = vmax.f32 %v3795, 0.0
    %v3911 = vmax.f32 %v3362, 0.0
    %v3912 = vmax.f32 %v3391, 0.0
    %v3913 = vmax.f32 %v3420, 0.0
    %v3914 = vmax.f32 %v3449, 0.0
    %v3915 = vmax.f32 %v3478, 0.0
    %v3916 = vmax.f32 %v3507, 0.0
    %v3917 = vmax.f32 %v3536, 0.0
    %v3918 = vmax.f32 %v3565, 0.0
    %v3919 = vmax.f32 %v3594, 0.0
    %v3920 = vmax.f32 %v3623, 0.0
    %v3921 = vmax.f32 %v3652, 0.0
    %v3922 = vmax.f32 %v3681, 0.0
    %v3923 = vmax.f32 %v3710, 0.0
    %v3924 = vmax.f32 %v3739, 0.0
    %v3925 = vmax.f32 %v3768, 0.0
    %v3926 = vmax.f32 %v3797, 0.0
    %v3927 = vpack.c.bf16 %v3815, %v3799
    %v3928 = vpack.c.bf16 %v3816, %v3800
    %v3929 = vpack.c.bf16 %v3817, %v3801
    %v3930 = vpack.c.bf16 %v3818, %v3802
    %v3931 = vpack.c.bf16 %v3819, %v3803
    %v3932 = vpack.c.bf16 %v3820, %v3804
    %v3933 = vpack.c.bf16 %v3821, %v3805
    %v3934 = vpack.c.bf16 %v3822, %v3806
    %v3935 = vpack.c.bf16 %v3823, %v3807
    %v3936 = vpack.c.bf16 %v3824, %v3808
    %v3937 = vpack.c.bf16 %v3825, %v3809
    %v3938 = vpack.c.bf16 %v3826, %v3810
    %v3939 = vpack.c.bf16 %v3827, %v3811
    %v3940 = vpack.c.bf16 %v3828, %v3812
    %v3941 = vpack.c.bf16 %v3829, %v3813
    %v3942 = vpack.c.bf16 %v3830, %v3814
    %v3943 = vpack.c.bf16 %v3847, %v3831
    %v3944 = vpack.c.bf16 %v3848, %v3832
    %v3945 = vpack.c.bf16 %v3849, %v3833
    %v3946 = vpack.c.bf16 %v3850, %v3834
    %v3947 = vpack.c.bf16 %v3851, %v3835
    %v3948 = vpack.c.bf16 %v3852, %v3836
    %v3949 = vpack.c.bf16 %v3853, %v3837
    %v3950 = vpack.c.bf16 %v3854, %v3838
    %v3951 = vpack.c.bf16 %v3855, %v3839
    %v3952 = vpack.c.bf16 %v3856, %v3840
    %v3953 = vpack.c.bf16 %v3857, %v3841
    %v3954 = vpack.c.bf16 %v3858, %v3842
    %v3955 = vpack.c.bf16 %v3859, %v3843
    %v3956 = vpack.c.bf16 %v3860, %v3844
    %v3957 = vpack.c.bf16 %v3861, %v3845
    %v3958 = vpack.c.bf16 %v3862, %v3846
    %v3959 = vpack.c.bf16 %v3879, %v3863
    %v3960 = vpack.c.bf16 %v3880, %v3864
    %v3961 = vpack.c.bf16 %v3881, %v3865
    %v3962 = vpack.c.bf16 %v3882, %v3866
    %v3963 = vpack.c.bf16 %v3883, %v3867
    %v3964 = vpack.c.bf16 %v3884, %v3868
    %v3965 = vpack.c.bf16 %v3885, %v3869
    %v3966 = vpack.c.bf16 %v3886, %v3870
    %v3967 = vpack.c.bf16 %v3887, %v3871
    %v3968 = vpack.c.bf16 %v3888, %v3872
    %v3969 = vpack.c.bf16 %v3889, %v3873
    %v3970 = vpack.c.bf16 %v3890, %v3874
    %v3971 = vpack.c.bf16 %v3891, %v3875
    %v3972 = vpack.c.bf16 %v3892, %v3876
    %v3973 = vpack.c.bf16 %v3893, %v3877
    %v3974 = vpack.c.bf16 %v3894, %v3878
    %v3975 = vpack.c.bf16 %v3911, %v3895
    %v3976 = vpack.c.bf16 %v3912, %v3896
    %v3977 = vpack.c.bf16 %v3913, %v3897
    %v3978 = vpack.c.bf16 %v3914, %v3898
    %v3979 = vpack.c.bf16 %v3915, %v3899
    %v3980 = vpack.c.bf16 %v3916, %v3900
    %v3981 = vpack.c.bf16 %v3917, %v3901
    %v3982 = vpack.c.bf16 %v3918, %v3902
    %v3983 = vpack.c.bf16 %v3919, %v3903
    %v3984 = vpack.c.bf16 %v3920, %v3904
    %v3985 = vpack.c.bf16 %v3921, %v3905
    %v3986 = vpack.c.bf16 %v3922, %v3906
    %v3987 = vpack.c.bf16 %v3923, %v3907
    %v3988 = vpack.c.bf16 %v3924, %v3908
    %v3989 = vpack.c.bf16 %v3925, %v3909
    %v3990 = vpack.c.bf16 %v3926, %v3910
    %v3991 = vld [vmem:[%s13] sm:$0xf]
    %v3992 = vld [vmem:[%s13 + $0x4] sm:$0xf]
    %v3993 = vld [vmem:[%s13 + $0x8] sm:$0xf]
    %v3994 = vld [vmem:[%s13 + $0xc] sm:$0xf]
    %v3995 = vld [vmem:[%s13 + $0x10] sm:$0xf]
    %v3996 = vld [vmem:[%s13 + $0x14] sm:$0xf]
    %v3997 = vld [vmem:[%s13 + $0x18] sm:$0xf]
    %v3998 = vld [vmem:[%s13 + $0x1c] sm:$0xf]
    %v3999 = vld [vmem:[%s13 + $0x20] sm:$0xf]
    %v4000 = vld [vmem:[%s13 + $0x24] sm:$0xf]
    %v4001 = vld [vmem:[%s13 + $0x28] sm:$0xf]
    %v4002 = vld [vmem:[%s13 + $0x2c] sm:$0xf]
    %v4003 = vld [vmem:[%s13 + $0x30] sm:$0xf]
    %v4004 = vld [vmem:[%s13 + $0x34] sm:$0xf]
    %v4005 = vld [vmem:[%s13 + $0x38] sm:$0xf]
    %v4006 = vld [vmem:[%s13 + $0x3c] sm:$0xf]
    %v4007 = vld [vmem:[%s13 + $0x40] sm:$0xf]
    %v4008 = vld [vmem:[%s13 + $0x44] sm:$0xf]
    %v4009 = vld [vmem:[%s13 + $0x48] sm:$0xf]
    %v4010 = vld [vmem:[%s13 + $0x4c] sm:$0xf]
    %v4011 = vld [vmem:[%s13 + $0x50] sm:$0xf]
    %v4012 = vld [vmem:[%s13 + $0x54] sm:$0xf]
    %v4013 = vld [vmem:[%s13 + $0x58] sm:$0xf]
    %v4014 = vld [vmem:[%s13 + $0x5c] sm:$0xf]
    %v4015 = vld [vmem:[%s13 + $0x60] sm:$0xf]
    %v4016 = vld [vmem:[%s13 + $0x64] sm:$0xf]
    %v4017 = vld [vmem:[%s13 + $0x68] sm:$0xf]
    %v4018 = vld [vmem:[%s13 + $0x6c] sm:$0xf]
    %v4019 = vld [vmem:[%s13 + $0x70] sm:$0xf]
    %v4020 = vld [vmem:[%s13 + $0x74] sm:$0xf]
    %v4021 = vld [vmem:[%s13 + $0x78] sm:$0xf]
    %v4022 = vld [vmem:[%s13 + $0x7c] sm:$0xf]
    %v4023 = vld [vmem:[%s13 + $0x80] sm:$0xf]
    %v4024 = vld [vmem:[%s13 + $0x84] sm:$0xf]
    %v4025 = vld [vmem:[%s13 + $0x88] sm:$0xf]
    %v4026 = vld [vmem:[%s13 + $0x8c] sm:$0xf]
    %v4027 = vld [vmem:[%s13 + $0x90] sm:$0xf]
    %v4028 = vld [vmem:[%s13 + $0x94] sm:$0xf]
    %v4029 = vld [vmem:[%s13 + $0x98] sm:$0xf]
    %v4030 = vld [vmem:[%s13 + $0x9c] sm:$0xf]
    %v4031 = vld [vmem:[%s13 + $0xa0] sm:$0xf]
    %v4032 = vld [vmem:[%s13 + $0xa4] sm:$0xf]
    %v4033 = vld [vmem:[%s13 + $0xa8] sm:$0xf]
    %v4034 = vld [vmem:[%s13 + $0xac] sm:$0xf]
    %v4035 = vld [vmem:[%s13 + $0xb0] sm:$0xf]
    %v4036 = vld [vmem:[%s13 + $0xb4] sm:$0xf]
    %v4037 = vld [vmem:[%s13 + $0xb8] sm:$0xf]
    %v4038 = vld [vmem:[%s13 + $0xbc] sm:$0xf]
    %v4039 = vld [vmem:[%s13 + $0xc0] sm:$0xf]
    %v4040 = vld [vmem:[%s13 + $0xc4] sm:$0xf]
    %v4041 = vld [vmem:[%s13 + $0xc8] sm:$0xf]
    %v4042 = vld [vmem:[%s13 + $0xcc] sm:$0xf]
    %v4043 = vld [vmem:[%s13 + $0xd0] sm:$0xf]
    %v4044 = vld [vmem:[%s13 + $0xd4] sm:$0xf]
    %v4045 = vld [vmem:[%s13 + $0xd8] sm:$0xf]
    %v4046 = vld [vmem:[%s13 + $0xdc] sm:$0xf]
    %v4047 = vld [vmem:[%s13 + $0xe0] sm:$0xf]
    %v4048 = vld [vmem:[%s13 + $0xe4] sm:$0xf]
    %v4049 = vld [vmem:[%s13 + $0xe8] sm:$0xf]
    %v4050 = vld [vmem:[%s13 + $0xec] sm:$0xf]
    %v4051 = vld [vmem:[%s13 + $0xf0] sm:$0xf]
    %v4052 = vld [vmem:[%s13 + $0xf4] sm:$0xf]
    %v4053 = vld [vmem:[%s13 + $0xf8] sm:$0xf]
    %v4054 = vld [vmem:[%s13 + $0xfc] sm:$0xf]
    %v4055 = vld [vmem:[%s13 + $0x100] sm:$0xf]
    %v4056 = vld [vmem:[%s13 + $0x104] sm:$0xf]
    %v4057 = vld [vmem:[%s13 + $0x108] sm:$0xf]
    %v4058 = vld [vmem:[%s13 + $0x10c] sm:$0xf]
    %v4059 = vld [vmem:[%s13 + $0x110] sm:$0xf]
    %v4060 = vld [vmem:[%s13 + $0x114] sm:$0xf]
    %v4061 = vld [vmem:[%s13 + $0x118] sm:$0xf]
    %v4062 = vld [vmem:[%s13 + $0x11c] sm:$0xf]
    %v4063 = vld [vmem:[%s13 + $0x120] sm:$0xf]
    %v4064 = vld [vmem:[%s13 + $0x124] sm:$0xf]
    %v4065 = vld [vmem:[%s13 + $0x128] sm:$0xf]
    %v4066 = vld [vmem:[%s13 + $0x12c] sm:$0xf]
    %v4067 = vld [vmem:[%s13 + $0x130] sm:$0xf]
    %v4068 = vld [vmem:[%s13 + $0x134] sm:$0xf]
    %v4069 = vld [vmem:[%s13 + $0x138] sm:$0xf]
    %v4070 = vld [vmem:[%s13 + $0x13c] sm:$0xf]
    %v4071 = vld [vmem:[%s13 + $0x140] sm:$0xf]
    %v4072 = vld [vmem:[%s13 + $0x144] sm:$0xf]
    %v4073 = vld [vmem:[%s13 + $0x148] sm:$0xf]
    %v4074 = vld [vmem:[%s13 + $0x14c] sm:$0xf]
    %v4075 = vld [vmem:[%s13 + $0x150] sm:$0xf]
    %v4076 = vld [vmem:[%s13 + $0x154] sm:$0xf]
    %v4077 = vld [vmem:[%s13 + $0x158] sm:$0xf]
    %v4078 = vld [vmem:[%s13 + $0x15c] sm:$0xf]
    %v4079 = vld [vmem:[%s13 + $0x160] sm:$0xf]
    %v4080 = vld [vmem:[%s13 + $0x164] sm:$0xf]
    %v4081 = vld [vmem:[%s13 + $0x168] sm:$0xf]
    %v4082 = vld [vmem:[%s13 + $0x16c] sm:$0xf]
    %v4083 = vld [vmem:[%s13 + $0x170] sm:$0xf]
    %v4084 = vld [vmem:[%s13 + $0x174] sm:$0xf]
    %v4085 = vld [vmem:[%s13 + $0x178] sm:$0xf]
    %v4086 = vld [vmem:[%s13 + $0x17c] sm:$0xf]
    %v4087 = vld [vmem:[%s13 + $0x180] sm:$0xf]
    %v4088 = vld [vmem:[%s13 + $0x184] sm:$0xf]
    %v4089 = vld [vmem:[%s13 + $0x188] sm:$0xf]
    %v4090 = vld [vmem:[%s13 + $0x18c] sm:$0xf]
    %v4091 = vld [vmem:[%s13 + $0x190] sm:$0xf]
    %v4092 = vld [vmem:[%s13 + $0x194] sm:$0xf]
    %v4093 = vld [vmem:[%s13 + $0x198] sm:$0xf]
    %v4094 = vld [vmem:[%s13 + $0x19c] sm:$0xf]
    %v4095 = vld [vmem:[%s13 + $0x1a0] sm:$0xf]
    %v4096 = vld [vmem:[%s13 + $0x1a4] sm:$0xf]
    %v4097 = vld [vmem:[%s13 + $0x1a8] sm:$0xf]
    %v4098 = vld [vmem:[%s13 + $0x1ac] sm:$0xf]
    %v4099 = vld [vmem:[%s13 + $0x1b0] sm:$0xf]
    %v4100 = vld [vmem:[%s13 + $0x1b4] sm:$0xf]
    %v4101 = vld [vmem:[%s13 + $0x1b8] sm:$0xf]
    %v4102 = vld [vmem:[%s13 + $0x1bc] sm:$0xf]
    %v4103 = vld [vmem:[%s13 + $0x1c0] sm:$0xf]
    %v4104 = vld [vmem:[%s13 + $0x1c4] sm:$0xf]
    %v4105 = vld [vmem:[%s13 + $0x1c8] sm:$0xf]
    %v4106 = vld [vmem:[%s13 + $0x1cc] sm:$0xf]
    %v4107 = vld [vmem:[%s13 + $0x1d0] sm:$0xf]
    %v4108 = vld [vmem:[%s13 + $0x1d4] sm:$0xf]
    %v4109 = vld [vmem:[%s13 + $0x1d8] sm:$0xf]
    %v4110 = vld [vmem:[%s13 + $0x1dc] sm:$0xf]
    %v4111 = vld [vmem:[%s13 + $0x1e0] sm:$0xf]
    %v4112 = vld [vmem:[%s13 + $0x1e4] sm:$0xf]
    %v4113 = vld [vmem:[%s13 + $0x1e8] sm:$0xf]
    %v4114 = vld [vmem:[%s13 + $0x1ec] sm:$0xf]
    %v4115 = vld [vmem:[%s13 + $0x1f0] sm:$0xf]
    %v4116 = vld [vmem:[%s13 + $0x1f4] sm:$0xf]
    %v4117 = vld [vmem:[%s13 + $0x1f8] sm:$0xf]
    %v4118 = vld [vmem:[%s13 + $0x1fc] sm:$0xf]
    %v4119 = vld [vmem:[%s13 + $0x200] sm:$0xf]
    %v4120 = vld [vmem:[%s13 + $0x204] sm:$0xf]
    %v4121 = vld [vmem:[%s13 + $0x208] sm:$0xf]
    %v4122 = vld [vmem:[%s13 + $0x20c] sm:$0xf]
    %v4123 = vld [vmem:[%s13 + $0x210] sm:$0xf]
    %v4124 = vld [vmem:[%s13 + $0x214] sm:$0xf]
    %v4125 = vld [vmem:[%s13 + $0x218] sm:$0xf]
    %v4126 = vld [vmem:[%s13 + $0x21c] sm:$0xf]
    %v4127 = vld [vmem:[%s13 + $0x220] sm:$0xf]
    %v4128 = vld [vmem:[%s13 + $0x224] sm:$0xf]
    %v4129 = vld [vmem:[%s13 + $0x228] sm:$0xf]
    %v4130 = vld [vmem:[%s13 + $0x22c] sm:$0xf]
    %v4131 = vld [vmem:[%s13 + $0x230] sm:$0xf]
    %v4132 = vld [vmem:[%s13 + $0x234] sm:$0xf]
    %v4133 = vld [vmem:[%s13 + $0x238] sm:$0xf]
    %v4134 = vld [vmem:[%s13 + $0x23c] sm:$0xf]
    %v4135 = vld [vmem:[%s13 + $0x240] sm:$0xf]
    %v4136 = vld [vmem:[%s13 + $0x244] sm:$0xf]
    %v4137 = vld [vmem:[%s13 + $0x248] sm:$0xf]
    %v4138 = vld [vmem:[%s13 + $0x24c] sm:$0xf]
    %v4139 = vld [vmem:[%s13 + $0x250] sm:$0xf]
    %v4140 = vld [vmem:[%s13 + $0x254] sm:$0xf]
    %v4141 = vld [vmem:[%s13 + $0x258] sm:$0xf]
    %v4142 = vld [vmem:[%s13 + $0x25c] sm:$0xf]
    %v4143 = vld [vmem:[%s13 + $0x260] sm:$0xf]
    %v4144 = vld [vmem:[%s13 + $0x264] sm:$0xf]
    %v4145 = vld [vmem:[%s13 + $0x268] sm:$0xf]
    %v4146 = vld [vmem:[%s13 + $0x26c] sm:$0xf]
    %v4147 = vld [vmem:[%s13 + $0x270] sm:$0xf]
    %v4148 = vld [vmem:[%s13 + $0x274] sm:$0xf]
    %v4149 = vld [vmem:[%s13 + $0x278] sm:$0xf]
    %v4150 = vld [vmem:[%s13 + $0x27c] sm:$0xf]
    %v4151 = vld [vmem:[%s13 + $0x280] sm:$0xf]
    %v4152 = vld [vmem:[%s13 + $0x284] sm:$0xf]
    %v4153 = vld [vmem:[%s13 + $0x288] sm:$0xf]
    %v4154 = vld [vmem:[%s13 + $0x28c] sm:$0xf]
    %v4155 = vld [vmem:[%s13 + $0x290] sm:$0xf]
    %v4156 = vld [vmem:[%s13 + $0x294] sm:$0xf]
    %v4157 = vld [vmem:[%s13 + $0x298] sm:$0xf]
    %v4158 = vld [vmem:[%s13 + $0x29c] sm:$0xf]
    %v4159 = vld [vmem:[%s13 + $0x2a0] sm:$0xf]
    %v4160 = vld [vmem:[%s13 + $0x2a4] sm:$0xf]
    %v4161 = vld [vmem:[%s13 + $0x2a8] sm:$0xf]
    %v4162 = vld [vmem:[%s13 + $0x2ac] sm:$0xf]
    %v4163 = vld [vmem:[%s13 + $0x2b0] sm:$0xf]
    %v4164 = vld [vmem:[%s13 + $0x2b4] sm:$0xf]
    %v4165 = vld [vmem:[%s13 + $0x2b8] sm:$0xf]
    %v4166 = vld [vmem:[%s13 + $0x2bc] sm:$0xf]
    %v4167 = vld [vmem:[%s13 + $0x2c0] sm:$0xf]
    %v4168 = vld [vmem:[%s13 + $0x2c4] sm:$0xf]
    %v4169 = vld [vmem:[%s13 + $0x2c8] sm:$0xf]
    %v4170 = vld [vmem:[%s13 + $0x2cc] sm:$0xf]
    %v4171 = vld [vmem:[%s13 + $0x2d0] sm:$0xf]
    %v4172 = vld [vmem:[%s13 + $0x2d4] sm:$0xf]
    %v4173 = vld [vmem:[%s13 + $0x2d8] sm:$0xf]
    %v4174 = vld [vmem:[%s13 + $0x2dc] sm:$0xf]
    %v4175 = vld [vmem:[%s13 + $0x2e0] sm:$0xf]
    %v4176 = vld [vmem:[%s13 + $0x2e4] sm:$0xf]
    %v4177 = vld [vmem:[%s13 + $0x2e8] sm:$0xf]
    %v4178 = vld [vmem:[%s13 + $0x2ec] sm:$0xf]
    %v4179 = vld [vmem:[%s13 + $0x2f0] sm:$0xf]
    %v4180 = vld [vmem:[%s13 + $0x2f4] sm:$0xf]
    %v4181 = vld [vmem:[%s13 + $0x2f8] sm:$0xf]
    %v4182 = vld [vmem:[%s13 + $0x2fc] sm:$0xf]
    %v4183 = vld [vmem:[%s13 + $0x300] sm:$0xf]
    %v4184 = vld [vmem:[%s13 + $0x304] sm:$0xf]
    %v4185 = vld [vmem:[%s13 + $0x308] sm:$0xf]
    %v4186 = vld [vmem:[%s13 + $0x30c] sm:$0xf]
    %v4187 = vld [vmem:[%s13 + $0x310] sm:$0xf]
    %v4188 = vld [vmem:[%s13 + $0x314] sm:$0xf]
    %v4189 = vld [vmem:[%s13 + $0x318] sm:$0xf]
    %v4190 = vld [vmem:[%s13 + $0x31c] sm:$0xf]
    %v4191 = vld [vmem:[%s13 + $0x320] sm:$0xf]
    %v4192 = vld [vmem:[%s13 + $0x324] sm:$0xf]
    %v4193 = vld [vmem:[%s13 + $0x328] sm:$0xf]
    %v4194 = vld [vmem:[%s13 + $0x32c] sm:$0xf]
    %v4195 = vld [vmem:[%s13 + $0x330] sm:$0xf]
    %v4196 = vld [vmem:[%s13 + $0x334] sm:$0xf]
    %v4197 = vld [vmem:[%s13 + $0x338] sm:$0xf]
    %v4198 = vld [vmem:[%s13 + $0x33c] sm:$0xf]
    %v4199 = vld [vmem:[%s13 + $0x340] sm:$0xf]
    %v4200 = vld [vmem:[%s13 + $0x344] sm:$0xf]
    %v4201 = vld [vmem:[%s13 + $0x348] sm:$0xf]
    %v4202 = vld [vmem:[%s13 + $0x34c] sm:$0xf]
    %v4203 = vld [vmem:[%s13 + $0x350] sm:$0xf]
    %v4204 = vld [vmem:[%s13 + $0x354] sm:$0xf]
    %v4205 = vld [vmem:[%s13 + $0x358] sm:$0xf]
    %v4206 = vld [vmem:[%s13 + $0x35c] sm:$0xf]
    %v4207 = vld [vmem:[%s13 + $0x360] sm:$0xf]
    %v4208 = vld [vmem:[%s13 + $0x364] sm:$0xf]
    %v4209 = vld [vmem:[%s13 + $0x368] sm:$0xf]
    %v4210 = vld [vmem:[%s13 + $0x36c] sm:$0xf]
    %v4211 = vld [vmem:[%s13 + $0x370] sm:$0xf]
    %v4212 = vld [vmem:[%s13 + $0x374] sm:$0xf]
    %v4213 = vld [vmem:[%s13 + $0x378] sm:$0xf]
    %v4214 = vld [vmem:[%s13 + $0x37c] sm:$0xf]
    %v4215 = vld [vmem:[%s13 + $0x380] sm:$0xf]
    %v4216 = vld [vmem:[%s13 + $0x384] sm:$0xf]
    %v4217 = vld [vmem:[%s13 + $0x388] sm:$0xf]
    %v4218 = vld [vmem:[%s13 + $0x38c] sm:$0xf]
    %v4219 = vld [vmem:[%s13 + $0x390] sm:$0xf]
    %v4220 = vld [vmem:[%s13 + $0x394] sm:$0xf]
    %v4221 = vld [vmem:[%s13 + $0x398] sm:$0xf]
    %v4222 = vld [vmem:[%s13 + $0x39c] sm:$0xf]
    %v4223 = vld [vmem:[%s13 + $0x3a0] sm:$0xf]
    %v4224 = vld [vmem:[%s13 + $0x3a4] sm:$0xf]
    %v4225 = vld [vmem:[%s13 + $0x3a8] sm:$0xf]
    %v4226 = vld [vmem:[%s13 + $0x3ac] sm:$0xf]
    %v4227 = vld [vmem:[%s13 + $0x3b0] sm:$0xf]
    %v4228 = vld [vmem:[%s13 + $0x3b4] sm:$0xf]
    %v4229 = vld [vmem:[%s13 + $0x3b8] sm:$0xf]
    %v4230 = vld [vmem:[%s13 + $0x3bc] sm:$0xf]
    %v4231 = vld [vmem:[%s13 + $0x3c0] sm:$0xf]
    %v4232 = vld [vmem:[%s13 + $0x3c4] sm:$0xf]
    %v4233 = vld [vmem:[%s13 + $0x3c8] sm:$0xf]
    %v4234 = vld [vmem:[%s13 + $0x3cc] sm:$0xf]
    %v4235 = vld [vmem:[%s13 + $0x3d0] sm:$0xf]
    %v4236 = vld [vmem:[%s13 + $0x3d4] sm:$0xf]
    %v4237 = vld [vmem:[%s13 + $0x3d8] sm:$0xf]
    %v4238 = vld [vmem:[%s13 + $0x3dc] sm:$0xf]
    %v4239 = vld [vmem:[%s13 + $0x3e0] sm:$0xf]
    %v4240 = vld [vmem:[%s13 + $0x3e4] sm:$0xf]
    %v4241 = vld [vmem:[%s13 + $0x3e8] sm:$0xf]
    %v4242 = vld [vmem:[%s13 + $0x3ec] sm:$0xf]
    %v4243 = vld [vmem:[%s13 + $0x3f0] sm:$0xf]
    %v4244 = vld [vmem:[%s13 + $0x3f4] sm:$0xf]
    %v4245 = vld [vmem:[%s13 + $0x3f8] sm:$0xf]
    %v4246 = vld [vmem:[%s13 + $0x3fc] sm:$0xf]
    %v4247 = vld [vmem:[%s14] sm:$0x1]
    %v4249 = vperm.slane %v4247, 0
    %v4507 = vunpack.c.l.b16 %v3991
    %v4508 = vunpack.c.l.b16 %v3992
    %v4509 = vunpack.c.l.b16 %v3993
    %v4510 = vunpack.c.l.b16 %v3994
    %v4511 = vunpack.c.l.b16 %v3995
    %v4512 = vunpack.c.l.b16 %v3996
    %v4513 = vunpack.c.l.b16 %v3997
    %v4514 = vunpack.c.l.b16 %v3998
    %v4515 = vunpack.c.l.b16 %v3999
    %v4516 = vunpack.c.l.b16 %v4000
    %v4517 = vunpack.c.l.b16 %v4001
    %v4518 = vunpack.c.l.b16 %v4002
    %v4519 = vunpack.c.l.b16 %v4003
    %v4520 = vunpack.c.l.b16 %v4004
    %v4521 = vunpack.c.l.b16 %v4005
    %v4522 = vunpack.c.l.b16 %v4006
    %v4523 = vunpack.c.l.b16 %v4007
    %v4524 = vunpack.c.l.b16 %v4008
    %v4525 = vunpack.c.l.b16 %v4009
    %v4526 = vunpack.c.l.b16 %v4010
    %v4527 = vunpack.c.l.b16 %v4011
    %v4528 = vunpack.c.l.b16 %v4012
    %v4529 = vunpack.c.l.b16 %v4013
    %v4530 = vunpack.c.l.b16 %v4014
    %v4531 = vunpack.c.l.b16 %v4015
    %v4532 = vunpack.c.l.b16 %v4016
    %v4533 = vunpack.c.l.b16 %v4017
    %v4534 = vunpack.c.l.b16 %v4018
    %v4535 = vunpack.c.l.b16 %v4019
    %v4536 = vunpack.c.l.b16 %v4020
    %v4537 = vunpack.c.l.b16 %v4021
    %v4538 = vunpack.c.l.b16 %v4022
    %v4539 = vunpack.c.l.b16 %v4023
    %v4540 = vunpack.c.l.b16 %v4024
    %v4541 = vunpack.c.l.b16 %v4025
    %v4542 = vunpack.c.l.b16 %v4026
    %v4543 = vunpack.c.l.b16 %v4027
    %v4544 = vunpack.c.l.b16 %v4028
    %v4545 = vunpack.c.l.b16 %v4029
    %v4546 = vunpack.c.l.b16 %v4030
    %v4547 = vunpack.c.l.b16 %v4031
    %v4548 = vunpack.c.l.b16 %v4032
    %v4549 = vunpack.c.l.b16 %v4033
    %v4550 = vunpack.c.l.b16 %v4034
    %v4551 = vunpack.c.l.b16 %v4035
    %v4552 = vunpack.c.l.b16 %v4036
    %v4553 = vunpack.c.l.b16 %v4037
    %v4554 = vunpack.c.l.b16 %v4038
    %v4555 = vunpack.c.l.b16 %v4039
    %v4556 = vunpack.c.l.b16 %v4040
    %v4557 = vunpack.c.l.b16 %v4041
    %v4558 = vunpack.c.l.b16 %v4042
    %v4559 = vunpack.c.l.b16 %v4043
    %v4560 = vunpack.c.l.b16 %v4044
    %v4561 = vunpack.c.l.b16 %v4045
    %v4562 = vunpack.c.l.b16 %v4046
    %v4563 = vunpack.c.l.b16 %v4047
    %v4564 = vunpack.c.l.b16 %v4048
    %v4565 = vunpack.c.l.b16 %v4049
    %v4566 = vunpack.c.l.b16 %v4050
    %v4567 = vunpack.c.l.b16 %v4051
    %v4568 = vunpack.c.l.b16 %v4052
    %v4569 = vunpack.c.l.b16 %v4053
    %v4570 = vunpack.c.l.b16 %v4054
    %v4571 = vunpack.c.l.b16 %v4055
    %v4572 = vunpack.c.l.b16 %v4056
    %v4573 = vunpack.c.l.b16 %v4057
    %v4574 = vunpack.c.l.b16 %v4058
    %v4575 = vunpack.c.l.b16 %v4059
    %v4576 = vunpack.c.l.b16 %v4060
    %v4577 = vunpack.c.l.b16 %v4061
    %v4578 = vunpack.c.l.b16 %v4062
    %v4579 = vunpack.c.l.b16 %v4063
    %v4580 = vunpack.c.l.b16 %v4064
    %v4581 = vunpack.c.l.b16 %v4065
    %v4582 = vunpack.c.l.b16 %v4066
    %v4583 = vunpack.c.l.b16 %v4067
    %v4584 = vunpack.c.l.b16 %v4068
    %v4585 = vunpack.c.l.b16 %v4069
    %v4586 = vunpack.c.l.b16 %v4070
    %v4587 = vunpack.c.l.b16 %v4071
    %v4588 = vunpack.c.l.b16 %v4072
    %v4589 = vunpack.c.l.b16 %v4073
    %v4590 = vunpack.c.l.b16 %v4074
    %v4591 = vunpack.c.l.b16 %v4075
    %v4592 = vunpack.c.l.b16 %v4076
    %v4593 = vunpack.c.l.b16 %v4077
    %v4594 = vunpack.c.l.b16 %v4078
    %v4595 = vunpack.c.l.b16 %v4079
    %v4596 = vunpack.c.l.b16 %v4080
    %v4597 = vunpack.c.l.b16 %v4081
    %v4598 = vunpack.c.l.b16 %v4082
    %v4599 = vunpack.c.l.b16 %v4083
    %v4600 = vunpack.c.l.b16 %v4084
    %v4601 = vunpack.c.l.b16 %v4085
    %v4602 = vunpack.c.l.b16 %v4086
    %v4603 = vunpack.c.l.b16 %v4087
    %v4604 = vunpack.c.l.b16 %v4088
    %v4605 = vunpack.c.l.b16 %v4089
    %v4606 = vunpack.c.l.b16 %v4090
    %v4607 = vunpack.c.l.b16 %v4091
    %v4608 = vunpack.c.l.b16 %v4092
    %v4609 = vunpack.c.l.b16 %v4093
    %v4610 = vunpack.c.l.b16 %v4094
    %v4611 = vunpack.c.l.b16 %v4095
    %v4612 = vunpack.c.l.b16 %v4096
    %v4613 = vunpack.c.l.b16 %v4097
    %v4614 = vunpack.c.l.b16 %v4098
    %v4615 = vunpack.c.l.b16 %v4099
    %v4616 = vunpack.c.l.b16 %v4100
    %v4617 = vunpack.c.l.b16 %v4101
    %v4618 = vunpack.c.l.b16 %v4102
    %v4619 = vunpack.c.l.b16 %v4103
    %v4620 = vunpack.c.l.b16 %v4104
    %v4621 = vunpack.c.l.b16 %v4105
    %v4622 = vunpack.c.l.b16 %v4106
    %v4623 = vunpack.c.l.b16 %v4107
    %v4624 = vunpack.c.l.b16 %v4108
    %v4625 = vunpack.c.l.b16 %v4109
    %v4626 = vunpack.c.l.b16 %v4110
    %v4627 = vunpack.c.l.b16 %v4111
    %v4628 = vunpack.c.l.b16 %v4112
    %v4629 = vunpack.c.l.b16 %v4113
    %v4630 = vunpack.c.l.b16 %v4114
    %v4631 = vunpack.c.l.b16 %v4115
    %v4632 = vunpack.c.l.b16 %v4116
    %v4633 = vunpack.c.l.b16 %v4117
    %v4634 = vunpack.c.l.b16 %v4118
    %v4635 = vunpack.c.l.b16 %v4119
    %v4636 = vunpack.c.l.b16 %v4120
    %v4637 = vunpack.c.l.b16 %v4121
    %v4638 = vunpack.c.l.b16 %v4122
    %v4639 = vunpack.c.l.b16 %v4123
    %v4640 = vunpack.c.l.b16 %v4124
    %v4641 = vunpack.c.l.b16 %v4125
    %v4642 = vunpack.c.l.b16 %v4126
    %v4643 = vunpack.c.l.b16 %v4127
    %v4644 = vunpack.c.l.b16 %v4128
    %v4645 = vunpack.c.l.b16 %v4129
    %v4646 = vunpack.c.l.b16 %v4130
    %v4647 = vunpack.c.l.b16 %v4131
    %v4648 = vunpack.c.l.b16 %v4132
    %v4649 = vunpack.c.l.b16 %v4133
    %v4650 = vunpack.c.l.b16 %v4134
    %v4651 = vunpack.c.l.b16 %v4135
    %v4652 = vunpack.c.l.b16 %v4136
    %v4653 = vunpack.c.l.b16 %v4137
    %v4654 = vunpack.c.l.b16 %v4138
    %v4655 = vunpack.c.l.b16 %v4139
    %v4656 = vunpack.c.l.b16 %v4140
    %v4657 = vunpack.c.l.b16 %v4141
    %v4658 = vunpack.c.l.b16 %v4142
    %v4659 = vunpack.c.l.b16 %v4143
    %v4660 = vunpack.c.l.b16 %v4144
    %v4661 = vunpack.c.l.b16 %v4145
    %v4662 = vunpack.c.l.b16 %v4146
    %v4663 = vunpack.c.l.b16 %v4147
    %v4664 = vunpack.c.l.b16 %v4148
    %v4665 = vunpack.c.l.b16 %v4149
    %v4666 = vunpack.c.l.b16 %v4150
    %v4667 = vunpack.c.l.b16 %v4151
    %v4668 = vunpack.c.l.b16 %v4152
    %v4669 = vunpack.c.l.b16 %v4153
    %v4670 = vunpack.c.l.b16 %v4154
    %v4671 = vunpack.c.l.b16 %v4155
    %v4672 = vunpack.c.l.b16 %v4156
    %v4673 = vunpack.c.l.b16 %v4157
    %v4674 = vunpack.c.l.b16 %v4158
    %v4675 = vunpack.c.l.b16 %v4159
    %v4676 = vunpack.c.l.b16 %v4160
    %v4677 = vunpack.c.l.b16 %v4161
    %v4678 = vunpack.c.l.b16 %v4162
    %v4679 = vunpack.c.l.b16 %v4163
    %v4680 = vunpack.c.l.b16 %v4164
    %v4681 = vunpack.c.l.b16 %v4165
    %v4682 = vunpack.c.l.b16 %v4166
    %v4683 = vunpack.c.l.b16 %v4167
    %v4684 = vunpack.c.l.b16 %v4168
    %v4685 = vunpack.c.l.b16 %v4169
    %v4686 = vunpack.c.l.b16 %v4170
    %v4687 = vunpack.c.l.b16 %v4171
    %v4688 = vunpack.c.l.b16 %v4172
    %v4689 = vunpack.c.l.b16 %v4173
    %v4690 = vunpack.c.l.b16 %v4174
    %v4691 = vunpack.c.l.b16 %v4175
    %v4692 = vunpack.c.l.b16 %v4176
    %v4693 = vunpack.c.l.b16 %v4177
    %v4694 = vunpack.c.l.b16 %v4178
    %v4695 = vunpack.c.l.b16 %v4179
    %v4696 = vunpack.c.l.b16 %v4180
    %v4697 = vunpack.c.l.b16 %v4181
    %v4698 = vunpack.c.l.b16 %v4182
    %v4699 = vunpack.c.l.b16 %v4183
    %v4700 = vunpack.c.l.b16 %v4184
    %v4701 = vunpack.c.l.b16 %v4185
    %v4702 = vunpack.c.l.b16 %v4186
    %v4703 = vunpack.c.l.b16 %v4187
    %v4704 = vunpack.c.l.b16 %v4188
    %v4705 = vunpack.c.l.b16 %v4189
    %v4706 = vunpack.c.l.b16 %v4190
    %v4707 = vunpack.c.l.b16 %v4191
    %v4708 = vunpack.c.l.b16 %v4192
    %v4709 = vunpack.c.l.b16 %v4193
    %v4710 = vunpack.c.l.b16 %v4194
    %v4711 = vunpack.c.l.b16 %v4195
    %v4712 = vunpack.c.l.b16 %v4196
    %v4713 = vunpack.c.l.b16 %v4197
    %v4714 = vunpack.c.l.b16 %v4198
    %v4715 = vunpack.c.l.b16 %v4199
    %v4716 = vunpack.c.l.b16 %v4200
    %v4717 = vunpack.c.l.b16 %v4201
    %v4718 = vunpack.c.l.b16 %v4202
    %v4719 = vunpack.c.l.b16 %v4203
    %v4720 = vunpack.c.l.b16 %v4204
    %v4721 = vunpack.c.l.b16 %v4205
    %v4722 = vunpack.c.l.b16 %v4206
    %v4723 = vunpack.c.l.b16 %v4207
    %v4724 = vunpack.c.l.b16 %v4208
    %v4725 = vunpack.c.l.b16 %v4209
    %v4726 = vunpack.c.l.b16 %v4210
    %v4727 = vunpack.c.l.b16 %v4211
    %v4728 = vunpack.c.l.b16 %v4212
    %v4729 = vunpack.c.l.b16 %v4213
    %v4730 = vunpack.c.l.b16 %v4214
    %v4731 = vunpack.c.l.b16 %v4215
    %v4732 = vunpack.c.l.b16 %v4216
    %v4733 = vunpack.c.l.b16 %v4217
    %v4734 = vunpack.c.l.b16 %v4218
    %v4735 = vunpack.c.l.b16 %v4219
    %v4736 = vunpack.c.l.b16 %v4220
    %v4737 = vunpack.c.l.b16 %v4221
    %v4738 = vunpack.c.l.b16 %v4222
    %v4739 = vunpack.c.l.b16 %v4223
    %v4740 = vunpack.c.l.b16 %v4224
    %v4741 = vunpack.c.l.b16 %v4225
    %v4742 = vunpack.c.l.b16 %v4226
    %v4743 = vunpack.c.l.b16 %v4227
    %v4744 = vunpack.c.l.b16 %v4228
    %v4745 = vunpack.c.l.b16 %v4229
    %v4746 = vunpack.c.l.b16 %v4230
    %v4747 = vunpack.c.l.b16 %v4231
    %v4748 = vunpack.c.l.b16 %v4232
    %v4749 = vunpack.c.l.b16 %v4233
    %v4750 = vunpack.c.l.b16 %v4234
    %v4751 = vunpack.c.l.b16 %v4235
    %v4752 = vunpack.c.l.b16 %v4236
    %v4753 = vunpack.c.l.b16 %v4237
    %v4754 = vunpack.c.l.b16 %v4238
    %v4755 = vunpack.c.l.b16 %v4239
    %v4756 = vunpack.c.l.b16 %v4240
    %v4757 = vunpack.c.l.b16 %v4241
    %v4758 = vunpack.c.l.b16 %v4242
    %v4759 = vunpack.c.l.b16 %v4243
    %v4760 = vunpack.c.l.b16 %v4244
    %v4761 = vunpack.c.l.b16 %v4245
    %v4762 = vunpack.c.l.b16 %v4246
    %v4763 = vpack.c.b16 %v4508, %v4507
    %v4764 = vpack.c.b16 %v4510, %v4509
    %v4765 = vpack.c.b16 %v4512, %v4511
    %v4766 = vpack.c.b16 %v4514, %v4513
    %v4767 = vpack.c.b16 %v4516, %v4515
    %v4768 = vpack.c.b16 %v4518, %v4517
    %v4769 = vpack.c.b16 %v4520, %v4519
    %v4770 = vpack.c.b16 %v4522, %v4521
    %v4771 = vpack.c.b16 %v4524, %v4523
    %v4772 = vpack.c.b16 %v4526, %v4525
    %v4773 = vpack.c.b16 %v4528, %v4527
    %v4774 = vpack.c.b16 %v4530, %v4529
    %v4775 = vpack.c.b16 %v4532, %v4531
    %v4776 = vpack.c.b16 %v4534, %v4533
    %v4777 = vpack.c.b16 %v4536, %v4535
    %v4778 = vpack.c.b16 %v4538, %v4537
    %v4779 = vpack.c.b16 %v4540, %v4539
    %v4780 = vpack.c.b16 %v4542, %v4541
    %v4781 = vpack.c.b16 %v4544, %v4543
    %v4782 = vpack.c.b16 %v4546, %v4545
    %v4783 = vpack.c.b16 %v4548, %v4547
    %v4784 = vpack.c.b16 %v4550, %v4549
    %v4785 = vpack.c.b16 %v4552, %v4551
    %v4786 = vpack.c.b16 %v4554, %v4553
    %v4787 = vpack.c.b16 %v4556, %v4555
    %v4788 = vpack.c.b16 %v4558, %v4557
    %v4789 = vpack.c.b16 %v4560, %v4559
    %v4790 = vpack.c.b16 %v4562, %v4561
    %v4791 = vpack.c.b16 %v4564, %v4563
    %v4792 = vpack.c.b16 %v4566, %v4565
    %v4793 = vpack.c.b16 %v4568, %v4567
    %v4794 = vpack.c.b16 %v4570, %v4569
    %v4795 = vpack.c.b16 %v4572, %v4571
    %v4796 = vpack.c.b16 %v4574, %v4573
    %v4797 = vpack.c.b16 %v4576, %v4575
    %v4798 = vpack.c.b16 %v4578, %v4577
    %v4799 = vpack.c.b16 %v4580, %v4579
    %v4800 = vpack.c.b16 %v4582, %v4581
    %v4801 = vpack.c.b16 %v4584, %v4583
    %v4802 = vpack.c.b16 %v4586, %v4585
    %v4803 = vpack.c.b16 %v4588, %v4587
    %v4804 = vpack.c.b16 %v4590, %v4589
    %v4805 = vpack.c.b16 %v4592, %v4591
    %v4806 = vpack.c.b16 %v4594, %v4593
    %v4807 = vpack.c.b16 %v4596, %v4595
    %v4808 = vpack.c.b16 %v4598, %v4597
    %v4809 = vpack.c.b16 %v4600, %v4599
    %v4810 = vpack.c.b16 %v4602, %v4601
    %v4811 = vpack.c.b16 %v4604, %v4603
    %v4812 = vpack.c.b16 %v4606, %v4605
    %v4813 = vpack.c.b16 %v4608, %v4607
    %v4814 = vpack.c.b16 %v4610, %v4609
    %v4815 = vpack.c.b16 %v4612, %v4611
    %v4816 = vpack.c.b16 %v4614, %v4613
    %v4817 = vpack.c.b16 %v4616, %v4615
    %v4818 = vpack.c.b16 %v4618, %v4617
    %v4819 = vpack.c.b16 %v4620, %v4619
    %v4820 = vpack.c.b16 %v4622, %v4621
    %v4821 = vpack.c.b16 %v4624, %v4623
    %v4822 = vpack.c.b16 %v4626, %v4625
    %v4823 = vpack.c.b16 %v4628, %v4627
    %v4824 = vpack.c.b16 %v4630, %v4629
    %v4825 = vpack.c.b16 %v4632, %v4631
    %v4826 = vpack.c.b16 %v4634, %v4633
    %v4827 = vpack.c.b16 %v4636, %v4635
    %v4828 = vpack.c.b16 %v4638, %v4637
    %v4829 = vpack.c.b16 %v4640, %v4639
    %v4830 = vpack.c.b16 %v4642, %v4641
    %v4831 = vpack.c.b16 %v4644, %v4643
    %v4832 = vpack.c.b16 %v4646, %v4645
    %v4833 = vpack.c.b16 %v4648, %v4647
    %v4834 = vpack.c.b16 %v4650, %v4649
    %v4835 = vpack.c.b16 %v4652, %v4651
    %v4836 = vpack.c.b16 %v4654, %v4653
    %v4837 = vpack.c.b16 %v4656, %v4655
    %v4838 = vpack.c.b16 %v4658, %v4657
    %v4839 = vpack.c.b16 %v4660, %v4659
    %v4840 = vpack.c.b16 %v4662, %v4661
    %v4841 = vpack.c.b16 %v4664, %v4663
    %v4842 = vpack.c.b16 %v4666, %v4665
    %v4843 = vpack.c.b16 %v4668, %v4667
    %v4844 = vpack.c.b16 %v4670, %v4669
    %v4845 = vpack.c.b16 %v4672, %v4671
    %v4846 = vpack.c.b16 %v4674, %v4673
    %v4847 = vpack.c.b16 %v4676, %v4675
    %v4848 = vpack.c.b16 %v4678, %v4677
    %v4849 = vpack.c.b16 %v4680, %v4679
    %v4850 = vpack.c.b16 %v4682, %v4681
    %v4851 = vpack.c.b16 %v4684, %v4683
    %v4852 = vpack.c.b16 %v4686, %v4685
    %v4853 = vpack.c.b16 %v4688, %v4687
    %v4854 = vpack.c.b16 %v4690, %v4689
    %v4855 = vpack.c.b16 %v4692, %v4691
    %v4856 = vpack.c.b16 %v4694, %v4693
    %v4857 = vpack.c.b16 %v4696, %v4695
    %v4858 = vpack.c.b16 %v4698, %v4697
    %v4859 = vpack.c.b16 %v4700, %v4699
    %v4860 = vpack.c.b16 %v4702, %v4701
    %v4861 = vpack.c.b16 %v4704, %v4703
    %v4862 = vpack.c.b16 %v4706, %v4705
    %v4863 = vpack.c.b16 %v4708, %v4707
    %v4864 = vpack.c.b16 %v4710, %v4709
    %v4865 = vpack.c.b16 %v4712, %v4711
    %v4866 = vpack.c.b16 %v4714, %v4713
    %v4867 = vpack.c.b16 %v4716, %v4715
    %v4868 = vpack.c.b16 %v4718, %v4717
    %v4869 = vpack.c.b16 %v4720, %v4719
    %v4870 = vpack.c.b16 %v4722, %v4721
    %v4871 = vpack.c.b16 %v4724, %v4723
    %v4872 = vpack.c.b16 %v4726, %v4725
    %v4873 = vpack.c.b16 %v4728, %v4727
    %v4874 = vpack.c.b16 %v4730, %v4729
    %v4875 = vpack.c.b16 %v4732, %v4731
    %v4876 = vpack.c.b16 %v4734, %v4733
    %v4877 = vpack.c.b16 %v4736, %v4735
    %v4878 = vpack.c.b16 %v4738, %v4737
    %v4879 = vpack.c.b16 %v4740, %v4739
    %v4880 = vpack.c.b16 %v4742, %v4741
    %v4881 = vpack.c.b16 %v4744, %v4743
    %v4882 = vpack.c.b16 %v4746, %v4745
    %v4883 = vpack.c.b16 %v4748, %v4747
    %v4884 = vpack.c.b16 %v4750, %v4749
    %v4885 = vpack.c.b16 %v4752, %v4751
    %v4886 = vpack.c.b16 %v4754, %v4753
    %v4887 = vpack.c.b16 %v4756, %v4755
    %v4888 = vpack.c.b16 %v4758, %v4757
    %v4889 = vpack.c.b16 %v4760, %v4759
    %v4890 = vpack.c.b16 %v4762, %v4761
    %5019 = vmatpush.bf16.msra.mxu0 %v4770
    %5020 = vmatpush.bf16.msra.mxu0 %v4769
    %5021 = vmatpush.bf16.msra.mxu0 %v4768
    %5022 = vmatpush.bf16.msra.mxu0 %v4767
    %5023 = vmatpush.bf16.msra.mxu0 %v4766
    %5024 = vmatpush.bf16.msra.mxu0 %v4765
    %5025 = vmatpush.bf16.msra.mxu0 %v4764
    %5026 = vmatpush.bf16.msra.mxu0 %v4763
    %5027 = vmatmul.bf16.gmra.mxu0 %v3927
    %v5028 = vpop.f32.mrf.mxu0
    %v5029 = vadd.f32 %v4249, %v5028
    %v5030 = vpop.f32.mrf.mxu0
    %v5031 = vadd.f32 %v4249, %v5030
    %5032 = vmatmul.bf16.gmra.mxu0 %v3943
    %v5033 = vpop.f32.mrf.mxu0
    %v5034 = vadd.f32 %v4249, %v5033
    %v5035 = vpop.f32.mrf.mxu0
    %v5036 = vadd.f32 %v4249, %v5035
    %5037 = vmatmul.bf16.gmra.mxu0 %v3959
    %v5038 = vpop.f32.mrf.mxu0
    %v5039 = vadd.f32 %v4249, %v5038
    %v5040 = vpop.f32.mrf.mxu0
    %v5041 = vadd.f32 %v4249, %v5040
    %5042 = vmatmul.bf16.gmra.mxu0 %v3975
    %v5043 = vpop.f32.mrf.mxu0
    %v5044 = vadd.f32 %v4249, %v5043
    %v5045 = vpop.f32.mrf.mxu0
    %v5046 = vadd.f32 %v4249, %v5045
    %5047 = vdwg.mxu0
    %5048 = vmatpush.bf16.msra.mxu0 %v4778
    %5049 = vmatpush.bf16.msra.mxu0 %v4777
    %5050 = vmatpush.bf16.msra.mxu0 %v4776
    %5051 = vmatpush.bf16.msra.mxu0 %v4775
    %5052 = vmatpush.bf16.msra.mxu0 %v4774
    %5053 = vmatpush.bf16.msra.mxu0 %v4773
    %5054 = vmatpush.bf16.msra.mxu0 %v4772
    %5055 = vmatpush.bf16.msra.mxu0 %v4771
    %5056 = vmatmul.bf16.gmra.mxu0 %v3928
    %v5057 = vpop.f32.mrf.mxu0
    %v5058 = vadd.f32 %v5029, %v5057
    %v5059 = vpop.f32.mrf.mxu0
    %v5060 = vadd.f32 %v5031, %v5059
    %5061 = vmatmul.bf16.gmra.mxu0 %v3944
    %v5062 = vpop.f32.mrf.mxu0
    %v5063 = vadd.f32 %v5034, %v5062
    %v5064 = vpop.f32.mrf.mxu0
    %v5065 = vadd.f32 %v5036, %v5064
    %5066 = vmatmul.bf16.gmra.mxu0 %v3960
    %v5067 = vpop.f32.mrf.mxu0
    %v5068 = vadd.f32 %v5039, %v5067
    %v5069 = vpop.f32.mrf.mxu0
    %v5070 = vadd.f32 %v5041, %v5069
    %5071 = vmatmul.bf16.gmra.mxu0 %v3976
    %v5072 = vpop.f32.mrf.mxu0
    %v5073 = vadd.f32 %v5044, %v5072
    %v5074 = vpop.f32.mrf.mxu0
    %v5075 = vadd.f32 %v5046, %v5074
    %5076 = vdwg.mxu0
    %5077 = vmatpush.bf16.msra.mxu0 %v4786
    %5078 = vmatpush.bf16.msra.mxu0 %v4785
    %5079 = vmatpush.bf16.msra.mxu0 %v4784
    %5080 = vmatpush.bf16.msra.mxu0 %v4783
    %5081 = vmatpush.bf16.msra.mxu0 %v4782
    %5082 = vmatpush.bf16.msra.mxu0 %v4781
    %5083 = vmatpush.bf16.msra.mxu0 %v4780
    %5084 = vmatpush.bf16.msra.mxu0 %v4779
    %5085 = vmatmul.bf16.gmra.mxu0 %v3929
    %v5086 = vpop.f32.mrf.mxu0
    %v5087 = vadd.f32 %v5058, %v5086
    %v5088 = vpop.f32.mrf.mxu0
    %v5089 = vadd.f32 %v5060, %v5088
    %5090 = vmatmul.bf16.gmra.mxu0 %v3945
    %v5091 = vpop.f32.mrf.mxu0
    %v5092 = vadd.f32 %v5063, %v5091
    %v5093 = vpop.f32.mrf.mxu0
    %v5094 = vadd.f32 %v5065, %v5093
    %5095 = vmatmul.bf16.gmra.mxu0 %v3961
    %v5096 = vpop.f32.mrf.mxu0
    %v5097 = vadd.f32 %v5068, %v5096
    %v5098 = vpop.f32.mrf.mxu0
    %v5099 = vadd.f32 %v5070, %v5098
    %5100 = vmatmul.bf16.gmra.mxu0 %v3977
    %v5101 = vpop.f32.mrf.mxu0
    %v5102 = vadd.f32 %v5073, %v5101
    %v5103 = vpop.f32.mrf.mxu0
    %v5104 = vadd.f32 %v5075, %v5103
    %5105 = vdwg.mxu0
    %5106 = vmatpush.bf16.msra.mxu0 %v4794
    %5107 = vmatpush.bf16.msra.mxu0 %v4793
    %5108 = vmatpush.bf16.msra.mxu0 %v4792
    %5109 = vmatpush.bf16.msra.mxu0 %v4791
    %5110 = vmatpush.bf16.msra.mxu0 %v4790
    %5111 = vmatpush.bf16.msra.mxu0 %v4789
    %5112 = vmatpush.bf16.msra.mxu0 %v4788
    %5113 = vmatpush.bf16.msra.mxu0 %v4787
    %5114 = vmatmul.bf16.gmra.mxu0 %v3930
    %v5115 = vpop.f32.mrf.mxu0
    %v5116 = vadd.f32 %v5087, %v5115
    %v5117 = vpop.f32.mrf.mxu0
    %v5118 = vadd.f32 %v5089, %v5117
    %5119 = vmatmul.bf16.gmra.mxu0 %v3946
    %v5120 = vpop.f32.mrf.mxu0
    %v5121 = vadd.f32 %v5092, %v5120
    %v5122 = vpop.f32.mrf.mxu0
    %v5123 = vadd.f32 %v5094, %v5122
    %5124 = vmatmul.bf16.gmra.mxu0 %v3962
    %v5125 = vpop.f32.mrf.mxu0
    %v5126 = vadd.f32 %v5097, %v5125
    %v5127 = vpop.f32.mrf.mxu0
    %v5128 = vadd.f32 %v5099, %v5127
    %5129 = vmatmul.bf16.gmra.mxu0 %v3978
    %v5130 = vpop.f32.mrf.mxu0
    %v5131 = vadd.f32 %v5102, %v5130
    %v5132 = vpop.f32.mrf.mxu0
    %v5133 = vadd.f32 %v5104, %v5132
    %5134 = vdwg.mxu0
    %5135 = vmatpush.bf16.msra.mxu0 %v4802
    %5136 = vmatpush.bf16.msra.mxu0 %v4801
    %5137 = vmatpush.bf16.msra.mxu0 %v4800
    %5138 = vmatpush.bf16.msra.mxu0 %v4799
    %5139 = vmatpush.bf16.msra.mxu0 %v4798
    %5140 = vmatpush.bf16.msra.mxu0 %v4797
    %5141 = vmatpush.bf16.msra.mxu0 %v4796
    %5142 = vmatpush.bf16.msra.mxu0 %v4795
    %5143 = vmatmul.bf16.gmra.mxu0 %v3931
    %v5144 = vpop.f32.mrf.mxu0
    %v5145 = vadd.f32 %v5116, %v5144
    %v5146 = vpop.f32.mrf.mxu0
    %v5147 = vadd.f32 %v5118, %v5146
    %5148 = vmatmul.bf16.gmra.mxu0 %v3947
    %v5149 = vpop.f32.mrf.mxu0
    %v5150 = vadd.f32 %v5121, %v5149
    %v5151 = vpop.f32.mrf.mxu0
    %v5152 = vadd.f32 %v5123, %v5151
    %5153 = vmatmul.bf16.gmra.mxu0 %v3963
    %v5154 = vpop.f32.mrf.mxu0
    %v5155 = vadd.f32 %v5126, %v5154
    %v5156 = vpop.f32.mrf.mxu0
    %v5157 = vadd.f32 %v5128, %v5156
    %5158 = vmatmul.bf16.gmra.mxu0 %v3979
    %v5159 = vpop.f32.mrf.mxu0
    %v5160 = vadd.f32 %v5131, %v5159
    %v5161 = vpop.f32.mrf.mxu0
    %v5162 = vadd.f32 %v5133, %v5161
    %5163 = vdwg.mxu0
    %5164 = vmatpush.bf16.msra.mxu0 %v4810
    %5165 = vmatpush.bf16.msra.mxu0 %v4809
    %5166 = vmatpush.bf16.msra.mxu0 %v4808
    %5167 = vmatpush.bf16.msra.mxu0 %v4807
    %5168 = vmatpush.bf16.msra.mxu0 %v4806
    %5169 = vmatpush.bf16.msra.mxu0 %v4805
    %5170 = vmatpush.bf16.msra.mxu0 %v4804
    %5171 = vmatpush.bf16.msra.mxu0 %v4803
    %5172 = vmatmul.bf16.gmra.mxu0 %v3932
    %v5173 = vpop.f32.mrf.mxu0
    %v5174 = vadd.f32 %v5145, %v5173
    %v5175 = vpop.f32.mrf.mxu0
    %v5176 = vadd.f32 %v5147, %v5175
    %5177 = vmatmul.bf16.gmra.mxu0 %v3948
    %v5178 = vpop.f32.mrf.mxu0
    %v5179 = vadd.f32 %v5150, %v5178
    %v5180 = vpop.f32.mrf.mxu0
    %v5181 = vadd.f32 %v5152, %v5180
    %5182 = vmatmul.bf16.gmra.mxu0 %v3964
    %v5183 = vpop.f32.mrf.mxu0
    %v5184 = vadd.f32 %v5155, %v5183
    %v5185 = vpop.f32.mrf.mxu0
    %v5186 = vadd.f32 %v5157, %v5185
    %5187 = vmatmul.bf16.gmra.mxu0 %v3980
    %v5188 = vpop.f32.mrf.mxu0
    %v5189 = vadd.f32 %v5160, %v5188
    %v5190 = vpop.f32.mrf.mxu0
    %v5191 = vadd.f32 %v5162, %v5190
    %5192 = vdwg.mxu0
    %5193 = vmatpush.bf16.msra.mxu0 %v4818
    %5194 = vmatpush.bf16.msra.mxu0 %v4817
    %5195 = vmatpush.bf16.msra.mxu0 %v4816
    %5196 = vmatpush.bf16.msra.mxu0 %v4815
    %5197 = vmatpush.bf16.msra.mxu0 %v4814
    %5198 = vmatpush.bf16.msra.mxu0 %v4813
    %5199 = vmatpush.bf16.msra.mxu0 %v4812
    %5200 = vmatpush.bf16.msra.mxu0 %v4811
    %5201 = vmatmul.bf16.gmra.mxu0 %v3933
    %v5202 = vpop.f32.mrf.mxu0
    %v5203 = vadd.f32 %v5174, %v5202
    %v5204 = vpop.f32.mrf.mxu0
    %v5205 = vadd.f32 %v5176, %v5204
    %5206 = vmatmul.bf16.gmra.mxu0 %v3949
    %v5207 = vpop.f32.mrf.mxu0
    %v5208 = vadd.f32 %v5179, %v5207
    %v5209 = vpop.f32.mrf.mxu0
    %v5210 = vadd.f32 %v5181, %v5209
    %5211 = vmatmul.bf16.gmra.mxu0 %v3965
    %v5212 = vpop.f32.mrf.mxu0
    %v5213 = vadd.f32 %v5184, %v5212
    %v5214 = vpop.f32.mrf.mxu0
    %v5215 = vadd.f32 %v5186, %v5214
    %5216 = vmatmul.bf16.gmra.mxu0 %v3981
    %v5217 = vpop.f32.mrf.mxu0
    %v5218 = vadd.f32 %v5189, %v5217
    %v5219 = vpop.f32.mrf.mxu0
    %v5220 = vadd.f32 %v5191, %v5219
    %5221 = vdwg.mxu0
    %5222 = vmatpush.bf16.msra.mxu0 %v4826
    %5223 = vmatpush.bf16.msra.mxu0 %v4825
    %5224 = vmatpush.bf16.msra.mxu0 %v4824
    %5225 = vmatpush.bf16.msra.mxu0 %v4823
    %5226 = vmatpush.bf16.msra.mxu0 %v4822
    %5227 = vmatpush.bf16.msra.mxu0 %v4821
    %5228 = vmatpush.bf16.msra.mxu0 %v4820
    %5229 = vmatpush.bf16.msra.mxu0 %v4819
    %5230 = vmatmul.bf16.gmra.mxu0 %v3934
    %v5231 = vpop.f32.mrf.mxu0
    %v5232 = vadd.f32 %v5203, %v5231
    %v5233 = vpop.f32.mrf.mxu0
    %v5234 = vadd.f32 %v5205, %v5233
    %5235 = vmatmul.bf16.gmra.mxu0 %v3950
    %v5236 = vpop.f32.mrf.mxu0
    %v5237 = vadd.f32 %v5208, %v5236
    %v5238 = vpop.f32.mrf.mxu0
    %v5239 = vadd.f32 %v5210, %v5238
    %5240 = vmatmul.bf16.gmra.mxu0 %v3966
    %v5241 = vpop.f32.mrf.mxu0
    %v5242 = vadd.f32 %v5213, %v5241
    %v5243 = vpop.f32.mrf.mxu0
    %v5244 = vadd.f32 %v5215, %v5243
    %5245 = vmatmul.bf16.gmra.mxu0 %v3982
    %v5246 = vpop.f32.mrf.mxu0
    %v5247 = vadd.f32 %v5218, %v5246
    %v5248 = vpop.f32.mrf.mxu0
    %v5249 = vadd.f32 %v5220, %v5248
    %5250 = vdwg.mxu0
    %5251 = vmatpush.bf16.msra.mxu0 %v4834
    %5252 = vmatpush.bf16.msra.mxu0 %v4833
    %5253 = vmatpush.bf16.msra.mxu0 %v4832
    %5254 = vmatpush.bf16.msra.mxu0 %v4831
    %5255 = vmatpush.bf16.msra.mxu0 %v4830
    %5256 = vmatpush.bf16.msra.mxu0 %v4829
    %5257 = vmatpush.bf16.msra.mxu0 %v4828
    %5258 = vmatpush.bf16.msra.mxu0 %v4827
    %5259 = vmatmul.bf16.gmra.mxu0 %v3935
    %v5260 = vpop.f32.mrf.mxu0
    %v5261 = vadd.f32 %v5232, %v5260
    %v5262 = vpop.f32.mrf.mxu0
    %v5263 = vadd.f32 %v5234, %v5262
    %5264 = vmatmul.bf16.gmra.mxu0 %v3951
    %v5265 = vpop.f32.mrf.mxu0
    %v5266 = vadd.f32 %v5237, %v5265
    %v5267 = vpop.f32.mrf.mxu0
    %v5268 = vadd.f32 %v5239, %v5267
    %5269 = vmatmul.bf16.gmra.mxu0 %v3967
    %v5270 = vpop.f32.mrf.mxu0
    %v5271 = vadd.f32 %v5242, %v5270
    %v5272 = vpop.f32.mrf.mxu0
    %v5273 = vadd.f32 %v5244, %v5272
    %5274 = vmatmul.bf16.gmra.mxu0 %v3983
    %v5275 = vpop.f32.mrf.mxu0
    %v5276 = vadd.f32 %v5247, %v5275
    %v5277 = vpop.f32.mrf.mxu0
    %v5278 = vadd.f32 %v5249, %v5277
    %5279 = vdwg.mxu0
    %5280 = vmatpush.bf16.msra.mxu0 %v4842
    %5281 = vmatpush.bf16.msra.mxu0 %v4841
    %5282 = vmatpush.bf16.msra.mxu0 %v4840
    %5283 = vmatpush.bf16.msra.mxu0 %v4839
    %5284 = vmatpush.bf16.msra.mxu0 %v4838
    %5285 = vmatpush.bf16.msra.mxu0 %v4837
    %5286 = vmatpush.bf16.msra.mxu0 %v4836
    %5287 = vmatpush.bf16.msra.mxu0 %v4835
    %5288 = vmatmul.bf16.gmra.mxu0 %v3936
    %v5289 = vpop.f32.mrf.mxu0
    %v5290 = vadd.f32 %v5261, %v5289
    %v5291 = vpop.f32.mrf.mxu0
    %v5292 = vadd.f32 %v5263, %v5291
    %5293 = vmatmul.bf16.gmra.mxu0 %v3952
    %v5294 = vpop.f32.mrf.mxu0
    %v5295 = vadd.f32 %v5266, %v5294
    %v5296 = vpop.f32.mrf.mxu0
    %v5297 = vadd.f32 %v5268, %v5296
    %5298 = vmatmul.bf16.gmra.mxu0 %v3968
    %v5299 = vpop.f32.mrf.mxu0
    %v5300 = vadd.f32 %v5271, %v5299
    %v5301 = vpop.f32.mrf.mxu0
    %v5302 = vadd.f32 %v5273, %v5301
    %5303 = vmatmul.bf16.gmra.mxu0 %v3984
    %v5304 = vpop.f32.mrf.mxu0
    %v5305 = vadd.f32 %v5276, %v5304
    %v5306 = vpop.f32.mrf.mxu0
    %v5307 = vadd.f32 %v5278, %v5306
    %5308 = vdwg.mxu0
    %5309 = vmatpush.bf16.msra.mxu0 %v4850
    %5310 = vmatpush.bf16.msra.mxu0 %v4849
    %5311 = vmatpush.bf16.msra.mxu0 %v4848
    %5312 = vmatpush.bf16.msra.mxu0 %v4847
    %5313 = vmatpush.bf16.msra.mxu0 %v4846
    %5314 = vmatpush.bf16.msra.mxu0 %v4845
    %5315 = vmatpush.bf16.msra.mxu0 %v4844
    %5316 = vmatpush.bf16.msra.mxu0 %v4843
    %5317 = vmatmul.bf16.gmra.mxu0 %v3937
    %v5318 = vpop.f32.mrf.mxu0
    %v5319 = vadd.f32 %v5290, %v5318
    %v5320 = vpop.f32.mrf.mxu0
    %v5321 = vadd.f32 %v5292, %v5320
    %5322 = vmatmul.bf16.gmra.mxu0 %v3953
    %v5323 = vpop.f32.mrf.mxu0
    %v5324 = vadd.f32 %v5295, %v5323
    %v5325 = vpop.f32.mrf.mxu0
    %v5326 = vadd.f32 %v5297, %v5325
    %5327 = vmatmul.bf16.gmra.mxu0 %v3969
    %v5328 = vpop.f32.mrf.mxu0
    %v5329 = vadd.f32 %v5300, %v5328
    %v5330 = vpop.f32.mrf.mxu0
    %v5331 = vadd.f32 %v5302, %v5330
    %5332 = vmatmul.bf16.gmra.mxu0 %v3985
    %v5333 = vpop.f32.mrf.mxu0
    %v5334 = vadd.f32 %v5305, %v5333
    %v5335 = vpop.f32.mrf.mxu0
    %v5336 = vadd.f32 %v5307, %v5335
    %5337 = vdwg.mxu0
    %5338 = vmatpush.bf16.msra.mxu0 %v4858
    %5339 = vmatpush.bf16.msra.mxu0 %v4857
    %5340 = vmatpush.bf16.msra.mxu0 %v4856
    %5341 = vmatpush.bf16.msra.mxu0 %v4855
    %5342 = vmatpush.bf16.msra.mxu0 %v4854
    %5343 = vmatpush.bf16.msra.mxu0 %v4853
    %5344 = vmatpush.bf16.msra.mxu0 %v4852
    %5345 = vmatpush.bf16.msra.mxu0 %v4851
    %5346 = vmatmul.bf16.gmra.mxu0 %v3938
    %v5347 = vpop.f32.mrf.mxu0
    %v5348 = vadd.f32 %v5319, %v5347
    %v5349 = vpop.f32.mrf.mxu0
    %v5350 = vadd.f32 %v5321, %v5349
    %5351 = vmatmul.bf16.gmra.mxu0 %v3954
    %v5352 = vpop.f32.mrf.mxu0
    %v5353 = vadd.f32 %v5324, %v5352
    %v5354 = vpop.f32.mrf.mxu0
    %v5355 = vadd.f32 %v5326, %v5354
    %5356 = vmatmul.bf16.gmra.mxu0 %v3970
    %v5357 = vpop.f32.mrf.mxu0
    %v5358 = vadd.f32 %v5329, %v5357
    %v5359 = vpop.f32.mrf.mxu0
    %v5360 = vadd.f32 %v5331, %v5359
    %5361 = vmatmul.bf16.gmra.mxu0 %v3986
    %v5362 = vpop.f32.mrf.mxu0
    %v5363 = vadd.f32 %v5334, %v5362
    %v5364 = vpop.f32.mrf.mxu0
    %v5365 = vadd.f32 %v5336, %v5364
    %5366 = vdwg.mxu0
    %5367 = vmatpush.bf16.msra.mxu0 %v4866
    %5368 = vmatpush.bf16.msra.mxu0 %v4865
    %5369 = vmatpush.bf16.msra.mxu0 %v4864
    %5370 = vmatpush.bf16.msra.mxu0 %v4863
    %5371 = vmatpush.bf16.msra.mxu0 %v4862
    %5372 = vmatpush.bf16.msra.mxu0 %v4861
    %5373 = vmatpush.bf16.msra.mxu0 %v4860
    %5374 = vmatpush.bf16.msra.mxu0 %v4859
    %5375 = vmatmul.bf16.gmra.mxu0 %v3939
    %v5376 = vpop.f32.mrf.mxu0
    %v5377 = vadd.f32 %v5348, %v5376
    %v5378 = vpop.f32.mrf.mxu0
    %v5379 = vadd.f32 %v5350, %v5378
    %5380 = vmatmul.bf16.gmra.mxu0 %v3955
    %v5381 = vpop.f32.mrf.mxu0
    %v5382 = vadd.f32 %v5353, %v5381
    %v5383 = vpop.f32.mrf.mxu0
    %v5384 = vadd.f32 %v5355, %v5383
    %5385 = vmatmul.bf16.gmra.mxu0 %v3971
    %v5386 = vpop.f32.mrf.mxu0
    %v5387 = vadd.f32 %v5358, %v5386
    %v5388 = vpop.f32.mrf.mxu0
    %v5389 = vadd.f32 %v5360, %v5388
    %5390 = vmatmul.bf16.gmra.mxu0 %v3987
    %v5391 = vpop.f32.mrf.mxu0
    %v5392 = vadd.f32 %v5363, %v5391
    %v5393 = vpop.f32.mrf.mxu0
    %v5394 = vadd.f32 %v5365, %v5393
    %5395 = vdwg.mxu0
    %5396 = vmatpush.bf16.msra.mxu0 %v4874
    %5397 = vmatpush.bf16.msra.mxu0 %v4873
    %5398 = vmatpush.bf16.msra.mxu0 %v4872
    %5399 = vmatpush.bf16.msra.mxu0 %v4871
    %5400 = vmatpush.bf16.msra.mxu0 %v4870
    %5401 = vmatpush.bf16.msra.mxu0 %v4869
    %5402 = vmatpush.bf16.msra.mxu0 %v4868
    %5403 = vmatpush.bf16.msra.mxu0 %v4867
    %5404 = vmatmul.bf16.gmra.mxu0 %v3940
    %v5405 = vpop.f32.mrf.mxu0
    %v5406 = vadd.f32 %v5377, %v5405
    %v5407 = vpop.f32.mrf.mxu0
    %v5408 = vadd.f32 %v5379, %v5407
    %5409 = vmatmul.bf16.gmra.mxu0 %v3956
    %v5410 = vpop.f32.mrf.mxu0
    %v5411 = vadd.f32 %v5382, %v5410
    %v5412 = vpop.f32.mrf.mxu0
    %v5413 = vadd.f32 %v5384, %v5412
    %5414 = vmatmul.bf16.gmra.mxu0 %v3972
    %v5415 = vpop.f32.mrf.mxu0
    %v5416 = vadd.f32 %v5387, %v5415
    %v5417 = vpop.f32.mrf.mxu0
    %v5418 = vadd.f32 %v5389, %v5417
    %5419 = vmatmul.bf16.gmra.mxu0 %v3988
    %v5420 = vpop.f32.mrf.mxu0
    %v5421 = vadd.f32 %v5392, %v5420
    %v5422 = vpop.f32.mrf.mxu0
    %v5423 = vadd.f32 %v5394, %v5422
    %5424 = vdwg.mxu0
    %5425 = vmatpush.bf16.msra.mxu0 %v4882
    %5426 = vmatpush.bf16.msra.mxu0 %v4881
    %5427 = vmatpush.bf16.msra.mxu0 %v4880
    %5428 = vmatpush.bf16.msra.mxu0 %v4879
    %5429 = vmatpush.bf16.msra.mxu0 %v4878
    %5430 = vmatpush.bf16.msra.mxu0 %v4877
    %5431 = vmatpush.bf16.msra.mxu0 %v4876
    %5432 = vmatpush.bf16.msra.mxu0 %v4875
    %5433 = vmatmul.bf16.gmra.mxu0 %v3941
    %v5434 = vpop.f32.mrf.mxu0
    %v5435 = vadd.f32 %v5406, %v5434
    %v5436 = vpop.f32.mrf.mxu0
    %v5437 = vadd.f32 %v5408, %v5436
    %5438 = vmatmul.bf16.gmra.mxu0 %v3957
    %v5439 = vpop.f32.mrf.mxu0
    %v5440 = vadd.f32 %v5411, %v5439
    %v5441 = vpop.f32.mrf.mxu0
    %v5442 = vadd.f32 %v5413, %v5441
    %5443 = vmatmul.bf16.gmra.mxu0 %v3973
    %v5444 = vpop.f32.mrf.mxu0
    %v5445 = vadd.f32 %v5416, %v5444
    %v5446 = vpop.f32.mrf.mxu0
    %v5447 = vadd.f32 %v5418, %v5446
    %5448 = vmatmul.bf16.gmra.mxu0 %v3989
    %v5449 = vpop.f32.mrf.mxu0
    %v5450 = vadd.f32 %v5421, %v5449
    %v5451 = vpop.f32.mrf.mxu0
    %v5452 = vadd.f32 %v5423, %v5451
    %5453 = vdwg.mxu0
    %5454 = vmatpush.bf16.msra.mxu0 %v4890
    %5455 = vmatpush.bf16.msra.mxu0 %v4889
    %5456 = vmatpush.bf16.msra.mxu0 %v4888
    %5457 = vmatpush.bf16.msra.mxu0 %v4887
    %5458 = vmatpush.bf16.msra.mxu0 %v4886
    %5459 = vmatpush.bf16.msra.mxu0 %v4885
    %5460 = vmatpush.bf16.msra.mxu0 %v4884
    %5461 = vmatpush.bf16.msra.mxu0 %v4883
    %5462 = vmatmul.bf16.gmra.mxu0 %v3942
    %v5463 = vpop.f32.mrf.mxu0
    %v5464 = vadd.f32 %v5435, %v5463
    %v5465 = vpop.f32.mrf.mxu0
    %v5466 = vadd.f32 %v5437, %v5465
    %5467 = vmatmul.bf16.gmra.mxu0 %v3958
    %v5468 = vpop.f32.mrf.mxu0
    %v5469 = vadd.f32 %v5440, %v5468
    %v5470 = vpop.f32.mrf.mxu0
    %v5471 = vadd.f32 %v5442, %v5470
    %5472 = vmatmul.bf16.gmra.mxu0 %v3974
    %v5473 = vpop.f32.mrf.mxu0
    %v5474 = vadd.f32 %v5445, %v5473
    %v5475 = vpop.f32.mrf.mxu0
    %v5476 = vadd.f32 %v5447, %v5475
    %5477 = vmatmul.bf16.gmra.mxu0 %v3990
    %v5478 = vpop.f32.mrf.mxu0
    %v5479 = vadd.f32 %v5450, %v5478
    %v5480 = vpop.f32.mrf.mxu0
    %v5481 = vadd.f32 %v5452, %v5480
    %5482 = vdwg.mxu0
    %5491 = vrot.lane.b32.xlu0 %v5464, 32
    %v5492 = vpop.permute.xlu0 %5491
    %5493 = vrot.lane.b32.xlu0 %v5466, 32
    %v5494 = vpop.permute.xlu0 %5493
    %5495 = vrot.lane.b32.xlu0 %v5469, 32
    %v5496 = vpop.permute.xlu0 %5495
    %5497 = vrot.lane.b32.xlu0 %v5471, 32
    %v5498 = vpop.permute.xlu0 %5497
    %5499 = vrot.lane.b32.xlu0 %v5474, 32
    %v5500 = vpop.permute.xlu0 %5499
    %5501 = vrot.lane.b32.xlu0 %v5476, 32
    %v5502 = vpop.permute.xlu0 %5501
    %5503 = vrot.lane.b32.xlu0 %v5479, 32
    %v5504 = vpop.permute.xlu0 %5503
    %5505 = vrot.lane.b32.xlu0 %v5481, 32
    %v5506 = vpop.permute.xlu0 %5505
    %v5515 = vadd.f32 %v3071, %v5492
    %v5516 = vadd.f32 %v3072, %v5494
    %v5517 = vadd.f32 %v3073, %v5496
    %v5518 = vadd.f32 %v3074, %v5498
    %v5519 = vadd.f32 %v3075, %v5500
    %v5520 = vadd.f32 %v3076, %v5502
    %v5521 = vadd.f32 %v3077, %v5504
    %v5522 = vadd.f32 %v3078, %v5506
    %v5523 = vld [vmem:[%s15] sm:$0x1]
    %v5524 = vld [vmem:[%s16] sm:$0x1]
    %5533 = vrot.lane.b32.xlu0 %v5515, 96
    %v5534 = vpop.permute.xlu0 %5533
    %5535 = vrot.lane.b32.xlu0 %v5516, 96
    %v5536 = vpop.permute.xlu0 %5535
    %5537 = vrot.lane.b32.xlu0 %v5517, 96
    %v5538 = vpop.permute.xlu0 %5537
    %5539 = vrot.lane.b32.xlu0 %v5518, 96
    %v5540 = vpop.permute.xlu0 %5539
    %5541 = vrot.lane.b32.xlu0 %v5519, 96
    %v5542 = vpop.permute.xlu0 %5541
    %5543 = vrot.lane.b32.xlu0 %v5520, 96
    %v5544 = vpop.permute.xlu0 %5543
    %5545 = vrot.lane.b32.xlu0 %v5521, 96
    %v5546 = vpop.permute.xlu0 %5545
    %5547 = vrot.lane.b32.xlu0 %v5522, 96
    %v5548 = vpop.permute.xlu0 %5547
    %v5557 = vsel %vm309, %v5534, 0.0
    %5558 = vadd.xlane.f32.xlu0 %v5557
    %v5559 = vpop.xlane.xlu0 %5558
    %v5560 = vsel %vm309, %v5536, 0.0
    %5561 = vadd.xlane.f32.xlu0 %v5560
    %v5562 = vpop.xlane.xlu0 %5561
    %v5563 = vsel %vm309, %v5538, 0.0
    %5564 = vadd.xlane.f32.xlu0 %v5563
    %v5565 = vpop.xlane.xlu0 %5564
    %v5566 = vsel %vm309, %v5540, 0.0
    %5567 = vadd.xlane.f32.xlu0 %v5566
    %v5568 = vpop.xlane.xlu0 %5567
    %v5569 = vsel %vm309, %v5542, 0.0
    %5570 = vadd.xlane.f32.xlu0 %v5569
    %v5571 = vpop.xlane.xlu0 %5570
    %v5572 = vsel %vm309, %v5544, 0.0
    %5573 = vadd.xlane.f32.xlu0 %v5572
    %v5574 = vpop.xlane.xlu0 %5573
    %v5575 = vsel %vm309, %v5546, 0.0
    %5576 = vadd.xlane.f32.xlu0 %v5575
    %v5577 = vpop.xlane.xlu0 %5576
    %v5578 = vsel %vm309, %v5548, 0.0
    %5579 = vadd.xlane.f32.xlu0 %v5578
    %v5580 = vpop.xlane.xlu0 %5579
    %v5581 = vmul.f32 %v5559, %v2868
    %v5582 = vmul.f32 %v5562, %v2868
    %v5583 = vmul.f32 %v5565, %v2868
    %v5584 = vmul.f32 %v5568, %v2868
    %v5585 = vmul.f32 %v5571, %v2868
    %v5586 = vmul.f32 %v5574, %v2868
    %v5587 = vmul.f32 %v5577, %v2868
    %v5588 = vmul.f32 %v5580, %v2868
    %v5589 = vsub.f32 %v5515, %v5581
    %v5590 = vsub.f32 %v5516, %v5582
    %v5591 = vsub.f32 %v5517, %v5583
    %v5592 = vsub.f32 %v5518, %v5584
    %v5593 = vsub.f32 %v5519, %v5585
    %v5594 = vsub.f32 %v5520, %v5586
    %v5595 = vsub.f32 %v5521, %v5587
    %v5596 = vsub.f32 %v5522, %v5588
    %v5597 = vmul.f32 %v5589, %v5589
    %v5598 = vmul.f32 %v5590, %v5590
    %v5599 = vmul.f32 %v5591, %v5591
    %v5600 = vmul.f32 %v5592, %v5592
    %v5601 = vmul.f32 %v5593, %v5593
    %v5602 = vmul.f32 %v5594, %v5594
    %v5603 = vmul.f32 %v5595, %v5595
    %v5604 = vmul.f32 %v5596, %v5596
    %5613 = vrot.lane.b32.xlu0 %v5597, 96
    %v5614 = vpop.permute.xlu0 %5613
    %5615 = vrot.lane.b32.xlu0 %v5598, 96
    %v5616 = vpop.permute.xlu0 %5615
    %5617 = vrot.lane.b32.xlu0 %v5599, 96
    %v5618 = vpop.permute.xlu0 %5617
    %5619 = vrot.lane.b32.xlu0 %v5600, 96
    %v5620 = vpop.permute.xlu0 %5619
    %5621 = vrot.lane.b32.xlu0 %v5601, 96
    %v5622 = vpop.permute.xlu0 %5621
    %5623 = vrot.lane.b32.xlu0 %v5602, 96
    %v5624 = vpop.permute.xlu0 %5623
    %5625 = vrot.lane.b32.xlu0 %v5603, 96
    %v5626 = vpop.permute.xlu0 %5625
    %5627 = vrot.lane.b32.xlu0 %v5604, 96
    %v5628 = vpop.permute.xlu0 %5627
    %v5637 = vsel %vm309, %v5614, 0.0
    %5638 = vadd.xlane.f32.xlu0 %v5637
    %v5639 = vpop.xlane.xlu0 %5638
    %v5640 = vsel %vm309, %v5616, 0.0
    %5641 = vadd.xlane.f32.xlu0 %v5640
    %v5642 = vpop.xlane.xlu0 %5641
    %v5643 = vsel %vm309, %v5618, 0.0
    %5644 = vadd.xlane.f32.xlu0 %v5643
    %v5645 = vpop.xlane.xlu0 %5644
    %v5646 = vsel %vm309, %v5620, 0.0
    %5647 = vadd.xlane.f32.xlu0 %v5646
    %v5648 = vpop.xlane.xlu0 %5647
    %v5649 = vsel %vm309, %v5622, 0.0
    %5650 = vadd.xlane.f32.xlu0 %v5649
    %v5651 = vpop.xlane.xlu0 %5650
    %v5652 = vsel %vm309, %v5624, 0.0
    %5653 = vadd.xlane.f32.xlu0 %v5652
    %v5654 = vpop.xlane.xlu0 %5653
    %v5655 = vsel %vm309, %v5626, 0.0
    %5656 = vadd.xlane.f32.xlu0 %v5655
    %v5657 = vpop.xlane.xlu0 %5656
    %v5658 = vsel %vm309, %v5628, 0.0
    %5659 = vadd.xlane.f32.xlu0 %v5658
    %v5660 = vpop.xlane.xlu0 %5659
    %v5661 = vmul.f32 %v5639, %v2868
    %v5662 = vmul.f32 %v5642, %v2868
    %v5663 = vmul.f32 %v5645, %v2868
    %v5664 = vmul.f32 %v5648, %v2868
    %v5665 = vmul.f32 %v5651, %v2868
    %v5666 = vmul.f32 %v5654, %v2868
    %v5667 = vmul.f32 %v5657, %v2868
    %v5668 = vmul.f32 %v5660, %v2868
    %v5669 = vadd.f32 %v5661, 1e-05
    %v5670 = vadd.f32 %v5662, 1e-05
    %v5671 = vadd.f32 %v5663, 1e-05
    %v5672 = vadd.f32 %v5664, 1e-05
    %v5673 = vadd.f32 %v5665, 1e-05
    %v5674 = vadd.f32 %v5666, 1e-05
    %v5675 = vadd.f32 %v5667, 1e-05
    %v5676 = vadd.f32 %v5668, 1e-05
    %v5677 = vrsqrt.pop %v5669
    %v5678 = vmul.f32 %v5677, %v5669
    %v5679 = vmul.f32 %v5678, %v5677
    %v5680 = vmul.f32 0.5, %v5679
    %v5681 = vsub.f32 1.5, %v5680
    %v5682 = vmul.f32 %v5677, %v5681
    %vm5683 = vweird.f32 %v5669
    %vm5684 = vweird.f32 %v5677
    %vm5685 = vmor %vm5683, %vm5684
    %v5686 = vsel %vm5685, %v5677, %v5682
    %v5687 = vrsqrt.pop %v5670
    %v5688 = vmul.f32 %v5687, %v5670
    %v5689 = vmul.f32 %v5688, %v5687
    %v5690 = vmul.f32 0.5, %v5689
    %v5691 = vsub.f32 1.5, %v5690
    %v5692 = vmul.f32 %v5687, %v5691
    %vm5693 = vweird.f32 %v5670
    %vm5694 = vweird.f32 %v5687
    %vm5695 = vmor %vm5693, %vm5694
    %v5696 = vsel %vm5695, %v5687, %v5692
    %v5697 = vrsqrt.pop %v5671
    %v5698 = vmul.f32 %v5697, %v5671
    %v5699 = vmul.f32 %v5698, %v5697
    %v5700 = vmul.f32 0.5, %v5699
    %v5701 = vsub.f32 1.5, %v5700
    %v5702 = vmul.f32 %v5697, %v5701
    %vm5703 = vweird.f32 %v5671
    %vm5704 = vweird.f32 %v5697
    %vm5705 = vmor %vm5703, %vm5704
    %v5706 = vsel %vm5705, %v5697, %v5702
    %v5707 = vrsqrt.pop %v5672
    %v5708 = vmul.f32 %v5707, %v5672
    %v5709 = vmul.f32 %v5708, %v5707
    %v5710 = vmul.f32 0.5, %v5709
    %v5711 = vsub.f32 1.5, %v5710
    %v5712 = vmul.f32 %v5707, %v5711
    %vm5713 = vweird.f32 %v5672
    %vm5714 = vweird.f32 %v5707
    %vm5715 = vmor %vm5713, %vm5714
    %v5716 = vsel %vm5715, %v5707, %v5712
    %v5717 = vrsqrt.pop %v5673
    %v5718 = vmul.f32 %v5717, %v5673
    %v5719 = vmul.f32 %v5718, %v5717
    %v5720 = vmul.f32 0.5, %v5719
    %v5721 = vsub.f32 1.5, %v5720
    %v5722 = vmul.f32 %v5717, %v5721
    %vm5723 = vweird.f32 %v5673
    %vm5724 = vweird.f32 %v5717
    %vm5725 = vmor %vm5723, %vm5724
    %v5726 = vsel %vm5725, %v5717, %v5722
    %v5727 = vrsqrt.pop %v5674
    %v5728 = vmul.f32 %v5727, %v5674
    %v5729 = vmul.f32 %v5728, %v5727
    %v5730 = vmul.f32 0.5, %v5729
    %v5731 = vsub.f32 1.5, %v5730
    %v5732 = vmul.f32 %v5727, %v5731
    %vm5733 = vweird.f32 %v5674
    %vm5734 = vweird.f32 %v5727
    %vm5735 = vmor %vm5733, %vm5734
    %v5736 = vsel %vm5735, %v5727, %v5732
    %v5737 = vrsqrt.pop %v5675
    %v5738 = vmul.f32 %v5737, %v5675
    %v5739 = vmul.f32 %v5738, %v5737
    %v5740 = vmul.f32 0.5, %v5739
    %v5741 = vsub.f32 1.5, %v5740
    %v5742 = vmul.f32 %v5737, %v5741
    %vm5743 = vweird.f32 %v5675
    %vm5744 = vweird.f32 %v5737
    %vm5745 = vmor %vm5743, %vm5744
    %v5746 = vsel %vm5745, %v5737, %v5742
    %v5747 = vrsqrt.pop %v5676
    %v5748 = vmul.f32 %v5747, %v5676
    %v5749 = vmul.f32 %v5748, %v5747
    %v5750 = vmul.f32 0.5, %v5749
    %v5751 = vsub.f32 1.5, %v5750
    %v5752 = vmul.f32 %v5747, %v5751
    %vm5753 = vweird.f32 %v5676
    %vm5754 = vweird.f32 %v5747
    %vm5755 = vmor %vm5753, %vm5754
    %v5756 = vsel %vm5755, %v5747, %v5752
    %v5757 = vmul.f32 %v5589, %v5686
    %v5758 = vmul.f32 %v5590, %v5696
    %v5759 = vmul.f32 %v5591, %v5706
    %v5760 = vmul.f32 %v5592, %v5716
    %v5761 = vmul.f32 %v5593, %v5726
    %v5762 = vmul.f32 %v5594, %v5736
    %v5763 = vmul.f32 %v5595, %v5746
    %v5764 = vmul.f32 %v5596, %v5756
    %v5766 = vperm.slane %v5523, 0
    %5767 = vrot.lane.b32.xlu0 %v5766, 32
    %v5768 = vpop.permute.xlu0 %5767
    %v5770 = vmul.f32 %v5757, %v5768
    %v5771 = vmul.f32 %v5758, %v5768
    %v5772 = vmul.f32 %v5759, %v5768
    %v5773 = vmul.f32 %v5760, %v5768
    %v5774 = vmul.f32 %v5761, %v5768
    %v5775 = vmul.f32 %v5762, %v5768
    %v5776 = vmul.f32 %v5763, %v5768
    %v5777 = vmul.f32 %v5764, %v5768
    %v5779 = vperm.slane %v5524, 0
    %5780 = vrot.lane.b32.xlu0 %v5779, 32
    %v5781 = vpop.permute.xlu0 %5780
    %v5783 = vadd.f32 %v5770, %v5781
    %v5784 = vadd.f32 %v5771, %v5781
    %v5785 = vadd.f32 %v5772, %v5781
    %v5786 = vadd.f32 %v5773, %v5781
    %v5787 = vadd.f32 %v5774, %v5781
    %v5788 = vadd.f32 %v5775, %v5781
    %v5789 = vadd.f32 %v5776, %v5781
    %v5790 = vadd.f32 %v5777, %v5781
    %v5791 = vpack.c.bf16 %v5784, %v5783
    %v5792 = vpack.c.bf16 %v5786, %v5785
    %v5793 = vpack.c.bf16 %v5788, %v5787
    %v5794 = vpack.c.bf16 %v5790, %v5789
    %s5795 = scalar_lea.vmem %s5, 16
    %v5796 = vld [vmem:[%s5795] sm:$0xf]
    %v5797 = vld [vmem:[%s5795 + $0x4] sm:$0xf]
    %v5798 = vld [vmem:[%s5795 + $0x8] sm:$0xf]
    %v5799 = vld [vmem:[%s5795 + $0xc] sm:$0xf]
    %s5800 = scalar_lea.vmem %s6, 1
    %v5801 = vld [vmem:[%s5800] sm:$0x1]
    %v5803 = vperm.slane %v5801, 0
    %5809 = vrot.lane.b32.xlu0 %v5791, 96
    %v5810 = vpop.permute.xlu0 %5809
    %5811 = vrot.lane.b32.xlu0 %v5792, 96
    %v5812 = vpop.permute.xlu0 %5811
    %5813 = vrot.lane.b32.xlu0 %v5793, 96
    %v5814 = vpop.permute.xlu0 %5813
    %5815 = vrot.lane.b32.xlu0 %v5794, 96
    %v5816 = vpop.permute.xlu0 %5815
    %v5821 = vunpack.c.l.b16 %v5796
    %v5822 = vunpack.c.l.b16 %v5797
    %v5823 = vunpack.c.l.b16 %v5798
    %v5824 = vunpack.c.l.b16 %v5799
    %v5825 = vpack.c.b16 %v5822, %v5821
    %v5826 = vpack.c.b16 %v5824, %v5823
    %v5830 = vsel %vm309, %v5810, 0
    %v5833 = vsel %vm309, %v5812, 0
    %v5836 = vsel %vm309, %v5814, 0
    %v5839 = vsel %vm309, %v5816, 0
    %5841 = vmatpush.bf16.msra.mxu0 0
    %5842 = vmatpush.bf16.msra.mxu0 0
    %5843 = vmatpush.bf16.msra.mxu0 0
    %5844 = vmatpush.bf16.msra.mxu0 0
    %5845 = vmatpush.bf16.msra.mxu0 0
    %5846 = vmatpush.bf16.msra.mxu0 0
    %5847 = vmatpush.bf16.msra.mxu0 %v5826
    %5848 = vmatpush.bf16.msra.mxu0 %v5825
    %5849 = vmatmul.bf16.gmra.mxu0 %v5830
    %v5850 = vpop.f32.mrf.mxu0
    %v5851 = vadd.f32 %v5803, %v5850
    %v5852 = vpop.f32.mrf.mxu0
    %v5853 = vadd.f32 %v5803, %v5852
    %5854 = vmatmul.bf16.gmra.mxu0 %v5833
    %v5855 = vpop.f32.mrf.mxu0
    %v5856 = vadd.f32 %v5803, %v5855
    %v5857 = vpop.f32.mrf.mxu0
    %v5858 = vadd.f32 %v5803, %v5857
    %5859 = vmatmul.bf16.gmra.mxu0 %v5836
    %v5860 = vpop.f32.mrf.mxu0
    %v5861 = vadd.f32 %v5803, %v5860
    %v5862 = vpop.f32.mrf.mxu0
    %v5863 = vadd.f32 %v5803, %v5862
    %5864 = vmatmul.bf16.gmra.mxu0 %v5839
    %v5865 = vpop.f32.mrf.mxu0
    %v5866 = vadd.f32 %v5803, %v5865
    %v5867 = vpop.f32.mrf.mxu0
    %v5868 = vadd.f32 %v5803, %v5867
    %5869 = vdwg.mxu0
    %v5870 = vpack.c.bf16 %v5851, %v5851
    %v5871 = vpack.c.bf16 %v5853, %v5853
    %v5872 = vpack.c.bf16 %v5856, %v5856
    %v5873 = vpack.c.bf16 %v5858, %v5858
    %v5874 = vpack.c.bf16 %v5861, %v5861
    %v5875 = vpack.c.bf16 %v5863, %v5863
    %v5876 = vpack.c.bf16 %v5866, %v5866
    %v5877 = vpack.c.bf16 %v5868, %v5868
    %v5879 = vunpack.c.l.b16 %v5870
    %v5880 = vpack.c.b16 %v5879, %v5879
    %5881 = vrot.lane.b32.xlu0 %v5880, 96
    %v5882 = vpop.permute.xlu0 %5881
    %v5884 = vsel %vm364, %v5870, 0
    %v5887 = vsel %vm364, %v5882, 0
    %5889 = vmatpush.bf16.xpose.msra.mxu0 0
    %5890 = vmatpush.bf16.xpose.msra.mxu0 0
    %5891 = vmatpush.bf16.xpose.msra.mxu0 0
    %5892 = vmatpush.bf16.xpose.msra.mxu0 0
    %5893 = vmatpush.bf16.xpose.msra.mxu0 0
    %5894 = vmatpush.bf16.xpose.msra.mxu0 0
    %5895 = vmatpush.bf16.xpose.msra.mxu0 0
    %5896 = vmatpush.bf16.xpose.msra.mxu0 %v5887
    %5897 = vmatmul.bf16.gmra.mxu0 %v5884
    %v5898 = vpop.f32.mrf.mxu0
    %v5899 = vadd.f32 0.0, %v5898
    %v5900 = vpop.f32.mrf.mxu0
    %5901 = vdwg.mxu0
    %v5903 = vunpack.c.l.b16 %v5871
    %v5904 = vpack.c.b16 %v5903, %v5903
    %5905 = vrot.lane.b32.xlu0 %v5904, 96
    %v5906 = vpop.permute.xlu0 %5905
    %v5908 = vsel %vm364, %v5871, 0
    %v5911 = vsel %vm364, %v5906, 0
    %5913 = vmatpush.bf16.xpose.msra.mxu0 0
    %5914 = vmatpush.bf16.xpose.msra.mxu0 0
    %5915 = vmatpush.bf16.xpose.msra.mxu0 0
    %5916 = vmatpush.bf16.xpose.msra.mxu0 0
    %5917 = vmatpush.bf16.xpose.msra.mxu0 0
    %5918 = vmatpush.bf16.xpose.msra.mxu0 0
    %5919 = vmatpush.bf16.xpose.msra.mxu0 0
    %5920 = vmatpush.bf16.xpose.msra.mxu0 %v5911
    %5921 = vmatmul.bf16.gmra.mxu0 %v5908
    %v5922 = vpop.f32.mrf.mxu0
    %v5923 = vadd.f32 0.0, %v5922
    %v5924 = vpop.f32.mrf.mxu0
    %5925 = vdwg.mxu0
    %v5927 = vunpack.c.l.b16 %v5872
    %v5928 = vpack.c.b16 %v5927, %v5927
    %5929 = vrot.lane.b32.xlu0 %v5928, 96
    %v5930 = vpop.permute.xlu0 %5929
    %v5932 = vsel %vm364, %v5872, 0
    %v5935 = vsel %vm364, %v5930, 0
    %5937 = vmatpush.bf16.xpose.msra.mxu0 0
    %5938 = vmatpush.bf16.xpose.msra.mxu0 0
    %5939 = vmatpush.bf16.xpose.msra.mxu0 0
    %5940 = vmatpush.bf16.xpose.msra.mxu0 0
    %5941 = vmatpush.bf16.xpose.msra.mxu0 0
    %5942 = vmatpush.bf16.xpose.msra.mxu0 0
    %5943 = vmatpush.bf16.xpose.msra.mxu0 0
    %5944 = vmatpush.bf16.xpose.msra.mxu0 %v5935
    %5945 = vmatmul.bf16.gmra.mxu0 %v5932
    %v5946 = vpop.f32.mrf.mxu0
    %v5947 = vadd.f32 0.0, %v5946
    %v5948 = vpop.f32.mrf.mxu0
    %5949 = vdwg.mxu0
    %v5951 = vunpack.c.l.b16 %v5873
    %v5952 = vpack.c.b16 %v5951, %v5951
    %5953 = vrot.lane.b32.xlu0 %v5952, 96
    %v5954 = vpop.permute.xlu0 %5953
    %v5956 = vsel %vm364, %v5873, 0
    %v5959 = vsel %vm364, %v5954, 0
    %5961 = vmatpush.bf16.xpose.msra.mxu0 0
    %5962 = vmatpush.bf16.xpose.msra.mxu0 0
    %5963 = vmatpush.bf16.xpose.msra.mxu0 0
    %5964 = vmatpush.bf16.xpose.msra.mxu0 0
    %5965 = vmatpush.bf16.xpose.msra.mxu0 0
    %5966 = vmatpush.bf16.xpose.msra.mxu0 0
    %5967 = vmatpush.bf16.xpose.msra.mxu0 0
    %5968 = vmatpush.bf16.xpose.msra.mxu0 %v5959
    %5969 = vmatmul.bf16.gmra.mxu0 %v5956
    %v5970 = vpop.f32.mrf.mxu0
    %v5971 = vadd.f32 0.0, %v5970
    %v5972 = vpop.f32.mrf.mxu0
    %5973 = vdwg.mxu0
    %v5975 = vunpack.c.l.b16 %v5874
    %v5976 = vpack.c.b16 %v5975, %v5975
    %5977 = vrot.lane.b32.xlu0 %v5976, 96
    %v5978 = vpop.permute.xlu0 %5977
    %v5980 = vsel %vm364, %v5874, 0
    %v5983 = vsel %vm364, %v5978, 0
    %5985 = vmatpush.bf16.xpose.msra.mxu0 0
    %5986 = vmatpush.bf16.xpose.msra.mxu0 0
    %5987 = vmatpush.bf16.xpose.msra.mxu0 0
    %5988 = vmatpush.bf16.xpose.msra.mxu0 0
    %5989 = vmatpush.bf16.xpose.msra.mxu0 0
    %5990 = vmatpush.bf16.xpose.msra.mxu0 0
    %5991 = vmatpush.bf16.xpose.msra.mxu0 0
    %5992 = vmatpush.bf16.xpose.msra.mxu0 %v5983
    %5993 = vmatmul.bf16.gmra.mxu0 %v5980
    %v5994 = vpop.f32.mrf.mxu0
    %v5995 = vadd.f32 0.0, %v5994
    %v5996 = vpop.f32.mrf.mxu0
    %5997 = vdwg.mxu0
    %v5999 = vunpack.c.l.b16 %v5875
    %v6000 = vpack.c.b16 %v5999, %v5999
    %6001 = vrot.lane.b32.xlu0 %v6000, 96
    %v6002 = vpop.permute.xlu0 %6001
    %v6004 = vsel %vm364, %v5875, 0
    %v6007 = vsel %vm364, %v6002, 0
    %6009 = vmatpush.bf16.xpose.msra.mxu0 0
    %6010 = vmatpush.bf16.xpose.msra.mxu0 0
    %6011 = vmatpush.bf16.xpose.msra.mxu0 0
    %6012 = vmatpush.bf16.xpose.msra.mxu0 0
    %6013 = vmatpush.bf16.xpose.msra.mxu0 0
    %6014 = vmatpush.bf16.xpose.msra.mxu0 0
    %6015 = vmatpush.bf16.xpose.msra.mxu0 0
    %6016 = vmatpush.bf16.xpose.msra.mxu0 %v6007
    %6017 = vmatmul.bf16.gmra.mxu0 %v6004
    %v6018 = vpop.f32.mrf.mxu0
    %v6019 = vadd.f32 0.0, %v6018
    %v6020 = vpop.f32.mrf.mxu0
    %6021 = vdwg.mxu0
    %v6023 = vunpack.c.l.b16 %v5876
    %v6024 = vpack.c.b16 %v6023, %v6023
    %6025 = vrot.lane.b32.xlu0 %v6024, 96
    %v6026 = vpop.permute.xlu0 %6025
    %v6028 = vsel %vm364, %v5876, 0
    %v6031 = vsel %vm364, %v6026, 0
    %6033 = vmatpush.bf16.xpose.msra.mxu0 0
    %6034 = vmatpush.bf16.xpose.msra.mxu0 0
    %6035 = vmatpush.bf16.xpose.msra.mxu0 0
    %6036 = vmatpush.bf16.xpose.msra.mxu0 0
    %6037 = vmatpush.bf16.xpose.msra.mxu0 0
    %6038 = vmatpush.bf16.xpose.msra.mxu0 0
    %6039 = vmatpush.bf16.xpose.msra.mxu0 0
    %6040 = vmatpush.bf16.xpose.msra.mxu0 %v6031
    %6041 = vmatmul.bf16.gmra.mxu0 %v6028
    %v6042 = vpop.f32.mrf.mxu0
    %v6043 = vadd.f32 0.0, %v6042
    %v6044 = vpop.f32.mrf.mxu0
    %6045 = vdwg.mxu0
    %v6047 = vunpack.c.l.b16 %v5877
    %v6048 = vpack.c.b16 %v6047, %v6047
    %6049 = vrot.lane.b32.xlu0 %v6048, 96
    %v6050 = vpop.permute.xlu0 %6049
    %v6052 = vsel %vm364, %v5877, 0
    %v6055 = vsel %vm364, %v6050, 0
    %6057 = vmatpush.bf16.xpose.msra.mxu0 0
    %6058 = vmatpush.bf16.xpose.msra.mxu0 0
    %6059 = vmatpush.bf16.xpose.msra.mxu0 0
    %6060 = vmatpush.bf16.xpose.msra.mxu0 0
    %6061 = vmatpush.bf16.xpose.msra.mxu0 0
    %6062 = vmatpush.bf16.xpose.msra.mxu0 0
    %6063 = vmatpush.bf16.xpose.msra.mxu0 0
    %6064 = vmatpush.bf16.xpose.msra.mxu0 %v6055
    %6065 = vmatmul.bf16.gmra.mxu0 %v6052
    %v6066 = vpop.f32.mrf.mxu0
    %v6067 = vadd.f32 0.0, %v6066
    %v6068 = vpop.f32.mrf.mxu0
    %6069 = vdwg.mxu0
    %v6070 = vsel %vm364, %v5899, -inf
    %6071 = vmax.xlane.f32.xlu0 %v6070
    %v6072 = vpop.xlane.xlu0 %6071
    %v6073 = vsel %vm364, %v5923, -inf
    %6074 = vmax.xlane.f32.xlu0 %v6073
    %v6075 = vpop.xlane.xlu0 %6074
    %v6076 = vsel %vm364, %v5947, -inf
    %6077 = vmax.xlane.f32.xlu0 %v6076
    %v6078 = vpop.xlane.xlu0 %6077
    %v6079 = vsel %vm364, %v5971, -inf
    %6080 = vmax.xlane.f32.xlu0 %v6079
    %v6081 = vpop.xlane.xlu0 %6080
    %v6082 = vsel %vm364, %v5995, -inf
    %6083 = vmax.xlane.f32.xlu0 %v6082
    %v6084 = vpop.xlane.xlu0 %6083
    %v6085 = vsel %vm364, %v6019, -inf
    %6086 = vmax.xlane.f32.xlu0 %v6085
    %v6087 = vpop.xlane.xlu0 %6086
    %v6088 = vsel %vm364, %v6043, -inf
    %6089 = vmax.xlane.f32.xlu0 %v6088
    %v6090 = vpop.xlane.xlu0 %6089
    %v6091 = vsel %vm364, %v6067, -inf
    %6092 = vmax.xlane.f32.xlu0 %v6091
    %v6093 = vpop.xlane.xlu0 %6092
    %v6094 = vsub.f32 %v5899, %v6072
    %v6095 = vsub.f32 %v5923, %v6075
    %v6096 = vsub.f32 %v5947, %v6078
    %v6097 = vsub.f32 %v5971, %v6081
    %v6098 = vsub.f32 %v5995, %v6084
    %v6099 = vsub.f32 %v6019, %v6087
    %v6100 = vsub.f32 %v6043, %v6090
    %v6101 = vsub.f32 %v6067, %v6093
    %v6102 = vmul.f32 %v6094, 1.442695
    %v6103 = vpow.pop %v6102
    %v6104 = vmul.f32 %v6095, 1.442695
    %v6105 = vpow.pop %v6104
    %v6106 = vmul.f32 %v6096, 1.442695
    %v6107 = vpow.pop %v6106
    %v6108 = vmul.f32 %v6097, 1.442695
    %v6109 = vpow.pop %v6108
    %v6110 = vmul.f32 %v6098, 1.442695
    %v6111 = vpow.pop %v6110
    %v6112 = vmul.f32 %v6099, 1.442695
    %v6113 = vpow.pop %v6112
    %v6114 = vmul.f32 %v6100, 1.442695
    %v6115 = vpow.pop %v6114
    %v6116 = vmul.f32 %v6101, 1.442695
    %v6117 = vpow.pop %v6116
    %v6118 = vsel %vm364, %v6103, 0.0
    %6119 = vadd.xlane.f32.xlu0 %v6118
    %v6120 = vpop.xlane.xlu0 %6119
    %v6121 = vsel %vm364, %v6105, 0.0
    %6122 = vadd.xlane.f32.xlu0 %v6121
    %v6123 = vpop.xlane.xlu0 %6122
    %v6124 = vsel %vm364, %v6107, 0.0
    %6125 = vadd.xlane.f32.xlu0 %v6124
    %v6126 = vpop.xlane.xlu0 %6125
    %v6127 = vsel %vm364, %v6109, 0.0
    %6128 = vadd.xlane.f32.xlu0 %v6127
    %v6129 = vpop.xlane.xlu0 %6128
    %v6130 = vsel %vm364, %v6111, 0.0
    %6131 = vadd.xlane.f32.xlu0 %v6130
    %v6132 = vpop.xlane.xlu0 %6131
    %v6133 = vsel %vm364, %v6113, 0.0
    %6134 = vadd.xlane.f32.xlu0 %v6133
    %v6135 = vpop.xlane.xlu0 %6134
    %v6136 = vsel %vm364, %v6115, 0.0
    %6137 = vadd.xlane.f32.xlu0 %v6136
    %v6138 = vpop.xlane.xlu0 %6137
    %v6139 = vsel %vm364, %v6117, 0.0
    %6140 = vadd.xlane.f32.xlu0 %v6139
    %v6141 = vpop.xlane.xlu0 %6140
    %v6142 = vrcp.pop %v6120
    %v6143 = vmul.f32 %v6120, %v6142
    %v6144 = vsub.f32 1.0, %v6143
    %v6145 = vmul.f32 %v6142, %v6144
    %v6146 = vadd.f32 %v6142, %v6145
    %vm6147 = vweird.f32 %v6120
    %vm6148 = vweird.f32 %v6142
    %vm6149 = vmor %vm6147, %vm6148
    %v6150 = vsel %vm6149, %v6142, %v6146
    %v6151 = vand.u32 2147483647, %v6120
    %vm6152 = vcmp.eq.f32.partialorder %v6151, 8.507059e+37
    %v6153 = vand.u32 %v6120, 2147483648
    %v6154 = vor.u32 1.1754944e-38, %v6153
    %v6155 = vsel %vm6152, %v6154, %v6150
    %v6156 = vmul.f32 %v6103, %v6155
    %v6157 = vrcp.pop %v6123
    %v6158 = vmul.f32 %v6123, %v6157
    %v6159 = vsub.f32 1.0, %v6158
    %v6160 = vmul.f32 %v6157, %v6159
    %v6161 = vadd.f32 %v6157, %v6160
    %vm6162 = vweird.f32 %v6123
    %vm6163 = vweird.f32 %v6157
    %vm6164 = vmor %vm6162, %vm6163
    %v6165 = vsel %vm6164, %v6157, %v6161
    %v6166 = vand.u32 2147483647, %v6123
    %vm6167 = vcmp.eq.f32.partialorder %v6166, 8.507059e+37
    %v6168 = vand.u32 %v6123, 2147483648
    %v6169 = vor.u32 1.1754944e-38, %v6168
    %v6170 = vsel %vm6167, %v6169, %v6165
    %v6171 = vmul.f32 %v6105, %v6170
    %v6172 = vrcp.pop %v6126
    %v6173 = vmul.f32 %v6126, %v6172
    %v6174 = vsub.f32 1.0, %v6173
    %v6175 = vmul.f32 %v6172, %v6174
    %v6176 = vadd.f32 %v6172, %v6175
    %vm6177 = vweird.f32 %v6126
    %vm6178 = vweird.f32 %v6172
    %vm6179 = vmor %vm6177, %vm6178
    %v6180 = vsel %vm6179, %v6172, %v6176
    %v6181 = vand.u32 2147483647, %v6126
    %vm6182 = vcmp.eq.f32.partialorder %v6181, 8.507059e+37
    %v6183 = vand.u32 %v6126, 2147483648
    %v6184 = vor.u32 1.1754944e-38, %v6183
    %v6185 = vsel %vm6182, %v6184, %v6180
    %v6186 = vmul.f32 %v6107, %v6185
    %v6187 = vrcp.pop %v6129
    %v6188 = vmul.f32 %v6129, %v6187
    %v6189 = vsub.f32 1.0, %v6188
    %v6190 = vmul.f32 %v6187, %v6189
    %v6191 = vadd.f32 %v6187, %v6190
    %vm6192 = vweird.f32 %v6129
    %vm6193 = vweird.f32 %v6187
    %vm6194 = vmor %vm6192, %vm6193
    %v6195 = vsel %vm6194, %v6187, %v6191
    %v6196 = vand.u32 2147483647, %v6129
    %vm6197 = vcmp.eq.f32.partialorder %v6196, 8.507059e+37
    %v6198 = vand.u32 %v6129, 2147483648
    %v6199 = vor.u32 1.1754944e-38, %v6198
    %v6200 = vsel %vm6197, %v6199, %v6195
    %v6201 = vmul.f32 %v6109, %v6200
    %v6202 = vrcp.pop %v6132
    %v6203 = vmul.f32 %v6132, %v6202
    %v6204 = vsub.f32 1.0, %v6203
    %v6205 = vmul.f32 %v6202, %v6204
    %v6206 = vadd.f32 %v6202, %v6205
    %vm6207 = vweird.f32 %v6132
    %vm6208 = vweird.f32 %v6202
    %vm6209 = vmor %vm6207, %vm6208
    %v6210 = vsel %vm6209, %v6202, %v6206
    %v6211 = vand.u32 2147483647, %v6132
    %vm6212 = vcmp.eq.f32.partialorder %v6211, 8.507059e+37
    %v6213 = vand.u32 %v6132, 2147483648
    %v6214 = vor.u32 1.1754944e-38, %v6213
    %v6215 = vsel %vm6212, %v6214, %v6210
    %v6216 = vmul.f32 %v6111, %v6215
    %v6217 = vrcp.pop %v6135
    %v6218 = vmul.f32 %v6135, %v6217
    %v6219 = vsub.f32 1.0, %v6218
    %v6220 = vmul.f32 %v6217, %v6219
    %v6221 = vadd.f32 %v6217, %v6220
    %vm6222 = vweird.f32 %v6135
    %vm6223 = vweird.f32 %v6217
    %vm6224 = vmor %vm6222, %vm6223
    %v6225 = vsel %vm6224, %v6217, %v6221
    %v6226 = vand.u32 2147483647, %v6135
    %vm6227 = vcmp.eq.f32.partialorder %v6226, 8.507059e+37
    %v6228 = vand.u32 %v6135, 2147483648
    %v6229 = vor.u32 1.1754944e-38, %v6228
    %v6230 = vsel %vm6227, %v6229, %v6225
    %v6231 = vmul.f32 %v6113, %v6230
    %v6232 = vrcp.pop %v6138
    %v6233 = vmul.f32 %v6138, %v6232
    %v6234 = vsub.f32 1.0, %v6233
    %v6235 = vmul.f32 %v6232, %v6234
    %v6236 = vadd.f32 %v6232, %v6235
    %vm6237 = vweird.f32 %v6138
    %vm6238 = vweird.f32 %v6232
    %vm6239 = vmor %vm6237, %vm6238
    %v6240 = vsel %vm6239, %v6232, %v6236
    %v6241 = vand.u32 2147483647, %v6138
    %vm6242 = vcmp.eq.f32.partialorder %v6241, 8.507059e+37
    %v6243 = vand.u32 %v6138, 2147483648
    %v6244 = vor.u32 1.1754944e-38, %v6243
    %v6245 = vsel %vm6242, %v6244, %v6240
    %v6246 = vmul.f32 %v6115, %v6245
    %v6247 = vrcp.pop %v6141
    %v6248 = vmul.f32 %v6141, %v6247
    %v6249 = vsub.f32 1.0, %v6248
    %v6250 = vmul.f32 %v6247, %v6249
    %v6251 = vadd.f32 %v6247, %v6250
    %vm6252 = vweird.f32 %v6141
    %vm6253 = vweird.f32 %v6247
    %vm6254 = vmor %vm6252, %vm6253
    %v6255 = vsel %vm6254, %v6247, %v6251
    %v6256 = vand.u32 2147483647, %v6141
    %vm6257 = vcmp.eq.f32.partialorder %v6256, 8.507059e+37
    %v6258 = vand.u32 %v6141, 2147483648
    %v6259 = vor.u32 1.1754944e-38, %v6258
    %v6260 = vsel %vm6257, %v6259, %v6255
    %v6261 = vmul.f32 %v6117, %v6260
    %v6262 = vpack.c.bf16 %v6156, %v6156
    %v6263 = vpack.c.bf16 %v6171, %v6171
    %v6264 = vpack.c.bf16 %v6186, %v6186
    %v6265 = vpack.c.bf16 %v6201, %v6201
    %v6266 = vpack.c.bf16 %v6216, %v6216
    %v6267 = vpack.c.bf16 %v6231, %v6231
    %v6268 = vpack.c.bf16 %v6246, %v6246
    %v6269 = vpack.c.bf16 %v6261, %v6261
    %6270 = vrot.lane.b32.xlu0 %v5880, 64
    %v6271 = vpop.permute.xlu0 %6270
    %v6273 = vsel %vm364, %v6262, 0
    %v6276 = vsel %vm757, %v6271, 0
    %6278 = vmatpush.bf16.msra.mxu0 0
    %6279 = vmatpush.bf16.msra.mxu0 0
    %6280 = vmatpush.bf16.msra.mxu0 0
    %6281 = vmatpush.bf16.msra.mxu0 0
    %6282 = vmatpush.bf16.msra.mxu0 0
    %6283 = vmatpush.bf16.msra.mxu0 0
    %6284 = vmatpush.bf16.msra.mxu0 0
    %6285 = vmatpush.bf16.msra.mxu0 %v6276
    %6286 = vmatmul.bf16.gmra.mxu0 %v6273
    %v6287 = vpop.f32.mrf.mxu0
    %v6288 = vadd.f32 0.0, %v6287
    %v6289 = vpop.f32.mrf.mxu0
    %6290 = vdwg.mxu0
    %6291 = vrot.lane.b32.xlu0 %v5904, 64
    %v6292 = vpop.permute.xlu0 %6291
    %v6294 = vsel %vm364, %v6263, 0
    %v6297 = vsel %vm757, %v6292, 0
    %6299 = vmatpush.bf16.msra.mxu0 0
    %6300 = vmatpush.bf16.msra.mxu0 0
    %6301 = vmatpush.bf16.msra.mxu0 0
    %6302 = vmatpush.bf16.msra.mxu0 0
    %6303 = vmatpush.bf16.msra.mxu0 0
    %6304 = vmatpush.bf16.msra.mxu0 0
    %6305 = vmatpush.bf16.msra.mxu0 0
    %6306 = vmatpush.bf16.msra.mxu0 %v6297
    %6307 = vmatmul.bf16.gmra.mxu0 %v6294
    %v6308 = vpop.f32.mrf.mxu0
    %v6309 = vadd.f32 0.0, %v6308
    %v6310 = vpop.f32.mrf.mxu0
    %6311 = vdwg.mxu0
    %6312 = vrot.lane.b32.xlu0 %v5928, 64
    %v6313 = vpop.permute.xlu0 %6312
    %v6315 = vsel %vm364, %v6264, 0
    %v6318 = vsel %vm757, %v6313, 0
    %6320 = vmatpush.bf16.msra.mxu0 0
    %6321 = vmatpush.bf16.msra.mxu0 0
    %6322 = vmatpush.bf16.msra.mxu0 0
    %6323 = vmatpush.bf16.msra.mxu0 0
    %6324 = vmatpush.bf16.msra.mxu0 0
    %6325 = vmatpush.bf16.msra.mxu0 0
    %6326 = vmatpush.bf16.msra.mxu0 0
    %6327 = vmatpush.bf16.msra.mxu0 %v6318
    %6328 = vmatmul.bf16.gmra.mxu0 %v6315
    %v6329 = vpop.f32.mrf.mxu0
    %v6330 = vadd.f32 0.0, %v6329
    %v6331 = vpop.f32.mrf.mxu0
    %6332 = vdwg.mxu0
    %6333 = vrot.lane.b32.xlu0 %v5952, 64
    %v6334 = vpop.permute.xlu0 %6333
    %v6336 = vsel %vm364, %v6265, 0
    %v6339 = vsel %vm757, %v6334, 0
    %6341 = vmatpush.bf16.msra.mxu0 0
    %6342 = vmatpush.bf16.msra.mxu0 0
    %6343 = vmatpush.bf16.msra.mxu0 0
    %6344 = vmatpush.bf16.msra.mxu0 0
    %6345 = vmatpush.bf16.msra.mxu0 0
    %6346 = vmatpush.bf16.msra.mxu0 0
    %6347 = vmatpush.bf16.msra.mxu0 0
    %6348 = vmatpush.bf16.msra.mxu0 %v6339
    %6349 = vmatmul.bf16.gmra.mxu0 %v6336
    %v6350 = vpop.f32.mrf.mxu0
    %v6351 = vadd.f32 0.0, %v6350
    %v6352 = vpop.f32.mrf.mxu0
    %6353 = vdwg.mxu0
    %6354 = vrot.lane.b32.xlu0 %v5976, 64
    %v6355 = vpop.permute.xlu0 %6354
    %v6357 = vsel %vm364, %v6266, 0
    %v6360 = vsel %vm757, %v6355, 0
    %6362 = vmatpush.bf16.msra.mxu0 0
    %6363 = vmatpush.bf16.msra.mxu0 0
    %6364 = vmatpush.bf16.msra.mxu0 0
    %6365 = vmatpush.bf16.msra.mxu0 0
    %6366 = vmatpush.bf16.msra.mxu0 0
    %6367 = vmatpush.bf16.msra.mxu0 0
    %6368 = vmatpush.bf16.msra.mxu0 0
    %6369 = vmatpush.bf16.msra.mxu0 %v6360
    %6370 = vmatmul.bf16.gmra.mxu0 %v6357
    %v6371 = vpop.f32.mrf.mxu0
    %v6372 = vadd.f32 0.0, %v6371
    %v6373 = vpop.f32.mrf.mxu0
    %6374 = vdwg.mxu0
    %6375 = vrot.lane.b32.xlu0 %v6000, 64
    %v6376 = vpop.permute.xlu0 %6375
    %v6378 = vsel %vm364, %v6267, 0
    %v6381 = vsel %vm757, %v6376, 0
    %6383 = vmatpush.bf16.msra.mxu0 0
    %6384 = vmatpush.bf16.msra.mxu0 0
    %6385 = vmatpush.bf16.msra.mxu0 0
    %6386 = vmatpush.bf16.msra.mxu0 0
    %6387 = vmatpush.bf16.msra.mxu0 0
    %6388 = vmatpush.bf16.msra.mxu0 0
    %6389 = vmatpush.bf16.msra.mxu0 0
    %6390 = vmatpush.bf16.msra.mxu0 %v6381
    %6391 = vmatmul.bf16.gmra.mxu0 %v6378
    %v6392 = vpop.f32.mrf.mxu0
    %v6393 = vadd.f32 0.0, %v6392
    %v6394 = vpop.f32.mrf.mxu0
    %6395 = vdwg.mxu0
    %6396 = vrot.lane.b32.xlu0 %v6024, 64
    %v6397 = vpop.permute.xlu0 %6396
    %v6399 = vsel %vm364, %v6268, 0
    %v6402 = vsel %vm757, %v6397, 0
    %6404 = vmatpush.bf16.msra.mxu0 0
    %6405 = vmatpush.bf16.msra.mxu0 0
    %6406 = vmatpush.bf16.msra.mxu0 0
    %6407 = vmatpush.bf16.msra.mxu0 0
    %6408 = vmatpush.bf16.msra.mxu0 0
    %6409 = vmatpush.bf16.msra.mxu0 0
    %6410 = vmatpush.bf16.msra.mxu0 0
    %6411 = vmatpush.bf16.msra.mxu0 %v6402
    %6412 = vmatmul.bf16.gmra.mxu0 %v6399
    %v6413 = vpop.f32.mrf.mxu0
    %v6414 = vadd.f32 0.0, %v6413
    %v6415 = vpop.f32.mrf.mxu0
    %6416 = vdwg.mxu0
    %6417 = vrot.lane.b32.xlu0 %v6048, 64
    %v6418 = vpop.permute.xlu0 %6417
    %v6420 = vsel %vm364, %v6269, 0
    %v6423 = vsel %vm757, %v6418, 0
    %6425 = vmatpush.bf16.msra.mxu0 0
    %6426 = vmatpush.bf16.msra.mxu0 0
    %6427 = vmatpush.bf16.msra.mxu0 0
    %6428 = vmatpush.bf16.msra.mxu0 0
    %6429 = vmatpush.bf16.msra.mxu0 0
    %6430 = vmatpush.bf16.msra.mxu0 0
    %6431 = vmatpush.bf16.msra.mxu0 0
    %6432 = vmatpush.bf16.msra.mxu0 %v6423
    %6433 = vmatmul.bf16.gmra.mxu0 %v6420
    %v6434 = vpop.f32.mrf.mxu0
    %v6435 = vadd.f32 0.0, %v6434
    %v6436 = vpop.f32.mrf.mxu0
    %6437 = vdwg.mxu0
    %6438 = vrot.lane.b32.xlu0 %v5880, 120
    %v6439 = vpop.permute.xlu0 %6438
    %6440 = vrot.lane.b32.xlu0 %v5880, 88
    %v6441 = vpop.permute.xlu0 %6440
    %v6443 = vsel %vm364, %v6439, 0
    %v6446 = vsel %vm364, %v6441, 0
    %6448 = vmatpush.bf16.xpose.msra.mxu0 0
    %6449 = vmatpush.bf16.xpose.msra.mxu0 0
    %6450 = vmatpush.bf16.xpose.msra.mxu0 0
    %6451 = vmatpush.bf16.xpose.msra.mxu0 0
    %6452 = vmatpush.bf16.xpose.msra.mxu0 0
    %6453 = vmatpush.bf16.xpose.msra.mxu0 0
    %6454 = vmatpush.bf16.xpose.msra.mxu0 0
    %6455 = vmatpush.bf16.xpose.msra.mxu0 %v6446
    %6456 = vmatmul.bf16.gmra.mxu0 %v6443
    %v6457 = vpop.f32.mrf.mxu0
    %v6458 = vadd.f32 0.0, %v6457
    %v6459 = vpop.f32.mrf.mxu0
    %6460 = vdwg.mxu0
    %6461 = vrot.lane.b32.xlu0 %v5904, 120
    %v6462 = vpop.permute.xlu0 %6461
    %6463 = vrot.lane.b32.xlu0 %v5904, 88
    %v6464 = vpop.permute.xlu0 %6463
    %v6466 = vsel %vm364, %v6462, 0
    %v6469 = vsel %vm364, %v6464, 0
    %6471 = vmatpush.bf16.xpose.msra.mxu0 0
    %6472 = vmatpush.bf16.xpose.msra.mxu0 0
    %6473 = vmatpush.bf16.xpose.msra.mxu0 0
    %6474 = vmatpush.bf16.xpose.msra.mxu0 0
    %6475 = vmatpush.bf16.xpose.msra.mxu0 0
    %6476 = vmatpush.bf16.xpose.msra.mxu0 0
    %6477 = vmatpush.bf16.xpose.msra.mxu0 0
    %6478 = vmatpush.bf16.xpose.msra.mxu0 %v6469
    %6479 = vmatmul.bf16.gmra.mxu0 %v6466
    %v6480 = vpop.f32.mrf.mxu0
    %v6481 = vadd.f32 0.0, %v6480
    %v6482 = vpop.f32.mrf.mxu0
    %6483 = vdwg.mxu0
    %6484 = vrot.lane.b32.xlu0 %v5928, 120
    %v6485 = vpop.permute.xlu0 %6484
    %6486 = vrot.lane.b32.xlu0 %v5928, 88
    %v6487 = vpop.permute.xlu0 %6486
    %v6489 = vsel %vm364, %v6485, 0
    %v6492 = vsel %vm364, %v6487, 0
    %6494 = vmatpush.bf16.xpose.msra.mxu0 0
    %6495 = vmatpush.bf16.xpose.msra.mxu0 0
    %6496 = vmatpush.bf16.xpose.msra.mxu0 0
    %6497 = vmatpush.bf16.xpose.msra.mxu0 0
    %6498 = vmatpush.bf16.xpose.msra.mxu0 0
    %6499 = vmatpush.bf16.xpose.msra.mxu0 0
    %6500 = vmatpush.bf16.xpose.msra.mxu0 0
    %6501 = vmatpush.bf16.xpose.msra.mxu0 %v6492
    %6502 = vmatmul.bf16.gmra.mxu0 %v6489
    %v6503 = vpop.f32.mrf.mxu0
    %v6504 = vadd.f32 0.0, %v6503
    %v6505 = vpop.f32.mrf.mxu0
    %6506 = vdwg.mxu0
    %6507 = vrot.lane.b32.xlu0 %v5952, 120
    %v6508 = vpop.permute.xlu0 %6507
    %6509 = vrot.lane.b32.xlu0 %v5952, 88
    %v6510 = vpop.permute.xlu0 %6509
    %v6512 = vsel %vm364, %v6508, 0
    %v6515 = vsel %vm364, %v6510, 0
    %6517 = vmatpush.bf16.xpose.msra.mxu0 0
    %6518 = vmatpush.bf16.xpose.msra.mxu0 0
    %6519 = vmatpush.bf16.xpose.msra.mxu0 0
    %6520 = vmatpush.bf16.xpose.msra.mxu0 0
    %6521 = vmatpush.bf16.xpose.msra.mxu0 0
    %6522 = vmatpush.bf16.xpose.msra.mxu0 0
    %6523 = vmatpush.bf16.xpose.msra.mxu0 0
    %6524 = vmatpush.bf16.xpose.msra.mxu0 %v6515
    %6525 = vmatmul.bf16.gmra.mxu0 %v6512
    %v6526 = vpop.f32.mrf.mxu0
    %v6527 = vadd.f32 0.0, %v6526
    %v6528 = vpop.f32.mrf.mxu0
    %6529 = vdwg.mxu0
    %6530 = vrot.lane.b32.xlu0 %v5976, 120
    %v6531 = vpop.permute.xlu0 %6530
    %6532 = vrot.lane.b32.xlu0 %v5976, 88
    %v6533 = vpop.permute.xlu0 %6532
    %v6535 = vsel %vm364, %v6531, 0
    %v6538 = vsel %vm364, %v6533, 0
    %6540 = vmatpush.bf16.xpose.msra.mxu0 0
    %6541 = vmatpush.bf16.xpose.msra.mxu0 0
    %6542 = vmatpush.bf16.xpose.msra.mxu0 0
    %6543 = vmatpush.bf16.xpose.msra.mxu0 0
    %6544 = vmatpush.bf16.xpose.msra.mxu0 0
    %6545 = vmatpush.bf16.xpose.msra.mxu0 0
    %6546 = vmatpush.bf16.xpose.msra.mxu0 0
    %6547 = vmatpush.bf16.xpose.msra.mxu0 %v6538
    %6548 = vmatmul.bf16.gmra.mxu0 %v6535
    %v6549 = vpop.f32.mrf.mxu0
    %v6550 = vadd.f32 0.0, %v6549
    %v6551 = vpop.f32.mrf.mxu0
    %6552 = vdwg.mxu0
    %6553 = vrot.lane.b32.xlu0 %v6000, 120
    %v6554 = vpop.permute.xlu0 %6553
    %6555 = vrot.lane.b32.xlu0 %v6000, 88
    %v6556 = vpop.permute.xlu0 %6555
    %v6558 = vsel %vm364, %v6554, 0
    %v6561 = vsel %vm364, %v6556, 0
    %6563 = vmatpush.bf16.xpose.msra.mxu0 0
    %6564 = vmatpush.bf16.xpose.msra.mxu0 0
    %6565 = vmatpush.bf16.xpose.msra.mxu0 0
    %6566 = vmatpush.bf16.xpose.msra.mxu0 0
    %6567 = vmatpush.bf16.xpose.msra.mxu0 0
    %6568 = vmatpush.bf16.xpose.msra.mxu0 0
    %6569 = vmatpush.bf16.xpose.msra.mxu0 0
    %6570 = vmatpush.bf16.xpose.msra.mxu0 %v6561
    %6571 = vmatmul.bf16.gmra.mxu0 %v6558
    %v6572 = vpop.f32.mrf.mxu0
    %v6573 = vadd.f32 0.0, %v6572
    %v6574 = vpop.f32.mrf.mxu0
    %6575 = vdwg.mxu0
    %6576 = vrot.lane.b32.xlu0 %v6024, 120
    %v6577 = vpop.permute.xlu0 %6576
    %6578 = vrot.lane.b32.xlu0 %v6024, 88
    %v6579 = vpop.permute.xlu0 %6578
    %v6581 = vsel %vm364, %v6577, 0
    %v6584 = vsel %vm364, %v6579, 0
    %6586 = vmatpush.bf16.xpose.msra.mxu0 0
    %6587 = vmatpush.bf16.xpose.msra.mxu0 0
    %6588 = vmatpush.bf16.xpose.msra.mxu0 0
    %6589 = vmatpush.bf16.xpose.msra.mxu0 0
    %6590 = vmatpush.bf16.xpose.msra.mxu0 0
    %6591 = vmatpush.bf16.xpose.msra.mxu0 0
    %6592 = vmatpush.bf16.xpose.msra.mxu0 0
    %6593 = vmatpush.bf16.xpose.msra.mxu0 %v6584
    %6594 = vmatmul.bf16.gmra.mxu0 %v6581
    %v6595 = vpop.f32.mrf.mxu0
    %v6596 = vadd.f32 0.0, %v6595
    %v6597 = vpop.f32.mrf.mxu0
    %6598 = vdwg.mxu0
    %6599 = vrot.lane.b32.xlu0 %v6048, 120
    %v6600 = vpop.permute.xlu0 %6599
    %6601 = vrot.lane.b32.xlu0 %v6048, 88
    %v6602 = vpop.permute.xlu0 %6601
    %v6604 = vsel %vm364, %v6600, 0
    %v6607 = vsel %vm364, %v6602, 0
    %6609 = vmatpush.bf16.xpose.msra.mxu0 0
    %6610 = vmatpush.bf16.xpose.msra.mxu0 0
    %6611 = vmatpush.bf16.xpose.msra.mxu0 0
    %6612 = vmatpush.bf16.xpose.msra.mxu0 0
    %6613 = vmatpush.bf16.xpose.msra.mxu0 0
    %6614 = vmatpush.bf16.xpose.msra.mxu0 0
    %6615 = vmatpush.bf16.xpose.msra.mxu0 0
    %6616 = vmatpush.bf16.xpose.msra.mxu0 %v6607
    %6617 = vmatmul.bf16.gmra.mxu0 %v6604
    %v6618 = vpop.f32.mrf.mxu0
    %v6619 = vadd.f32 0.0, %v6618
    %v6620 = vpop.f32.mrf.mxu0
    %6621 = vdwg.mxu0
    %v6622 = vsel %vm364, %v6458, -inf
    %6623 = vmax.xlane.f32.xlu0 %v6622
    %v6624 = vpop.xlane.xlu0 %6623
    %v6625 = vsel %vm364, %v6481, -inf
    %6626 = vmax.xlane.f32.xlu0 %v6625
    %v6627 = vpop.xlane.xlu0 %6626
    %v6628 = vsel %vm364, %v6504, -inf
    %6629 = vmax.xlane.f32.xlu0 %v6628
    %v6630 = vpop.xlane.xlu0 %6629
    %v6631 = vsel %vm364, %v6527, -inf
    %6632 = vmax.xlane.f32.xlu0 %v6631
    %v6633 = vpop.xlane.xlu0 %6632
    %v6634 = vsel %vm364, %v6550, -inf
    %6635 = vmax.xlane.f32.xlu0 %v6634
    %v6636 = vpop.xlane.xlu0 %6635
    %v6637 = vsel %vm364, %v6573, -inf
    %6638 = vmax.xlane.f32.xlu0 %v6637
    %v6639 = vpop.xlane.xlu0 %6638
    %v6640 = vsel %vm364, %v6596, -inf
    %6641 = vmax.xlane.f32.xlu0 %v6640
    %v6642 = vpop.xlane.xlu0 %6641
    %v6643 = vsel %vm364, %v6619, -inf
    %6644 = vmax.xlane.f32.xlu0 %v6643
    %v6645 = vpop.xlane.xlu0 %6644
    %v6646 = vsub.f32 %v6458, %v6624
    %v6647 = vsub.f32 %v6481, %v6627
    %v6648 = vsub.f32 %v6504, %v6630
    %v6649 = vsub.f32 %v6527, %v6633
    %v6650 = vsub.f32 %v6550, %v6636
    %v6651 = vsub.f32 %v6573, %v6639
    %v6652 = vsub.f32 %v6596, %v6642
    %v6653 = vsub.f32 %v6619, %v6645
    %v6654 = vmul.f32 %v6646, 1.442695
    %v6655 = vpow.pop %v6654
    %v6656 = vmul.f32 %v6647, 1.442695
    %v6657 = vpow.pop %v6656
    %v6658 = vmul.f32 %v6648, 1.442695
    %v6659 = vpow.pop %v6658
    %v6660 = vmul.f32 %v6649, 1.442695
    %v6661 = vpow.pop %v6660
    %v6662 = vmul.f32 %v6650, 1.442695
    %v6663 = vpow.pop %v6662
    %v6664 = vmul.f32 %v6651, 1.442695
    %v6665 = vpow.pop %v6664
    %v6666 = vmul.f32 %v6652, 1.442695
    %v6667 = vpow.pop %v6666
    %v6668 = vmul.f32 %v6653, 1.442695
    %v6669 = vpow.pop %v6668
    %v6670 = vsel %vm364, %v6655, 0.0
    %6671 = vadd.xlane.f32.xlu0 %v6670
    %v6672 = vpop.xlane.xlu0 %6671
    %v6673 = vsel %vm364, %v6657, 0.0
    %6674 = vadd.xlane.f32.xlu0 %v6673
    %v6675 = vpop.xlane.xlu0 %6674
    %v6676 = vsel %vm364, %v6659, 0.0
    %6677 = vadd.xlane.f32.xlu0 %v6676
    %v6678 = vpop.xlane.xlu0 %6677
    %v6679 = vsel %vm364, %v6661, 0.0
    %6680 = vadd.xlane.f32.xlu0 %v6679
    %v6681 = vpop.xlane.xlu0 %6680
    %v6682 = vsel %vm364, %v6663, 0.0
    %6683 = vadd.xlane.f32.xlu0 %v6682
    %v6684 = vpop.xlane.xlu0 %6683
    %v6685 = vsel %vm364, %v6665, 0.0
    %6686 = vadd.xlane.f32.xlu0 %v6685
    %v6687 = vpop.xlane.xlu0 %6686
    %v6688 = vsel %vm364, %v6667, 0.0
    %6689 = vadd.xlane.f32.xlu0 %v6688
    %v6690 = vpop.xlane.xlu0 %6689
    %v6691 = vsel %vm364, %v6669, 0.0
    %6692 = vadd.xlane.f32.xlu0 %v6691
    %v6693 = vpop.xlane.xlu0 %6692
    %v6694 = vrcp.pop %v6672
    %v6695 = vmul.f32 %v6672, %v6694
    %v6696 = vsub.f32 1.0, %v6695
    %v6697 = vmul.f32 %v6694, %v6696
    %v6698 = vadd.f32 %v6694, %v6697
    %vm6699 = vweird.f32 %v6672
    %vm6700 = vweird.f32 %v6694
    %vm6701 = vmor %vm6699, %vm6700
    %v6702 = vsel %vm6701, %v6694, %v6698
    %v6703 = vand.u32 2147483647, %v6672
    %vm6704 = vcmp.eq.f32.partialorder %v6703, 8.507059e+37
    %v6705 = vand.u32 %v6672, 2147483648
    %v6706 = vor.u32 1.1754944e-38, %v6705
    %v6707 = vsel %vm6704, %v6706, %v6702
    %v6708 = vmul.f32 %v6655, %v6707
    %v6709 = vrcp.pop %v6675
    %v6710 = vmul.f32 %v6675, %v6709
    %v6711 = vsub.f32 1.0, %v6710
    %v6712 = vmul.f32 %v6709, %v6711
    %v6713 = vadd.f32 %v6709, %v6712
    %vm6714 = vweird.f32 %v6675
    %vm6715 = vweird.f32 %v6709
    %vm6716 = vmor %vm6714, %vm6715
    %v6717 = vsel %vm6716, %v6709, %v6713
    %v6718 = vand.u32 2147483647, %v6675
    %vm6719 = vcmp.eq.f32.partialorder %v6718, 8.507059e+37
    %v6720 = vand.u32 %v6675, 2147483648
    %v6721 = vor.u32 1.1754944e-38, %v6720
    %v6722 = vsel %vm6719, %v6721, %v6717
    %v6723 = vmul.f32 %v6657, %v6722
    %v6724 = vrcp.pop %v6678
    %v6725 = vmul.f32 %v6678, %v6724
    %v6726 = vsub.f32 1.0, %v6725
    %v6727 = vmul.f32 %v6724, %v6726
    %v6728 = vadd.f32 %v6724, %v6727
    %vm6729 = vweird.f32 %v6678
    %vm6730 = vweird.f32 %v6724
    %vm6731 = vmor %vm6729, %vm6730
    %v6732 = vsel %vm6731, %v6724, %v6728
    %v6733 = vand.u32 2147483647, %v6678
    %vm6734 = vcmp.eq.f32.partialorder %v6733, 8.507059e+37
    %v6735 = vand.u32 %v6678, 2147483648
    %v6736 = vor.u32 1.1754944e-38, %v6735
    %v6737 = vsel %vm6734, %v6736, %v6732
    %v6738 = vmul.f32 %v6659, %v6737
    %v6739 = vrcp.pop %v6681
    %v6740 = vmul.f32 %v6681, %v6739
    %v6741 = vsub.f32 1.0, %v6740
    %v6742 = vmul.f32 %v6739, %v6741
    %v6743 = vadd.f32 %v6739, %v6742
    %vm6744 = vweird.f32 %v6681
    %vm6745 = vweird.f32 %v6739
    %vm6746 = vmor %vm6744, %vm6745
    %v6747 = vsel %vm6746, %v6739, %v6743
    %v6748 = vand.u32 2147483647, %v6681
    %vm6749 = vcmp.eq.f32.partialorder %v6748, 8.507059e+37
    %v6750 = vand.u32 %v6681, 2147483648
    %v6751 = vor.u32 1.1754944e-38, %v6750
    %v6752 = vsel %vm6749, %v6751, %v6747
    %v6753 = vmul.f32 %v6661, %v6752
    %v6754 = vrcp.pop %v6684
    %v6755 = vmul.f32 %v6684, %v6754
    %v6756 = vsub.f32 1.0, %v6755
    %v6757 = vmul.f32 %v6754, %v6756
    %v6758 = vadd.f32 %v6754, %v6757
    %vm6759 = vweird.f32 %v6684
    %vm6760 = vweird.f32 %v6754
    %vm6761 = vmor %vm6759, %vm6760
    %v6762 = vsel %vm6761, %v6754, %v6758
    %v6763 = vand.u32 2147483647, %v6684
    %vm6764 = vcmp.eq.f32.partialorder %v6763, 8.507059e+37
    %v6765 = vand.u32 %v6684, 2147483648
    %v6766 = vor.u32 1.1754944e-38, %v6765
    %v6767 = vsel %vm6764, %v6766, %v6762
    %v6768 = vmul.f32 %v6663, %v6767
    %v6769 = vrcp.pop %v6687
    %v6770 = vmul.f32 %v6687, %v6769
    %v6771 = vsub.f32 1.0, %v6770
    %v6772 = vmul.f32 %v6769, %v6771
    %v6773 = vadd.f32 %v6769, %v6772
    %vm6774 = vweird.f32 %v6687
    %vm6775 = vweird.f32 %v6769
    %vm6776 = vmor %vm6774, %vm6775
    %v6777 = vsel %vm6776, %v6769, %v6773
    %v6778 = vand.u32 2147483647, %v6687
    %vm6779 = vcmp.eq.f32.partialorder %v6778, 8.507059e+37
    %v6780 = vand.u32 %v6687, 2147483648
    %v6781 = vor.u32 1.1754944e-38, %v6780
    %v6782 = vsel %vm6779, %v6781, %v6777
    %v6783 = vmul.f32 %v6665, %v6782
    %v6784 = vrcp.pop %v6690
    %v6785 = vmul.f32 %v6690, %v6784
    %v6786 = vsub.f32 1.0, %v6785
    %v6787 = vmul.f32 %v6784, %v6786
    %v6788 = vadd.f32 %v6784, %v6787
    %vm6789 = vweird.f32 %v6690
    %vm6790 = vweird.f32 %v6784
    %vm6791 = vmor %vm6789, %vm6790
    %v6792 = vsel %vm6791, %v6784, %v6788
    %v6793 = vand.u32 2147483647, %v6690
    %vm6794 = vcmp.eq.f32.partialorder %v6793, 8.507059e+37
    %v6795 = vand.u32 %v6690, 2147483648
    %v6796 = vor.u32 1.1754944e-38, %v6795
    %v6797 = vsel %vm6794, %v6796, %v6792
    %v6798 = vmul.f32 %v6667, %v6797
    %v6799 = vrcp.pop %v6693
    %v6800 = vmul.f32 %v6693, %v6799
    %v6801 = vsub.f32 1.0, %v6800
    %v6802 = vmul.f32 %v6799, %v6801
    %v6803 = vadd.f32 %v6799, %v6802
    %vm6804 = vweird.f32 %v6693
    %vm6805 = vweird.f32 %v6799
    %vm6806 = vmor %vm6804, %vm6805
    %v6807 = vsel %vm6806, %v6799, %v6803
    %v6808 = vand.u32 2147483647, %v6693
    %vm6809 = vcmp.eq.f32.partialorder %v6808, 8.507059e+37
    %v6810 = vand.u32 %v6693, 2147483648
    %v6811 = vor.u32 1.1754944e-38, %v6810
    %v6812 = vsel %vm6809, %v6811, %v6807
    %v6813 = vmul.f32 %v6669, %v6812
    %v6814 = vpack.c.bf16 %v6708, %v6708
    %v6815 = vpack.c.bf16 %v6723, %v6723
    %v6816 = vpack.c.bf16 %v6738, %v6738
    %v6817 = vpack.c.bf16 %v6753, %v6753
    %v6818 = vpack.c.bf16 %v6768, %v6768
    %v6819 = vpack.c.bf16 %v6783, %v6783
    %v6820 = vpack.c.bf16 %v6798, %v6798
    %v6821 = vpack.c.bf16 %v6813, %v6813
    %6822 = vrot.lane.b32.xlu0 %v5880, 56
    %v6823 = vpop.permute.xlu0 %6822
    %v6825 = vsel %vm364, %v6814, 0
    %v6828 = vsel %vm757, %v6823, 0
    %6830 = vmatpush.bf16.msra.mxu0 0
    %6831 = vmatpush.bf16.msra.mxu0 0
    %6832 = vmatpush.bf16.msra.mxu0 0
    %6833 = vmatpush.bf16.msra.mxu0 0
    %6834 = vmatpush.bf16.msra.mxu0 0
    %6835 = vmatpush.bf16.msra.mxu0 0
    %6836 = vmatpush.bf16.msra.mxu0 0
    %6837 = vmatpush.bf16.msra.mxu0 %v6828
    %6838 = vmatmul.bf16.gmra.mxu0 %v6825
    %v6839 = vpop.f32.mrf.mxu0
    %v6840 = vadd.f32 0.0, %v6839
    %v6841 = vpop.f32.mrf.mxu0
    %6842 = vdwg.mxu0
    %6843 = vrot.lane.b32.xlu0 %v5904, 56
    %v6844 = vpop.permute.xlu0 %6843
    %v6846 = vsel %vm364, %v6815, 0
    %v6849 = vsel %vm757, %v6844, 0
    %6851 = vmatpush.bf16.msra.mxu0 0
    %6852 = vmatpush.bf16.msra.mxu0 0
    %6853 = vmatpush.bf16.msra.mxu0 0
    %6854 = vmatpush.bf16.msra.mxu0 0
    %6855 = vmatpush.bf16.msra.mxu0 0
    %6856 = vmatpush.bf16.msra.mxu0 0
    %6857 = vmatpush.bf16.msra.mxu0 0
    %6858 = vmatpush.bf16.msra.mxu0 %v6849
    %6859 = vmatmul.bf16.gmra.mxu0 %v6846
    %v6860 = vpop.f32.mrf.mxu0
    %v6861 = vadd.f32 0.0, %v6860
    %v6862 = vpop.f32.mrf.mxu0
    %6863 = vdwg.mxu0
    %6864 = vrot.lane.b32.xlu0 %v5928, 56
    %v6865 = vpop.permute.xlu0 %6864
    %v6867 = vsel %vm364, %v6816, 0
    %v6870 = vsel %vm757, %v6865, 0
    %6872 = vmatpush.bf16.msra.mxu0 0
    %6873 = vmatpush.bf16.msra.mxu0 0
    %6874 = vmatpush.bf16.msra.mxu0 0
    %6875 = vmatpush.bf16.msra.mxu0 0
    %6876 = vmatpush.bf16.msra.mxu0 0
    %6877 = vmatpush.bf16.msra.mxu0 0
    %6878 = vmatpush.bf16.msra.mxu0 0
    %6879 = vmatpush.bf16.msra.mxu0 %v6870
    %6880 = vmatmul.bf16.gmra.mxu0 %v6867
    %v6881 = vpop.f32.mrf.mxu0
    %v6882 = vadd.f32 0.0, %v6881
    %v6883 = vpop.f32.mrf.mxu0
    %6884 = vdwg.mxu0
    %6885 = vrot.lane.b32.xlu0 %v5952, 56
    %v6886 = vpop.permute.xlu0 %6885
    %v6888 = vsel %vm364, %v6817, 0
    %v6891 = vsel %vm757, %v6886, 0
    %6893 = vmatpush.bf16.msra.mxu0 0
    %6894 = vmatpush.bf16.msra.mxu0 0
    %6895 = vmatpush.bf16.msra.mxu0 0
    %6896 = vmatpush.bf16.msra.mxu0 0
    %6897 = vmatpush.bf16.msra.mxu0 0
    %6898 = vmatpush.bf16.msra.mxu0 0
    %6899 = vmatpush.bf16.msra.mxu0 0
    %6900 = vmatpush.bf16.msra.mxu0 %v6891
    %6901 = vmatmul.bf16.gmra.mxu0 %v6888
    %v6902 = vpop.f32.mrf.mxu0
    %v6903 = vadd.f32 0.0, %v6902
    %v6904 = vpop.f32.mrf.mxu0
    %6905 = vdwg.mxu0
    %6906 = vrot.lane.b32.xlu0 %v5976, 56
    %v6907 = vpop.permute.xlu0 %6906
    %v6909 = vsel %vm364, %v6818, 0
    %v6912 = vsel %vm757, %v6907, 0
    %6914 = vmatpush.bf16.msra.mxu0 0
    %6915 = vmatpush.bf16.msra.mxu0 0
    %6916 = vmatpush.bf16.msra.mxu0 0
    %6917 = vmatpush.bf16.msra.mxu0 0
    %6918 = vmatpush.bf16.msra.mxu0 0
    %6919 = vmatpush.bf16.msra.mxu0 0
    %6920 = vmatpush.bf16.msra.mxu0 0
    %6921 = vmatpush.bf16.msra.mxu0 %v6912
    %6922 = vmatmul.bf16.gmra.mxu0 %v6909
    %v6923 = vpop.f32.mrf.mxu0
    %v6924 = vadd.f32 0.0, %v6923
    %v6925 = vpop.f32.mrf.mxu0
    %6926 = vdwg.mxu0
    %6927 = vrot.lane.b32.xlu0 %v6000, 56
    %v6928 = vpop.permute.xlu0 %6927
    %v6930 = vsel %vm364, %v6819, 0
    %v6933 = vsel %vm757, %v6928, 0
    %6935 = vmatpush.bf16.msra.mxu0 0
    %6936 = vmatpush.bf16.msra.mxu0 0
    %6937 = vmatpush.bf16.msra.mxu0 0
    %6938 = vmatpush.bf16.msra.mxu0 0
    %6939 = vmatpush.bf16.msra.mxu0 0
    %6940 = vmatpush.bf16.msra.mxu0 0
    %6941 = vmatpush.bf16.msra.mxu0 0
    %6942 = vmatpush.bf16.msra.mxu0 %v6933
    %6943 = vmatmul.bf16.gmra.mxu0 %v6930
    %v6944 = vpop.f32.mrf.mxu0
    %v6945 = vadd.f32 0.0, %v6944
    %v6946 = vpop.f32.mrf.mxu0
    %6947 = vdwg.mxu0
    %6948 = vrot.lane.b32.xlu0 %v6024, 56
    %v6949 = vpop.permute.xlu0 %6948
    %v6951 = vsel %vm364, %v6820, 0
    %v6954 = vsel %vm757, %v6949, 0
    %6956 = vmatpush.bf16.msra.mxu0 0
    %6957 = vmatpush.bf16.msra.mxu0 0
    %6958 = vmatpush.bf16.msra.mxu0 0
    %6959 = vmatpush.bf16.msra.mxu0 0
    %6960 = vmatpush.bf16.msra.mxu0 0
    %6961 = vmatpush.bf16.msra.mxu0 0
    %6962 = vmatpush.bf16.msra.mxu0 0
    %6963 = vmatpush.bf16.msra.mxu0 %v6954
    %6964 = vmatmul.bf16.gmra.mxu0 %v6951
    %v6965 = vpop.f32.mrf.mxu0
    %v6966 = vadd.f32 0.0, %v6965
    %v6967 = vpop.f32.mrf.mxu0
    %6968 = vdwg.mxu0
    %6969 = vrot.lane.b32.xlu0 %v6048, 56
    %v6970 = vpop.permute.xlu0 %6969
    %v6972 = vsel %vm364, %v6821, 0
    %v6975 = vsel %vm757, %v6970, 0
    %6977 = vmatpush.bf16.msra.mxu0 0
    %6978 = vmatpush.bf16.msra.mxu0 0
    %6979 = vmatpush.bf16.msra.mxu0 0
    %6980 = vmatpush.bf16.msra.mxu0 0
    %6981 = vmatpush.bf16.msra.mxu0 0
    %6982 = vmatpush.bf16.msra.mxu0 0
    %6983 = vmatpush.bf16.msra.mxu0 0
    %6984 = vmatpush.bf16.msra.mxu0 %v6975
    %6985 = vmatmul.bf16.gmra.mxu0 %v6972
    %v6986 = vpop.f32.mrf.mxu0
    %v6987 = vadd.f32 0.0, %v6986
    %v6988 = vpop.f32.mrf.mxu0
    %6989 = vdwg.mxu0
    %6990 = vrot.lane.b32.xlu0 %v5880, 112
    %v6991 = vpop.permute.xlu0 %6990
    %6992 = vrot.lane.b32.xlu0 %v5880, 80
    %v6993 = vpop.permute.xlu0 %6992
    %v6995 = vsel %vm364, %v6991, 0
    %v6998 = vsel %vm364, %v6993, 0
    %7000 = vmatpush.bf16.xpose.msra.mxu0 0
    %7001 = vmatpush.bf16.xpose.msra.mxu0 0
    %7002 = vmatpush.bf16.xpose.msra.mxu0 0
    %7003 = vmatpush.bf16.xpose.msra.mxu0 0
    %7004 = vmatpush.bf16.xpose.msra.mxu0 0
    %7005 = vmatpush.bf16.xpose.msra.mxu0 0
    %7006 = vmatpush.bf16.xpose.msra.mxu0 0
    %7007 = vmatpush.bf16.xpose.msra.mxu0 %v6998
    %7008 = vmatmul.bf16.gmra.mxu0 %v6995
    %v7009 = vpop.f32.mrf.mxu0
    %v7010 = vadd.f32 0.0, %v7009
    %v7011 = vpop.f32.mrf.mxu0
    %7012 = vdwg.mxu0
    %7013 = vrot.lane.b32.xlu0 %v5904, 112
    %v7014 = vpop.permute.xlu0 %7013
    %7015 = vrot.lane.b32.xlu0 %v5904, 80
    %v7016 = vpop.permute.xlu0 %7015
    %v7018 = vsel %vm364, %v7014, 0
    %v7021 = vsel %vm364, %v7016, 0
    %7023 = vmatpush.bf16.xpose.msra.mxu0 0
    %7024 = vmatpush.bf16.xpose.msra.mxu0 0
    %7025 = vmatpush.bf16.xpose.msra.mxu0 0
    %7026 = vmatpush.bf16.xpose.msra.mxu0 0
    %7027 = vmatpush.bf16.xpose.msra.mxu0 0
    %7028 = vmatpush.bf16.xpose.msra.mxu0 0
    %7029 = vmatpush.bf16.xpose.msra.mxu0 0
    %7030 = vmatpush.bf16.xpose.msra.mxu0 %v7021
    %7031 = vmatmul.bf16.gmra.mxu0 %v7018
    %v7032 = vpop.f32.mrf.mxu0
    %v7033 = vadd.f32 0.0, %v7032
    %v7034 = vpop.f32.mrf.mxu0
    %7035 = vdwg.mxu0
    %7036 = vrot.lane.b32.xlu0 %v5928, 112
    %v7037 = vpop.permute.xlu0 %7036
    %7038 = vrot.lane.b32.xlu0 %v5928, 80
    %v7039 = vpop.permute.xlu0 %7038
    %v7041 = vsel %vm364, %v7037, 0
    %v7044 = vsel %vm364, %v7039, 0
    %7046 = vmatpush.bf16.xpose.msra.mxu0 0
    %7047 = vmatpush.bf16.xpose.msra.mxu0 0
    %7048 = vmatpush.bf16.xpose.msra.mxu0 0
    %7049 = vmatpush.bf16.xpose.msra.mxu0 0
    %7050 = vmatpush.bf16.xpose.msra.mxu0 0
    %7051 = vmatpush.bf16.xpose.msra.mxu0 0
    %7052 = vmatpush.bf16.xpose.msra.mxu0 0
    %7053 = vmatpush.bf16.xpose.msra.mxu0 %v7044
    %7054 = vmatmul.bf16.gmra.mxu0 %v7041
    %v7055 = vpop.f32.mrf.mxu0
    %v7056 = vadd.f32 0.0, %v7055
    %v7057 = vpop.f32.mrf.mxu0
    %7058 = vdwg.mxu0
    %7059 = vrot.lane.b32.xlu0 %v5952, 112
    %v7060 = vpop.permute.xlu0 %7059
    %7061 = vrot.lane.b32.xlu0 %v5952, 80
    %v7062 = vpop.permute.xlu0 %7061
    %v7064 = vsel %vm364, %v7060, 0
    %v7067 = vsel %vm364, %v7062, 0
    %7069 = vmatpush.bf16.xpose.msra.mxu0 0
    %7070 = vmatpush.bf16.xpose.msra.mxu0 0
    %7071 = vmatpush.bf16.xpose.msra.mxu0 0
    %7072 = vmatpush.bf16.xpose.msra.mxu0 0
    %7073 = vmatpush.bf16.xpose.msra.mxu0 0
    %7074 = vmatpush.bf16.xpose.msra.mxu0 0
    %7075 = vmatpush.bf16.xpose.msra.mxu0 0
    %7076 = vmatpush.bf16.xpose.msra.mxu0 %v7067
    %7077 = vmatmul.bf16.gmra.mxu0 %v7064
    %v7078 = vpop.f32.mrf.mxu0
    %v7079 = vadd.f32 0.0, %v7078
    %v7080 = vpop.f32.mrf.mxu0
    %7081 = vdwg.mxu0
    %7082 = vrot.lane.b32.xlu0 %v5976, 112
    %v7083 = vpop.permute.xlu0 %7082
    %7084 = vrot.lane.b32.xlu0 %v5976, 80
    %v7085 = vpop.permute.xlu0 %7084
    %v7087 = vsel %vm364, %v7083, 0
    %v7090 = vsel %vm364, %v7085, 0
    %7092 = vmatpush.bf16.xpose.msra.mxu0 0
    %7093 = vmatpush.bf16.xpose.msra.mxu0 0
    %7094 = vmatpush.bf16.xpose.msra.mxu0 0
    %7095 = vmatpush.bf16.xpose.msra.mxu0 0
    %7096 = vmatpush.bf16.xpose.msra.mxu0 0
    %7097 = vmatpush.bf16.xpose.msra.mxu0 0
    %7098 = vmatpush.bf16.xpose.msra.mxu0 0
    %7099 = vmatpush.bf16.xpose.msra.mxu0 %v7090
    %7100 = vmatmul.bf16.gmra.mxu0 %v7087
    %v7101 = vpop.f32.mrf.mxu0
    %v7102 = vadd.f32 0.0, %v7101
    %v7103 = vpop.f32.mrf.mxu0
    %7104 = vdwg.mxu0
    %7105 = vrot.lane.b32.xlu0 %v6000, 112
    %v7106 = vpop.permute.xlu0 %7105
    %7107 = vrot.lane.b32.xlu0 %v6000, 80
    %v7108 = vpop.permute.xlu0 %7107
    %v7110 = vsel %vm364, %v7106, 0
    %v7113 = vsel %vm364, %v7108, 0
    %7115 = vmatpush.bf16.xpose.msra.mxu0 0
    %7116 = vmatpush.bf16.xpose.msra.mxu0 0
    %7117 = vmatpush.bf16.xpose.msra.mxu0 0
    %7118 = vmatpush.bf16.xpose.msra.mxu0 0
    %7119 = vmatpush.bf16.xpose.msra.mxu0 0
    %7120 = vmatpush.bf16.xpose.msra.mxu0 0
    %7121 = vmatpush.bf16.xpose.msra.mxu0 0
    %7122 = vmatpush.bf16.xpose.msra.mxu0 %v7113
    %7123 = vmatmul.bf16.gmra.mxu0 %v7110
    %v7124 = vpop.f32.mrf.mxu0
    %v7125 = vadd.f32 0.0, %v7124
    %v7126 = vpop.f32.mrf.mxu0
    %7127 = vdwg.mxu0
    %7128 = vrot.lane.b32.xlu0 %v6024, 112
    %v7129 = vpop.permute.xlu0 %7128
    %7130 = vrot.lane.b32.xlu0 %v6024, 80
    %v7131 = vpop.permute.xlu0 %7130
    %v7133 = vsel %vm364, %v7129, 0
    %v7136 = vsel %vm364, %v7131, 0
    %7138 = vmatpush.bf16.xpose.msra.mxu0 0
    %7139 = vmatpush.bf16.xpose.msra.mxu0 0
    %7140 = vmatpush.bf16.xpose.msra.mxu0 0
    %7141 = vmatpush.bf16.xpose.msra.mxu0 0
    %7142 = vmatpush.bf16.xpose.msra.mxu0 0
    %7143 = vmatpush.bf16.xpose.msra.mxu0 0
    %7144 = vmatpush.bf16.xpose.msra.mxu0 0
    %7145 = vmatpush.bf16.xpose.msra.mxu0 %v7136
    %7146 = vmatmul.bf16.gmra.mxu0 %v7133
    %v7147 = vpop.f32.mrf.mxu0
    %v7148 = vadd.f32 0.0, %v7147
    %v7149 = vpop.f32.mrf.mxu0
    %7150 = vdwg.mxu0
    %7151 = vrot.lane.b32.xlu0 %v6048, 112
    %v7152 = vpop.permute.xlu0 %7151
    %7153 = vrot.lane.b32.xlu0 %v6048, 80
    %v7154 = vpop.permute.xlu0 %7153
    %v7156 = vsel %vm364, %v7152, 0
    %v7159 = vsel %vm364, %v7154, 0
    %7161 = vmatpush.bf16.xpose.msra.mxu0 0
    %7162 = vmatpush.bf16.xpose.msra.mxu0 0
    %7163 = vmatpush.bf16.xpose.msra.mxu0 0
    %7164 = vmatpush.bf16.xpose.msra.mxu0 0
    %7165 = vmatpush.bf16.xpose.msra.mxu0 0
    %7166 = vmatpush.bf16.xpose.msra.mxu0 0
    %7167 = vmatpush.bf16.xpose.msra.mxu0 0
    %7168 = vmatpush.bf16.xpose.msra.mxu0 %v7159
    %7169 = vmatmul.bf16.gmra.mxu0 %v7156
    %v7170 = vpop.f32.mrf.mxu0
    %v7171 = vadd.f32 0.0, %v7170
    %v7172 = vpop.f32.mrf.mxu0
    %7173 = vdwg.mxu0
    %v7174 = vsel %vm364, %v7010, -inf
    %7175 = vmax.xlane.f32.xlu0 %v7174
    %v7176 = vpop.xlane.xlu0 %7175
    %v7177 = vsel %vm364, %v7033, -inf
    %7178 = vmax.xlane.f32.xlu0 %v7177
    %v7179 = vpop.xlane.xlu0 %7178
    %v7180 = vsel %vm364, %v7056, -inf
    %7181 = vmax.xlane.f32.xlu0 %v7180
    %v7182 = vpop.xlane.xlu0 %7181
    %v7183 = vsel %vm364, %v7079, -inf
    %7184 = vmax.xlane.f32.xlu0 %v7183
    %v7185 = vpop.xlane.xlu0 %7184
    %v7186 = vsel %vm364, %v7102, -inf
    %7187 = vmax.xlane.f32.xlu0 %v7186
    %v7188 = vpop.xlane.xlu0 %7187
    %v7189 = vsel %vm364, %v7125, -inf
    %7190 = vmax.xlane.f32.xlu0 %v7189
    %v7191 = vpop.xlane.xlu0 %7190
    %v7192 = vsel %vm364, %v7148, -inf
    %7193 = vmax.xlane.f32.xlu0 %v7192
    %v7194 = vpop.xlane.xlu0 %7193
    %v7195 = vsel %vm364, %v7171, -inf
    %7196 = vmax.xlane.f32.xlu0 %v7195
    %v7197 = vpop.xlane.xlu0 %7196
    %v7198 = vsub.f32 %v7010, %v7176
    %v7199 = vsub.f32 %v7033, %v7179
    %v7200 = vsub.f32 %v7056, %v7182
    %v7201 = vsub.f32 %v7079, %v7185
    %v7202 = vsub.f32 %v7102, %v7188
    %v7203 = vsub.f32 %v7125, %v7191
    %v7204 = vsub.f32 %v7148, %v7194
    %v7205 = vsub.f32 %v7171, %v7197
    %v7206 = vmul.f32 %v7198, 1.442695
    %v7207 = vpow.pop %v7206
    %v7208 = vmul.f32 %v7199, 1.442695
    %v7209 = vpow.pop %v7208
    %v7210 = vmul.f32 %v7200, 1.442695
    %v7211 = vpow.pop %v7210
    %v7212 = vmul.f32 %v7201, 1.442695
    %v7213 = vpow.pop %v7212
    %v7214 = vmul.f32 %v7202, 1.442695
    %v7215 = vpow.pop %v7214
    %v7216 = vmul.f32 %v7203, 1.442695
    %v7217 = vpow.pop %v7216
    %v7218 = vmul.f32 %v7204, 1.442695
    %v7219 = vpow.pop %v7218
    %v7220 = vmul.f32 %v7205, 1.442695
    %v7221 = vpow.pop %v7220
    %v7222 = vsel %vm364, %v7207, 0.0
    %7223 = vadd.xlane.f32.xlu0 %v7222
    %v7224 = vpop.xlane.xlu0 %7223
    %v7225 = vsel %vm364, %v7209, 0.0
    %7226 = vadd.xlane.f32.xlu0 %v7225
    %v7227 = vpop.xlane.xlu0 %7226
    %v7228 = vsel %vm364, %v7211, 0.0
    %7229 = vadd.xlane.f32.xlu0 %v7228
    %v7230 = vpop.xlane.xlu0 %7229
    %v7231 = vsel %vm364, %v7213, 0.0
    %7232 = vadd.xlane.f32.xlu0 %v7231
    %v7233 = vpop.xlane.xlu0 %7232
    %v7234 = vsel %vm364, %v7215, 0.0
    %7235 = vadd.xlane.f32.xlu0 %v7234
    %v7236 = vpop.xlane.xlu0 %7235
    %v7237 = vsel %vm364, %v7217, 0.0
    %7238 = vadd.xlane.f32.xlu0 %v7237
    %v7239 = vpop.xlane.xlu0 %7238
    %v7240 = vsel %vm364, %v7219, 0.0
    %7241 = vadd.xlane.f32.xlu0 %v7240
    %v7242 = vpop.xlane.xlu0 %7241
    %v7243 = vsel %vm364, %v7221, 0.0
    %7244 = vadd.xlane.f32.xlu0 %v7243
    %v7245 = vpop.xlane.xlu0 %7244
    %v7246 = vrcp.pop %v7224
    %v7247 = vmul.f32 %v7224, %v7246
    %v7248 = vsub.f32 1.0, %v7247
    %v7249 = vmul.f32 %v7246, %v7248
    %v7250 = vadd.f32 %v7246, %v7249
    %vm7251 = vweird.f32 %v7224
    %vm7252 = vweird.f32 %v7246
    %vm7253 = vmor %vm7251, %vm7252
    %v7254 = vsel %vm7253, %v7246, %v7250
    %v7255 = vand.u32 2147483647, %v7224
    %vm7256 = vcmp.eq.f32.partialorder %v7255, 8.507059e+37
    %v7257 = vand.u32 %v7224, 2147483648
    %v7258 = vor.u32 1.1754944e-38, %v7257
    %v7259 = vsel %vm7256, %v7258, %v7254
    %v7260 = vmul.f32 %v7207, %v7259
    %v7261 = vrcp.pop %v7227
    %v7262 = vmul.f32 %v7227, %v7261
    %v7263 = vsub.f32 1.0, %v7262
    %v7264 = vmul.f32 %v7261, %v7263
    %v7265 = vadd.f32 %v7261, %v7264
    %vm7266 = vweird.f32 %v7227
    %vm7267 = vweird.f32 %v7261
    %vm7268 = vmor %vm7266, %vm7267
    %v7269 = vsel %vm7268, %v7261, %v7265
    %v7270 = vand.u32 2147483647, %v7227
    %vm7271 = vcmp.eq.f32.partialorder %v7270, 8.507059e+37
    %v7272 = vand.u32 %v7227, 2147483648
    %v7273 = vor.u32 1.1754944e-38, %v7272
    %v7274 = vsel %vm7271, %v7273, %v7269
    %v7275 = vmul.f32 %v7209, %v7274
    %v7276 = vrcp.pop %v7230
    %v7277 = vmul.f32 %v7230, %v7276
    %v7278 = vsub.f32 1.0, %v7277
    %v7279 = vmul.f32 %v7276, %v7278
    %v7280 = vadd.f32 %v7276, %v7279
    %vm7281 = vweird.f32 %v7230
    %vm7282 = vweird.f32 %v7276
    %vm7283 = vmor %vm7281, %vm7282
    %v7284 = vsel %vm7283, %v7276, %v7280
    %v7285 = vand.u32 2147483647, %v7230
    %vm7286 = vcmp.eq.f32.partialorder %v7285, 8.507059e+37
    %v7287 = vand.u32 %v7230, 2147483648
    %v7288 = vor.u32 1.1754944e-38, %v7287
    %v7289 = vsel %vm7286, %v7288, %v7284
    %v7290 = vmul.f32 %v7211, %v7289
    %v7291 = vrcp.pop %v7233
    %v7292 = vmul.f32 %v7233, %v7291
    %v7293 = vsub.f32 1.0, %v7292
    %v7294 = vmul.f32 %v7291, %v7293
    %v7295 = vadd.f32 %v7291, %v7294
    %vm7296 = vweird.f32 %v7233
    %vm7297 = vweird.f32 %v7291
    %vm7298 = vmor %vm7296, %vm7297
    %v7299 = vsel %vm7298, %v7291, %v7295
    %v7300 = vand.u32 2147483647, %v7233
    %vm7301 = vcmp.eq.f32.partialorder %v7300, 8.507059e+37
    %v7302 = vand.u32 %v7233, 2147483648
    %v7303 = vor.u32 1.1754944e-38, %v7302
    %v7304 = vsel %vm7301, %v7303, %v7299
    %v7305 = vmul.f32 %v7213, %v7304
    %v7306 = vrcp.pop %v7236
    %v7307 = vmul.f32 %v7236, %v7306
    %v7308 = vsub.f32 1.0, %v7307
    %v7309 = vmul.f32 %v7306, %v7308
    %v7310 = vadd.f32 %v7306, %v7309
    %vm7311 = vweird.f32 %v7236
    %vm7312 = vweird.f32 %v7306
    %vm7313 = vmor %vm7311, %vm7312
    %v7314 = vsel %vm7313, %v7306, %v7310
    %v7315 = vand.u32 2147483647, %v7236
    %vm7316 = vcmp.eq.f32.partialorder %v7315, 8.507059e+37
    %v7317 = vand.u32 %v7236, 2147483648
    %v7318 = vor.u32 1.1754944e-38, %v7317
    %v7319 = vsel %vm7316, %v7318, %v7314
    %v7320 = vmul.f32 %v7215, %v7319
    %v7321 = vrcp.pop %v7239
    %v7322 = vmul.f32 %v7239, %v7321
    %v7323 = vsub.f32 1.0, %v7322
    %v7324 = vmul.f32 %v7321, %v7323
    %v7325 = vadd.f32 %v7321, %v7324
    %vm7326 = vweird.f32 %v7239
    %vm7327 = vweird.f32 %v7321
    %vm7328 = vmor %vm7326, %vm7327
    %v7329 = vsel %vm7328, %v7321, %v7325
    %v7330 = vand.u32 2147483647, %v7239
    %vm7331 = vcmp.eq.f32.partialorder %v7330, 8.507059e+37
    %v7332 = vand.u32 %v7239, 2147483648
    %v7333 = vor.u32 1.1754944e-38, %v7332
    %v7334 = vsel %vm7331, %v7333, %v7329
    %v7335 = vmul.f32 %v7217, %v7334
    %v7336 = vrcp.pop %v7242
    %v7337 = vmul.f32 %v7242, %v7336
    %v7338 = vsub.f32 1.0, %v7337
    %v7339 = vmul.f32 %v7336, %v7338
    %v7340 = vadd.f32 %v7336, %v7339
    %vm7341 = vweird.f32 %v7242
    %vm7342 = vweird.f32 %v7336
    %vm7343 = vmor %vm7341, %vm7342
    %v7344 = vsel %vm7343, %v7336, %v7340
    %v7345 = vand.u32 2147483647, %v7242
    %vm7346 = vcmp.eq.f32.partialorder %v7345, 8.507059e+37
    %v7347 = vand.u32 %v7242, 2147483648
    %v7348 = vor.u32 1.1754944e-38, %v7347
    %v7349 = vsel %vm7346, %v7348, %v7344
    %v7350 = vmul.f32 %v7219, %v7349
    %v7351 = vrcp.pop %v7245
    %v7352 = vmul.f32 %v7245, %v7351
    %v7353 = vsub.f32 1.0, %v7352
    %v7354 = vmul.f32 %v7351, %v7353
    %v7355 = vadd.f32 %v7351, %v7354
    %vm7356 = vweird.f32 %v7245
    %vm7357 = vweird.f32 %v7351
    %vm7358 = vmor %vm7356, %vm7357
    %v7359 = vsel %vm7358, %v7351, %v7355
    %v7360 = vand.u32 2147483647, %v7245
    %vm7361 = vcmp.eq.f32.partialorder %v7360, 8.507059e+37
    %v7362 = vand.u32 %v7245, 2147483648
    %v7363 = vor.u32 1.1754944e-38, %v7362
    %v7364 = vsel %vm7361, %v7363, %v7359
    %v7365 = vmul.f32 %v7221, %v7364
    %v7366 = vpack.c.bf16 %v7260, %v7260
    %v7367 = vpack.c.bf16 %v7275, %v7275
    %v7368 = vpack.c.bf16 %v7290, %v7290
    %v7369 = vpack.c.bf16 %v7305, %v7305
    %v7370 = vpack.c.bf16 %v7320, %v7320
    %v7371 = vpack.c.bf16 %v7335, %v7335
    %v7372 = vpack.c.bf16 %v7350, %v7350
    %v7373 = vpack.c.bf16 %v7365, %v7365
    %7374 = vrot.lane.b32.xlu0 %v5880, 48
    %v7375 = vpop.permute.xlu0 %7374
    %v7377 = vsel %vm364, %v7366, 0
    %v7380 = vsel %vm757, %v7375, 0
    %7382 = vmatpush.bf16.msra.mxu0 0
    %7383 = vmatpush.bf16.msra.mxu0 0
    %7384 = vmatpush.bf16.msra.mxu0 0
    %7385 = vmatpush.bf16.msra.mxu0 0
    %7386 = vmatpush.bf16.msra.mxu0 0
    %7387 = vmatpush.bf16.msra.mxu0 0
    %7388 = vmatpush.bf16.msra.mxu0 0
    %7389 = vmatpush.bf16.msra.mxu0 %v7380
    %7390 = vmatmul.bf16.gmra.mxu0 %v7377
    %v7391 = vpop.f32.mrf.mxu0
    %v7392 = vadd.f32 0.0, %v7391
    %v7393 = vpop.f32.mrf.mxu0
    %7394 = vdwg.mxu0
    %7395 = vrot.lane.b32.xlu0 %v5904, 48
    %v7396 = vpop.permute.xlu0 %7395
    %v7398 = vsel %vm364, %v7367, 0
    %v7401 = vsel %vm757, %v7396, 0
    %7403 = vmatpush.bf16.msra.mxu0 0
    %7404 = vmatpush.bf16.msra.mxu0 0
    %7405 = vmatpush.bf16.msra.mxu0 0
    %7406 = vmatpush.bf16.msra.mxu0 0
    %7407 = vmatpush.bf16.msra.mxu0 0
    %7408 = vmatpush.bf16.msra.mxu0 0
    %7409 = vmatpush.bf16.msra.mxu0 0
    %7410 = vmatpush.bf16.msra.mxu0 %v7401
    %7411 = vmatmul.bf16.gmra.mxu0 %v7398
    %v7412 = vpop.f32.mrf.mxu0
    %v7413 = vadd.f32 0.0, %v7412
    %v7414 = vpop.f32.mrf.mxu0
    %7415 = vdwg.mxu0
    %7416 = vrot.lane.b32.xlu0 %v5928, 48
    %v7417 = vpop.permute.xlu0 %7416
    %v7419 = vsel %vm364, %v7368, 0
    %v7422 = vsel %vm757, %v7417, 0
    %7424 = vmatpush.bf16.msra.mxu0 0
    %7425 = vmatpush.bf16.msra.mxu0 0
    %7426 = vmatpush.bf16.msra.mxu0 0
    %7427 = vmatpush.bf16.msra.mxu0 0
    %7428 = vmatpush.bf16.msra.mxu0 0
    %7429 = vmatpush.bf16.msra.mxu0 0
    %7430 = vmatpush.bf16.msra.mxu0 0
    %7431 = vmatpush.bf16.msra.mxu0 %v7422
    %7432 = vmatmul.bf16.gmra.mxu0 %v7419
    %v7433 = vpop.f32.mrf.mxu0
    %v7434 = vadd.f32 0.0, %v7433
    %v7435 = vpop.f32.mrf.mxu0
    %7436 = vdwg.mxu0
    %7437 = vrot.lane.b32.xlu0 %v5952, 48
    %v7438 = vpop.permute.xlu0 %7437
    %v7440 = vsel %vm364, %v7369, 0
    %v7443 = vsel %vm757, %v7438, 0
    %7445 = vmatpush.bf16.msra.mxu0 0
    %7446 = vmatpush.bf16.msra.mxu0 0
    %7447 = vmatpush.bf16.msra.mxu0 0
    %7448 = vmatpush.bf16.msra.mxu0 0
    %7449 = vmatpush.bf16.msra.mxu0 0
    %7450 = vmatpush.bf16.msra.mxu0 0
    %7451 = vmatpush.bf16.msra.mxu0 0
    %7452 = vmatpush.bf16.msra.mxu0 %v7443
    %7453 = vmatmul.bf16.gmra.mxu0 %v7440
    %v7454 = vpop.f32.mrf.mxu0
    %v7455 = vadd.f32 0.0, %v7454
    %v7456 = vpop.f32.mrf.mxu0
    %7457 = vdwg.mxu0
    %7458 = vrot.lane.b32.xlu0 %v5976, 48
    %v7459 = vpop.permute.xlu0 %7458
    %v7461 = vsel %vm364, %v7370, 0
    %v7464 = vsel %vm757, %v7459, 0
    %7466 = vmatpush.bf16.msra.mxu0 0
    %7467 = vmatpush.bf16.msra.mxu0 0
    %7468 = vmatpush.bf16.msra.mxu0 0
    %7469 = vmatpush.bf16.msra.mxu0 0
    %7470 = vmatpush.bf16.msra.mxu0 0
    %7471 = vmatpush.bf16.msra.mxu0 0
    %7472 = vmatpush.bf16.msra.mxu0 0
    %7473 = vmatpush.bf16.msra.mxu0 %v7464
    %7474 = vmatmul.bf16.gmra.mxu0 %v7461
    %v7475 = vpop.f32.mrf.mxu0
    %v7476 = vadd.f32 0.0, %v7475
    %v7477 = vpop.f32.mrf.mxu0
    %7478 = vdwg.mxu0
    %7479 = vrot.lane.b32.xlu0 %v6000, 48
    %v7480 = vpop.permute.xlu0 %7479
    %v7482 = vsel %vm364, %v7371, 0
    %v7485 = vsel %vm757, %v7480, 0
    %7487 = vmatpush.bf16.msra.mxu0 0
    %7488 = vmatpush.bf16.msra.mxu0 0
    %7489 = vmatpush.bf16.msra.mxu0 0
    %7490 = vmatpush.bf16.msra.mxu0 0
    %7491 = vmatpush.bf16.msra.mxu0 0
    %7492 = vmatpush.bf16.msra.mxu0 0
    %7493 = vmatpush.bf16.msra.mxu0 0
    %7494 = vmatpush.bf16.msra.mxu0 %v7485
    %7495 = vmatmul.bf16.gmra.mxu0 %v7482
    %v7496 = vpop.f32.mrf.mxu0
    %v7497 = vadd.f32 0.0, %v7496
    %v7498 = vpop.f32.mrf.mxu0
    %7499 = vdwg.mxu0
    %7500 = vrot.lane.b32.xlu0 %v6024, 48
    %v7501 = vpop.permute.xlu0 %7500
    %v7503 = vsel %vm364, %v7372, 0
    %v7506 = vsel %vm757, %v7501, 0
    %7508 = vmatpush.bf16.msra.mxu0 0
    %7509 = vmatpush.bf16.msra.mxu0 0
    %7510 = vmatpush.bf16.msra.mxu0 0
    %7511 = vmatpush.bf16.msra.mxu0 0
    %7512 = vmatpush.bf16.msra.mxu0 0
    %7513 = vmatpush.bf16.msra.mxu0 0
    %7514 = vmatpush.bf16.msra.mxu0 0
    %7515 = vmatpush.bf16.msra.mxu0 %v7506
    %7516 = vmatmul.bf16.gmra.mxu0 %v7503
    %v7517 = vpop.f32.mrf.mxu0
    %v7518 = vadd.f32 0.0, %v7517
    %v7519 = vpop.f32.mrf.mxu0
    %7520 = vdwg.mxu0
    %7521 = vrot.lane.b32.xlu0 %v6048, 48
    %v7522 = vpop.permute.xlu0 %7521
    %v7524 = vsel %vm364, %v7373, 0
    %v7527 = vsel %vm757, %v7522, 0
    %7529 = vmatpush.bf16.msra.mxu0 0
    %7530 = vmatpush.bf16.msra.mxu0 0
    %7531 = vmatpush.bf16.msra.mxu0 0
    %7532 = vmatpush.bf16.msra.mxu0 0
    %7533 = vmatpush.bf16.msra.mxu0 0
    %7534 = vmatpush.bf16.msra.mxu0 0
    %7535 = vmatpush.bf16.msra.mxu0 0
    %7536 = vmatpush.bf16.msra.mxu0 %v7527
    %7537 = vmatmul.bf16.gmra.mxu0 %v7524
    %v7538 = vpop.f32.mrf.mxu0
    %v7539 = vadd.f32 0.0, %v7538
    %v7540 = vpop.f32.mrf.mxu0
    %7541 = vdwg.mxu0
    %7542 = vrot.lane.b32.xlu0 %v5880, 104
    %v7543 = vpop.permute.xlu0 %7542
    %7544 = vrot.lane.b32.xlu0 %v5880, 72
    %v7545 = vpop.permute.xlu0 %7544
    %v7547 = vsel %vm364, %v7543, 0
    %v7550 = vsel %vm364, %v7545, 0
    %7552 = vmatpush.bf16.xpose.msra.mxu0 0
    %7553 = vmatpush.bf16.xpose.msra.mxu0 0
    %7554 = vmatpush.bf16.xpose.msra.mxu0 0
    %7555 = vmatpush.bf16.xpose.msra.mxu0 0
    %7556 = vmatpush.bf16.xpose.msra.mxu0 0
    %7557 = vmatpush.bf16.xpose.msra.mxu0 0
    %7558 = vmatpush.bf16.xpose.msra.mxu0 0
    %7559 = vmatpush.bf16.xpose.msra.mxu0 %v7550
    %7560 = vmatmul.bf16.gmra.mxu0 %v7547
    %v7561 = vpop.f32.mrf.mxu0
    %v7562 = vadd.f32 0.0, %v7561
    %v7563 = vpop.f32.mrf.mxu0
    %7564 = vdwg.mxu0
    %7565 = vrot.lane.b32.xlu0 %v5904, 104
    %v7566 = vpop.permute.xlu0 %7565
    %7567 = vrot.lane.b32.xlu0 %v5904, 72
    %v7568 = vpop.permute.xlu0 %7567
    %v7570 = vsel %vm364, %v7566, 0
    %v7573 = vsel %vm364, %v7568, 0
    %7575 = vmatpush.bf16.xpose.msra.mxu0 0
    %7576 = vmatpush.bf16.xpose.msra.mxu0 0
    %7577 = vmatpush.bf16.xpose.msra.mxu0 0
    %7578 = vmatpush.bf16.xpose.msra.mxu0 0
    %7579 = vmatpush.bf16.xpose.msra.mxu0 0
    %7580 = vmatpush.bf16.xpose.msra.mxu0 0
    %7581 = vmatpush.bf16.xpose.msra.mxu0 0
    %7582 = vmatpush.bf16.xpose.msra.mxu0 %v7573
    %7583 = vmatmul.bf16.gmra.mxu0 %v7570
    %v7584 = vpop.f32.mrf.mxu0
    %v7585 = vadd.f32 0.0, %v7584
    %v7586 = vpop.f32.mrf.mxu0
    %7587 = vdwg.mxu0
    %7588 = vrot.lane.b32.xlu0 %v5928, 104
    %v7589 = vpop.permute.xlu0 %7588
    %7590 = vrot.lane.b32.xlu0 %v5928, 72
    %v7591 = vpop.permute.xlu0 %7590
    %v7593 = vsel %vm364, %v7589, 0
    %v7596 = vsel %vm364, %v7591, 0
    %7598 = vmatpush.bf16.xpose.msra.mxu0 0
    %7599 = vmatpush.bf16.xpose.msra.mxu0 0
    %7600 = vmatpush.bf16.xpose.msra.mxu0 0
    %7601 = vmatpush.bf16.xpose.msra.mxu0 0
    %7602 = vmatpush.bf16.xpose.msra.mxu0 0
    %7603 = vmatpush.bf16.xpose.msra.mxu0 0
    %7604 = vmatpush.bf16.xpose.msra.mxu0 0
    %7605 = vmatpush.bf16.xpose.msra.mxu0 %v7596
    %7606 = vmatmul.bf16.gmra.mxu0 %v7593
    %v7607 = vpop.f32.mrf.mxu0
    %v7608 = vadd.f32 0.0, %v7607
    %v7609 = vpop.f32.mrf.mxu0
    %7610 = vdwg.mxu0
    %7611 = vrot.lane.b32.xlu0 %v5952, 104
    %v7612 = vpop.permute.xlu0 %7611
    %7613 = vrot.lane.b32.xlu0 %v5952, 72
    %v7614 = vpop.permute.xlu0 %7613
    %v7616 = vsel %vm364, %v7612, 0
    %v7619 = vsel %vm364, %v7614, 0
    %7621 = vmatpush.bf16.xpose.msra.mxu0 0
    %7622 = vmatpush.bf16.xpose.msra.mxu0 0
    %7623 = vmatpush.bf16.xpose.msra.mxu0 0
    %7624 = vmatpush.bf16.xpose.msra.mxu0 0
    %7625 = vmatpush.bf16.xpose.msra.mxu0 0
    %7626 = vmatpush.bf16.xpose.msra.mxu0 0
    %7627 = vmatpush.bf16.xpose.msra.mxu0 0
    %7628 = vmatpush.bf16.xpose.msra.mxu0 %v7619
    %7629 = vmatmul.bf16.gmra.mxu0 %v7616
    %v7630 = vpop.f32.mrf.mxu0
    %v7631 = vadd.f32 0.0, %v7630
    %v7632 = vpop.f32.mrf.mxu0
    %7633 = vdwg.mxu0
    %7634 = vrot.lane.b32.xlu0 %v5976, 104
    %v7635 = vpop.permute.xlu0 %7634
    %7636 = vrot.lane.b32.xlu0 %v5976, 72
    %v7637 = vpop.permute.xlu0 %7636
    %v7639 = vsel %vm364, %v7635, 0
    %v7642 = vsel %vm364, %v7637, 0
    %7644 = vmatpush.bf16.xpose.msra.mxu0 0
    %7645 = vmatpush.bf16.xpose.msra.mxu0 0
    %7646 = vmatpush.bf16.xpose.msra.mxu0 0
    %7647 = vmatpush.bf16.xpose.msra.mxu0 0
    %7648 = vmatpush.bf16.xpose.msra.mxu0 0
    %7649 = vmatpush.bf16.xpose.msra.mxu0 0
    %7650 = vmatpush.bf16.xpose.msra.mxu0 0
    %7651 = vmatpush.bf16.xpose.msra.mxu0 %v7642
    %7652 = vmatmul.bf16.gmra.mxu0 %v7639
    %v7653 = vpop.f32.mrf.mxu0
    %v7654 = vadd.f32 0.0, %v7653
    %v7655 = vpop.f32.mrf.mxu0
    %7656 = vdwg.mxu0
    %7657 = vrot.lane.b32.xlu0 %v6000, 104
    %v7658 = vpop.permute.xlu0 %7657
    %7659 = vrot.lane.b32.xlu0 %v6000, 72
    %v7660 = vpop.permute.xlu0 %7659
    %v7662 = vsel %vm364, %v7658, 0
    %v7665 = vsel %vm364, %v7660, 0
    %7667 = vmatpush.bf16.xpose.msra.mxu0 0
    %7668 = vmatpush.bf16.xpose.msra.mxu0 0
    %7669 = vmatpush.bf16.xpose.msra.mxu0 0
    %7670 = vmatpush.bf16.xpose.msra.mxu0 0
    %7671 = vmatpush.bf16.xpose.msra.mxu0 0
    %7672 = vmatpush.bf16.xpose.msra.mxu0 0
    %7673 = vmatpush.bf16.xpose.msra.mxu0 0
    %7674 = vmatpush.bf16.xpose.msra.mxu0 %v7665
    %7675 = vmatmul.bf16.gmra.mxu0 %v7662
    %v7676 = vpop.f32.mrf.mxu0
    %v7677 = vadd.f32 0.0, %v7676
    %v7678 = vpop.f32.mrf.mxu0
    %7679 = vdwg.mxu0
    %7680 = vrot.lane.b32.xlu0 %v6024, 104
    %v7681 = vpop.permute.xlu0 %7680
    %7682 = vrot.lane.b32.xlu0 %v6024, 72
    %v7683 = vpop.permute.xlu0 %7682
    %v7685 = vsel %vm364, %v7681, 0
    %v7688 = vsel %vm364, %v7683, 0
    %7690 = vmatpush.bf16.xpose.msra.mxu0 0
    %7691 = vmatpush.bf16.xpose.msra.mxu0 0
    %7692 = vmatpush.bf16.xpose.msra.mxu0 0
    %7693 = vmatpush.bf16.xpose.msra.mxu0 0
    %7694 = vmatpush.bf16.xpose.msra.mxu0 0
    %7695 = vmatpush.bf16.xpose.msra.mxu0 0
    %7696 = vmatpush.bf16.xpose.msra.mxu0 0
    %7697 = vmatpush.bf16.xpose.msra.mxu0 %v7688
    %7698 = vmatmul.bf16.gmra.mxu0 %v7685
    %v7699 = vpop.f32.mrf.mxu0
    %v7700 = vadd.f32 0.0, %v7699
    %v7701 = vpop.f32.mrf.mxu0
    %7702 = vdwg.mxu0
    %7703 = vrot.lane.b32.xlu0 %v6048, 104
    %v7704 = vpop.permute.xlu0 %7703
    %7705 = vrot.lane.b32.xlu0 %v6048, 72
    %v7706 = vpop.permute.xlu0 %7705
    %v7708 = vsel %vm364, %v7704, 0
    %v7711 = vsel %vm364, %v7706, 0
    %7713 = vmatpush.bf16.xpose.msra.mxu0 0
    %7714 = vmatpush.bf16.xpose.msra.mxu0 0
    %7715 = vmatpush.bf16.xpose.msra.mxu0 0
    %7716 = vmatpush.bf16.xpose.msra.mxu0 0
    %7717 = vmatpush.bf16.xpose.msra.mxu0 0
    %7718 = vmatpush.bf16.xpose.msra.mxu0 0
    %7719 = vmatpush.bf16.xpose.msra.mxu0 0
    %7720 = vmatpush.bf16.xpose.msra.mxu0 %v7711
    %7721 = vmatmul.bf16.gmra.mxu0 %v7708
    %v7722 = vpop.f32.mrf.mxu0
    %v7723 = vadd.f32 0.0, %v7722
    %v7724 = vpop.f32.mrf.mxu0
    %7725 = vdwg.mxu0
    %v7726 = vsel %vm364, %v7562, -inf
    %7727 = vmax.xlane.f32.xlu0 %v7726
    %v7728 = vpop.xlane.xlu0 %7727
    %v7729 = vsel %vm364, %v7585, -inf
    %7730 = vmax.xlane.f32.xlu0 %v7729
    %v7731 = vpop.xlane.xlu0 %7730
    %v7732 = vsel %vm364, %v7608, -inf
    %7733 = vmax.xlane.f32.xlu0 %v7732
    %v7734 = vpop.xlane.xlu0 %7733
    %v7735 = vsel %vm364, %v7631, -inf
    %7736 = vmax.xlane.f32.xlu0 %v7735
    %v7737 = vpop.xlane.xlu0 %7736
    %v7738 = vsel %vm364, %v7654, -inf
    %7739 = vmax.xlane.f32.xlu0 %v7738
    %v7740 = vpop.xlane.xlu0 %7739
    %v7741 = vsel %vm364, %v7677, -inf
    %7742 = vmax.xlane.f32.xlu0 %v7741
    %v7743 = vpop.xlane.xlu0 %7742
    %v7744 = vsel %vm364, %v7700, -inf
    %7745 = vmax.xlane.f32.xlu0 %v7744
    %v7746 = vpop.xlane.xlu0 %7745
    %v7747 = vsel %vm364, %v7723, -inf
    %7748 = vmax.xlane.f32.xlu0 %v7747
    %v7749 = vpop.xlane.xlu0 %7748
    %v7750 = vsub.f32 %v7562, %v7728
    %v7751 = vsub.f32 %v7585, %v7731
    %v7752 = vsub.f32 %v7608, %v7734
    %v7753 = vsub.f32 %v7631, %v7737
    %v7754 = vsub.f32 %v7654, %v7740
    %v7755 = vsub.f32 %v7677, %v7743
    %v7756 = vsub.f32 %v7700, %v7746
    %v7757 = vsub.f32 %v7723, %v7749
    %v7758 = vmul.f32 %v7750, 1.442695
    %v7759 = vpow.pop %v7758
    %v7760 = vmul.f32 %v7751, 1.442695
    %v7761 = vpow.pop %v7760
    %v7762 = vmul.f32 %v7752, 1.442695
    %v7763 = vpow.pop %v7762
    %v7764 = vmul.f32 %v7753, 1.442695
    %v7765 = vpow.pop %v7764
    %v7766 = vmul.f32 %v7754, 1.442695
    %v7767 = vpow.pop %v7766
    %v7768 = vmul.f32 %v7755, 1.442695
    %v7769 = vpow.pop %v7768
    %v7770 = vmul.f32 %v7756, 1.442695
    %v7771 = vpow.pop %v7770
    %v7772 = vmul.f32 %v7757, 1.442695
    %v7773 = vpow.pop %v7772
    %v7774 = vsel %vm364, %v7759, 0.0
    %7775 = vadd.xlane.f32.xlu0 %v7774
    %v7776 = vpop.xlane.xlu0 %7775
    %v7777 = vsel %vm364, %v7761, 0.0
    %7778 = vadd.xlane.f32.xlu0 %v7777
    %v7779 = vpop.xlane.xlu0 %7778
    %v7780 = vsel %vm364, %v7763, 0.0
    %7781 = vadd.xlane.f32.xlu0 %v7780
    %v7782 = vpop.xlane.xlu0 %7781
    %v7783 = vsel %vm364, %v7765, 0.0
    %7784 = vadd.xlane.f32.xlu0 %v7783
    %v7785 = vpop.xlane.xlu0 %7784
    %v7786 = vsel %vm364, %v7767, 0.0
    %7787 = vadd.xlane.f32.xlu0 %v7786
    %v7788 = vpop.xlane.xlu0 %7787
    %v7789 = vsel %vm364, %v7769, 0.0
    %7790 = vadd.xlane.f32.xlu0 %v7789
    %v7791 = vpop.xlane.xlu0 %7790
    %v7792 = vsel %vm364, %v7771, 0.0
    %7793 = vadd.xlane.f32.xlu0 %v7792
    %v7794 = vpop.xlane.xlu0 %7793
    %v7795 = vsel %vm364, %v7773, 0.0
    %7796 = vadd.xlane.f32.xlu0 %v7795
    %v7797 = vpop.xlane.xlu0 %7796
    %v7798 = vrcp.pop %v7776
    %v7799 = vmul.f32 %v7776, %v7798
    %v7800 = vsub.f32 1.0, %v7799
    %v7801 = vmul.f32 %v7798, %v7800
    %v7802 = vadd.f32 %v7798, %v7801
    %vm7803 = vweird.f32 %v7776
    %vm7804 = vweird.f32 %v7798
    %vm7805 = vmor %vm7803, %vm7804
    %v7806 = vsel %vm7805, %v7798, %v7802
    %v7807 = vand.u32 2147483647, %v7776
    %vm7808 = vcmp.eq.f32.partialorder %v7807, 8.507059e+37
    %v7809 = vand.u32 %v7776, 2147483648
    %v7810 = vor.u32 1.1754944e-38, %v7809
    %v7811 = vsel %vm7808, %v7810, %v7806
    %v7812 = vmul.f32 %v7759, %v7811
    %v7813 = vrcp.pop %v7779
    %v7814 = vmul.f32 %v7779, %v7813
    %v7815 = vsub.f32 1.0, %v7814
    %v7816 = vmul.f32 %v7813, %v7815
    %v7817 = vadd.f32 %v7813, %v7816
    %vm7818 = vweird.f32 %v7779
    %vm7819 = vweird.f32 %v7813
    %vm7820 = vmor %vm7818, %vm7819
    %v7821 = vsel %vm7820, %v7813, %v7817
    %v7822 = vand.u32 2147483647, %v7779
    %vm7823 = vcmp.eq.f32.partialorder %v7822, 8.507059e+37
    %v7824 = vand.u32 %v7779, 2147483648
    %v7825 = vor.u32 1.1754944e-38, %v7824
    %v7826 = vsel %vm7823, %v7825, %v7821
    %v7827 = vmul.f32 %v7761, %v7826
    %v7828 = vrcp.pop %v7782
    %v7829 = vmul.f32 %v7782, %v7828
    %v7830 = vsub.f32 1.0, %v7829
    %v7831 = vmul.f32 %v7828, %v7830
    %v7832 = vadd.f32 %v7828, %v7831
    %vm7833 = vweird.f32 %v7782
    %vm7834 = vweird.f32 %v7828
    %vm7835 = vmor %vm7833, %vm7834
    %v7836 = vsel %vm7835, %v7828, %v7832
    %v7837 = vand.u32 2147483647, %v7782
    %vm7838 = vcmp.eq.f32.partialorder %v7837, 8.507059e+37
    %v7839 = vand.u32 %v7782, 2147483648
    %v7840 = vor.u32 1.1754944e-38, %v7839
    %v7841 = vsel %vm7838, %v7840, %v7836
    %v7842 = vmul.f32 %v7763, %v7841
    %v7843 = vrcp.pop %v7785
    %v7844 = vmul.f32 %v7785, %v7843
    %v7845 = vsub.f32 1.0, %v7844
    %v7846 = vmul.f32 %v7843, %v7845
    %v7847 = vadd.f32 %v7843, %v7846
    %vm7848 = vweird.f32 %v7785
    %vm7849 = vweird.f32 %v7843
    %vm7850 = vmor %vm7848, %vm7849
    %v7851 = vsel %vm7850, %v7843, %v7847
    %v7852 = vand.u32 2147483647, %v7785
    %vm7853 = vcmp.eq.f32.partialorder %v7852, 8.507059e+37
    %v7854 = vand.u32 %v7785, 2147483648
    %v7855 = vor.u32 1.1754944e-38, %v7854
    %v7856 = vsel %vm7853, %v7855, %v7851
    %v7857 = vmul.f32 %v7765, %v7856
    %v7858 = vrcp.pop %v7788
    %v7859 = vmul.f32 %v7788, %v7858
    %v7860 = vsub.f32 1.0, %v7859
    %v7861 = vmul.f32 %v7858, %v7860
    %v7862 = vadd.f32 %v7858, %v7861
    %vm7863 = vweird.f32 %v7788
    %vm7864 = vweird.f32 %v7858
    %vm7865 = vmor %vm7863, %vm7864
    %v7866 = vsel %vm7865, %v7858, %v7862
    %v7867 = vand.u32 2147483647, %v7788
    %vm7868 = vcmp.eq.f32.partialorder %v7867, 8.507059e+37
    %v7869 = vand.u32 %v7788, 2147483648
    %v7870 = vor.u32 1.1754944e-38, %v7869
    %v7871 = vsel %vm7868, %v7870, %v7866
    %v7872 = vmul.f32 %v7767, %v7871
    %v7873 = vrcp.pop %v7791
    %v7874 = vmul.f32 %v7791, %v7873
    %v7875 = vsub.f32 1.0, %v7874
    %v7876 = vmul.f32 %v7873, %v7875
    %v7877 = vadd.f32 %v7873, %v7876
    %vm7878 = vweird.f32 %v7791
    %vm7879 = vweird.f32 %v7873
    %vm7880 = vmor %vm7878, %vm7879
    %v7881 = vsel %vm7880, %v7873, %v7877
    %v7882 = vand.u32 2147483647, %v7791
    %vm7883 = vcmp.eq.f32.partialorder %v7882, 8.507059e+37
    %v7884 = vand.u32 %v7791, 2147483648
    %v7885 = vor.u32 1.1754944e-38, %v7884
    %v7886 = vsel %vm7883, %v7885, %v7881
    %v7887 = vmul.f32 %v7769, %v7886
    %v7888 = vrcp.pop %v7794
    %v7889 = vmul.f32 %v7794, %v7888
    %v7890 = vsub.f32 1.0, %v7889
    %v7891 = vmul.f32 %v7888, %v7890
    %v7892 = vadd.f32 %v7888, %v7891
    %vm7893 = vweird.f32 %v7794
    %vm7894 = vweird.f32 %v7888
    %vm7895 = vmor %vm7893, %vm7894
    %v7896 = vsel %vm7895, %v7888, %v7892
    %v7897 = vand.u32 2147483647, %v7794
    %vm7898 = vcmp.eq.f32.partialorder %v7897, 8.507059e+37
    %v7899 = vand.u32 %v7794, 2147483648
    %v7900 = vor.u32 1.1754944e-38, %v7899
    %v7901 = vsel %vm7898, %v7900, %v7896
    %v7902 = vmul.f32 %v7771, %v7901
    %v7903 = vrcp.pop %v7797
    %v7904 = vmul.f32 %v7797, %v7903
    %v7905 = vsub.f32 1.0, %v7904
    %v7906 = vmul.f32 %v7903, %v7905
    %v7907 = vadd.f32 %v7903, %v7906
    %vm7908 = vweird.f32 %v7797
    %vm7909 = vweird.f32 %v7903
    %vm7910 = vmor %vm7908, %vm7909
    %v7911 = vsel %vm7910, %v7903, %v7907
    %v7912 = vand.u32 2147483647, %v7797
    %vm7913 = vcmp.eq.f32.partialorder %v7912, 8.507059e+37
    %v7914 = vand.u32 %v7797, 2147483648
    %v7915 = vor.u32 1.1754944e-38, %v7914
    %v7916 = vsel %vm7913, %v7915, %v7911
    %v7917 = vmul.f32 %v7773, %v7916
    %v7918 = vpack.c.bf16 %v7812, %v7812
    %v7919 = vpack.c.bf16 %v7827, %v7827
    %v7920 = vpack.c.bf16 %v7842, %v7842
    %v7921 = vpack.c.bf16 %v7857, %v7857
    %v7922 = vpack.c.bf16 %v7872, %v7872
    %v7923 = vpack.c.bf16 %v7887, %v7887
    %v7924 = vpack.c.bf16 %v7902, %v7902
    %v7925 = vpack.c.bf16 %v7917, %v7917
    %7926 = vrot.lane.b32.xlu0 %v5880, 40
    %v7927 = vpop.permute.xlu0 %7926
    %v7929 = vsel %vm364, %v7918, 0
    %v7932 = vsel %vm757, %v7927, 0
    %7934 = vmatpush.bf16.msra.mxu0 0
    %7935 = vmatpush.bf16.msra.mxu0 0
    %7936 = vmatpush.bf16.msra.mxu0 0
    %7937 = vmatpush.bf16.msra.mxu0 0
    %7938 = vmatpush.bf16.msra.mxu0 0
    %7939 = vmatpush.bf16.msra.mxu0 0
    %7940 = vmatpush.bf16.msra.mxu0 0
    %7941 = vmatpush.bf16.msra.mxu0 %v7932
    %7942 = vmatmul.bf16.gmra.mxu0 %v7929
    %v7943 = vpop.f32.mrf.mxu0
    %v7944 = vadd.f32 0.0, %v7943
    %v7945 = vpop.f32.mrf.mxu0
    %7946 = vdwg.mxu0
    %7947 = vrot.lane.b32.xlu0 %v5904, 40
    %v7948 = vpop.permute.xlu0 %7947
    %v7950 = vsel %vm364, %v7919, 0
    %v7953 = vsel %vm757, %v7948, 0
    %7955 = vmatpush.bf16.msra.mxu0 0
    %7956 = vmatpush.bf16.msra.mxu0 0
    %7957 = vmatpush.bf16.msra.mxu0 0
    %7958 = vmatpush.bf16.msra.mxu0 0
    %7959 = vmatpush.bf16.msra.mxu0 0
    %7960 = vmatpush.bf16.msra.mxu0 0
    %7961 = vmatpush.bf16.msra.mxu0 0
    %7962 = vmatpush.bf16.msra.mxu0 %v7953
    %7963 = vmatmul.bf16.gmra.mxu0 %v7950
    %v7964 = vpop.f32.mrf.mxu0
    %v7965 = vadd.f32 0.0, %v7964
    %v7966 = vpop.f32.mrf.mxu0
    %7967 = vdwg.mxu0
    %7968 = vrot.lane.b32.xlu0 %v5928, 40
    %v7969 = vpop.permute.xlu0 %7968
    %v7971 = vsel %vm364, %v7920, 0
    %v7974 = vsel %vm757, %v7969, 0
    %7976 = vmatpush.bf16.msra.mxu0 0
    %7977 = vmatpush.bf16.msra.mxu0 0
    %7978 = vmatpush.bf16.msra.mxu0 0
    %7979 = vmatpush.bf16.msra.mxu0 0
    %7980 = vmatpush.bf16.msra.mxu0 0
    %7981 = vmatpush.bf16.msra.mxu0 0
    %7982 = vmatpush.bf16.msra.mxu0 0
    %7983 = vmatpush.bf16.msra.mxu0 %v7974
    %7984 = vmatmul.bf16.gmra.mxu0 %v7971
    %v7985 = vpop.f32.mrf.mxu0
    %v7986 = vadd.f32 0.0, %v7985
    %v7987 = vpop.f32.mrf.mxu0
    %7988 = vdwg.mxu0
    %7989 = vrot.lane.b32.xlu0 %v5952, 40
    %v7990 = vpop.permute.xlu0 %7989
    %v7992 = vsel %vm364, %v7921, 0
    %v7995 = vsel %vm757, %v7990, 0
    %7997 = vmatpush.bf16.msra.mxu0 0
    %7998 = vmatpush.bf16.msra.mxu0 0
    %7999 = vmatpush.bf16.msra.mxu0 0
    %8000 = vmatpush.bf16.msra.mxu0 0
    %8001 = vmatpush.bf16.msra.mxu0 0
    %8002 = vmatpush.bf16.msra.mxu0 0
    %8003 = vmatpush.bf16.msra.mxu0 0
    %8004 = vmatpush.bf16.msra.mxu0 %v7995
    %8005 = vmatmul.bf16.gmra.mxu0 %v7992
    %v8006 = vpop.f32.mrf.mxu0
    %v8007 = vadd.f32 0.0, %v8006
    %v8008 = vpop.f32.mrf.mxu0
    %8009 = vdwg.mxu0
    %8010 = vrot.lane.b32.xlu0 %v5976, 40
    %v8011 = vpop.permute.xlu0 %8010
    %v8013 = vsel %vm364, %v7922, 0
    %v8016 = vsel %vm757, %v8011, 0
    %8018 = vmatpush.bf16.msra.mxu0 0
    %8019 = vmatpush.bf16.msra.mxu0 0
    %8020 = vmatpush.bf16.msra.mxu0 0
    %8021 = vmatpush.bf16.msra.mxu0 0
    %8022 = vmatpush.bf16.msra.mxu0 0
    %8023 = vmatpush.bf16.msra.mxu0 0
    %8024 = vmatpush.bf16.msra.mxu0 0
    %8025 = vmatpush.bf16.msra.mxu0 %v8016
    %8026 = vmatmul.bf16.gmra.mxu0 %v8013
    %v8027 = vpop.f32.mrf.mxu0
    %v8028 = vadd.f32 0.0, %v8027
    %v8029 = vpop.f32.mrf.mxu0
    %8030 = vdwg.mxu0
    %8031 = vrot.lane.b32.xlu0 %v6000, 40
    %v8032 = vpop.permute.xlu0 %8031
    %v8034 = vsel %vm364, %v7923, 0
    %v8037 = vsel %vm757, %v8032, 0
    %8039 = vmatpush.bf16.msra.mxu0 0
    %8040 = vmatpush.bf16.msra.mxu0 0
    %8041 = vmatpush.bf16.msra.mxu0 0
    %8042 = vmatpush.bf16.msra.mxu0 0
    %8043 = vmatpush.bf16.msra.mxu0 0
    %8044 = vmatpush.bf16.msra.mxu0 0
    %8045 = vmatpush.bf16.msra.mxu0 0
    %8046 = vmatpush.bf16.msra.mxu0 %v8037
    %8047 = vmatmul.bf16.gmra.mxu0 %v8034
    %v8048 = vpop.f32.mrf.mxu0
    %v8049 = vadd.f32 0.0, %v8048
    %v8050 = vpop.f32.mrf.mxu0
    %8051 = vdwg.mxu0
    %8052 = vrot.lane.b32.xlu0 %v6024, 40
    %v8053 = vpop.permute.xlu0 %8052
    %v8055 = vsel %vm364, %v7924, 0
    %v8058 = vsel %vm757, %v8053, 0
    %8060 = vmatpush.bf16.msra.mxu0 0
    %8061 = vmatpush.bf16.msra.mxu0 0
    %8062 = vmatpush.bf16.msra.mxu0 0
    %8063 = vmatpush.bf16.msra.mxu0 0
    %8064 = vmatpush.bf16.msra.mxu0 0
    %8065 = vmatpush.bf16.msra.mxu0 0
    %8066 = vmatpush.bf16.msra.mxu0 0
    %8067 = vmatpush.bf16.msra.mxu0 %v8058
    %8068 = vmatmul.bf16.gmra.mxu0 %v8055
    %v8069 = vpop.f32.mrf.mxu0
    %v8070 = vadd.f32 0.0, %v8069
    %v8071 = vpop.f32.mrf.mxu0
    %8072 = vdwg.mxu0
    %8073 = vrot.lane.b32.xlu0 %v6048, 40
    %v8074 = vpop.permute.xlu0 %8073
    %v8076 = vsel %vm364, %v7925, 0
    %v8079 = vsel %vm757, %v8074, 0
    %8081 = vmatpush.bf16.msra.mxu0 0
    %8082 = vmatpush.bf16.msra.mxu0 0
    %8083 = vmatpush.bf16.msra.mxu0 0
    %8084 = vmatpush.bf16.msra.mxu0 0
    %8085 = vmatpush.bf16.msra.mxu0 0
    %8086 = vmatpush.bf16.msra.mxu0 0
    %8087 = vmatpush.bf16.msra.mxu0 0
    %8088 = vmatpush.bf16.msra.mxu0 %v8079
    %8089 = vmatmul.bf16.gmra.mxu0 %v8076
    %v8090 = vpop.f32.mrf.mxu0
    %v8091 = vadd.f32 0.0, %v8090
    %v8092 = vpop.f32.mrf.mxu0
    %8093 = vdwg.mxu0
    %8102 = vrot.lane.b32.xlu0 %v6840, 8
    %v8103 = vpop.permute.xlu0 %8102
    %8104 = vrot.lane.b32.xlu0 %v6861, 8
    %v8105 = vpop.permute.xlu0 %8104
    %8106 = vrot.lane.b32.xlu0 %v6882, 8
    %v8107 = vpop.permute.xlu0 %8106
    %8108 = vrot.lane.b32.xlu0 %v6903, 8
    %v8109 = vpop.permute.xlu0 %8108
    %8110 = vrot.lane.b32.xlu0 %v6924, 8
    %v8111 = vpop.permute.xlu0 %8110
    %8112 = vrot.lane.b32.xlu0 %v6945, 8
    %v8113 = vpop.permute.xlu0 %8112
    %8114 = vrot.lane.b32.xlu0 %v6966, 8
    %v8115 = vpop.permute.xlu0 %8114
    %8116 = vrot.lane.b32.xlu0 %v6987, 8
    %v8117 = vpop.permute.xlu0 %8116
    %8134 = vrot.lane.b32.xlu0 %v7392, 16
    %v8135 = vpop.permute.xlu0 %8134
    %8136 = vrot.lane.b32.xlu0 %v7413, 16
    %v8137 = vpop.permute.xlu0 %8136
    %8138 = vrot.lane.b32.xlu0 %v7434, 16
    %v8139 = vpop.permute.xlu0 %8138
    %8140 = vrot.lane.b32.xlu0 %v7455, 16
    %v8141 = vpop.permute.xlu0 %8140
    %8142 = vrot.lane.b32.xlu0 %v7476, 16
    %v8143 = vpop.permute.xlu0 %8142
    %8144 = vrot.lane.b32.xlu0 %v7497, 16
    %v8145 = vpop.permute.xlu0 %8144
    %8146 = vrot.lane.b32.xlu0 %v7518, 16
    %v8147 = vpop.permute.xlu0 %8146
    %8148 = vrot.lane.b32.xlu0 %v7539, 16
    %v8149 = vpop.permute.xlu0 %8148
    %8166 = vrot.lane.b32.xlu0 %v7944, 24
    %v8167 = vpop.permute.xlu0 %8166
    %8168 = vrot.lane.b32.xlu0 %v7965, 24
    %v8169 = vpop.permute.xlu0 %8168
    %8170 = vrot.lane.b32.xlu0 %v7986, 24
    %v8171 = vpop.permute.xlu0 %8170
    %8172 = vrot.lane.b32.xlu0 %v8007, 24
    %v8173 = vpop.permute.xlu0 %8172
    %8174 = vrot.lane.b32.xlu0 %v8028, 24
    %v8175 = vpop.permute.xlu0 %8174
    %8176 = vrot.lane.b32.xlu0 %v8049, 24
    %v8177 = vpop.permute.xlu0 %8176
    %8178 = vrot.lane.b32.xlu0 %v8070, 24
    %v8179 = vpop.permute.xlu0 %8178
    %8180 = vrot.lane.b32.xlu0 %v8091, 24
    %v8181 = vpop.permute.xlu0 %8180
    %v8190 = vsel %vm364, %v6288, %v8103
    %v8191 = vsel %vm364, %v6309, %v8105
    %v8192 = vsel %vm364, %v6330, %v8107
    %v8193 = vsel %vm364, %v6351, %v8109
    %v8194 = vsel %vm364, %v6372, %v8111
    %v8195 = vsel %vm364, %v6393, %v8113
    %v8196 = vsel %vm364, %v6414, %v8115
    %v8197 = vsel %vm364, %v6435, %v8117
    %v8198 = vsel %vm2681, %v8190, %v8135
    %v8199 = vsel %vm2681, %v8191, %v8137
    %v8200 = vsel %vm2681, %v8192, %v8139
    %v8201 = vsel %vm2681, %v8193, %v8141
    %v8202 = vsel %vm2681, %v8194, %v8143
    %v8203 = vsel %vm2681, %v8195, %v8145
    %v8204 = vsel %vm2681, %v8196, %v8147
    %v8205 = vsel %vm2681, %v8197, %v8149
    %v8206 = vsel %vm2690, %v8198, %v8167
    %v8207 = vsel %vm2690, %v8199, %v8169
    %v8208 = vsel %vm2690, %v8200, %v8171
    %v8209 = vsel %vm2690, %v8201, %v8173
    %v8210 = vsel %vm2690, %v8202, %v8175
    %v8211 = vsel %vm2690, %v8203, %v8177
    %v8212 = vsel %vm2690, %v8204, %v8179
    %v8213 = vsel %vm2690, %v8205, %v8181
    %v8214 = vpack.c.bf16 %v8207, %v8206
    %v8215 = vpack.c.bf16 %v8209, %v8208
    %v8216 = vpack.c.bf16 %v8211, %v8210
    %v8217 = vpack.c.bf16 %v8213, %v8212
    %s8218 = scalar_lea.vmem %s7, 16
    %v8219 = vld [vmem:[%s8218] sm:$0xf]
    %v8220 = vld [vmem:[%s8218 + $0x4] sm:$0xf]
    %v8221 = vld [vmem:[%s8218 + $0x8] sm:$0xf]
    %v8222 = vld [vmem:[%s8218 + $0xc] sm:$0xf]
    %s8223 = scalar_lea.vmem %s8, 1
    %v8224 = vld [vmem:[%s8223] sm:$0x1]
    %v8226 = vperm.slane %v8224, 0
    %v8232 = vunpack.c.l.b16 %v8219
    %v8233 = vunpack.c.l.b16 %v8220
    %v8234 = vunpack.c.l.b16 %v8221
    %v8235 = vunpack.c.l.b16 %v8222
    %v8236 = vpack.c.b16 %v8233, %v8232
    %v8237 = vpack.c.b16 %v8235, %v8234
    %v8241 = vsel %vm309, %v8214, 0
    %v8244 = vsel %vm309, %v8215, 0
    %v8247 = vsel %vm309, %v8216, 0
    %v8250 = vsel %vm309, %v8217, 0
    %8252 = vmatpush.bf16.msra.mxu0 0
    %8253 = vmatpush.bf16.msra.mxu0 0
    %8254 = vmatpush.bf16.msra.mxu0 0
    %8255 = vmatpush.bf16.msra.mxu0 0
    %8256 = vmatpush.bf16.msra.mxu0 0
    %8257 = vmatpush.bf16.msra.mxu0 0
    %8258 = vmatpush.bf16.msra.mxu0 %v8237
    %8259 = vmatpush.bf16.msra.mxu0 %v8236
    %8260 = vmatmul.bf16.gmra.mxu0 %v8241
    %v8261 = vpop.f32.mrf.mxu0
    %v8262 = vadd.f32 %v8226, %v8261
    %v8263 = vpop.f32.mrf.mxu0
    %v8264 = vadd.f32 %v8226, %v8263
    %8265 = vmatmul.bf16.gmra.mxu0 %v8244
    %v8266 = vpop.f32.mrf.mxu0
    %v8267 = vadd.f32 %v8226, %v8266
    %v8268 = vpop.f32.mrf.mxu0
    %v8269 = vadd.f32 %v8226, %v8268
    %8270 = vmatmul.bf16.gmra.mxu0 %v8247
    %v8271 = vpop.f32.mrf.mxu0
    %v8272 = vadd.f32 %v8226, %v8271
    %v8273 = vpop.f32.mrf.mxu0
    %v8274 = vadd.f32 %v8226, %v8273
    %8275 = vmatmul.bf16.gmra.mxu0 %v8250
    %v8276 = vpop.f32.mrf.mxu0
    %v8277 = vadd.f32 %v8226, %v8276
    %v8278 = vpop.f32.mrf.mxu0
    %v8279 = vadd.f32 %v8226, %v8278
    %8280 = vdwg.mxu0
    %8289 = vrot.lane.b32.xlu0 %v8262, 32
    %v8290 = vpop.permute.xlu0 %8289
    %8291 = vrot.lane.b32.xlu0 %v8264, 32
    %v8292 = vpop.permute.xlu0 %8291
    %8293 = vrot.lane.b32.xlu0 %v8267, 32
    %v8294 = vpop.permute.xlu0 %8293
    %8295 = vrot.lane.b32.xlu0 %v8269, 32
    %v8296 = vpop.permute.xlu0 %8295
    %8297 = vrot.lane.b32.xlu0 %v8272, 32
    %v8298 = vpop.permute.xlu0 %8297
    %8299 = vrot.lane.b32.xlu0 %v8274, 32
    %v8300 = vpop.permute.xlu0 %8299
    %8301 = vrot.lane.b32.xlu0 %v8277, 32
    %v8302 = vpop.permute.xlu0 %8301
    %8303 = vrot.lane.b32.xlu0 %v8279, 32
    %v8304 = vpop.permute.xlu0 %8303
    %v8313 = vadd.f32 %v5783, %v8290
    %v8314 = vadd.f32 %v5784, %v8292
    %v8315 = vadd.f32 %v5785, %v8294
    %v8316 = vadd.f32 %v5786, %v8296
    %v8317 = vadd.f32 %v5787, %v8298
    %v8318 = vadd.f32 %v5788, %v8300
    %v8319 = vadd.f32 %v5789, %v8302
    %v8320 = vadd.f32 %v5790, %v8304
    %s8321 = scalar_lea.vmem %s9, 1
    %v8322 = vld [vmem:[%s8321] sm:$0x1]
    %s8323 = scalar_lea.vmem %s10, 1
    %v8324 = vld [vmem:[%s8323] sm:$0x1]
    %8333 = vrot.lane.b32.xlu0 %v8313, 96
    %v8334 = vpop.permute.xlu0 %8333
    %8335 = vrot.lane.b32.xlu0 %v8314, 96
    %v8336 = vpop.permute.xlu0 %8335
    %8337 = vrot.lane.b32.xlu0 %v8315, 96
    %v8338 = vpop.permute.xlu0 %8337
    %8339 = vrot.lane.b32.xlu0 %v8316, 96
    %v8340 = vpop.permute.xlu0 %8339
    %8341 = vrot.lane.b32.xlu0 %v8317, 96
    %v8342 = vpop.permute.xlu0 %8341
    %8343 = vrot.lane.b32.xlu0 %v8318, 96
    %v8344 = vpop.permute.xlu0 %8343
    %8345 = vrot.lane.b32.xlu0 %v8319, 96
    %v8346 = vpop.permute.xlu0 %8345
    %8347 = vrot.lane.b32.xlu0 %v8320, 96
    %v8348 = vpop.permute.xlu0 %8347
    %v8357 = vsel %vm309, %v8334, 0.0
    %8358 = vadd.xlane.f32.xlu0 %v8357
    %v8359 = vpop.xlane.xlu0 %8358
    %v8360 = vsel %vm309, %v8336, 0.0
    %8361 = vadd.xlane.f32.xlu0 %v8360
    %v8362 = vpop.xlane.xlu0 %8361
    %v8363 = vsel %vm309, %v8338, 0.0
    %8364 = vadd.xlane.f32.xlu0 %v8363
    %v8365 = vpop.xlane.xlu0 %8364
    %v8366 = vsel %vm309, %v8340, 0.0
    %8367 = vadd.xlane.f32.xlu0 %v8366
    %v8368 = vpop.xlane.xlu0 %8367
    %v8369 = vsel %vm309, %v8342, 0.0
    %8370 = vadd.xlane.f32.xlu0 %v8369
    %v8371 = vpop.xlane.xlu0 %8370
    %v8372 = vsel %vm309, %v8344, 0.0
    %8373 = vadd.xlane.f32.xlu0 %v8372
    %v8374 = vpop.xlane.xlu0 %8373
    %v8375 = vsel %vm309, %v8346, 0.0
    %8376 = vadd.xlane.f32.xlu0 %v8375
    %v8377 = vpop.xlane.xlu0 %8376
    %v8378 = vsel %vm309, %v8348, 0.0
    %8379 = vadd.xlane.f32.xlu0 %v8378
    %v8380 = vpop.xlane.xlu0 %8379
    %v8381 = vmul.f32 %v8359, %v2868
    %v8382 = vmul.f32 %v8362, %v2868
    %v8383 = vmul.f32 %v8365, %v2868
    %v8384 = vmul.f32 %v8368, %v2868
    %v8385 = vmul.f32 %v8371, %v2868
    %v8386 = vmul.f32 %v8374, %v2868
    %v8387 = vmul.f32 %v8377, %v2868
    %v8388 = vmul.f32 %v8380, %v2868
    %v8389 = vsub.f32 %v8313, %v8381
    %v8390 = vsub.f32 %v8314, %v8382
    %v8391 = vsub.f32 %v8315, %v8383
    %v8392 = vsub.f32 %v8316, %v8384
    %v8393 = vsub.f32 %v8317, %v8385
    %v8394 = vsub.f32 %v8318, %v8386
    %v8395 = vsub.f32 %v8319, %v8387
    %v8396 = vsub.f32 %v8320, %v8388
    %v8397 = vmul.f32 %v8389, %v8389
    %v8398 = vmul.f32 %v8390, %v8390
    %v8399 = vmul.f32 %v8391, %v8391
    %v8400 = vmul.f32 %v8392, %v8392
    %v8401 = vmul.f32 %v8393, %v8393
    %v8402 = vmul.f32 %v8394, %v8394
    %v8403 = vmul.f32 %v8395, %v8395
    %v8404 = vmul.f32 %v8396, %v8396
    %8413 = vrot.lane.b32.xlu0 %v8397, 96
    %v8414 = vpop.permute.xlu0 %8413
    %8415 = vrot.lane.b32.xlu0 %v8398, 96
    %v8416 = vpop.permute.xlu0 %8415
    %8417 = vrot.lane.b32.xlu0 %v8399, 96
    %v8418 = vpop.permute.xlu0 %8417
    %8419 = vrot.lane.b32.xlu0 %v8400, 96
    %v8420 = vpop.permute.xlu0 %8419
    %8421 = vrot.lane.b32.xlu0 %v8401, 96
    %v8422 = vpop.permute.xlu0 %8421
    %8423 = vrot.lane.b32.xlu0 %v8402, 96
    %v8424 = vpop.permute.xlu0 %8423
    %8425 = vrot.lane.b32.xlu0 %v8403, 96
    %v8426 = vpop.permute.xlu0 %8425
    %8427 = vrot.lane.b32.xlu0 %v8404, 96
    %v8428 = vpop.permute.xlu0 %8427
    %v8437 = vsel %vm309, %v8414, 0.0
    %8438 = vadd.xlane.f32.xlu0 %v8437
    %v8439 = vpop.xlane.xlu0 %8438
    %v8440 = vsel %vm309, %v8416, 0.0
    %8441 = vadd.xlane.f32.xlu0 %v8440
    %v8442 = vpop.xlane.xlu0 %8441
    %v8443 = vsel %vm309, %v8418, 0.0
    %8444 = vadd.xlane.f32.xlu0 %v8443
    %v8445 = vpop.xlane.xlu0 %8444
    %v8446 = vsel %vm309, %v8420, 0.0
    %8447 = vadd.xlane.f32.xlu0 %v8446
    %v8448 = vpop.xlane.xlu0 %8447
    %v8449 = vsel %vm309, %v8422, 0.0
    %8450 = vadd.xlane.f32.xlu0 %v8449
    %v8451 = vpop.xlane.xlu0 %8450
    %v8452 = vsel %vm309, %v8424, 0.0
    %8453 = vadd.xlane.f32.xlu0 %v8452
    %v8454 = vpop.xlane.xlu0 %8453
    %v8455 = vsel %vm309, %v8426, 0.0
    %8456 = vadd.xlane.f32.xlu0 %v8455
    %v8457 = vpop.xlane.xlu0 %8456
    %v8458 = vsel %vm309, %v8428, 0.0
    %8459 = vadd.xlane.f32.xlu0 %v8458
    %v8460 = vpop.xlane.xlu0 %8459
    %v8461 = vmul.f32 %v8439, %v2868
    %v8462 = vmul.f32 %v8442, %v2868
    %v8463 = vmul.f32 %v8445, %v2868
    %v8464 = vmul.f32 %v8448, %v2868
    %v8465 = vmul.f32 %v8451, %v2868
    %v8466 = vmul.f32 %v8454, %v2868
    %v8467 = vmul.f32 %v8457, %v2868
    %v8468 = vmul.f32 %v8460, %v2868
    %v8469 = vadd.f32 %v8461, 1e-05
    %v8470 = vadd.f32 %v8462, 1e-05
    %v8471 = vadd.f32 %v8463, 1e-05
    %v8472 = vadd.f32 %v8464, 1e-05
    %v8473 = vadd.f32 %v8465, 1e-05
    %v8474 = vadd.f32 %v8466, 1e-05
    %v8475 = vadd.f32 %v8467, 1e-05
    %v8476 = vadd.f32 %v8468, 1e-05
    %v8477 = vrsqrt.pop %v8469
    %v8478 = vmul.f32 %v8477, %v8469
    %v8479 = vmul.f32 %v8478, %v8477
    %v8480 = vmul.f32 0.5, %v8479
    %v8481 = vsub.f32 1.5, %v8480
    %v8482 = vmul.f32 %v8477, %v8481
    %vm8483 = vweird.f32 %v8469
    %vm8484 = vweird.f32 %v8477
    %vm8485 = vmor %vm8483, %vm8484
    %v8486 = vsel %vm8485, %v8477, %v8482
    %v8487 = vrsqrt.pop %v8470
    %v8488 = vmul.f32 %v8487, %v8470
    %v8489 = vmul.f32 %v8488, %v8487
    %v8490 = vmul.f32 0.5, %v8489
    %v8491 = vsub.f32 1.5, %v8490
    %v8492 = vmul.f32 %v8487, %v8491
    %vm8493 = vweird.f32 %v8470
    %vm8494 = vweird.f32 %v8487
    %vm8495 = vmor %vm8493, %vm8494
    %v8496 = vsel %vm8495, %v8487, %v8492
    %v8497 = vrsqrt.pop %v8471
    %v8498 = vmul.f32 %v8497, %v8471
    %v8499 = vmul.f32 %v8498, %v8497
    %v8500 = vmul.f32 0.5, %v8499
    %v8501 = vsub.f32 1.5, %v8500
    %v8502 = vmul.f32 %v8497, %v8501
    %vm8503 = vweird.f32 %v8471
    %vm8504 = vweird.f32 %v8497
    %vm8505 = vmor %vm8503, %vm8504
    %v8506 = vsel %vm8505, %v8497, %v8502
    %v8507 = vrsqrt.pop %v8472
    %v8508 = vmul.f32 %v8507, %v8472
    %v8509 = vmul.f32 %v8508, %v8507
    %v8510 = vmul.f32 0.5, %v8509
    %v8511 = vsub.f32 1.5, %v8510
    %v8512 = vmul.f32 %v8507, %v8511
    %vm8513 = vweird.f32 %v8472
    %vm8514 = vweird.f32 %v8507
    %vm8515 = vmor %vm8513, %vm8514
    %v8516 = vsel %vm8515, %v8507, %v8512
    %v8517 = vrsqrt.pop %v8473
    %v8518 = vmul.f32 %v8517, %v8473
    %v8519 = vmul.f32 %v8518, %v8517
    %v8520 = vmul.f32 0.5, %v8519
    %v8521 = vsub.f32 1.5, %v8520
    %v8522 = vmul.f32 %v8517, %v8521
    %vm8523 = vweird.f32 %v8473
    %vm8524 = vweird.f32 %v8517
    %vm8525 = vmor %vm8523, %vm8524
    %v8526 = vsel %vm8525, %v8517, %v8522
    %v8527 = vrsqrt.pop %v8474
    %v8528 = vmul.f32 %v8527, %v8474
    %v8529 = vmul.f32 %v8528, %v8527
    %v8530 = vmul.f32 0.5, %v8529
    %v8531 = vsub.f32 1.5, %v8530
    %v8532 = vmul.f32 %v8527, %v8531
    %vm8533 = vweird.f32 %v8474
    %vm8534 = vweird.f32 %v8527
    %vm8535 = vmor %vm8533, %vm8534
    %v8536 = vsel %vm8535, %v8527, %v8532
    %v8537 = vrsqrt.pop %v8475
    %v8538 = vmul.f32 %v8537, %v8475
    %v8539 = vmul.f32 %v8538, %v8537
    %v8540 = vmul.f32 0.5, %v8539
    %v8541 = vsub.f32 1.5, %v8540
    %v8542 = vmul.f32 %v8537, %v8541
    %vm8543 = vweird.f32 %v8475
    %vm8544 = vweird.f32 %v8537
    %vm8545 = vmor %vm8543, %vm8544
    %v8546 = vsel %vm8545, %v8537, %v8542
    %v8547 = vrsqrt.pop %v8476
    %v8548 = vmul.f32 %v8547, %v8476
    %v8549 = vmul.f32 %v8548, %v8547
    %v8550 = vmul.f32 0.5, %v8549
    %v8551 = vsub.f32 1.5, %v8550
    %v8552 = vmul.f32 %v8547, %v8551
    %vm8553 = vweird.f32 %v8476
    %vm8554 = vweird.f32 %v8547
    %vm8555 = vmor %vm8553, %vm8554
    %v8556 = vsel %vm8555, %v8547, %v8552
    %v8557 = vmul.f32 %v8389, %v8486
    %v8558 = vmul.f32 %v8390, %v8496
    %v8559 = vmul.f32 %v8391, %v8506
    %v8560 = vmul.f32 %v8392, %v8516
    %v8561 = vmul.f32 %v8393, %v8526
    %v8562 = vmul.f32 %v8394, %v8536
    %v8563 = vmul.f32 %v8395, %v8546
    %v8564 = vmul.f32 %v8396, %v8556
    %v8566 = vperm.slane %v8322, 0
    %8567 = vrot.lane.b32.xlu0 %v8566, 32
    %v8568 = vpop.permute.xlu0 %8567
    %v8570 = vmul.f32 %v8557, %v8568
    %v8571 = vmul.f32 %v8558, %v8568
    %v8572 = vmul.f32 %v8559, %v8568
    %v8573 = vmul.f32 %v8560, %v8568
    %v8574 = vmul.f32 %v8561, %v8568
    %v8575 = vmul.f32 %v8562, %v8568
    %v8576 = vmul.f32 %v8563, %v8568
    %v8577 = vmul.f32 %v8564, %v8568
    %v8579 = vperm.slane %v8324, 0
    %8580 = vrot.lane.b32.xlu0 %v8579, 32
    %v8581 = vpop.permute.xlu0 %8580
    %v8583 = vadd.f32 %v8570, %v8581
    %v8584 = vadd.f32 %v8571, %v8581
    %v8585 = vadd.f32 %v8572, %v8581
    %v8586 = vadd.f32 %v8573, %v8581
    %v8587 = vadd.f32 %v8574, %v8581
    %v8588 = vadd.f32 %v8575, %v8581
    %v8589 = vadd.f32 %v8576, %v8581
    %v8590 = vadd.f32 %v8577, %v8581
    %v8591 = vpack.c.bf16 %v8584, %v8583
    %v8592 = vpack.c.bf16 %v8586, %v8585
    %v8593 = vpack.c.bf16 %v8588, %v8587
    %v8594 = vpack.c.bf16 %v8590, %v8589
    %s8595 = scalar_lea.vmem %s11, 256
    %v8596 = vld [vmem:[%s8595] sm:$0xff]
    %v8597 = vld [vmem:[%s8595 + $0x8] sm:$0xff]
    %v8598 = vld [vmem:[%s8595 + $0x10] sm:$0xff]
    %v8599 = vld [vmem:[%s8595 + $0x18] sm:$0xff]
    %v8600 = vld [vmem:[%s8595 + $0x20] sm:$0xff]
    %v8601 = vld [vmem:[%s8595 + $0x28] sm:$0xff]
    %v8602 = vld [vmem:[%s8595 + $0x30] sm:$0xff]
    %v8603 = vld [vmem:[%s8595 + $0x38] sm:$0xff]
    %v8604 = vld [vmem:[%s8595 + $0x40] sm:$0xff]
    %v8605 = vld [vmem:[%s8595 + $0x48] sm:$0xff]
    %v8606 = vld [vmem:[%s8595 + $0x50] sm:$0xff]
    %v8607 = vld [vmem:[%s8595 + $0x58] sm:$0xff]
    %v8608 = vld [vmem:[%s8595 + $0x60] sm:$0xff]
    %v8609 = vld [vmem:[%s8595 + $0x68] sm:$0xff]
    %v8610 = vld [vmem:[%s8595 + $0x70] sm:$0xff]
    %v8611 = vld [vmem:[%s8595 + $0x78] sm:$0xff]
    %v8612 = vld [vmem:[%s8595 + $0x80] sm:$0xff]
    %v8613 = vld [vmem:[%s8595 + $0x88] sm:$0xff]
    %v8614 = vld [vmem:[%s8595 + $0x90] sm:$0xff]
    %v8615 = vld [vmem:[%s8595 + $0x98] sm:$0xff]
    %v8616 = vld [vmem:[%s8595 + $0xa0] sm:$0xff]
    %v8617 = vld [vmem:[%s8595 + $0xa8] sm:$0xff]
    %v8618 = vld [vmem:[%s8595 + $0xb0] sm:$0xff]
    %v8619 = vld [vmem:[%s8595 + $0xb8] sm:$0xff]
    %v8620 = vld [vmem:[%s8595 + $0xc0] sm:$0xff]
    %v8621 = vld [vmem:[%s8595 + $0xc8] sm:$0xff]
    %v8622 = vld [vmem:[%s8595 + $0xd0] sm:$0xff]
    %v8623 = vld [vmem:[%s8595 + $0xd8] sm:$0xff]
    %v8624 = vld [vmem:[%s8595 + $0xe0] sm:$0xff]
    %v8625 = vld [vmem:[%s8595 + $0xe8] sm:$0xff]
    %v8626 = vld [vmem:[%s8595 + $0xf0] sm:$0xff]
    %v8627 = vld [vmem:[%s8595 + $0xf8] sm:$0xff]
    %s8628 = scalar_lea.vmem %s12, 16
    %v8629 = vld [vmem:[%s8628] sm:$0xff]
    %v8630 = vld [vmem:[%s8628 + $0x8] sm:$0xff]
    %v8633 = vperm.slane %v8629, 0
    %v8634 = vperm.slane %v8629, 1
    %v8635 = vperm.slane %v8629, 2
    %v8636 = vperm.slane %v8629, 3
    %v8637 = vperm.slane %v8629, 4
    %v8638 = vperm.slane %v8629, 5
    %v8639 = vperm.slane %v8629, 6
    %v8640 = vperm.slane %v8629, 7
    %v8641 = vperm.slane %v8630, 0
    %v8642 = vperm.slane %v8630, 1
    %v8643 = vperm.slane %v8630, 2
    %v8644 = vperm.slane %v8630, 3
    %v8645 = vperm.slane %v8630, 4
    %v8646 = vperm.slane %v8630, 5
    %v8647 = vperm.slane %v8630, 6
    %v8648 = vperm.slane %v8630, 7
    %8669 = vrot.lane.b32.xlu0 %v8591, 96
    %v8670 = vpop.permute.xlu0 %8669
    %8671 = vrot.lane.b32.xlu0 %v8592, 96
    %v8672 = vpop.permute.xlu0 %8671
    %8673 = vrot.lane.b32.xlu0 %v8593, 96
    %v8674 = vpop.permute.xlu0 %8673
    %8675 = vrot.lane.b32.xlu0 %v8594, 96
    %v8676 = vpop.permute.xlu0 %8675
    %v8709 = vunpack.c.l.b16 %v8596
    %v8710 = vunpack.c.h.b16 %v8596
    %v8711 = vunpack.c.l.b16 %v8597
    %v8712 = vunpack.c.h.b16 %v8597
    %v8713 = vunpack.c.l.b16 %v8598
    %v8714 = vunpack.c.h.b16 %v8598
    %v8715 = vunpack.c.l.b16 %v8599
    %v8716 = vunpack.c.h.b16 %v8599
    %v8717 = vunpack.c.l.b16 %v8600
    %v8718 = vunpack.c.h.b16 %v8600
    %v8719 = vunpack.c.l.b16 %v8601
    %v8720 = vunpack.c.h.b16 %v8601
    %v8721 = vunpack.c.l.b16 %v8602
    %v8722 = vunpack.c.h.b16 %v8602
    %v8723 = vunpack.c.l.b16 %v8603
    %v8724 = vunpack.c.h.b16 %v8603
    %v8725 = vunpack.c.l.b16 %v8604
    %v8726 = vunpack.c.h.b16 %v8604
    %v8727 = vunpack.c.l.b16 %v8605
    %v8728 = vunpack.c.h.b16 %v8605
    %v8729 = vunpack.c.l.b16 %v8606
    %v8730 = vunpack.c.h.b16 %v8606
    %v8731 = vunpack.c.l.b16 %v8607
    %v8732 = vunpack.c.h.b16 %v8607
    %v8733 = vunpack.c.l.b16 %v8608
    %v8734 = vunpack.c.h.b16 %v8608
    %v8735 = vunpack.c.l.b16 %v8609
    %v8736 = vunpack.c.h.b16 %v8609
    %v8737 = vunpack.c.l.b16 %v8610
    %v8738 = vunpack.c.h.b16 %v8610
    %v8739 = vunpack.c.l.b16 %v8611
    %v8740 = vunpack.c.h.b16 %v8611
    %v8741 = vunpack.c.l.b16 %v8612
    %v8742 = vunpack.c.h.b16 %v8612
    %v8743 = vunpack.c.l.b16 %v8613
    %v8744 = vunpack.c.h.b16 %v8613
    %v8745 = vunpack.c.l.b16 %v8614
    %v8746 = vunpack.c.h.b16 %v8614
    %v8747 = vunpack.c.l.b16 %v8615
    %v8748 = vunpack.c.h.b16 %v8615
    %v8749 = vunpack.c.l.b16 %v8616
    %v8750 = vunpack.c.h.b16 %v8616
    %v8751 = vunpack.c.l.b16 %v8617
    %v8752 = vunpack.c.h.b16 %v8617
    %v8753 = vunpack.c.l.b16 %v8618
    %v8754 = vunpack.c.h.b16 %v8618
    %v8755 = vunpack.c.l.b16 %v8619
    %v8756 = vunpack.c.h.b16 %v8619
    %v8757 = vunpack.c.l.b16 %v8620
    %v8758 = vunpack.c.h.b16 %v8620
    %v8759 = vunpack.c.l.b16 %v8621
    %v8760 = vunpack.c.h.b16 %v8621
    %v8761 = vunpack.c.l.b16 %v8622
    %v8762 = vunpack.c.h.b16 %v8622
    %v8763 = vunpack.c.l.b16 %v8623
    %v8764 = vunpack.c.h.b16 %v8623
    %v8765 = vunpack.c.l.b16 %v8624
    %v8766 = vunpack.c.h.b16 %v8624
    %v8767 = vunpack.c.l.b16 %v8625
    %v8768 = vunpack.c.h.b16 %v8625
    %v8769 = vunpack.c.l.b16 %v8626
    %v8770 = vunpack.c.h.b16 %v8626
    %v8771 = vunpack.c.l.b16 %v8627
    %v8772 = vunpack.c.h.b16 %v8627
    %v8773 = vpack.c.b16 %v8725, %v8709
    %v8774 = vpack.c.b16 %v8726, %v8710
    %v8775 = vpack.c.b16 %v8727, %v8711
    %v8776 = vpack.c.b16 %v8728, %v8712
    %v8777 = vpack.c.b16 %v8729, %v8713
    %v8778 = vpack.c.b16 %v8730, %v8714
    %v8779 = vpack.c.b16 %v8731, %v8715
    %v8780 = vpack.c.b16 %v8732, %v8716
    %v8781 = vpack.c.b16 %v8733, %v8717
    %v8782 = vpack.c.b16 %v8734, %v8718
    %v8783 = vpack.c.b16 %v8735, %v8719
    %v8784 = vpack.c.b16 %v8736, %v8720
    %v8785 = vpack.c.b16 %v8737, %v8721
    %v8786 = vpack.c.b16 %v8738, %v8722
    %v8787 = vpack.c.b16 %v8739, %v8723
    %v8788 = vpack.c.b16 %v8740, %v8724
    %v8789 = vpack.c.b16 %v8757, %v8741
    %v8790 = vpack.c.b16 %v8758, %v8742
    %v8791 = vpack.c.b16 %v8759, %v8743
    %v8792 = vpack.c.b16 %v8760, %v8744
    %v8793 = vpack.c.b16 %v8761, %v8745
    %v8794 = vpack.c.b16 %v8762, %v8746
    %v8795 = vpack.c.b16 %v8763, %v8747
    %v8796 = vpack.c.b16 %v8764, %v8748
    %v8797 = vpack.c.b16 %v8765, %v8749
    %v8798 = vpack.c.b16 %v8766, %v8750
    %v8799 = vpack.c.b16 %v8767, %v8751
    %v8800 = vpack.c.b16 %v8768, %v8752
    %v8801 = vpack.c.b16 %v8769, %v8753
    %v8802 = vpack.c.b16 %v8770, %v8754
    %v8803 = vpack.c.b16 %v8771, %v8755
    %v8804 = vpack.c.b16 %v8772, %v8756
    %v8838 = vsel %vm309, %v8670, 0
    %v8841 = vsel %vm309, %v8672, 0
    %v8844 = vsel %vm309, %v8674, 0
    %v8847 = vsel %vm309, %v8676, 0
    %8849 = vmatpush.bf16.msra.mxu0 0
    %8850 = vmatpush.bf16.msra.mxu0 0
    %8851 = vmatpush.bf16.msra.mxu0 0
    %8852 = vmatpush.bf16.msra.mxu0 0
    %8853 = vmatpush.bf16.msra.mxu0 0
    %8854 = vmatpush.bf16.msra.mxu0 0
    %8855 = vmatpush.bf16.msra.mxu0 %v8789
    %8856 = vmatpush.bf16.msra.mxu0 %v8773
    %8857 = vmatmul.bf16.gmra.mxu0 %v8838
    %v8858 = vpop.f32.mrf.mxu0
    %v8859 = vadd.f32 %v8633, %v8858
    %v8860 = vpop.f32.mrf.mxu0
    %v8861 = vadd.f32 %v8633, %v8860
    %8862 = vmatmul.bf16.gmra.mxu0 %v8841
    %v8863 = vpop.f32.mrf.mxu0
    %v8864 = vadd.f32 %v8633, %v8863
    %v8865 = vpop.f32.mrf.mxu0
    %v8866 = vadd.f32 %v8633, %v8865
    %8867 = vmatmul.bf16.gmra.mxu0 %v8844
    %v8868 = vpop.f32.mrf.mxu0
    %v8869 = vadd.f32 %v8633, %v8868
    %v8870 = vpop.f32.mrf.mxu0
    %v8871 = vadd.f32 %v8633, %v8870
    %8872 = vmatmul.bf16.gmra.mxu0 %v8847
    %v8873 = vpop.f32.mrf.mxu0
    %v8874 = vadd.f32 %v8633, %v8873
    %v8875 = vpop.f32.mrf.mxu0
    %v8876 = vadd.f32 %v8633, %v8875
    %8877 = vdwg.mxu0
    %8878 = vmatpush.bf16.msra.mxu0 0
    %8879 = vmatpush.bf16.msra.mxu0 0
    %8880 = vmatpush.bf16.msra.mxu0 0
    %8881 = vmatpush.bf16.msra.mxu0 0
    %8882 = vmatpush.bf16.msra.mxu0 0
    %8883 = vmatpush.bf16.msra.mxu0 0
    %8884 = vmatpush.bf16.msra.mxu0 %v8790
    %8885 = vmatpush.bf16.msra.mxu0 %v8774
    %8886 = vmatmul.bf16.gmra.mxu0 %v8838
    %v8887 = vpop.f32.mrf.mxu0
    %v8888 = vadd.f32 %v8634, %v8887
    %v8889 = vpop.f32.mrf.mxu0
    %v8890 = vadd.f32 %v8634, %v8889
    %8891 = vmatmul.bf16.gmra.mxu0 %v8841
    %v8892 = vpop.f32.mrf.mxu0
    %v8893 = vadd.f32 %v8634, %v8892
    %v8894 = vpop.f32.mrf.mxu0
    %v8895 = vadd.f32 %v8634, %v8894
    %8896 = vmatmul.bf16.gmra.mxu0 %v8844
    %v8897 = vpop.f32.mrf.mxu0
    %v8898 = vadd.f32 %v8634, %v8897
    %v8899 = vpop.f32.mrf.mxu0
    %v8900 = vadd.f32 %v8634, %v8899
    %8901 = vmatmul.bf16.gmra.mxu0 %v8847
    %v8902 = vpop.f32.mrf.mxu0
    %v8903 = vadd.f32 %v8634, %v8902
    %v8904 = vpop.f32.mrf.mxu0
    %v8905 = vadd.f32 %v8634, %v8904
    %8906 = vdwg.mxu0
    %8907 = vmatpush.bf16.msra.mxu0 0
    %8908 = vmatpush.bf16.msra.mxu0 0
    %8909 = vmatpush.bf16.msra.mxu0 0
    %8910 = vmatpush.bf16.msra.mxu0 0
    %8911 = vmatpush.bf16.msra.mxu0 0
    %8912 = vmatpush.bf16.msra.mxu0 0
    %8913 = vmatpush.bf16.msra.mxu0 %v8791
    %8914 = vmatpush.bf16.msra.mxu0 %v8775
    %8915 = vmatmul.bf16.gmra.mxu0 %v8838
    %v8916 = vpop.f32.mrf.mxu0
    %v8917 = vadd.f32 %v8635, %v8916
    %v8918 = vpop.f32.mrf.mxu0
    %v8919 = vadd.f32 %v8635, %v8918
    %8920 = vmatmul.bf16.gmra.mxu0 %v8841
    %v8921 = vpop.f32.mrf.mxu0
    %v8922 = vadd.f32 %v8635, %v8921
    %v8923 = vpop.f32.mrf.mxu0
    %v8924 = vadd.f32 %v8635, %v8923
    %8925 = vmatmul.bf16.gmra.mxu0 %v8844
    %v8926 = vpop.f32.mrf.mxu0
    %v8927 = vadd.f32 %v8635, %v8926
    %v8928 = vpop.f32.mrf.mxu0
    %v8929 = vadd.f32 %v8635, %v8928
    %8930 = vmatmul.bf16.gmra.mxu0 %v8847
    %v8931 = vpop.f32.mrf.mxu0
    %v8932 = vadd.f32 %v8635, %v8931
    %v8933 = vpop.f32.mrf.mxu0
    %v8934 = vadd.f32 %v8635, %v8933
    %8935 = vdwg.mxu0
    %8936 = vmatpush.bf16.msra.mxu0 0
    %8937 = vmatpush.bf16.msra.mxu0 0
    %8938 = vmatpush.bf16.msra.mxu0 0
    %8939 = vmatpush.bf16.msra.mxu0 0
    %8940 = vmatpush.bf16.msra.mxu0 0
    %8941 = vmatpush.bf16.msra.mxu0 0
    %8942 = vmatpush.bf16.msra.mxu0 %v8792
    %8943 = vmatpush.bf16.msra.mxu0 %v8776
    %8944 = vmatmul.bf16.gmra.mxu0 %v8838
    %v8945 = vpop.f32.mrf.mxu0
    %v8946 = vadd.f32 %v8636, %v8945
    %v8947 = vpop.f32.mrf.mxu0
    %v8948 = vadd.f32 %v8636, %v8947
    %8949 = vmatmul.bf16.gmra.mxu0 %v8841
    %v8950 = vpop.f32.mrf.mxu0
    %v8951 = vadd.f32 %v8636, %v8950
    %v8952 = vpop.f32.mrf.mxu0
    %v8953 = vadd.f32 %v8636, %v8952
    %8954 = vmatmul.bf16.gmra.mxu0 %v8844
    %v8955 = vpop.f32.mrf.mxu0
    %v8956 = vadd.f32 %v8636, %v8955
    %v8957 = vpop.f32.mrf.mxu0
    %v8958 = vadd.f32 %v8636, %v8957
    %8959 = vmatmul.bf16.gmra.mxu0 %v8847
    %v8960 = vpop.f32.mrf.mxu0
    %v8961 = vadd.f32 %v8636, %v8960
    %v8962 = vpop.f32.mrf.mxu0
    %v8963 = vadd.f32 %v8636, %v8962
    %8964 = vdwg.mxu0
    %8965 = vmatpush.bf16.msra.mxu0 0
    %8966 = vmatpush.bf16.msra.mxu0 0
    %8967 = vmatpush.bf16.msra.mxu0 0
    %8968 = vmatpush.bf16.msra.mxu0 0
    %8969 = vmatpush.bf16.msra.mxu0 0
    %8970 = vmatpush.bf16.msra.mxu0 0
    %8971 = vmatpush.bf16.msra.mxu0 %v8793
    %8972 = vmatpush.bf16.msra.mxu0 %v8777
    %8973 = vmatmul.bf16.gmra.mxu0 %v8838
    %v8974 = vpop.f32.mrf.mxu0
    %v8975 = vadd.f32 %v8637, %v8974
    %v8976 = vpop.f32.mrf.mxu0
    %v8977 = vadd.f32 %v8637, %v8976
    %8978 = vmatmul.bf16.gmra.mxu0 %v8841
    %v8979 = vpop.f32.mrf.mxu0
    %v8980 = vadd.f32 %v8637, %v8979
    %v8981 = vpop.f32.mrf.mxu0
    %v8982 = vadd.f32 %v8637, %v8981
    %8983 = vmatmul.bf16.gmra.mxu0 %v8844
    %v8984 = vpop.f32.mrf.mxu0
    %v8985 = vadd.f32 %v8637, %v8984
    %v8986 = vpop.f32.mrf.mxu0
    %v8987 = vadd.f32 %v8637, %v8986
    %8988 = vmatmul.bf16.gmra.mxu0 %v8847
    %v8989 = vpop.f32.mrf.mxu0
    %v8990 = vadd.f32 %v8637, %v8989
    %v8991 = vpop.f32.mrf.mxu0
    %v8992 = vadd.f32 %v8637, %v8991
    %8993 = vdwg.mxu0
    %8994 = vmatpush.bf16.msra.mxu0 0
    %8995 = vmatpush.bf16.msra.mxu0 0
    %8996 = vmatpush.bf16.msra.mxu0 0
    %8997 = vmatpush.bf16.msra.mxu0 0
    %8998 = vmatpush.bf16.msra.mxu0 0
    %8999 = vmatpush.bf16.msra.mxu0 0
    %9000 = vmatpush.bf16.msra.mxu0 %v8794
    %9001 = vmatpush.bf16.msra.mxu0 %v8778
    %9002 = vmatmul.bf16.gmra.mxu0 %v8838
    %v9003 = vpop.f32.mrf.mxu0
    %v9004 = vadd.f32 %v8638, %v9003
    %v9005 = vpop.f32.mrf.mxu0
    %v9006 = vadd.f32 %v8638, %v9005
    %9007 = vmatmul.bf16.gmra.mxu0 %v8841
    %v9008 = vpop.f32.mrf.mxu0
    %v9009 = vadd.f32 %v8638, %v9008
    %v9010 = vpop.f32.mrf.mxu0
    %v9011 = vadd.f32 %v8638, %v9010
    %9012 = vmatmul.bf16.gmra.mxu0 %v8844
    %v9013 = vpop.f32.mrf.mxu0
    %v9014 = vadd.f32 %v8638, %v9013
    %v9015 = vpop.f32.mrf.mxu0
    %v9016 = vadd.f32 %v8638, %v9015
    %9017 = vmatmul.bf16.gmra.mxu0 %v8847
    %v9018 = vpop.f32.mrf.mxu0
    %v9019 = vadd.f32 %v8638, %v9018
    %v9020 = vpop.f32.mrf.mxu0
    %v9021 = vadd.f32 %v8638, %v9020
    %9022 = vdwg.mxu0
    %9023 = vmatpush.bf16.msra.mxu0 0
    %9024 = vmatpush.bf16.msra.mxu0 0
    %9025 = vmatpush.bf16.msra.mxu0 0
    %9026 = vmatpush.bf16.msra.mxu0 0
    %9027 = vmatpush.bf16.msra.mxu0 0
    %9028 = vmatpush.bf16.msra.mxu0 0
    %9029 = vmatpush.bf16.msra.mxu0 %v8795
    %9030 = vmatpush.bf16.msra.mxu0 %v8779
    %9031 = vmatmul.bf16.gmra.mxu0 %v8838
    %v9032 = vpop.f32.mrf.mxu0
    %v9033 = vadd.f32 %v8639, %v9032
    %v9034 = vpop.f32.mrf.mxu0
    %v9035 = vadd.f32 %v8639, %v9034
    %9036 = vmatmul.bf16.gmra.mxu0 %v8841
    %v9037 = vpop.f32.mrf.mxu0
    %v9038 = vadd.f32 %v8639, %v9037
    %v9039 = vpop.f32.mrf.mxu0
    %v9040 = vadd.f32 %v8639, %v9039
    %9041 = vmatmul.bf16.gmra.mxu0 %v8844
    %v9042 = vpop.f32.mrf.mxu0
    %v9043 = vadd.f32 %v8639, %v9042
    %v9044 = vpop.f32.mrf.mxu0
    %v9045 = vadd.f32 %v8639, %v9044
    %9046 = vmatmul.bf16.gmra.mxu0 %v8847
    %v9047 = vpop.f32.mrf.mxu0
    %v9048 = vadd.f32 %v8639, %v9047
    %v9049 = vpop.f32.mrf.mxu0
    %v9050 = vadd.f32 %v8639, %v9049
    %9051 = vdwg.mxu0
    %9052 = vmatpush.bf16.msra.mxu0 0
    %9053 = vmatpush.bf16.msra.mxu0 0
    %9054 = vmatpush.bf16.msra.mxu0 0
    %9055 = vmatpush.bf16.msra.mxu0 0
    %9056 = vmatpush.bf16.msra.mxu0 0
    %9057 = vmatpush.bf16.msra.mxu0 0
    %9058 = vmatpush.bf16.msra.mxu0 %v8796
    %9059 = vmatpush.bf16.msra.mxu0 %v8780
    %9060 = vmatmul.bf16.gmra.mxu0 %v8838
    %v9061 = vpop.f32.mrf.mxu0
    %v9062 = vadd.f32 %v8640, %v9061
    %v9063 = vpop.f32.mrf.mxu0
    %v9064 = vadd.f32 %v8640, %v9063
    %9065 = vmatmul.bf16.gmra.mxu0 %v8841
    %v9066 = vpop.f32.mrf.mxu0
    %v9067 = vadd.f32 %v8640, %v9066
    %v9068 = vpop.f32.mrf.mxu0
    %v9069 = vadd.f32 %v8640, %v9068
    %9070 = vmatmul.bf16.gmra.mxu0 %v8844
    %v9071 = vpop.f32.mrf.mxu0
    %v9072 = vadd.f32 %v8640, %v9071
    %v9073 = vpop.f32.mrf.mxu0
    %v9074 = vadd.f32 %v8640, %v9073
    %9075 = vmatmul.bf16.gmra.mxu0 %v8847
    %v9076 = vpop.f32.mrf.mxu0
    %v9077 = vadd.f32 %v8640, %v9076
    %v9078 = vpop.f32.mrf.mxu0
    %v9079 = vadd.f32 %v8640, %v9078
    %9080 = vdwg.mxu0
    %9081 = vmatpush.bf16.msra.mxu0 0
    %9082 = vmatpush.bf16.msra.mxu0 0
    %9083 = vmatpush.bf16.msra.mxu0 0
    %9084 = vmatpush.bf16.msra.mxu0 0
    %9085 = vmatpush.bf16.msra.mxu0 0
    %9086 = vmatpush.bf16.msra.mxu0 0
    %9087 = vmatpush.bf16.msra.mxu0 %v8797
    %9088 = vmatpush.bf16.msra.mxu0 %v8781
    %9089 = vmatmul.bf16.gmra.mxu0 %v8838
    %v9090 = vpop.f32.mrf.mxu0
    %v9091 = vadd.f32 %v8641, %v9090
    %v9092 = vpop.f32.mrf.mxu0
    %v9093 = vadd.f32 %v8641, %v9092
    %9094 = vmatmul.bf16.gmra.mxu0 %v8841
    %v9095 = vpop.f32.mrf.mxu0
    %v9096 = vadd.f32 %v8641, %v9095
    %v9097 = vpop.f32.mrf.mxu0
    %v9098 = vadd.f32 %v8641, %v9097
    %9099 = vmatmul.bf16.gmra.mxu0 %v8844
    %v9100 = vpop.f32.mrf.mxu0
    %v9101 = vadd.f32 %v8641, %v9100
    %v9102 = vpop.f32.mrf.mxu0
    %v9103 = vadd.f32 %v8641, %v9102
    %9104 = vmatmul.bf16.gmra.mxu0 %v8847
    %v9105 = vpop.f32.mrf.mxu0
    %v9106 = vadd.f32 %v8641, %v9105
    %v9107 = vpop.f32.mrf.mxu0
    %v9108 = vadd.f32 %v8641, %v9107
    %9109 = vdwg.mxu0
    %9110 = vmatpush.bf16.msra.mxu0 0
    %9111 = vmatpush.bf16.msra.mxu0 0
    %9112 = vmatpush.bf16.msra.mxu0 0
    %9113 = vmatpush.bf16.msra.mxu0 0
    %9114 = vmatpush.bf16.msra.mxu0 0
    %9115 = vmatpush.bf16.msra.mxu0 0
    %9116 = vmatpush.bf16.msra.mxu0 %v8798
    %9117 = vmatpush.bf16.msra.mxu0 %v8782
    %9118 = vmatmul.bf16.gmra.mxu0 %v8838
    %v9119 = vpop.f32.mrf.mxu0
    %v9120 = vadd.f32 %v8642, %v9119
    %v9121 = vpop.f32.mrf.mxu0
    %v9122 = vadd.f32 %v8642, %v9121
    %9123 = vmatmul.bf16.gmra.mxu0 %v8841
    %v9124 = vpop.f32.mrf.mxu0
    %v9125 = vadd.f32 %v8642, %v9124
    %v9126 = vpop.f32.mrf.mxu0
    %v9127 = vadd.f32 %v8642, %v9126
    %9128 = vmatmul.bf16.gmra.mxu0 %v8844
    %v9129 = vpop.f32.mrf.mxu0
    %v9130 = vadd.f32 %v8642, %v9129
    %v9131 = vpop.f32.mrf.mxu0
    %v9132 = vadd.f32 %v8642, %v9131
    %9133 = vmatmul.bf16.gmra.mxu0 %v8847
    %v9134 = vpop.f32.mrf.mxu0
    %v9135 = vadd.f32 %v8642, %v9134
    %v9136 = vpop.f32.mrf.mxu0
    %v9137 = vadd.f32 %v8642, %v9136
    %9138 = vdwg.mxu0
    %9139 = vmatpush.bf16.msra.mxu0 0
    %9140 = vmatpush.bf16.msra.mxu0 0
    %9141 = vmatpush.bf16.msra.mxu0 0
    %9142 = vmatpush.bf16.msra.mxu0 0
    %9143 = vmatpush.bf16.msra.mxu0 0
    %9144 = vmatpush.bf16.msra.mxu0 0
    %9145 = vmatpush.bf16.msra.mxu0 %v8799
    %9146 = vmatpush.bf16.msra.mxu0 %v8783
    %9147 = vmatmul.bf16.gmra.mxu0 %v8838
    %v9148 = vpop.f32.mrf.mxu0
    %v9149 = vadd.f32 %v8643, %v9148
    %v9150 = vpop.f32.mrf.mxu0
    %v9151 = vadd.f32 %v8643, %v9150
    %9152 = vmatmul.bf16.gmra.mxu0 %v8841
    %v9153 = vpop.f32.mrf.mxu0
    %v9154 = vadd.f32 %v8643, %v9153
    %v9155 = vpop.f32.mrf.mxu0
    %v9156 = vadd.f32 %v8643, %v9155
    %9157 = vmatmul.bf16.gmra.mxu0 %v8844
    %v9158 = vpop.f32.mrf.mxu0
    %v9159 = vadd.f32 %v8643, %v9158
    %v9160 = vpop.f32.mrf.mxu0
    %v9161 = vadd.f32 %v8643, %v9160
    %9162 = vmatmul.bf16.gmra.mxu0 %v8847
    %v9163 = vpop.f32.mrf.mxu0
    %v9164 = vadd.f32 %v8643, %v9163
    %v9165 = vpop.f32.mrf.mxu0
    %v9166 = vadd.f32 %v8643, %v9165
    %9167 = vdwg.mxu0
    %9168 = vmatpush.bf16.msra.mxu0 0
    %9169 = vmatpush.bf16.msra.mxu0 0
    %9170 = vmatpush.bf16.msra.mxu0 0
    %9171 = vmatpush.bf16.msra.mxu0 0
    %9172 = vmatpush.bf16.msra.mxu0 0
    %9173 = vmatpush.bf16.msra.mxu0 0
    %9174 = vmatpush.bf16.msra.mxu0 %v8800
    %9175 = vmatpush.bf16.msra.mxu0 %v8784
    %9176 = vmatmul.bf16.gmra.mxu0 %v8838
    %v9177 = vpop.f32.mrf.mxu0
    %v9178 = vadd.f32 %v8644, %v9177
    %v9179 = vpop.f32.mrf.mxu0
    %v9180 = vadd.f32 %v8644, %v9179
    %9181 = vmatmul.bf16.gmra.mxu0 %v8841
    %v9182 = vpop.f32.mrf.mxu0
    %v9183 = vadd.f32 %v8644, %v9182
    %v9184 = vpop.f32.mrf.mxu0
    %v9185 = vadd.f32 %v8644, %v9184
    %9186 = vmatmul.bf16.gmra.mxu0 %v8844
    %v9187 = vpop.f32.mrf.mxu0
    %v9188 = vadd.f32 %v8644, %v9187
    %v9189 = vpop.f32.mrf.mxu0
    %v9190 = vadd.f32 %v8644, %v9189
    %9191 = vmatmul.bf16.gmra.mxu0 %v8847
    %v9192 = vpop.f32.mrf.mxu0
    %v9193 = vadd.f32 %v8644, %v9192
    %v9194 = vpop.f32.mrf.mxu0
    %v9195 = vadd.f32 %v8644, %v9194
    %9196 = vdwg.mxu0
    %9197 = vmatpush.bf16.msra.mxu0 0
    %9198 = vmatpush.bf16.msra.mxu0 0
    %9199 = vmatpush.bf16.msra.mxu0 0
    %9200 = vmatpush.bf16.msra.mxu0 0
    %9201 = vmatpush.bf16.msra.mxu0 0
    %9202 = vmatpush.bf16.msra.mxu0 0
    %9203 = vmatpush.bf16.msra.mxu0 %v8801
    %9204 = vmatpush.bf16.msra.mxu0 %v8785
    %9205 = vmatmul.bf16.gmra.mxu0 %v8838
    %v9206 = vpop.f32.mrf.mxu0
    %v9207 = vadd.f32 %v8645, %v9206
    %v9208 = vpop.f32.mrf.mxu0
    %v9209 = vadd.f32 %v8645, %v9208
    %9210 = vmatmul.bf16.gmra.mxu0 %v8841
    %v9211 = vpop.f32.mrf.mxu0
    %v9212 = vadd.f32 %v8645, %v9211
    %v9213 = vpop.f32.mrf.mxu0
    %v9214 = vadd.f32 %v8645, %v9213
    %9215 = vmatmul.bf16.gmra.mxu0 %v8844
    %v9216 = vpop.f32.mrf.mxu0
    %v9217 = vadd.f32 %v8645, %v9216
    %v9218 = vpop.f32.mrf.mxu0
    %v9219 = vadd.f32 %v8645, %v9218
    %9220 = vmatmul.bf16.gmra.mxu0 %v8847
    %v9221 = vpop.f32.mrf.mxu0
    %v9222 = vadd.f32 %v8645, %v9221
    %v9223 = vpop.f32.mrf.mxu0
    %v9224 = vadd.f32 %v8645, %v9223
    %9225 = vdwg.mxu0
    %9226 = vmatpush.bf16.msra.mxu0 0
    %9227 = vmatpush.bf16.msra.mxu0 0
    %9228 = vmatpush.bf16.msra.mxu0 0
    %9229 = vmatpush.bf16.msra.mxu0 0
    %9230 = vmatpush.bf16.msra.mxu0 0
    %9231 = vmatpush.bf16.msra.mxu0 0
    %9232 = vmatpush.bf16.msra.mxu0 %v8802
    %9233 = vmatpush.bf16.msra.mxu0 %v8786
    %9234 = vmatmul.bf16.gmra.mxu0 %v8838
    %v9235 = vpop.f32.mrf.mxu0
    %v9236 = vadd.f32 %v8646, %v9235
    %v9237 = vpop.f32.mrf.mxu0
    %v9238 = vadd.f32 %v8646, %v9237
    %9239 = vmatmul.bf16.gmra.mxu0 %v8841
    %v9240 = vpop.f32.mrf.mxu0
    %v9241 = vadd.f32 %v8646, %v9240
    %v9242 = vpop.f32.mrf.mxu0
    %v9243 = vadd.f32 %v8646, %v9242
    %9244 = vmatmul.bf16.gmra.mxu0 %v8844
    %v9245 = vpop.f32.mrf.mxu0
    %v9246 = vadd.f32 %v8646, %v9245
    %v9247 = vpop.f32.mrf.mxu0
    %v9248 = vadd.f32 %v8646, %v9247
    %9249 = vmatmul.bf16.gmra.mxu0 %v8847
    %v9250 = vpop.f32.mrf.mxu0
    %v9251 = vadd.f32 %v8646, %v9250
    %v9252 = vpop.f32.mrf.mxu0
    %v9253 = vadd.f32 %v8646, %v9252
    %9254 = vdwg.mxu0
    %9255 = vmatpush.bf16.msra.mxu0 0
    %9256 = vmatpush.bf16.msra.mxu0 0
    %9257 = vmatpush.bf16.msra.mxu0 0
    %9258 = vmatpush.bf16.msra.mxu0 0
    %9259 = vmatpush.bf16.msra.mxu0 0
    %9260 = vmatpush.bf16.msra.mxu0 0
    %9261 = vmatpush.bf16.msra.mxu0 %v8803
    %9262 = vmatpush.bf16.msra.mxu0 %v8787
    %9263 = vmatmul.bf16.gmra.mxu0 %v8838
    %v9264 = vpop.f32.mrf.mxu0
    %v9265 = vadd.f32 %v8647, %v9264
    %v9266 = vpop.f32.mrf.mxu0
    %v9267 = vadd.f32 %v8647, %v9266
    %9268 = vmatmul.bf16.gmra.mxu0 %v8841
    %v9269 = vpop.f32.mrf.mxu0
    %v9270 = vadd.f32 %v8647, %v9269
    %v9271 = vpop.f32.mrf.mxu0
    %v9272 = vadd.f32 %v8647, %v9271
    %9273 = vmatmul.bf16.gmra.mxu0 %v8844
    %v9274 = vpop.f32.mrf.mxu0
    %v9275 = vadd.f32 %v8647, %v9274
    %v9276 = vpop.f32.mrf.mxu0
    %v9277 = vadd.f32 %v8647, %v9276
    %9278 = vmatmul.bf16.gmra.mxu0 %v8847
    %v9279 = vpop.f32.mrf.mxu0
    %v9280 = vadd.f32 %v8647, %v9279
    %v9281 = vpop.f32.mrf.mxu0
    %v9282 = vadd.f32 %v8647, %v9281
    %9283 = vdwg.mxu0
    %9284 = vmatpush.bf16.msra.mxu0 0
    %9285 = vmatpush.bf16.msra.mxu0 0
    %9286 = vmatpush.bf16.msra.mxu0 0
    %9287 = vmatpush.bf16.msra.mxu0 0
    %9288 = vmatpush.bf16.msra.mxu0 0
    %9289 = vmatpush.bf16.msra.mxu0 0
    %9290 = vmatpush.bf16.msra.mxu0 %v8804
    %9291 = vmatpush.bf16.msra.mxu0 %v8788
    %9292 = vmatmul.bf16.gmra.mxu0 %v8838
    %v9293 = vpop.f32.mrf.mxu0
    %v9294 = vadd.f32 %v8648, %v9293
    %v9295 = vpop.f32.mrf.mxu0
    %v9296 = vadd.f32 %v8648, %v9295
    %9297 = vmatmul.bf16.gmra.mxu0 %v8841
    %v9298 = vpop.f32.mrf.mxu0
    %v9299 = vadd.f32 %v8648, %v9298
    %v9300 = vpop.f32.mrf.mxu0
    %v9301 = vadd.f32 %v8648, %v9300
    %9302 = vmatmul.bf16.gmra.mxu0 %v8844
    %v9303 = vpop.f32.mrf.mxu0
    %v9304 = vadd.f32 %v8648, %v9303
    %v9305 = vpop.f32.mrf.mxu0
    %v9306 = vadd.f32 %v8648, %v9305
    %9307 = vmatmul.bf16.gmra.mxu0 %v8847
    %v9308 = vpop.f32.mrf.mxu0
    %v9309 = vadd.f32 %v8648, %v9308
    %v9310 = vpop.f32.mrf.mxu0
    %v9311 = vadd.f32 %v8648, %v9310
    %9312 = vdwg.mxu0
    %v9313 = vmax.f32 %v8859, 0.0
    %v9314 = vmax.f32 %v8888, 0.0
    %v9315 = vmax.f32 %v8917, 0.0
    %v9316 = vmax.f32 %v8946, 0.0
    %v9317 = vmax.f32 %v8975, 0.0
    %v9318 = vmax.f32 %v9004, 0.0
    %v9319 = vmax.f32 %v9033, 0.0
    %v9320 = vmax.f32 %v9062, 0.0
    %v9321 = vmax.f32 %v9091, 0.0
    %v9322 = vmax.f32 %v9120, 0.0
    %v9323 = vmax.f32 %v9149, 0.0
    %v9324 = vmax.f32 %v9178, 0.0
    %v9325 = vmax.f32 %v9207, 0.0
    %v9326 = vmax.f32 %v9236, 0.0
    %v9327 = vmax.f32 %v9265, 0.0
    %v9328 = vmax.f32 %v9294, 0.0
    %v9329 = vmax.f32 %v8861, 0.0
    %v9330 = vmax.f32 %v8890, 0.0
    %v9331 = vmax.f32 %v8919, 0.0
    %v9332 = vmax.f32 %v8948, 0.0
    %v9333 = vmax.f32 %v8977, 0.0
    %v9334 = vmax.f32 %v9006, 0.0
    %v9335 = vmax.f32 %v9035, 0.0
    %v9336 = vmax.f32 %v9064, 0.0
    %v9337 = vmax.f32 %v9093, 0.0
    %v9338 = vmax.f32 %v9122, 0.0
    %v9339 = vmax.f32 %v9151, 0.0
    %v9340 = vmax.f32 %v9180, 0.0
    %v9341 = vmax.f32 %v9209, 0.0
    %v9342 = vmax.f32 %v9238, 0.0
    %v9343 = vmax.f32 %v9267, 0.0
    %v9344 = vmax.f32 %v9296, 0.0
    %v9345 = vmax.f32 %v8864, 0.0
    %v9346 = vmax.f32 %v8893, 0.0
    %v9347 = vmax.f32 %v8922, 0.0
    %v9348 = vmax.f32 %v8951, 0.0
    %v9349 = vmax.f32 %v8980, 0.0
    %v9350 = vmax.f32 %v9009, 0.0
    %v9351 = vmax.f32 %v9038, 0.0
    %v9352 = vmax.f32 %v9067, 0.0
    %v9353 = vmax.f32 %v9096, 0.0
    %v9354 = vmax.f32 %v9125, 0.0
    %v9355 = vmax.f32 %v9154, 0.0
    %v9356 = vmax.f32 %v9183, 0.0
    %v9357 = vmax.f32 %v9212, 0.0
    %v9358 = vmax.f32 %v9241, 0.0
    %v9359 = vmax.f32 %v9270, 0.0
    %v9360 = vmax.f32 %v9299, 0.0
    %v9361 = vmax.f32 %v8866, 0.0
    %v9362 = vmax.f32 %v8895, 0.0
    %v9363 = vmax.f32 %v8924, 0.0
    %v9364 = vmax.f32 %v8953, 0.0
    %v9365 = vmax.f32 %v8982, 0.0
    %v9366 = vmax.f32 %v9011, 0.0
    %v9367 = vmax.f32 %v9040, 0.0
    %v9368 = vmax.f32 %v9069, 0.0
    %v9369 = vmax.f32 %v9098, 0.0
    %v9370 = vmax.f32 %v9127, 0.0
    %v9371 = vmax.f32 %v9156, 0.0
    %v9372 = vmax.f32 %v9185, 0.0
    %v9373 = vmax.f32 %v9214, 0.0
    %v9374 = vmax.f32 %v9243, 0.0
    %v9375 = vmax.f32 %v9272, 0.0
    %v9376 = vmax.f32 %v9301, 0.0
    %v9377 = vmax.f32 %v8869, 0.0
    %v9378 = vmax.f32 %v8898, 0.0
    %v9379 = vmax.f32 %v8927, 0.0
    %v9380 = vmax.f32 %v8956, 0.0
    %v9381 = vmax.f32 %v8985, 0.0
    %v9382 = vmax.f32 %v9014, 0.0
    %v9383 = vmax.f32 %v9043, 0.0
    %v9384 = vmax.f32 %v9072, 0.0
    %v9385 = vmax.f32 %v9101, 0.0
    %v9386 = vmax.f32 %v9130, 0.0
    %v9387 = vmax.f32 %v9159, 0.0
    %v9388 = vmax.f32 %v9188, 0.0
    %v9389 = vmax.f32 %v9217, 0.0
    %v9390 = vmax.f32 %v9246, 0.0
    %v9391 = vmax.f32 %v9275, 0.0
    %v9392 = vmax.f32 %v9304, 0.0
    %v9393 = vmax.f32 %v8871, 0.0
    %v9394 = vmax.f32 %v8900, 0.0
    %v9395 = vmax.f32 %v8929, 0.0
    %v9396 = vmax.f32 %v8958, 0.0
    %v9397 = vmax.f32 %v8987, 0.0
    %v9398 = vmax.f32 %v9016, 0.0
    %v9399 = vmax.f32 %v9045, 0.0
    %v9400 = vmax.f32 %v9074, 0.0
    %v9401 = vmax.f32 %v9103, 0.0
    %v9402 = vmax.f32 %v9132, 0.0
    %v9403 = vmax.f32 %v9161, 0.0
    %v9404 = vmax.f32 %v9190, 0.0
    %v9405 = vmax.f32 %v9219, 0.0
    %v9406 = vmax.f32 %v9248, 0.0
    %v9407 = vmax.f32 %v9277, 0.0
    %v9408 = vmax.f32 %v9306, 0.0
    %v9409 = vmax.f32 %v8874, 0.0
    %v9410 = vmax.f32 %v8903, 0.0
    %v9411 = vmax.f32 %v8932, 0.0
    %v9412 = vmax.f32 %v8961, 0.0
    %v9413 = vmax.f32 %v8990, 0.0
    %v9414 = vmax.f32 %v9019, 0.0
    %v9415 = vmax.f32 %v9048, 0.0
    %v9416 = vmax.f32 %v9077, 0.0
    %v9417 = vmax.f32 %v9106, 0.0
    %v9418 = vmax.f32 %v9135, 0.0
    %v9419 = vmax.f32 %v9164, 0.0
    %v9420 = vmax.f32 %v9193, 0.0
    %v9421 = vmax.f32 %v9222, 0.0
    %v9422 = vmax.f32 %v9251, 0.0
    %v9423 = vmax.f32 %v9280, 0.0
    %v9424 = vmax.f32 %v9309, 0.0
    %v9425 = vmax.f32 %v8876, 0.0
    %v9426 = vmax.f32 %v8905, 0.0
    %v9427 = vmax.f32 %v8934, 0.0
    %v9428 = vmax.f32 %v8963, 0.0
    %v9429 = vmax.f32 %v8992, 0.0
    %v9430 = vmax.f32 %v9021, 0.0
    %v9431 = vmax.f32 %v9050, 0.0
    %v9432 = vmax.f32 %v9079, 0.0
    %v9433 = vmax.f32 %v9108, 0.0
    %v9434 = vmax.f32 %v9137, 0.0
    %v9435 = vmax.f32 %v9166, 0.0
    %v9436 = vmax.f32 %v9195, 0.0
    %v9437 = vmax.f32 %v9224, 0.0
    %v9438 = vmax.f32 %v9253, 0.0
    %v9439 = vmax.f32 %v9282, 0.0
    %v9440 = vmax.f32 %v9311, 0.0
    %v9441 = vpack.c.bf16 %v9329, %v9313
    %v9442 = vpack.c.bf16 %v9330, %v9314
    %v9443 = vpack.c.bf16 %v9331, %v9315
    %v9444 = vpack.c.bf16 %v9332, %v9316
    %v9445 = vpack.c.bf16 %v9333, %v9317
    %v9446 = vpack.c.bf16 %v9334, %v9318
    %v9447 = vpack.c.bf16 %v9335, %v9319
    %v9448 = vpack.c.bf16 %v9336, %v9320
    %v9449 = vpack.c.bf16 %v9337, %v9321
    %v9450 = vpack.c.bf16 %v9338, %v9322
    %v9451 = vpack.c.bf16 %v9339, %v9323
    %v9452 = vpack.c.bf16 %v9340, %v9324
    %v9453 = vpack.c.bf16 %v9341, %v9325
    %v9454 = vpack.c.bf16 %v9342, %v9326
    %v9455 = vpack.c.bf16 %v9343, %v9327
    %v9456 = vpack.c.bf16 %v9344, %v9328
    %v9457 = vpack.c.bf16 %v9361, %v9345
    %v9458 = vpack.c.bf16 %v9362, %v9346
    %v9459 = vpack.c.bf16 %v9363, %v9347
    %v9460 = vpack.c.bf16 %v9364, %v9348
    %v9461 = vpack.c.bf16 %v9365, %v9349
    %v9462 = vpack.c.bf16 %v9366, %v9350
    %v9463 = vpack.c.bf16 %v9367, %v9351
    %v9464 = vpack.c.bf16 %v9368, %v9352
    %v9465 = vpack.c.bf16 %v9369, %v9353
    %v9466 = vpack.c.bf16 %v9370, %v9354
    %v9467 = vpack.c.bf16 %v9371, %v9355
    %v9468 = vpack.c.bf16 %v9372, %v9356
    %v9469 = vpack.c.bf16 %v9373, %v9357
    %v9470 = vpack.c.bf16 %v9374, %v9358
    %v9471 = vpack.c.bf16 %v9375, %v9359
    %v9472 = vpack.c.bf16 %v9376, %v9360
    %v9473 = vpack.c.bf16 %v9393, %v9377
    %v9474 = vpack.c.bf16 %v9394, %v9378
    %v9475 = vpack.c.bf16 %v9395, %v9379
    %v9476 = vpack.c.bf16 %v9396, %v9380
    %v9477 = vpack.c.bf16 %v9397, %v9381
    %v9478 = vpack.c.bf16 %v9398, %v9382
    %v9479 = vpack.c.bf16 %v9399, %v9383
    %v9480 = vpack.c.bf16 %v9400, %v9384
    %v9481 = vpack.c.bf16 %v9401, %v9385
    %v9482 = vpack.c.bf16 %v9402, %v9386
    %v9483 = vpack.c.bf16 %v9403, %v9387
    %v9484 = vpack.c.bf16 %v9404, %v9388
    %v9485 = vpack.c.bf16 %v9405, %v9389
    %v9486 = vpack.c.bf16 %v9406, %v9390
    %v9487 = vpack.c.bf16 %v9407, %v9391
    %v9488 = vpack.c.bf16 %v9408, %v9392
    %v9489 = vpack.c.bf16 %v9425, %v9409
    %v9490 = vpack.c.bf16 %v9426, %v9410
    %v9491 = vpack.c.bf16 %v9427, %v9411
    %v9492 = vpack.c.bf16 %v9428, %v9412
    %v9493 = vpack.c.bf16 %v9429, %v9413
    %v9494 = vpack.c.bf16 %v9430, %v9414
    %v9495 = vpack.c.bf16 %v9431, %v9415
    %v9496 = vpack.c.bf16 %v9432, %v9416
    %v9497 = vpack.c.bf16 %v9433, %v9417
    %v9498 = vpack.c.bf16 %v9434, %v9418
    %v9499 = vpack.c.bf16 %v9435, %v9419
    %v9500 = vpack.c.bf16 %v9436, %v9420
    %v9501 = vpack.c.bf16 %v9437, %v9421
    %v9502 = vpack.c.bf16 %v9438, %v9422
    %v9503 = vpack.c.bf16 %v9439, %v9423
    %v9504 = vpack.c.bf16 %v9440, %v9424
    %s9505 = scalar_lea.vmem %s13, 1024
    %v9506 = vld [vmem:[%s9505] sm:$0xf]
    %v9507 = vld [vmem:[%s9505 + $0x4] sm:$0xf]
    %v9508 = vld [vmem:[%s9505 + $0x8] sm:$0xf]
    %v9509 = vld [vmem:[%s9505 + $0xc] sm:$0xf]
    %v9510 = vld [vmem:[%s9505 + $0x10] sm:$0xf]
    %v9511 = vld [vmem:[%s9505 + $0x14] sm:$0xf]
    %v9512 = vld [vmem:[%s9505 + $0x18] sm:$0xf]
    %v9513 = vld [vmem:[%s9505 + $0x1c] sm:$0xf]
    %v9514 = vld [vmem:[%s9505 + $0x20] sm:$0xf]
    %v9515 = vld [vmem:[%s9505 + $0x24] sm:$0xf]
    %v9516 = vld [vmem:[%s9505 + $0x28] sm:$0xf]
    %v9517 = vld [vmem:[%s9505 + $0x2c] sm:$0xf]
    %v9518 = vld [vmem:[%s9505 + $0x30] sm:$0xf]
    %v9519 = vld [vmem:[%s9505 + $0x34] sm:$0xf]
    %v9520 = vld [vmem:[%s9505 + $0x38] sm:$0xf]
    %v9521 = vld [vmem:[%s9505 + $0x3c] sm:$0xf]
    %v9522 = vld [vmem:[%s9505 + $0x40] sm:$0xf]
    %v9523 = vld [vmem:[%s9505 + $0x44] sm:$0xf]
    %v9524 = vld [vmem:[%s9505 + $0x48] sm:$0xf]
    %v9525 = vld [vmem:[%s9505 + $0x4c] sm:$0xf]
    %v9526 = vld [vmem:[%s9505 + $0x50] sm:$0xf]
    %v9527 = vld [vmem:[%s9505 + $0x54] sm:$0xf]
    %v9528 = vld [vmem:[%s9505 + $0x58] sm:$0xf]
    %v9529 = vld [vmem:[%s9505 + $0x5c] sm:$0xf]
    %v9530 = vld [vmem:[%s9505 + $0x60] sm:$0xf]
    %v9531 = vld [vmem:[%s9505 + $0x64] sm:$0xf]
    %v9532 = vld [vmem:[%s9505 + $0x68] sm:$0xf]
    %v9533 = vld [vmem:[%s9505 + $0x6c] sm:$0xf]
    %v9534 = vld [vmem:[%s9505 + $0x70] sm:$0xf]
    %v9535 = vld [vmem:[%s9505 + $0x74] sm:$0xf]
    %v9536 = vld [vmem:[%s9505 + $0x78] sm:$0xf]
    %v9537 = vld [vmem:[%s9505 + $0x7c] sm:$0xf]
    %v9538 = vld [vmem:[%s9505 + $0x80] sm:$0xf]
    %v9539 = vld [vmem:[%s9505 + $0x84] sm:$0xf]
    %v9540 = vld [vmem:[%s9505 + $0x88] sm:$0xf]
    %v9541 = vld [vmem:[%s9505 + $0x8c] sm:$0xf]
    %v9542 = vld [vmem:[%s9505 + $0x90] sm:$0xf]
    %v9543 = vld [vmem:[%s9505 + $0x94] sm:$0xf]
    %v9544 = vld [vmem:[%s9505 + $0x98] sm:$0xf]
    %v9545 = vld [vmem:[%s9505 + $0x9c] sm:$0xf]
    %v9546 = vld [vmem:[%s9505 + $0xa0] sm:$0xf]
    %v9547 = vld [vmem:[%s9505 + $0xa4] sm:$0xf]
    %v9548 = vld [vmem:[%s9505 + $0xa8] sm:$0xf]
    %v9549 = vld [vmem:[%s9505 + $0xac] sm:$0xf]
    %v9550 = vld [vmem:[%s9505 + $0xb0] sm:$0xf]
    %v9551 = vld [vmem:[%s9505 + $0xb4] sm:$0xf]
    %v9552 = vld [vmem:[%s9505 + $0xb8] sm:$0xf]
    %v9553 = vld [vmem:[%s9505 + $0xbc] sm:$0xf]
    %v9554 = vld [vmem:[%s9505 + $0xc0] sm:$0xf]
    %v9555 = vld [vmem:[%s9505 + $0xc4] sm:$0xf]
    %v9556 = vld [vmem:[%s9505 + $0xc8] sm:$0xf]
    %v9557 = vld [vmem:[%s9505 + $0xcc] sm:$0xf]
    %v9558 = vld [vmem:[%s9505 + $0xd0] sm:$0xf]
    %v9559 = vld [vmem:[%s9505 + $0xd4] sm:$0xf]
    %v9560 = vld [vmem:[%s9505 + $0xd8] sm:$0xf]
    %v9561 = vld [vmem:[%s9505 + $0xdc] sm:$0xf]
    %v9562 = vld [vmem:[%s9505 + $0xe0] sm:$0xf]
    %v9563 = vld [vmem:[%s9505 + $0xe4] sm:$0xf]
    %v9564 = vld [vmem:[%s9505 + $0xe8] sm:$0xf]
    %v9565 = vld [vmem:[%s9505 + $0xec] sm:$0xf]
    %v9566 = vld [vmem:[%s9505 + $0xf0] sm:$0xf]
    %v9567 = vld [vmem:[%s9505 + $0xf4] sm:$0xf]
    %v9568 = vld [vmem:[%s9505 + $0xf8] sm:$0xf]
    %v9569 = vld [vmem:[%s9505 + $0xfc] sm:$0xf]
    %v9570 = vld [vmem:[%s9505 + $0x100] sm:$0xf]
    %v9571 = vld [vmem:[%s9505 + $0x104] sm:$0xf]
    %v9572 = vld [vmem:[%s9505 + $0x108] sm:$0xf]
    %v9573 = vld [vmem:[%s9505 + $0x10c] sm:$0xf]
    %v9574 = vld [vmem:[%s9505 + $0x110] sm:$0xf]
    %v9575 = vld [vmem:[%s9505 + $0x114] sm:$0xf]
    %v9576 = vld [vmem:[%s9505 + $0x118] sm:$0xf]
    %v9577 = vld [vmem:[%s9505 + $0x11c] sm:$0xf]
    %v9578 = vld [vmem:[%s9505 + $0x120] sm:$0xf]
    %v9579 = vld [vmem:[%s9505 + $0x124] sm:$0xf]
    %v9580 = vld [vmem:[%s9505 + $0x128] sm:$0xf]
    %v9581 = vld [vmem:[%s9505 + $0x12c] sm:$0xf]
    %v9582 = vld [vmem:[%s9505 + $0x130] sm:$0xf]
    %v9583 = vld [vmem:[%s9505 + $0x134] sm:$0xf]
    %v9584 = vld [vmem:[%s9505 + $0x138] sm:$0xf]
    %v9585 = vld [vmem:[%s9505 + $0x13c] sm:$0xf]
    %v9586 = vld [vmem:[%s9505 + $0x140] sm:$0xf]
    %v9587 = vld [vmem:[%s9505 + $0x144] sm:$0xf]
    %v9588 = vld [vmem:[%s9505 + $0x148] sm:$0xf]
    %v9589 = vld [vmem:[%s9505 + $0x14c] sm:$0xf]
    %v9590 = vld [vmem:[%s9505 + $0x150] sm:$0xf]
    %v9591 = vld [vmem:[%s9505 + $0x154] sm:$0xf]
    %v9592 = vld [vmem:[%s9505 + $0x158] sm:$0xf]
    %v9593 = vld [vmem:[%s9505 + $0x15c] sm:$0xf]
    %v9594 = vld [vmem:[%s9505 + $0x160] sm:$0xf]
    %v9595 = vld [vmem:[%s9505 + $0x164] sm:$0xf]
    %v9596 = vld [vmem:[%s9505 + $0x168] sm:$0xf]
    %v9597 = vld [vmem:[%s9505 + $0x16c] sm:$0xf]
    %v9598 = vld [vmem:[%s9505 + $0x170] sm:$0xf]
    %v9599 = vld [vmem:[%s9505 + $0x174] sm:$0xf]
    %v9600 = vld [vmem:[%s9505 + $0x178] sm:$0xf]
    %v9601 = vld [vmem:[%s9505 + $0x17c] sm:$0xf]
    %v9602 = vld [vmem:[%s9505 + $0x180] sm:$0xf]
    %v9603 = vld [vmem:[%s9505 + $0x184] sm:$0xf]
    %v9604 = vld [vmem:[%s9505 + $0x188] sm:$0xf]
    %v9605 = vld [vmem:[%s9505 + $0x18c] sm:$0xf]
    %v9606 = vld [vmem:[%s9505 + $0x190] sm:$0xf]
    %v9607 = vld [vmem:[%s9505 + $0x194] sm:$0xf]
    %v9608 = vld [vmem:[%s9505 + $0x198] sm:$0xf]
    %v9609 = vld [vmem:[%s9505 + $0x19c] sm:$0xf]
    %v9610 = vld [vmem:[%s9505 + $0x1a0] sm:$0xf]
    %v9611 = vld [vmem:[%s9505 + $0x1a4] sm:$0xf]
    %v9612 = vld [vmem:[%s9505 + $0x1a8] sm:$0xf]
    %v9613 = vld [vmem:[%s9505 + $0x1ac] sm:$0xf]
    %v9614 = vld [vmem:[%s9505 + $0x1b0] sm:$0xf]
    %v9615 = vld [vmem:[%s9505 + $0x1b4] sm:$0xf]
    %v9616 = vld [vmem:[%s9505 + $0x1b8] sm:$0xf]
    %v9617 = vld [vmem:[%s9505 + $0x1bc] sm:$0xf]
    %v9618 = vld [vmem:[%s9505 + $0x1c0] sm:$0xf]
    %v9619 = vld [vmem:[%s9505 + $0x1c4] sm:$0xf]
    %v9620 = vld [vmem:[%s9505 + $0x1c8] sm:$0xf]
    %v9621 = vld [vmem:[%s9505 + $0x1cc] sm:$0xf]
    %v9622 = vld [vmem:[%s9505 + $0x1d0] sm:$0xf]
    %v9623 = vld [vmem:[%s9505 + $0x1d4] sm:$0xf]
    %v9624 = vld [vmem:[%s9505 + $0x1d8] sm:$0xf]
    %v9625 = vld [vmem:[%s9505 + $0x1dc] sm:$0xf]
    %v9626 = vld [vmem:[%s9505 + $0x1e0] sm:$0xf]
    %v9627 = vld [vmem:[%s9505 + $0x1e4] sm:$0xf]
    %v9628 = vld [vmem:[%s9505 + $0x1e8] sm:$0xf]
    %v9629 = vld [vmem:[%s9505 + $0x1ec] sm:$0xf]
    %v9630 = vld [vmem:[%s9505 + $0x1f0] sm:$0xf]
    %v9631 = vld [vmem:[%s9505 + $0x1f4] sm:$0xf]
    %v9632 = vld [vmem:[%s9505 + $0x1f8] sm:$0xf]
    %v9633 = vld [vmem:[%s9505 + $0x1fc] sm:$0xf]
    %v9634 = vld [vmem:[%s9505 + $0x200] sm:$0xf]
    %v9635 = vld [vmem:[%s9505 + $0x204] sm:$0xf]
    %v9636 = vld [vmem:[%s9505 + $0x208] sm:$0xf]
    %v9637 = vld [vmem:[%s9505 + $0x20c] sm:$0xf]
    %v9638 = vld [vmem:[%s9505 + $0x210] sm:$0xf]
    %v9639 = vld [vmem:[%s9505 + $0x214] sm:$0xf]
    %v9640 = vld [vmem:[%s9505 + $0x218] sm:$0xf]
    %v9641 = vld [vmem:[%s9505 + $0x21c] sm:$0xf]
    %v9642 = vld [vmem:[%s9505 + $0x220] sm:$0xf]
    %v9643 = vld [vmem:[%s9505 + $0x224] sm:$0xf]
    %v9644 = vld [vmem:[%s9505 + $0x228] sm:$0xf]
    %v9645 = vld [vmem:[%s9505 + $0x22c] sm:$0xf]
    %v9646 = vld [vmem:[%s9505 + $0x230] sm:$0xf]
    %v9647 = vld [vmem:[%s9505 + $0x234] sm:$0xf]
    %v9648 = vld [vmem:[%s9505 + $0x238] sm:$0xf]
    %v9649 = vld [vmem:[%s9505 + $0x23c] sm:$0xf]
    %v9650 = vld [vmem:[%s9505 + $0x240] sm:$0xf]
    %v9651 = vld [vmem:[%s9505 + $0x244] sm:$0xf]
    %v9652 = vld [vmem:[%s9505 + $0x248] sm:$0xf]
    %v9653 = vld [vmem:[%s9505 + $0x24c] sm:$0xf]
    %v9654 = vld [vmem:[%s9505 + $0x250] sm:$0xf]
    %v9655 = vld [vmem:[%s9505 + $0x254] sm:$0xf]
    %v9656 = vld [vmem:[%s9505 + $0x258] sm:$0xf]
    %v9657 = vld [vmem:[%s9505 + $0x25c] sm:$0xf]
    %v9658 = vld [vmem:[%s9505 + $0x260] sm:$0xf]
    %v9659 = vld [vmem:[%s9505 + $0x264] sm:$0xf]
    %v9660 = vld [vmem:[%s9505 + $0x268] sm:$0xf]
    %v9661 = vld [vmem:[%s9505 + $0x26c] sm:$0xf]
    %v9662 = vld [vmem:[%s9505 + $0x270] sm:$0xf]
    %v9663 = vld [vmem:[%s9505 + $0x274] sm:$0xf]
    %v9664 = vld [vmem:[%s9505 + $0x278] sm:$0xf]
    %v9665 = vld [vmem:[%s9505 + $0x27c] sm:$0xf]
    %v9666 = vld [vmem:[%s9505 + $0x280] sm:$0xf]
    %v9667 = vld [vmem:[%s9505 + $0x284] sm:$0xf]
    %v9668 = vld [vmem:[%s9505 + $0x288] sm:$0xf]
    %v9669 = vld [vmem:[%s9505 + $0x28c] sm:$0xf]
    %v9670 = vld [vmem:[%s9505 + $0x290] sm:$0xf]
    %v9671 = vld [vmem:[%s9505 + $0x294] sm:$0xf]
    %v9672 = vld [vmem:[%s9505 + $0x298] sm:$0xf]
    %v9673 = vld [vmem:[%s9505 + $0x29c] sm:$0xf]
    %v9674 = vld [vmem:[%s9505 + $0x2a0] sm:$0xf]
    %v9675 = vld [vmem:[%s9505 + $0x2a4] sm:$0xf]
    %v9676 = vld [vmem:[%s9505 + $0x2a8] sm:$0xf]
    %v9677 = vld [vmem:[%s9505 + $0x2ac] sm:$0xf]
    %v9678 = vld [vmem:[%s9505 + $0x2b0] sm:$0xf]
    %v9679 = vld [vmem:[%s9505 + $0x2b4] sm:$0xf]
    %v9680 = vld [vmem:[%s9505 + $0x2b8] sm:$0xf]
    %v9681 = vld [vmem:[%s9505 + $0x2bc] sm:$0xf]
    %v9682 = vld [vmem:[%s9505 + $0x2c0] sm:$0xf]
    %v9683 = vld [vmem:[%s9505 + $0x2c4] sm:$0xf]
    %v9684 = vld [vmem:[%s9505 + $0x2c8] sm:$0xf]
    %v9685 = vld [vmem:[%s9505 + $0x2cc] sm:$0xf]
    %v9686 = vld [vmem:[%s9505 + $0x2d0] sm:$0xf]
    %v9687 = vld [vmem:[%s9505 + $0x2d4] sm:$0xf]
    %v9688 = vld [vmem:[%s9505 + $0x2d8] sm:$0xf]
    %v9689 = vld [vmem:[%s9505 + $0x2dc] sm:$0xf]
    %v9690 = vld [vmem:[%s9505 + $0x2e0] sm:$0xf]
    %v9691 = vld [vmem:[%s9505 + $0x2e4] sm:$0xf]
    %v9692 = vld [vmem:[%s9505 + $0x2e8] sm:$0xf]
    %v9693 = vld [vmem:[%s9505 + $0x2ec] sm:$0xf]
    %v9694 = vld [vmem:[%s9505 + $0x2f0] sm:$0xf]
    %v9695 = vld [vmem:[%s9505 + $0x2f4] sm:$0xf]
    %v9696 = vld [vmem:[%s9505 + $0x2f8] sm:$0xf]
    %v9697 = vld [vmem:[%s9505 + $0x2fc] sm:$0xf]
    %v9698 = vld [vmem:[%s9505 + $0x300] sm:$0xf]
    %v9699 = vld [vmem:[%s9505 + $0x304] sm:$0xf]
    %v9700 = vld [vmem:[%s9505 + $0x308] sm:$0xf]
    %v9701 = vld [vmem:[%s9505 + $0x30c] sm:$0xf]
    %v9702 = vld [vmem:[%s9505 + $0x310] sm:$0xf]
    %v9703 = vld [vmem:[%s9505 + $0x314] sm:$0xf]
    %v9704 = vld [vmem:[%s9505 + $0x318] sm:$0xf]
    %v9705 = vld [vmem:[%s9505 + $0x31c] sm:$0xf]
    %v9706 = vld [vmem:[%s9505 + $0x320] sm:$0xf]
    %v9707 = vld [vmem:[%s9505 + $0x324] sm:$0xf]
    %v9708 = vld [vmem:[%s9505 + $0x328] sm:$0xf]
    %v9709 = vld [vmem:[%s9505 + $0x32c] sm:$0xf]
    %v9710 = vld [vmem:[%s9505 + $0x330] sm:$0xf]
    %v9711 = vld [vmem:[%s9505 + $0x334] sm:$0xf]
    %v9712 = vld [vmem:[%s9505 + $0x338] sm:$0xf]
    %v9713 = vld [vmem:[%s9505 + $0x33c] sm:$0xf]
    %v9714 = vld [vmem:[%s9505 + $0x340] sm:$0xf]
    %v9715 = vld [vmem:[%s9505 + $0x344] sm:$0xf]
    %v9716 = vld [vmem:[%s9505 + $0x348] sm:$0xf]
    %v9717 = vld [vmem:[%s9505 + $0x34c] sm:$0xf]
    %v9718 = vld [vmem:[%s9505 + $0x350] sm:$0xf]
    %v9719 = vld [vmem:[%s9505 + $0x354] sm:$0xf]
    %v9720 = vld [vmem:[%s9505 + $0x358] sm:$0xf]
    %v9721 = vld [vmem:[%s9505 + $0x35c] sm:$0xf]
    %v9722 = vld [vmem:[%s9505 + $0x360] sm:$0xf]
    %v9723 = vld [vmem:[%s9505 + $0x364] sm:$0xf]
    %v9724 = vld [vmem:[%s9505 + $0x368] sm:$0xf]
    %v9725 = vld [vmem:[%s9505 + $0x36c] sm:$0xf]
    %v9726 = vld [vmem:[%s9505 + $0x370] sm:$0xf]
    %v9727 = vld [vmem:[%s9505 + $0x374] sm:$0xf]
    %v9728 = vld [vmem:[%s9505 + $0x378] sm:$0xf]
    %v9729 = vld [vmem:[%s9505 + $0x37c] sm:$0xf]
    %v9730 = vld [vmem:[%s9505 + $0x380] sm:$0xf]
    %v9731 = vld [vmem:[%s9505 + $0x384] sm:$0xf]
    %v9732 = vld [vmem:[%s9505 + $0x388] sm:$0xf]
    %v9733 = vld [vmem:[%s9505 + $0x38c] sm:$0xf]
    %v9734 = vld [vmem:[%s9505 + $0x390] sm:$0xf]
    %v9735 = vld [vmem:[%s9505 + $0x394] sm:$0xf]
    %v9736 = vld [vmem:[%s9505 + $0x398] sm:$0xf]
    %v9737 = vld [vmem:[%s9505 + $0x39c] sm:$0xf]
    %v9738 = vld [vmem:[%s9505 + $0x3a0] sm:$0xf]
    %v9739 = vld [vmem:[%s9505 + $0x3a4] sm:$0xf]
    %v9740 = vld [vmem:[%s9505 + $0x3a8] sm:$0xf]
    %v9741 = vld [vmem:[%s9505 + $0x3ac] sm:$0xf]
    %v9742 = vld [vmem:[%s9505 + $0x3b0] sm:$0xf]
    %v9743 = vld [vmem:[%s9505 + $0x3b4] sm:$0xf]
    %v9744 = vld [vmem:[%s9505 + $0x3b8] sm:$0xf]
    %v9745 = vld [vmem:[%s9505 + $0x3bc] sm:$0xf]
    %v9746 = vld [vmem:[%s9505 + $0x3c0] sm:$0xf]
    %v9747 = vld [vmem:[%s9505 + $0x3c4] sm:$0xf]
    %v9748 = vld [vmem:[%s9505 + $0x3c8] sm:$0xf]
    %v9749 = vld [vmem:[%s9505 + $0x3cc] sm:$0xf]
    %v9750 = vld [vmem:[%s9505 + $0x3d0] sm:$0xf]
    %v9751 = vld [vmem:[%s9505 + $0x3d4] sm:$0xf]
    %v9752 = vld [vmem:[%s9505 + $0x3d8] sm:$0xf]
    %v9753 = vld [vmem:[%s9505 + $0x3dc] sm:$0xf]
    %v9754 = vld [vmem:[%s9505 + $0x3e0] sm:$0xf]
    %v9755 = vld [vmem:[%s9505 + $0x3e4] sm:$0xf]
    %v9756 = vld [vmem:[%s9505 + $0x3e8] sm:$0xf]
    %v9757 = vld [vmem:[%s9505 + $0x3ec] sm:$0xf]
    %v9758 = vld [vmem:[%s9505 + $0x3f0] sm:$0xf]
    %v9759 = vld [vmem:[%s9505 + $0x3f4] sm:$0xf]
    %v9760 = vld [vmem:[%s9505 + $0x3f8] sm:$0xf]
    %v9761 = vld [vmem:[%s9505 + $0x3fc] sm:$0xf]
    %s9762 = scalar_lea.vmem %s14, 1
    %v9763 = vld [vmem:[%s9762] sm:$0x1]
    %v9765 = vperm.slane %v9763, 0
    %v10023 = vunpack.c.l.b16 %v9506
    %v10024 = vunpack.c.l.b16 %v9507
    %v10025 = vunpack.c.l.b16 %v9508
    %v10026 = vunpack.c.l.b16 %v9509
    %v10027 = vunpack.c.l.b16 %v9510
    %v10028 = vunpack.c.l.b16 %v9511
    %v10029 = vunpack.c.l.b16 %v9512
    %v10030 = vunpack.c.l.b16 %v9513
    %v10031 = vunpack.c.l.b16 %v9514
    %v10032 = vunpack.c.l.b16 %v9515
    %v10033 = vunpack.c.l.b16 %v9516
    %v10034 = vunpack.c.l.b16 %v9517
    %v10035 = vunpack.c.l.b16 %v9518
    %v10036 = vunpack.c.l.b16 %v9519
    %v10037 = vunpack.c.l.b16 %v9520
    %v10038 = vunpack.c.l.b16 %v9521
    %v10039 = vunpack.c.l.b16 %v9522
    %v10040 = vunpack.c.l.b16 %v9523
    %v10041 = vunpack.c.l.b16 %v9524
    %v10042 = vunpack.c.l.b16 %v9525
    %v10043 = vunpack.c.l.b16 %v9526
    %v10044 = vunpack.c.l.b16 %v9527
    %v10045 = vunpack.c.l.b16 %v9528
    %v10046 = vunpack.c.l.b16 %v9529
    %v10047 = vunpack.c.l.b16 %v9530
    %v10048 = vunpack.c.l.b16 %v9531
    %v10049 = vunpack.c.l.b16 %v9532
    %v10050 = vunpack.c.l.b16 %v9533
    %v10051 = vunpack.c.l.b16 %v9534
    %v10052 = vunpack.c.l.b16 %v9535
    %v10053 = vunpack.c.l.b16 %v9536
    %v10054 = vunpack.c.l.b16 %v9537
    %v10055 = vunpack.c.l.b16 %v9538
    %v10056 = vunpack.c.l.b16 %v9539
    %v10057 = vunpack.c.l.b16 %v9540
    %v10058 = vunpack.c.l.b16 %v9541
    %v10059 = vunpack.c.l.b16 %v9542
    %v10060 = vunpack.c.l.b16 %v9543
    %v10061 = vunpack.c.l.b16 %v9544
    %v10062 = vunpack.c.l.b16 %v9545
    %v10063 = vunpack.c.l.b16 %v9546
    %v10064 = vunpack.c.l.b16 %v9547
    %v10065 = vunpack.c.l.b16 %v9548
    %v10066 = vunpack.c.l.b16 %v9549
    %v10067 = vunpack.c.l.b16 %v9550
    %v10068 = vunpack.c.l.b16 %v9551
    %v10069 = vunpack.c.l.b16 %v9552
    %v10070 = vunpack.c.l.b16 %v9553
    %v10071 = vunpack.c.l.b16 %v9554
    %v10072 = vunpack.c.l.b16 %v9555
    %v10073 = vunpack.c.l.b16 %v9556
    %v10074 = vunpack.c.l.b16 %v9557
    %v10075 = vunpack.c.l.b16 %v9558
    %v10076 = vunpack.c.l.b16 %v9559
    %v10077 = vunpack.c.l.b16 %v9560
    %v10078 = vunpack.c.l.b16 %v9561
    %v10079 = vunpack.c.l.b16 %v9562
    %v10080 = vunpack.c.l.b16 %v9563
    %v10081 = vunpack.c.l.b16 %v9564
    %v10082 = vunpack.c.l.b16 %v9565
    %v10083 = vunpack.c.l.b16 %v9566
    %v10084 = vunpack.c.l.b16 %v9567
    %v10085 = vunpack.c.l.b16 %v9568
    %v10086 = vunpack.c.l.b16 %v9569
    %v10087 = vunpack.c.l.b16 %v9570
    %v10088 = vunpack.c.l.b16 %v9571
    %v10089 = vunpack.c.l.b16 %v9572
    %v10090 = vunpack.c.l.b16 %v9573
    %v10091 = vunpack.c.l.b16 %v9574
    %v10092 = vunpack.c.l.b16 %v9575
    %v10093 = vunpack.c.l.b16 %v9576
    %v10094 = vunpack.c.l.b16 %v9577
    %v10095 = vunpack.c.l.b16 %v9578
    %v10096 = vunpack.c.l.b16 %v9579
    %v10097 = vunpack.c.l.b16 %v9580
    %v10098 = vunpack.c.l.b16 %v9581
    %v10099 = vunpack.c.l.b16 %v9582
    %v10100 = vunpack.c.l.b16 %v9583
    %v10101 = vunpack.c.l.b16 %v9584
    %v10102 = vunpack.c.l.b16 %v9585
    %v10103 = vunpack.c.l.b16 %v9586
    %v10104 = vunpack.c.l.b16 %v9587
    %v10105 = vunpack.c.l.b16 %v9588
    %v10106 = vunpack.c.l.b16 %v9589
    %v10107 = vunpack.c.l.b16 %v9590
    %v10108 = vunpack.c.l.b16 %v9591
    %v10109 = vunpack.c.l.b16 %v9592
    %v10110 = vunpack.c.l.b16 %v9593
    %v10111 = vunpack.c.l.b16 %v9594
    %v10112 = vunpack.c.l.b16 %v9595
    %v10113 = vunpack.c.l.b16 %v9596
    %v10114 = vunpack.c.l.b16 %v9597
    %v10115 = vunpack.c.l.b16 %v9598
    %v10116 = vunpack.c.l.b16 %v9599
    %v10117 = vunpack.c.l.b16 %v9600
    %v10118 = vunpack.c.l.b16 %v9601
    %v10119 = vunpack.c.l.b16 %v9602
    %v10120 = vunpack.c.l.b16 %v9603
    %v10121 = vunpack.c.l.b16 %v9604
    %v10122 = vunpack.c.l.b16 %v9605
    %v10123 = vunpack.c.l.b16 %v9606
    %v10124 = vunpack.c.l.b16 %v9607
    %v10125 = vunpack.c.l.b16 %v9608
    %v10126 = vunpack.c.l.b16 %v9609
    %v10127 = vunpack.c.l.b16 %v9610
    %v10128 = vunpack.c.l.b16 %v9611
    %v10129 = vunpack.c.l.b16 %v9612
    %v10130 = vunpack.c.l.b16 %v9613
    %v10131 = vunpack.c.l.b16 %v9614
    %v10132 = vunpack.c.l.b16 %v9615
    %v10133 = vunpack.c.l.b16 %v9616
    %v10134 = vunpack.c.l.b16 %v9617
    %v10135 = vunpack.c.l.b16 %v9618
    %v10136 = vunpack.c.l.b16 %v9619
    %v10137 = vunpack.c.l.b16 %v9620
    %v10138 = vunpack.c.l.b16 %v9621
    %v10139 = vunpack.c.l.b16 %v9622
    %v10140 = vunpack.c.l.b16 %v9623
    %v10141 = vunpack.c.l.b16 %v9624
    %v10142 = vunpack.c.l.b16 %v9625
    %v10143 = vunpack.c.l.b16 %v9626
    %v10144 = vunpack.c.l.b16 %v9627
    %v10145 = vunpack.c.l.b16 %v9628
    %v10146 = vunpack.c.l.b16 %v9629
    %v10147 = vunpack.c.l.b16 %v9630
    %v10148 = vunpack.c.l.b16 %v9631
    %v10149 = vunpack.c.l.b16 %v9632
    %v10150 = vunpack.c.l.b16 %v9633
    %v10151 = vunpack.c.l.b16 %v9634
    %v10152 = vunpack.c.l.b16 %v9635
    %v10153 = vunpack.c.l.b16 %v9636
    %v10154 = vunpack.c.l.b16 %v9637
    %v10155 = vunpack.c.l.b16 %v9638
    %v10156 = vunpack.c.l.b16 %v9639
    %v10157 = vunpack.c.l.b16 %v9640
    %v10158 = vunpack.c.l.b16 %v9641
    %v10159 = vunpack.c.l.b16 %v9642
    %v10160 = vunpack.c.l.b16 %v9643
    %v10161 = vunpack.c.l.b16 %v9644
    %v10162 = vunpack.c.l.b16 %v9645
    %v10163 = vunpack.c.l.b16 %v9646
    %v10164 = vunpack.c.l.b16 %v9647
    %v10165 = vunpack.c.l.b16 %v9648
    %v10166 = vunpack.c.l.b16 %v9649
    %v10167 = vunpack.c.l.b16 %v9650
    %v10168 = vunpack.c.l.b16 %v9651
    %v10169 = vunpack.c.l.b16 %v9652
    %v10170 = vunpack.c.l.b16 %v9653
    %v10171 = vunpack.c.l.b16 %v9654
    %v10172 = vunpack.c.l.b16 %v9655
    %v10173 = vunpack.c.l.b16 %v9656
    %v10174 = vunpack.c.l.b16 %v9657
    %v10175 = vunpack.c.l.b16 %v9658
    %v10176 = vunpack.c.l.b16 %v9659
    %v10177 = vunpack.c.l.b16 %v9660
    %v10178 = vunpack.c.l.b16 %v9661
    %v10179 = vunpack.c.l.b16 %v9662
    %v10180 = vunpack.c.l.b16 %v9663
    %v10181 = vunpack.c.l.b16 %v9664
    %v10182 = vunpack.c.l.b16 %v9665
    %v10183 = vunpack.c.l.b16 %v9666
    %v10184 = vunpack.c.l.b16 %v9667
    %v10185 = vunpack.c.l.b16 %v9668
    %v10186 = vunpack.c.l.b16 %v9669
    %v10187 = vunpack.c.l.b16 %v9670
    %v10188 = vunpack.c.l.b16 %v9671
    %v10189 = vunpack.c.l.b16 %v9672
    %v10190 = vunpack.c.l.b16 %v9673
    %v10191 = vunpack.c.l.b16 %v9674
    %v10192 = vunpack.c.l.b16 %v9675
    %v10193 = vunpack.c.l.b16 %v9676
    %v10194 = vunpack.c.l.b16 %v9677
    %v10195 = vunpack.c.l.b16 %v9678
    %v10196 = vunpack.c.l.b16 %v9679
    %v10197 = vunpack.c.l.b16 %v9680
    %v10198 = vunpack.c.l.b16 %v9681
    %v10199 = vunpack.c.l.b16 %v9682
    %v10200 = vunpack.c.l.b16 %v9683
    %v10201 = vunpack.c.l.b16 %v9684
    %v10202 = vunpack.c.l.b16 %v9685
    %v10203 = vunpack.c.l.b16 %v9686
    %v10204 = vunpack.c.l.b16 %v9687
    %v10205 = vunpack.c.l.b16 %v9688
    %v10206 = vunpack.c.l.b16 %v9689
    %v10207 = vunpack.c.l.b16 %v9690
    %v10208 = vunpack.c.l.b16 %v9691
    %v10209 = vunpack.c.l.b16 %v9692
    %v10210 = vunpack.c.l.b16 %v9693
    %v10211 = vunpack.c.l.b16 %v9694
    %v10212 = vunpack.c.l.b16 %v9695
    %v10213 = vunpack.c.l.b16 %v9696
    %v10214 = vunpack.c.l.b16 %v9697
    %v10215 = vunpack.c.l.b16 %v9698
    %v10216 = vunpack.c.l.b16 %v9699
    %v10217 = vunpack.c.l.b16 %v9700
    %v10218 = vunpack.c.l.b16 %v9701
    %v10219 = vunpack.c.l.b16 %v9702
    %v10220 = vunpack.c.l.b16 %v9703
    %v10221 = vunpack.c.l.b16 %v9704
    %v10222 = vunpack.c.l.b16 %v9705
    %v10223 = vunpack.c.l.b16 %v9706
    %v10224 = vunpack.c.l.b16 %v9707
    %v10225 = vunpack.c.l.b16 %v9708
    %v10226 = vunpack.c.l.b16 %v9709
    %v10227 = vunpack.c.l.b16 %v9710
    %v10228 = vunpack.c.l.b16 %v9711
    %v10229 = vunpack.c.l.b16 %v9712
    %v10230 = vunpack.c.l.b16 %v9713
    %v10231 = vunpack.c.l.b16 %v9714
    %v10232 = vunpack.c.l.b16 %v9715
    %v10233 = vunpack.c.l.b16 %v9716
    %v10234 = vunpack.c.l.b16 %v9717
    %v10235 = vunpack.c.l.b16 %v9718
    %v10236 = vunpack.c.l.b16 %v9719
    %v10237 = vunpack.c.l.b16 %v9720
    %v10238 = vunpack.c.l.b16 %v9721
    %v10239 = vunpack.c.l.b16 %v9722
    %v10240 = vunpack.c.l.b16 %v9723
    %v10241 = vunpack.c.l.b16 %v9724
    %v10242 = vunpack.c.l.b16 %v9725
    %v10243 = vunpack.c.l.b16 %v9726
    %v10244 = vunpack.c.l.b16 %v9727
    %v10245 = vunpack.c.l.b16 %v9728
    %v10246 = vunpack.c.l.b16 %v9729
    %v10247 = vunpack.c.l.b16 %v9730
    %v10248 = vunpack.c.l.b16 %v9731
    %v10249 = vunpack.c.l.b16 %v9732
    %v10250 = vunpack.c.l.b16 %v9733
    %v10251 = vunpack.c.l.b16 %v9734
    %v10252 = vunpack.c.l.b16 %v9735
    %v10253 = vunpack.c.l.b16 %v9736
    %v10254 = vunpack.c.l.b16 %v9737
    %v10255 = vunpack.c.l.b16 %v9738
    %v10256 = vunpack.c.l.b16 %v9739
    %v10257 = vunpack.c.l.b16 %v9740
    %v10258 = vunpack.c.l.b16 %v9741
    %v10259 = vunpack.c.l.b16 %v9742
    %v10260 = vunpack.c.l.b16 %v9743
    %v10261 = vunpack.c.l.b16 %v9744
    %v10262 = vunpack.c.l.b16 %v9745
    %v10263 = vunpack.c.l.b16 %v9746
    %v10264 = vunpack.c.l.b16 %v9747
    %v10265 = vunpack.c.l.b16 %v9748
    %v10266 = vunpack.c.l.b16 %v9749
    %v10267 = vunpack.c.l.b16 %v9750
    %v10268 = vunpack.c.l.b16 %v9751
    %v10269 = vunpack.c.l.b16 %v9752
    %v10270 = vunpack.c.l.b16 %v9753
    %v10271 = vunpack.c.l.b16 %v9754
    %v10272 = vunpack.c.l.b16 %v9755
    %v10273 = vunpack.c.l.b16 %v9756
    %v10274 = vunpack.c.l.b16 %v9757
    %v10275 = vunpack.c.l.b16 %v9758
    %v10276 = vunpack.c.l.b16 %v9759
    %v10277 = vunpack.c.l.b16 %v9760
    %v10278 = vunpack.c.l.b16 %v9761
    %v10279 = vpack.c.b16 %v10024, %v10023
    %v10280 = vpack.c.b16 %v10026, %v10025
    %v10281 = vpack.c.b16 %v10028, %v10027
    %v10282 = vpack.c.b16 %v10030, %v10029
    %v10283 = vpack.c.b16 %v10032, %v10031
    %v10284 = vpack.c.b16 %v10034, %v10033
    %v10285 = vpack.c.b16 %v10036, %v10035
    %v10286 = vpack.c.b16 %v10038, %v10037
    %v10287 = vpack.c.b16 %v10040, %v10039
    %v10288 = vpack.c.b16 %v10042, %v10041
    %v10289 = vpack.c.b16 %v10044, %v10043
    %v10290 = vpack.c.b16 %v10046, %v10045
    %v10291 = vpack.c.b16 %v10048, %v10047
    %v10292 = vpack.c.b16 %v10050, %v10049
    %v10293 = vpack.c.b16 %v10052, %v10051
    %v10294 = vpack.c.b16 %v10054, %v10053
    %v10295 = vpack.c.b16 %v10056, %v10055
    %v10296 = vpack.c.b16 %v10058, %v10057
    %v10297 = vpack.c.b16 %v10060, %v10059
    %v10298 = vpack.c.b16 %v10062, %v10061
    %v10299 = vpack.c.b16 %v10064, %v10063
    %v10300 = vpack.c.b16 %v10066, %v10065
    %v10301 = vpack.c.b16 %v10068, %v10067
    %v10302 = vpack.c.b16 %v10070, %v10069
    %v10303 = vpack.c.b16 %v10072, %v10071
    %v10304 = vpack.c.b16 %v10074, %v10073
    %v10305 = vpack.c.b16 %v10076, %v10075
    %v10306 = vpack.c.b16 %v10078, %v10077
    %v10307 = vpack.c.b16 %v10080, %v10079
    %v10308 = vpack.c.b16 %v10082, %v10081
    %v10309 = vpack.c.b16 %v10084, %v10083
    %v10310 = vpack.c.b16 %v10086, %v10085
    %v10311 = vpack.c.b16 %v10088, %v10087
    %v10312 = vpack.c.b16 %v10090, %v10089
    %v10313 = vpack.c.b16 %v10092, %v10091
    %v10314 = vpack.c.b16 %v10094, %v10093
    %v10315 = vpack.c.b16 %v10096, %v10095
    %v10316 = vpack.c.b16 %v10098, %v10097
    %v10317 = vpack.c.b16 %v10100, %v10099
    %v10318 = vpack.c.b16 %v10102, %v10101
    %v10319 = vpack.c.b16 %v10104, %v10103
    %v10320 = vpack.c.b16 %v10106, %v10105
    %v10321 = vpack.c.b16 %v10108, %v10107
    %v10322 = vpack.c.b16 %v10110, %v10109
    %v10323 = vpack.c.b16 %v10112, %v10111
    %v10324 = vpack.c.b16 %v10114, %v10113
    %v10325 = vpack.c.b16 %v10116, %v10115
    %v10326 = vpack.c.b16 %v10118, %v10117
    %v10327 = vpack.c.b16 %v10120, %v10119
    %v10328 = vpack.c.b16 %v10122, %v10121
    %v10329 = vpack.c.b16 %v10124, %v10123
    %v10330 = vpack.c.b16 %v10126, %v10125
    %v10331 = vpack.c.b16 %v10128, %v10127
    %v10332 = vpack.c.b16 %v10130, %v10129
    %v10333 = vpack.c.b16 %v10132, %v10131
    %v10334 = vpack.c.b16 %v10134, %v10133
    %v10335 = vpack.c.b16 %v10136, %v10135
    %v10336 = vpack.c.b16 %v10138, %v10137
    %v10337 = vpack.c.b16 %v10140, %v10139
    %v10338 = vpack.c.b16 %v10142, %v10141
    %v10339 = vpack.c.b16 %v10144, %v10143
    %v10340 = vpack.c.b16 %v10146, %v10145
    %v10341 = vpack.c.b16 %v10148, %v10147
    %v10342 = vpack.c.b16 %v10150, %v10149
    %v10343 = vpack.c.b16 %v10152, %v10151
    %v10344 = vpack.c.b16 %v10154, %v10153
    %v10345 = vpack.c.b16 %v10156, %v10155
    %v10346 = vpack.c.b16 %v10158, %v10157
    %v10347 = vpack.c.b16 %v10160, %v10159
    %v10348 = vpack.c.b16 %v10162, %v10161
    %v10349 = vpack.c.b16 %v10164, %v10163
    %v10350 = vpack.c.b16 %v10166, %v10165
    %v10351 = vpack.c.b16 %v10168, %v10167
    %v10352 = vpack.c.b16 %v10170, %v10169
    %v10353 = vpack.c.b16 %v10172, %v10171
    %v10354 = vpack.c.b16 %v10174, %v10173
    %v10355 = vpack.c.b16 %v10176, %v10175
    %v10356 = vpack.c.b16 %v10178, %v10177
    %v10357 = vpack.c.b16 %v10180, %v10179
    %v10358 = vpack.c.b16 %v10182, %v10181
    %v10359 = vpack.c.b16 %v10184, %v10183
    %v10360 = vpack.c.b16 %v10186, %v10185
    %v10361 = vpack.c.b16 %v10188, %v10187
    %v10362 = vpack.c.b16 %v10190, %v10189
    %v10363 = vpack.c.b16 %v10192, %v10191
    %v10364 = vpack.c.b16 %v10194, %v10193
    %v10365 = vpack.c.b16 %v10196, %v10195
    %v10366 = vpack.c.b16 %v10198, %v10197
    %v10367 = vpack.c.b16 %v10200, %v10199
    %v10368 = vpack.c.b16 %v10202, %v10201
    %v10369 = vpack.c.b16 %v10204, %v10203
    %v10370 = vpack.c.b16 %v10206, %v10205
    %v10371 = vpack.c.b16 %v10208, %v10207
    %v10372 = vpack.c.b16 %v10210, %v10209
    %v10373 = vpack.c.b16 %v10212, %v10211
    %v10374 = vpack.c.b16 %v10214, %v10213
    %v10375 = vpack.c.b16 %v10216, %v10215
    %v10376 = vpack.c.b16 %v10218, %v10217
    %v10377 = vpack.c.b16 %v10220, %v10219
    %v10378 = vpack.c.b16 %v10222, %v10221
    %v10379 = vpack.c.b16 %v10224, %v10223
    %v10380 = vpack.c.b16 %v10226, %v10225
    %v10381 = vpack.c.b16 %v10228, %v10227
    %v10382 = vpack.c.b16 %v10230, %v10229
    %v10383 = vpack.c.b16 %v10232, %v10231
    %v10384 = vpack.c.b16 %v10234, %v10233
    %v10385 = vpack.c.b16 %v10236, %v10235
    %v10386 = vpack.c.b16 %v10238, %v10237
    %v10387 = vpack.c.b16 %v10240, %v10239
    %v10388 = vpack.c.b16 %v10242, %v10241
    %v10389 = vpack.c.b16 %v10244, %v10243
    %v10390 = vpack.c.b16 %v10246, %v10245
    %v10391 = vpack.c.b16 %v10248, %v10247
    %v10392 = vpack.c.b16 %v10250, %v10249
    %v10393 = vpack.c.b16 %v10252, %v10251
    %v10394 = vpack.c.b16 %v10254, %v10253
    %v10395 = vpack.c.b16 %v10256, %v10255
    %v10396 = vpack.c.b16 %v10258, %v10257
    %v10397 = vpack.c.b16 %v10260, %v10259
    %v10398 = vpack.c.b16 %v10262, %v10261
    %v10399 = vpack.c.b16 %v10264, %v10263
    %v10400 = vpack.c.b16 %v10266, %v10265
    %v10401 = vpack.c.b16 %v10268, %v10267
    %v10402 = vpack.c.b16 %v10270, %v10269
    %v10403 = vpack.c.b16 %v10272, %v10271
    %v10404 = vpack.c.b16 %v10274, %v10273
    %v10405 = vpack.c.b16 %v10276, %v10275
    %v10406 = vpack.c.b16 %v10278, %v10277
    %10535 = vmatpush.bf16.msra.mxu0 %v10286
    %10536 = vmatpush.bf16.msra.mxu0 %v10285
    %10537 = vmatpush.bf16.msra.mxu0 %v10284
    %10538 = vmatpush.bf16.msra.mxu0 %v10283
    %10539 = vmatpush.bf16.msra.mxu0 %v10282
    %10540 = vmatpush.bf16.msra.mxu0 %v10281
    %10541 = vmatpush.bf16.msra.mxu0 %v10280
    %10542 = vmatpush.bf16.msra.mxu0 %v10279
    %10543 = vmatmul.bf16.gmra.mxu0 %v9441
    %v10544 = vpop.f32.mrf.mxu0
    %v10545 = vadd.f32 %v9765, %v10544
    %v10546 = vpop.f32.mrf.mxu0
    %v10547 = vadd.f32 %v9765, %v10546
    %10548 = vmatmul.bf16.gmra.mxu0 %v9457
    %v10549 = vpop.f32.mrf.mxu0
    %v10550 = vadd.f32 %v9765, %v10549
    %v10551 = vpop.f32.mrf.mxu0
    %v10552 = vadd.f32 %v9765, %v10551
    %10553 = vmatmul.bf16.gmra.mxu0 %v9473
    %v10554 = vpop.f32.mrf.mxu0
    %v10555 = vadd.f32 %v9765, %v10554
    %v10556 = vpop.f32.mrf.mxu0
    %v10557 = vadd.f32 %v9765, %v10556
    %10558 = vmatmul.bf16.gmra.mxu0 %v9489
    %v10559 = vpop.f32.mrf.mxu0
    %v10560 = vadd.f32 %v9765, %v10559
    %v10561 = vpop.f32.mrf.mxu0
    %v10562 = vadd.f32 %v9765, %v10561
    %10563 = vdwg.mxu0
    %10564 = vmatpush.bf16.msra.mxu0 %v10294
    %10565 = vmatpush.bf16.msra.mxu0 %v10293
    %10566 = vmatpush.bf16.msra.mxu0 %v10292
    %10567 = vmatpush.bf16.msra.mxu0 %v10291
    %10568 = vmatpush.bf16.msra.mxu0 %v10290
    %10569 = vmatpush.bf16.msra.mxu0 %v10289
    %10570 = vmatpush.bf16.msra.mxu0 %v10288
    %10571 = vmatpush.bf16.msra.mxu0 %v10287
    %10572 = vmatmul.bf16.gmra.mxu0 %v9442
    %v10573 = vpop.f32.mrf.mxu0
    %v10574 = vadd.f32 %v10545, %v10573
    %v10575 = vpop.f32.mrf.mxu0
    %v10576 = vadd.f32 %v10547, %v10575
    %10577 = vmatmul.bf16.gmra.mxu0 %v9458
    %v10578 = vpop.f32.mrf.mxu0
    %v10579 = vadd.f32 %v10550, %v10578
    %v10580 = vpop.f32.mrf.mxu0
    %v10581 = vadd.f32 %v10552, %v10580
    %10582 = vmatmul.bf16.gmra.mxu0 %v9474
    %v10583 = vpop.f32.mrf.mxu0
    %v10584 = vadd.f32 %v10555, %v10583
    %v10585 = vpop.f32.mrf.mxu0
    %v10586 = vadd.f32 %v10557, %v10585
    %10587 = vmatmul.bf16.gmra.mxu0 %v9490
    %v10588 = vpop.f32.mrf.mxu0
    %v10589 = vadd.f32 %v10560, %v10588
    %v10590 = vpop.f32.mrf.mxu0
    %v10591 = vadd.f32 %v10562, %v10590
    %10592 = vdwg.mxu0
    %10593 = vmatpush.bf16.msra.mxu0 %v10302
    %10594 = vmatpush.bf16.msra.mxu0 %v10301
    %10595 = vmatpush.bf16.msra.mxu0 %v10300
    %10596 = vmatpush.bf16.msra.mxu0 %v10299
    %10597 = vmatpush.bf16.msra.mxu0 %v10298
    %10598 = vmatpush.bf16.msra.mxu0 %v10297
    %10599 = vmatpush.bf16.msra.mxu0 %v10296
    %10600 = vmatpush.bf16.msra.mxu0 %v10295
    %10601 = vmatmul.bf16.gmra.mxu0 %v9443
    %v10602 = vpop.f32.mrf.mxu0
    %v10603 = vadd.f32 %v10574, %v10602
    %v10604 = vpop.f32.mrf.mxu0
    %v10605 = vadd.f32 %v10576, %v10604
    %10606 = vmatmul.bf16.gmra.mxu0 %v9459
    %v10607 = vpop.f32.mrf.mxu0
    %v10608 = vadd.f32 %v10579, %v10607
    %v10609 = vpop.f32.mrf.mxu0
    %v10610 = vadd.f32 %v10581, %v10609
    %10611 = vmatmul.bf16.gmra.mxu0 %v9475
    %v10612 = vpop.f32.mrf.mxu0
    %v10613 = vadd.f32 %v10584, %v10612
    %v10614 = vpop.f32.mrf.mxu0
    %v10615 = vadd.f32 %v10586, %v10614
    %10616 = vmatmul.bf16.gmra.mxu0 %v9491
    %v10617 = vpop.f32.mrf.mxu0
    %v10618 = vadd.f32 %v10589, %v10617
    %v10619 = vpop.f32.mrf.mxu0
    %v10620 = vadd.f32 %v10591, %v10619
    %10621 = vdwg.mxu0
    %10622 = vmatpush.bf16.msra.mxu0 %v10310
    %10623 = vmatpush.bf16.msra.mxu0 %v10309
    %10624 = vmatpush.bf16.msra.mxu0 %v10308
    %10625 = vmatpush.bf16.msra.mxu0 %v10307
    %10626 = vmatpush.bf16.msra.mxu0 %v10306
    %10627 = vmatpush.bf16.msra.mxu0 %v10305
    %10628 = vmatpush.bf16.msra.mxu0 %v10304
    %10629 = vmatpush.bf16.msra.mxu0 %v10303
    %10630 = vmatmul.bf16.gmra.mxu0 %v9444
    %v10631 = vpop.f32.mrf.mxu0
    %v10632 = vadd.f32 %v10603, %v10631
    %v10633 = vpop.f32.mrf.mxu0
    %v10634 = vadd.f32 %v10605, %v10633
    %10635 = vmatmul.bf16.gmra.mxu0 %v9460
    %v10636 = vpop.f32.mrf.mxu0
    %v10637 = vadd.f32 %v10608, %v10636
    %v10638 = vpop.f32.mrf.mxu0
    %v10639 = vadd.f32 %v10610, %v10638
    %10640 = vmatmul.bf16.gmra.mxu0 %v9476
    %v10641 = vpop.f32.mrf.mxu0
    %v10642 = vadd.f32 %v10613, %v10641
    %v10643 = vpop.f32.mrf.mxu0
    %v10644 = vadd.f32 %v10615, %v10643
    %10645 = vmatmul.bf16.gmra.mxu0 %v9492
    %v10646 = vpop.f32.mrf.mxu0
    %v10647 = vadd.f32 %v10618, %v10646
    %v10648 = vpop.f32.mrf.mxu0
    %v10649 = vadd.f32 %v10620, %v10648
    %10650 = vdwg.mxu0
    %10651 = vmatpush.bf16.msra.mxu0 %v10318
    %10652 = vmatpush.bf16.msra.mxu0 %v10317
    %10653 = vmatpush.bf16.msra.mxu0 %v10316
    %10654 = vmatpush.bf16.msra.mxu0 %v10315
    %10655 = vmatpush.bf16.msra.mxu0 %v10314
    %10656 = vmatpush.bf16.msra.mxu0 %v10313
    %10657 = vmatpush.bf16.msra.mxu0 %v10312
    %10658 = vmatpush.bf16.msra.mxu0 %v10311
    %10659 = vmatmul.bf16.gmra.mxu0 %v9445
    %v10660 = vpop.f32.mrf.mxu0
    %v10661 = vadd.f32 %v10632, %v10660
    %v10662 = vpop.f32.mrf.mxu0
    %v10663 = vadd.f32 %v10634, %v10662
    %10664 = vmatmul.bf16.gmra.mxu0 %v9461
    %v10665 = vpop.f32.mrf.mxu0
    %v10666 = vadd.f32 %v10637, %v10665
    %v10667 = vpop.f32.mrf.mxu0
    %v10668 = vadd.f32 %v10639, %v10667
    %10669 = vmatmul.bf16.gmra.mxu0 %v9477
    %v10670 = vpop.f32.mrf.mxu0
    %v10671 = vadd.f32 %v10642, %v10670
    %v10672 = vpop.f32.mrf.mxu0
    %v10673 = vadd.f32 %v10644, %v10672
    %10674 = vmatmul.bf16.gmra.mxu0 %v9493
    %v10675 = vpop.f32.mrf.mxu0
    %v10676 = vadd.f32 %v10647, %v10675
    %v10677 = vpop.f32.mrf.mxu0
    %v10678 = vadd.f32 %v10649, %v10677
    %10679 = vdwg.mxu0
    %10680 = vmatpush.bf16.msra.mxu0 %v10326
    %10681 = vmatpush.bf16.msra.mxu0 %v10325
    %10682 = vmatpush.bf16.msra.mxu0 %v10324
    %10683 = vmatpush.bf16.msra.mxu0 %v10323
    %10684 = vmatpush.bf16.msra.mxu0 %v10322
    %10685 = vmatpush.bf16.msra.mxu0 %v10321
    %10686 = vmatpush.bf16.msra.mxu0 %v10320
    %10687 = vmatpush.bf16.msra.mxu0 %v10319
    %10688 = vmatmul.bf16.gmra.mxu0 %v9446
    %v10689 = vpop.f32.mrf.mxu0
    %v10690 = vadd.f32 %v10661, %v10689
    %v10691 = vpop.f32.mrf.mxu0
    %v10692 = vadd.f32 %v10663, %v10691
    %10693 = vmatmul.bf16.gmra.mxu0 %v9462
    %v10694 = vpop.f32.mrf.mxu0
    %v10695 = vadd.f32 %v10666, %v10694
    %v10696 = vpop.f32.mrf.mxu0
    %v10697 = vadd.f32 %v10668, %v10696
    %10698 = vmatmul.bf16.gmra.mxu0 %v9478
    %v10699 = vpop.f32.mrf.mxu0
    %v10700 = vadd.f32 %v10671, %v10699
    %v10701 = vpop.f32.mrf.mxu0
    %v10702 = vadd.f32 %v10673, %v10701
    %10703 = vmatmul.bf16.gmra.mxu0 %v9494
    %v10704 = vpop.f32.mrf.mxu0
    %v10705 = vadd.f32 %v10676, %v10704
    %v10706 = vpop.f32.mrf.mxu0
    %v10707 = vadd.f32 %v10678, %v10706
    %10708 = vdwg.mxu0
    %10709 = vmatpush.bf16.msra.mxu0 %v10334
    %10710 = vmatpush.bf16.msra.mxu0 %v10333
    %10711 = vmatpush.bf16.msra.mxu0 %v10332
    %10712 = vmatpush.bf16.msra.mxu0 %v10331
    %10713 = vmatpush.bf16.msra.mxu0 %v10330
    %10714 = vmatpush.bf16.msra.mxu0 %v10329
    %10715 = vmatpush.bf16.msra.mxu0 %v10328
    %10716 = vmatpush.bf16.msra.mxu0 %v10327
    %10717 = vmatmul.bf16.gmra.mxu0 %v9447
    %v10718 = vpop.f32.mrf.mxu0
    %v10719 = vadd.f32 %v10690, %v10718
    %v10720 = vpop.f32.mrf.mxu0
    %v10721 = vadd.f32 %v10692, %v10720
    %10722 = vmatmul.bf16.gmra.mxu0 %v9463
    %v10723 = vpop.f32.mrf.mxu0
    %v10724 = vadd.f32 %v10695, %v10723
    %v10725 = vpop.f32.mrf.mxu0
    %v10726 = vadd.f32 %v10697, %v10725
    %10727 = vmatmul.bf16.gmra.mxu0 %v9479
    %v10728 = vpop.f32.mrf.mxu0
    %v10729 = vadd.f32 %v10700, %v10728
    %v10730 = vpop.f32.mrf.mxu0
    %v10731 = vadd.f32 %v10702, %v10730
    %10732 = vmatmul.bf16.gmra.mxu0 %v9495
    %v10733 = vpop.f32.mrf.mxu0
    %v10734 = vadd.f32 %v10705, %v10733
    %v10735 = vpop.f32.mrf.mxu0
    %v10736 = vadd.f32 %v10707, %v10735
    %10737 = vdwg.mxu0
    %10738 = vmatpush.bf16.msra.mxu0 %v10342
    %10739 = vmatpush.bf16.msra.mxu0 %v10341
    %10740 = vmatpush.bf16.msra.mxu0 %v10340
    %10741 = vmatpush.bf16.msra.mxu0 %v10339
    %10742 = vmatpush.bf16.msra.mxu0 %v10338
    %10743 = vmatpush.bf16.msra.mxu0 %v10337
    %10744 = vmatpush.bf16.msra.mxu0 %v10336
    %10745 = vmatpush.bf16.msra.mxu0 %v10335
    %10746 = vmatmul.bf16.gmra.mxu0 %v9448
    %v10747 = vpop.f32.mrf.mxu0
    %v10748 = vadd.f32 %v10719, %v10747
    %v10749 = vpop.f32.mrf.mxu0
    %v10750 = vadd.f32 %v10721, %v10749
    %10751 = vmatmul.bf16.gmra.mxu0 %v9464
    %v10752 = vpop.f32.mrf.mxu0
    %v10753 = vadd.f32 %v10724, %v10752
    %v10754 = vpop.f32.mrf.mxu0
    %v10755 = vadd.f32 %v10726, %v10754
    %10756 = vmatmul.bf16.gmra.mxu0 %v9480
    %v10757 = vpop.f32.mrf.mxu0
    %v10758 = vadd.f32 %v10729, %v10757
    %v10759 = vpop.f32.mrf.mxu0
    %v10760 = vadd.f32 %v10731, %v10759
    %10761 = vmatmul.bf16.gmra.mxu0 %v9496
    %v10762 = vpop.f32.mrf.mxu0
    %v10763 = vadd.f32 %v10734, %v10762
    %v10764 = vpop.f32.mrf.mxu0
    %v10765 = vadd.f32 %v10736, %v10764
    %10766 = vdwg.mxu0
    %10767 = vmatpush.bf16.msra.mxu0 %v10350
    %10768 = vmatpush.bf16.msra.mxu0 %v10349
    %10769 = vmatpush.bf16.msra.mxu0 %v10348
    %10770 = vmatpush.bf16.msra.mxu0 %v10347
    %10771 = vmatpush.bf16.msra.mxu0 %v10346
    %10772 = vmatpush.bf16.msra.mxu0 %v10345
    %10773 = vmatpush.bf16.msra.mxu0 %v10344
    %10774 = vmatpush.bf16.msra.mxu0 %v10343
    %10775 = vmatmul.bf16.gmra.mxu0 %v9449
    %v10776 = vpop.f32.mrf.mxu0
    %v10777 = vadd.f32 %v10748, %v10776
    %v10778 = vpop.f32.mrf.mxu0
    %v10779 = vadd.f32 %v10750, %v10778
    %10780 = vmatmul.bf16.gmra.mxu0 %v9465
    %v10781 = vpop.f32.mrf.mxu0
    %v10782 = vadd.f32 %v10753, %v10781
    %v10783 = vpop.f32.mrf.mxu0
    %v10784 = vadd.f32 %v10755, %v10783
    %10785 = vmatmul.bf16.gmra.mxu0 %v9481
    %v10786 = vpop.f32.mrf.mxu0
    %v10787 = vadd.f32 %v10758, %v10786
    %v10788 = vpop.f32.mrf.mxu0
    %v10789 = vadd.f32 %v10760, %v10788
    %10790 = vmatmul.bf16.gmra.mxu0 %v9497
    %v10791 = vpop.f32.mrf.mxu0
    %v10792 = vadd.f32 %v10763, %v10791
    %v10793 = vpop.f32.mrf.mxu0
    %v10794 = vadd.f32 %v10765, %v10793
    %10795 = vdwg.mxu0
    %10796 = vmatpush.bf16.msra.mxu0 %v10358
    %10797 = vmatpush.bf16.msra.mxu0 %v10357
    %10798 = vmatpush.bf16.msra.mxu0 %v10356
    %10799 = vmatpush.bf16.msra.mxu0 %v10355
    %10800 = vmatpush.bf16.msra.mxu0 %v10354
    %10801 = vmatpush.bf16.msra.mxu0 %v10353
    %10802 = vmatpush.bf16.msra.mxu0 %v10352
    %10803 = vmatpush.bf16.msra.mxu0 %v10351
    %10804 = vmatmul.bf16.gmra.mxu0 %v9450
    %v10805 = vpop.f32.mrf.mxu0
    %v10806 = vadd.f32 %v10777, %v10805
    %v10807 = vpop.f32.mrf.mxu0
    %v10808 = vadd.f32 %v10779, %v10807
    %10809 = vmatmul.bf16.gmra.mxu0 %v9466
    %v10810 = vpop.f32.mrf.mxu0
    %v10811 = vadd.f32 %v10782, %v10810
    %v10812 = vpop.f32.mrf.mxu0
    %v10813 = vadd.f32 %v10784, %v10812
    %10814 = vmatmul.bf16.gmra.mxu0 %v9482
    %v10815 = vpop.f32.mrf.mxu0
    %v10816 = vadd.f32 %v10787, %v10815
    %v10817 = vpop.f32.mrf.mxu0
    %v10818 = vadd.f32 %v10789, %v10817
    %10819 = vmatmul.bf16.gmra.mxu0 %v9498
    %v10820 = vpop.f32.mrf.mxu0
    %v10821 = vadd.f32 %v10792, %v10820
    %v10822 = vpop.f32.mrf.mxu0
    %v10823 = vadd.f32 %v10794, %v10822
    %10824 = vdwg.mxu0
    %10825 = vmatpush.bf16.msra.mxu0 %v10366
    %10826 = vmatpush.bf16.msra.mxu0 %v10365
    %10827 = vmatpush.bf16.msra.mxu0 %v10364
    %10828 = vmatpush.bf16.msra.mxu0 %v10363
    %10829 = vmatpush.bf16.msra.mxu0 %v10362
    %10830 = vmatpush.bf16.msra.mxu0 %v10361
    %10831 = vmatpush.bf16.msra.mxu0 %v10360
    %10832 = vmatpush.bf16.msra.mxu0 %v10359
    %10833 = vmatmul.bf16.gmra.mxu0 %v9451
    %v10834 = vpop.f32.mrf.mxu0
    %v10835 = vadd.f32 %v10806, %v10834
    %v10836 = vpop.f32.mrf.mxu0
    %v10837 = vadd.f32 %v10808, %v10836
    %10838 = vmatmul.bf16.gmra.mxu0 %v9467
    %v10839 = vpop.f32.mrf.mxu0
    %v10840 = vadd.f32 %v10811, %v10839
    %v10841 = vpop.f32.mrf.mxu0
    %v10842 = vadd.f32 %v10813, %v10841
    %10843 = vmatmul.bf16.gmra.mxu0 %v9483
    %v10844 = vpop.f32.mrf.mxu0
    %v10845 = vadd.f32 %v10816, %v10844
    %v10846 = vpop.f32.mrf.mxu0
    %v10847 = vadd.f32 %v10818, %v10846
    %10848 = vmatmul.bf16.gmra.mxu0 %v9499
    %v10849 = vpop.f32.mrf.mxu0
    %v10850 = vadd.f32 %v10821, %v10849
    %v10851 = vpop.f32.mrf.mxu0
    %v10852 = vadd.f32 %v10823, %v10851
    %10853 = vdwg.mxu0
    %10854 = vmatpush.bf16.msra.mxu0 %v10374
    %10855 = vmatpush.bf16.msra.mxu0 %v10373
    %10856 = vmatpush.bf16.msra.mxu0 %v10372
    %10857 = vmatpush.bf16.msra.mxu0 %v10371
    %10858 = vmatpush.bf16.msra.mxu0 %v10370
    %10859 = vmatpush.bf16.msra.mxu0 %v10369
    %10860 = vmatpush.bf16.msra.mxu0 %v10368
    %10861 = vmatpush.bf16.msra.mxu0 %v10367
    %10862 = vmatmul.bf16.gmra.mxu0 %v9452
    %v10863 = vpop.f32.mrf.mxu0
    %v10864 = vadd.f32 %v10835, %v10863
    %v10865 = vpop.f32.mrf.mxu0
    %v10866 = vadd.f32 %v10837, %v10865
    %10867 = vmatmul.bf16.gmra.mxu0 %v9468
    %v10868 = vpop.f32.mrf.mxu0
    %v10869 = vadd.f32 %v10840, %v10868
    %v10870 = vpop.f32.mrf.mxu0
    %v10871 = vadd.f32 %v10842, %v10870
    %10872 = vmatmul.bf16.gmra.mxu0 %v9484
    %v10873 = vpop.f32.mrf.mxu0
    %v10874 = vadd.f32 %v10845, %v10873
    %v10875 = vpop.f32.mrf.mxu0
    %v10876 = vadd.f32 %v10847, %v10875
    %10877 = vmatmul.bf16.gmra.mxu0 %v9500
    %v10878 = vpop.f32.mrf.mxu0
    %v10879 = vadd.f32 %v10850, %v10878
    %v10880 = vpop.f32.mrf.mxu0
    %v10881 = vadd.f32 %v10852, %v10880
    %10882 = vdwg.mxu0
    %10883 = vmatpush.bf16.msra.mxu0 %v10382
    %10884 = vmatpush.bf16.msra.mxu0 %v10381
    %10885 = vmatpush.bf16.msra.mxu0 %v10380
    %10886 = vmatpush.bf16.msra.mxu0 %v10379
    %10887 = vmatpush.bf16.msra.mxu0 %v10378
    %10888 = vmatpush.bf16.msra.mxu0 %v10377
    %10889 = vmatpush.bf16.msra.mxu0 %v10376
    %10890 = vmatpush.bf16.msra.mxu0 %v10375
    %10891 = vmatmul.bf16.gmra.mxu0 %v9453
    %v10892 = vpop.f32.mrf.mxu0
    %v10893 = vadd.f32 %v10864, %v10892
    %v10894 = vpop.f32.mrf.mxu0
    %v10895 = vadd.f32 %v10866, %v10894
    %10896 = vmatmul.bf16.gmra.mxu0 %v9469
    %v10897 = vpop.f32.mrf.mxu0
    %v10898 = vadd.f32 %v10869, %v10897
    %v10899 = vpop.f32.mrf.mxu0
    %v10900 = vadd.f32 %v10871, %v10899
    %10901 = vmatmul.bf16.gmra.mxu0 %v9485
    %v10902 = vpop.f32.mrf.mxu0
    %v10903 = vadd.f32 %v10874, %v10902
    %v10904 = vpop.f32.mrf.mxu0
    %v10905 = vadd.f32 %v10876, %v10904
    %10906 = vmatmul.bf16.gmra.mxu0 %v9501
    %v10907 = vpop.f32.mrf.mxu0
    %v10908 = vadd.f32 %v10879, %v10907
    %v10909 = vpop.f32.mrf.mxu0
    %v10910 = vadd.f32 %v10881, %v10909
    %10911 = vdwg.mxu0
    %10912 = vmatpush.bf16.msra.mxu0 %v10390
    %10913 = vmatpush.bf16.msra.mxu0 %v10389
    %10914 = vmatpush.bf16.msra.mxu0 %v10388
    %10915 = vmatpush.bf16.msra.mxu0 %v10387
    %10916 = vmatpush.bf16.msra.mxu0 %v10386
    %10917 = vmatpush.bf16.msra.mxu0 %v10385
    %10918 = vmatpush.bf16.msra.mxu0 %v10384
    %10919 = vmatpush.bf16.msra.mxu0 %v10383
    %10920 = vmatmul.bf16.gmra.mxu0 %v9454
    %v10921 = vpop.f32.mrf.mxu0
    %v10922 = vadd.f32 %v10893, %v10921
    %v10923 = vpop.f32.mrf.mxu0
    %v10924 = vadd.f32 %v10895, %v10923
    %10925 = vmatmul.bf16.gmra.mxu0 %v9470
    %v10926 = vpop.f32.mrf.mxu0
    %v10927 = vadd.f32 %v10898, %v10926
    %v10928 = vpop.f32.mrf.mxu0
    %v10929 = vadd.f32 %v10900, %v10928
    %10930 = vmatmul.bf16.gmra.mxu0 %v9486
    %v10931 = vpop.f32.mrf.mxu0
    %v10932 = vadd.f32 %v10903, %v10931
    %v10933 = vpop.f32.mrf.mxu0
    %v10934 = vadd.f32 %v10905, %v10933
    %10935 = vmatmul.bf16.gmra.mxu0 %v9502
    %v10936 = vpop.f32.mrf.mxu0
    %v10937 = vadd.f32 %v10908, %v10936
    %v10938 = vpop.f32.mrf.mxu0
    %v10939 = vadd.f32 %v10910, %v10938
    %10940 = vdwg.mxu0
    %10941 = vmatpush.bf16.msra.mxu0 %v10398
    %10942 = vmatpush.bf16.msra.mxu0 %v10397
    %10943 = vmatpush.bf16.msra.mxu0 %v10396
    %10944 = vmatpush.bf16.msra.mxu0 %v10395
    %10945 = vmatpush.bf16.msra.mxu0 %v10394
    %10946 = vmatpush.bf16.msra.mxu0 %v10393
    %10947 = vmatpush.bf16.msra.mxu0 %v10392
    %10948 = vmatpush.bf16.msra.mxu0 %v10391
    %10949 = vmatmul.bf16.gmra.mxu0 %v9455
    %v10950 = vpop.f32.mrf.mxu0
    %v10951 = vadd.f32 %v10922, %v10950
    %v10952 = vpop.f32.mrf.mxu0
    %v10953 = vadd.f32 %v10924, %v10952
    %10954 = vmatmul.bf16.gmra.mxu0 %v9471
    %v10955 = vpop.f32.mrf.mxu0
    %v10956 = vadd.f32 %v10927, %v10955
    %v10957 = vpop.f32.mrf.mxu0
    %v10958 = vadd.f32 %v10929, %v10957
    %10959 = vmatmul.bf16.gmra.mxu0 %v9487
    %v10960 = vpop.f32.mrf.mxu0
    %v10961 = vadd.f32 %v10932, %v10960
    %v10962 = vpop.f32.mrf.mxu0
    %v10963 = vadd.f32 %v10934, %v10962
    %10964 = vmatmul.bf16.gmra.mxu0 %v9503
    %v10965 = vpop.f32.mrf.mxu0
    %v10966 = vadd.f32 %v10937, %v10965
    %v10967 = vpop.f32.mrf.mxu0
    %v10968 = vadd.f32 %v10939, %v10967
    %10969 = vdwg.mxu0
    %10970 = vmatpush.bf16.msra.mxu0 %v10406
    %10971 = vmatpush.bf16.msra.mxu0 %v10405
    %10972 = vmatpush.bf16.msra.mxu0 %v10404
    %10973 = vmatpush.bf16.msra.mxu0 %v10403
    %10974 = vmatpush.bf16.msra.mxu0 %v10402
    %10975 = vmatpush.bf16.msra.mxu0 %v10401
    %10976 = vmatpush.bf16.msra.mxu0 %v10400
    %10977 = vmatpush.bf16.msra.mxu0 %v10399
    %10978 = vmatmul.bf16.gmra.mxu0 %v9456
    %v10979 = vpop.f32.mrf.mxu0
    %v10980 = vadd.f32 %v10951, %v10979
    %v10981 = vpop.f32.mrf.mxu0
    %v10982 = vadd.f32 %v10953, %v10981
    %10983 = vmatmul.bf16.gmra.mxu0 %v9472
    %v10984 = vpop.f32.mrf.mxu0
    %v10985 = vadd.f32 %v10956, %v10984
    %v10986 = vpop.f32.mrf.mxu0
    %v10987 = vadd.f32 %v10958, %v10986
    %10988 = vmatmul.bf16.gmra.mxu0 %v9488
    %v10989 = vpop.f32.mrf.mxu0
    %v10990 = vadd.f32 %v10961, %v10989
    %v10991 = vpop.f32.mrf.mxu0
    %v10992 = vadd.f32 %v10963, %v10991
    %10993 = vmatmul.bf16.gmra.mxu0 %v9504
    %v10994 = vpop.f32.mrf.mxu0
    %v10995 = vadd.f32 %v10966, %v10994
    %v10996 = vpop.f32.mrf.mxu0
    %v10997 = vadd.f32 %v10968, %v10996
    %10998 = vdwg.mxu0
    %11007 = vrot.lane.b32.xlu0 %v10980, 32
    %v11008 = vpop.permute.xlu0 %11007
    %11009 = vrot.lane.b32.xlu0 %v10982, 32
    %v11010 = vpop.permute.xlu0 %11009
    %11011 = vrot.lane.b32.xlu0 %v10985, 32
    %v11012 = vpop.permute.xlu0 %11011
    %11013 = vrot.lane.b32.xlu0 %v10987, 32
    %v11014 = vpop.permute.xlu0 %11013
    %11015 = vrot.lane.b32.xlu0 %v10990, 32
    %v11016 = vpop.permute.xlu0 %11015
    %11017 = vrot.lane.b32.xlu0 %v10992, 32
    %v11018 = vpop.permute.xlu0 %11017
    %11019 = vrot.lane.b32.xlu0 %v10995, 32
    %v11020 = vpop.permute.xlu0 %11019
    %11021 = vrot.lane.b32.xlu0 %v10997, 32
    %v11022 = vpop.permute.xlu0 %11021
    %v11031 = vadd.f32 %v8583, %v11008
    %v11032 = vadd.f32 %v8584, %v11010
    %v11033 = vadd.f32 %v8585, %v11012
    %v11034 = vadd.f32 %v8586, %v11014
    %v11035 = vadd.f32 %v8587, %v11016
    %v11036 = vadd.f32 %v8588, %v11018
    %v11037 = vadd.f32 %v8589, %v11020
    %v11038 = vadd.f32 %v8590, %v11022
    %s11039 = scalar_lea.vmem %s15, 1
    %v11040 = vld [vmem:[%s11039] sm:$0x1]
    %s11041 = scalar_lea.vmem %s16, 1
    %v11042 = vld [vmem:[%s11041] sm:$0x1]
    %11051 = vrot.lane.b32.xlu0 %v11031, 96
    %v11052 = vpop.permute.xlu0 %11051
    %11053 = vrot.lane.b32.xlu0 %v11032, 96
    %v11054 = vpop.permute.xlu0 %11053
    %11055 = vrot.lane.b32.xlu0 %v11033, 96
    %v11056 = vpop.permute.xlu0 %11055
    %11057 = vrot.lane.b32.xlu0 %v11034, 96
    %v11058 = vpop.permute.xlu0 %11057
    %11059 = vrot.lane.b32.xlu0 %v11035, 96
    %v11060 = vpop.permute.xlu0 %11059
    %11061 = vrot.lane.b32.xlu0 %v11036, 96
    %v11062 = vpop.permute.xlu0 %11061
    %11063 = vrot.lane.b32.xlu0 %v11037, 96
    %v11064 = vpop.permute.xlu0 %11063
    %11065 = vrot.lane.b32.xlu0 %v11038, 96
    %v11066 = vpop.permute.xlu0 %11065
    %v11075 = vsel %vm309, %v11052, 0.0
    %11076 = vadd.xlane.f32.xlu0 %v11075
    %v11077 = vpop.xlane.xlu0 %11076
    %v11078 = vsel %vm309, %v11054, 0.0
    %11079 = vadd.xlane.f32.xlu0 %v11078
    %v11080 = vpop.xlane.xlu0 %11079
    %v11081 = vsel %vm309, %v11056, 0.0
    %11082 = vadd.xlane.f32.xlu0 %v11081
    %v11083 = vpop.xlane.xlu0 %11082
    %v11084 = vsel %vm309, %v11058, 0.0
    %11085 = vadd.xlane.f32.xlu0 %v11084
    %v11086 = vpop.xlane.xlu0 %11085
    %v11087 = vsel %vm309, %v11060, 0.0
    %11088 = vadd.xlane.f32.xlu0 %v11087
    %v11089 = vpop.xlane.xlu0 %11088
    %v11090 = vsel %vm309, %v11062, 0.0
    %11091 = vadd.xlane.f32.xlu0 %v11090
    %v11092 = vpop.xlane.xlu0 %11091
    %v11093 = vsel %vm309, %v11064, 0.0
    %11094 = vadd.xlane.f32.xlu0 %v11093
    %v11095 = vpop.xlane.xlu0 %11094
    %v11096 = vsel %vm309, %v11066, 0.0
    %11097 = vadd.xlane.f32.xlu0 %v11096
    %v11098 = vpop.xlane.xlu0 %11097
    %v11099 = vmul.f32 %v11077, %v2868
    %v11100 = vmul.f32 %v11080, %v2868
    %v11101 = vmul.f32 %v11083, %v2868
    %v11102 = vmul.f32 %v11086, %v2868
    %v11103 = vmul.f32 %v11089, %v2868
    %v11104 = vmul.f32 %v11092, %v2868
    %v11105 = vmul.f32 %v11095, %v2868
    %v11106 = vmul.f32 %v11098, %v2868
    %v11107 = vsub.f32 %v11031, %v11099
    %v11108 = vsub.f32 %v11032, %v11100
    %v11109 = vsub.f32 %v11033, %v11101
    %v11110 = vsub.f32 %v11034, %v11102
    %v11111 = vsub.f32 %v11035, %v11103
    %v11112 = vsub.f32 %v11036, %v11104
    %v11113 = vsub.f32 %v11037, %v11105
    %v11114 = vsub.f32 %v11038, %v11106
    %v11115 = vmul.f32 %v11107, %v11107
    %v11116 = vmul.f32 %v11108, %v11108
    %v11117 = vmul.f32 %v11109, %v11109
    %v11118 = vmul.f32 %v11110, %v11110
    %v11119 = vmul.f32 %v11111, %v11111
    %v11120 = vmul.f32 %v11112, %v11112
    %v11121 = vmul.f32 %v11113, %v11113
    %v11122 = vmul.f32 %v11114, %v11114
    %11131 = vrot.lane.b32.xlu0 %v11115, 96
    %v11132 = vpop.permute.xlu0 %11131
    %11133 = vrot.lane.b32.xlu0 %v11116, 96
    %v11134 = vpop.permute.xlu0 %11133
    %11135 = vrot.lane.b32.xlu0 %v11117, 96
    %v11136 = vpop.permute.xlu0 %11135
    %11137 = vrot.lane.b32.xlu0 %v11118, 96
    %v11138 = vpop.permute.xlu0 %11137
    %11139 = vrot.lane.b32.xlu0 %v11119, 96
    %v11140 = vpop.permute.xlu0 %11139
    %11141 = vrot.lane.b32.xlu0 %v11120, 96
    %v11142 = vpop.permute.xlu0 %11141
    %11143 = vrot.lane.b32.xlu0 %v11121, 96
    %v11144 = vpop.permute.xlu0 %11143
    %11145 = vrot.lane.b32.xlu0 %v11122, 96
    %v11146 = vpop.permute.xlu0 %11145
    %v11155 = vsel %vm309, %v11132, 0.0
    %11156 = vadd.xlane.f32.xlu0 %v11155
    %v11157 = vpop.xlane.xlu0 %11156
    %v11158 = vsel %vm309, %v11134, 0.0
    %11159 = vadd.xlane.f32.xlu0 %v11158
    %v11160 = vpop.xlane.xlu0 %11159
    %v11161 = vsel %vm309, %v11136, 0.0
    %11162 = vadd.xlane.f32.xlu0 %v11161
    %v11163 = vpop.xlane.xlu0 %11162
    %v11164 = vsel %vm309, %v11138, 0.0
    %11165 = vadd.xlane.f32.xlu0 %v11164
    %v11166 = vpop.xlane.xlu0 %11165
    %v11167 = vsel %vm309, %v11140, 0.0
    %11168 = vadd.xlane.f32.xlu0 %v11167
    %v11169 = vpop.xlane.xlu0 %11168
    %v11170 = vsel %vm309, %v11142, 0.0
    %11171 = vadd.xlane.f32.xlu0 %v11170
    %v11172 = vpop.xlane.xlu0 %11171
    %v11173 = vsel %vm309, %v11144, 0.0
    %11174 = vadd.xlane.f32.xlu0 %v11173
    %v11175 = vpop.xlane.xlu0 %11174
    %v11176 = vsel %vm309, %v11146, 0.0
    %11177 = vadd.xlane.f32.xlu0 %v11176
    %v11178 = vpop.xlane.xlu0 %11177
    %v11179 = vmul.f32 %v11157, %v2868
    %v11180 = vmul.f32 %v11160, %v2868
    %v11181 = vmul.f32 %v11163, %v2868
    %v11182 = vmul.f32 %v11166, %v2868
    %v11183 = vmul.f32 %v11169, %v2868
    %v11184 = vmul.f32 %v11172, %v2868
    %v11185 = vmul.f32 %v11175, %v2868
    %v11186 = vmul.f32 %v11178, %v2868
    %v11187 = vadd.f32 %v11179, 1e-05
    %v11188 = vadd.f32 %v11180, 1e-05
    %v11189 = vadd.f32 %v11181, 1e-05
    %v11190 = vadd.f32 %v11182, 1e-05
    %v11191 = vadd.f32 %v11183, 1e-05
    %v11192 = vadd.f32 %v11184, 1e-05
    %v11193 = vadd.f32 %v11185, 1e-05
    %v11194 = vadd.f32 %v11186, 1e-05
    %v11195 = vrsqrt.pop %v11187
    %v11196 = vmul.f32 %v11195, %v11187
    %v11197 = vmul.f32 %v11196, %v11195
    %v11198 = vmul.f32 0.5, %v11197
    %v11199 = vsub.f32 1.5, %v11198
    %v11200 = vmul.f32 %v11195, %v11199
    %vm11201 = vweird.f32 %v11187
    %vm11202 = vweird.f32 %v11195
    %vm11203 = vmor %vm11201, %vm11202
    %v11204 = vsel %vm11203, %v11195, %v11200
    %v11205 = vrsqrt.pop %v11188
    %v11206 = vmul.f32 %v11205, %v11188
    %v11207 = vmul.f32 %v11206, %v11205
    %v11208 = vmul.f32 0.5, %v11207
    %v11209 = vsub.f32 1.5, %v11208
    %v11210 = vmul.f32 %v11205, %v11209
    %vm11211 = vweird.f32 %v11188
    %vm11212 = vweird.f32 %v11205
    %vm11213 = vmor %vm11211, %vm11212
    %v11214 = vsel %vm11213, %v11205, %v11210
    %v11215 = vrsqrt.pop %v11189
    %v11216 = vmul.f32 %v11215, %v11189
    %v11217 = vmul.f32 %v11216, %v11215
    %v11218 = vmul.f32 0.5, %v11217
    %v11219 = vsub.f32 1.5, %v11218
    %v11220 = vmul.f32 %v11215, %v11219
    %vm11221 = vweird.f32 %v11189
    %vm11222 = vweird.f32 %v11215
    %vm11223 = vmor %vm11221, %vm11222
    %v11224 = vsel %vm11223, %v11215, %v11220
    %v11225 = vrsqrt.pop %v11190
    %v11226 = vmul.f32 %v11225, %v11190
    %v11227 = vmul.f32 %v11226, %v11225
    %v11228 = vmul.f32 0.5, %v11227
    %v11229 = vsub.f32 1.5, %v11228
    %v11230 = vmul.f32 %v11225, %v11229
    %vm11231 = vweird.f32 %v11190
    %vm11232 = vweird.f32 %v11225
    %vm11233 = vmor %vm11231, %vm11232
    %v11234 = vsel %vm11233, %v11225, %v11230
    %v11235 = vrsqrt.pop %v11191
    %v11236 = vmul.f32 %v11235, %v11191
    %v11237 = vmul.f32 %v11236, %v11235
    %v11238 = vmul.f32 0.5, %v11237
    %v11239 = vsub.f32 1.5, %v11238
    %v11240 = vmul.f32 %v11235, %v11239
    %vm11241 = vweird.f32 %v11191
    %vm11242 = vweird.f32 %v11235
    %vm11243 = vmor %vm11241, %vm11242
    %v11244 = vsel %vm11243, %v11235, %v11240
    %v11245 = vrsqrt.pop %v11192
    %v11246 = vmul.f32 %v11245, %v11192
    %v11247 = vmul.f32 %v11246, %v11245
    %v11248 = vmul.f32 0.5, %v11247
    %v11249 = vsub.f32 1.5, %v11248
    %v11250 = vmul.f32 %v11245, %v11249
    %vm11251 = vweird.f32 %v11192
    %vm11252 = vweird.f32 %v11245
    %vm11253 = vmor %vm11251, %vm11252
    %v11254 = vsel %vm11253, %v11245, %v11250
    %v11255 = vrsqrt.pop %v11193
    %v11256 = vmul.f32 %v11255, %v11193
    %v11257 = vmul.f32 %v11256, %v11255
    %v11258 = vmul.f32 0.5, %v11257
    %v11259 = vsub.f32 1.5, %v11258
    %v11260 = vmul.f32 %v11255, %v11259
    %vm11261 = vweird.f32 %v11193
    %vm11262 = vweird.f32 %v11255
    %vm11263 = vmor %vm11261, %vm11262
    %v11264 = vsel %vm11263, %v11255, %v11260
    %v11265 = vrsqrt.pop %v11194
    %v11266 = vmul.f32 %v11265, %v11194
    %v11267 = vmul.f32 %v11266, %v11265
    %v11268 = vmul.f32 0.5, %v11267
    %v11269 = vsub.f32 1.5, %v11268
    %v11270 = vmul.f32 %v11265, %v11269
    %vm11271 = vweird.f32 %v11194
    %vm11272 = vweird.f32 %v11265
    %vm11273 = vmor %vm11271, %vm11272
    %v11274 = vsel %vm11273, %v11265, %v11270
    %v11275 = vmul.f32 %v11107, %v11204
    %v11276 = vmul.f32 %v11108, %v11214
    %v11277 = vmul.f32 %v11109, %v11224
    %v11278 = vmul.f32 %v11110, %v11234
    %v11279 = vmul.f32 %v11111, %v11244
    %v11280 = vmul.f32 %v11112, %v11254
    %v11281 = vmul.f32 %v11113, %v11264
    %v11282 = vmul.f32 %v11114, %v11274
    %v11284 = vperm.slane %v11040, 0
    %11285 = vrot.lane.b32.xlu0 %v11284, 32
    %v11286 = vpop.permute.xlu0 %11285
    %v11288 = vmul.f32 %v11275, %v11286
    %v11289 = vmul.f32 %v11276, %v11286
    %v11290 = vmul.f32 %v11277, %v11286
    %v11291 = vmul.f32 %v11278, %v11286
    %v11292 = vmul.f32 %v11279, %v11286
    %v11293 = vmul.f32 %v11280, %v11286
    %v11294 = vmul.f32 %v11281, %v11286
    %v11295 = vmul.f32 %v11282, %v11286
    %v11297 = vperm.slane %v11042, 0
    %11298 = vrot.lane.b32.xlu0 %v11297, 32
    %v11299 = vpop.permute.xlu0 %11298
    %v11301 = vadd.f32 %v11288, %v11299
    %v11302 = vadd.f32 %v11289, %v11299
    %v11303 = vadd.f32 %v11290, %v11299
    %v11304 = vadd.f32 %v11291, %v11299
    %v11305 = vadd.f32 %v11292, %v11299
    %v11306 = vadd.f32 %v11293, %v11299
    %v11307 = vadd.f32 %v11294, %v11299
    %v11308 = vadd.f32 %v11295, %v11299
    %v11309 = vpack.c.bf16 %v11302, %v11301
    %v11310 = vpack.c.bf16 %v11304, %v11303
    %v11311 = vpack.c.bf16 %v11306, %v11305
    %v11312 = vpack.c.bf16 %v11308, %v11307
    %v11313 = vld [vmem:[%s17] sm:$0xf]
    %v11314 = vld [vmem:[%s17 + $0x4] sm:$0xf]
    %v11315 = vld [vmem:[%s17 + $0x8] sm:$0xf]
    %v11316 = vld [vmem:[%s17 + $0xc] sm:$0xf]
    %v11317 = vld [vmem:[%s19] sm:$0x1]
    %v11319 = vperm.slane %v11317, 0
    %11325 = vrot.lane.b32.xlu0 %v11309, 96
    %v11326 = vpop.permute.xlu0 %11325
    %11327 = vrot.lane.b32.xlu0 %v11310, 96
    %v11328 = vpop.permute.xlu0 %11327
    %11329 = vrot.lane.b32.xlu0 %v11311, 96
    %v11330 = vpop.permute.xlu0 %11329
    %11331 = vrot.lane.b32.xlu0 %v11312, 96
    %v11332 = vpop.permute.xlu0 %11331
    %v11337 = vunpack.c.l.b16 %v11313
    %v11338 = vunpack.c.l.b16 %v11314
    %v11339 = vunpack.c.l.b16 %v11315
    %v11340 = vunpack.c.l.b16 %v11316
    %v11341 = vpack.c.b16 %v11338, %v11337
    %v11342 = vpack.c.b16 %v11340, %v11339
    %v11346 = vsel %vm309, %v11326, 0
    %v11349 = vsel %vm309, %v11328, 0
    %v11352 = vsel %vm309, %v11330, 0
    %v11355 = vsel %vm309, %v11332, 0
    %11357 = vmatpush.bf16.msra.mxu0 0
    %11358 = vmatpush.bf16.msra.mxu0 0
    %11359 = vmatpush.bf16.msra.mxu0 0
    %11360 = vmatpush.bf16.msra.mxu0 0
    %11361 = vmatpush.bf16.msra.mxu0 0
    %11362 = vmatpush.bf16.msra.mxu0 0
    %11363 = vmatpush.bf16.msra.mxu0 %v11342
    %11364 = vmatpush.bf16.msra.mxu0 %v11341
    %11365 = vmatmul.bf16.gmra.mxu0 %v11346
    %v11366 = vpop.f32.mrf.mxu0
    %v11367 = vadd.f32 %v11319, %v11366
    %v11368 = vpop.f32.mrf.mxu0
    %v11369 = vadd.f32 %v11319, %v11368
    %11370 = vmatmul.bf16.gmra.mxu0 %v11349
    %v11371 = vpop.f32.mrf.mxu0
    %v11372 = vadd.f32 %v11319, %v11371
    %v11373 = vpop.f32.mrf.mxu0
    %v11374 = vadd.f32 %v11319, %v11373
    %11375 = vmatmul.bf16.gmra.mxu0 %v11352
    %v11376 = vpop.f32.mrf.mxu0
    %v11377 = vadd.f32 %v11319, %v11376
    %v11378 = vpop.f32.mrf.mxu0
    %v11379 = vadd.f32 %v11319, %v11378
    %11380 = vmatmul.bf16.gmra.mxu0 %v11355
    %v11381 = vpop.f32.mrf.mxu0
    %v11382 = vadd.f32 %v11319, %v11381
    %v11383 = vpop.f32.mrf.mxu0
    %v11384 = vadd.f32 %v11319, %v11383
    %11385 = vdwg.mxu0
    %vm11386 = vcmask 785408
    %11387 = vst.msk [vmem:[#allocation2] sm:$0xff] %vm11386, %v11367
    %11388 = vst.msk [vmem:[#allocation2 + $0x8] sm:$0xff] %vm11386, %v11369
    %11389 = vst.msk [vmem:[#allocation2 + $0x10] sm:$0xff] %vm11386, %v11372
    %11390 = vst.msk [vmem:[#allocation2 + $0x18] sm:$0xff] %vm11386, %v11374
    %11391 = vst.msk [vmem:[#allocation2 + $0x20] sm:$0xff] %vm11386, %v11377
    %11392 = vst.msk [vmem:[#allocation2 + $0x28] sm:$0xff] %vm11386, %v11379
    %11393 = vst.msk [vmem:[#allocation2 + $0x30] sm:$0xff] %vm11386, %v11382
    %11394 = vst.msk [vmem:[#allocation2 + $0x38] sm:$0xff] %vm11386, %v11384
    %v11395 = vld [vmem:[%s18] sm:$0xf]
    %v11396 = vld [vmem:[%s18 + $0x4] sm:$0xf]
    %v11397 = vld [vmem:[%s18 + $0x8] sm:$0xf]
    %v11398 = vld [vmem:[%s18 + $0xc] sm:$0xf]
    %v11399 = vld [vmem:[%s20] sm:$0x1]
    %v11400 = vld [vmem:[#allocation2] ss:$8 sm:$0xf]
    %v11401 = vld [vmem:[#allocation2] ss:$8 sm:$0xf0]
    %v11402 = vor.u32 %v11400, %v11401
    %v11404 = vperm.slane %v11399, 0
    %v11410 = vunpack.c.l.b16 %v11395
    %v11411 = vunpack.c.l.b16 %v11396
    %v11412 = vunpack.c.l.b16 %v11397
    %v11413 = vunpack.c.l.b16 %v11398
    %v11414 = vpack.c.b16 %v11411, %v11410
    %v11415 = vpack.c.b16 %v11413, %v11412
    %v11419 = vsel %vm309, 0, 0
    %11421 = vmatpush.bf16.msra.mxu0 0
    %11422 = vmatpush.bf16.msra.mxu0 0
    %11423 = vmatpush.bf16.msra.mxu0 0
    %11424 = vmatpush.bf16.msra.mxu0 0
    %11425 = vmatpush.bf16.msra.mxu0 0
    %11426 = vmatpush.bf16.msra.mxu0 0
    %11427 = vmatpush.bf16.msra.mxu0 %v11415
    %11428 = vmatpush.bf16.msra.mxu0 %v11414
    %11429 = vmatmul.bf16.gmra.mxu0 %v11419
    %v11430 = vpop.f32.mrf.mxu0
    %v11431 = vadd.f32 %v11404, %v11430
    %v11432 = vpop.f32.mrf.mxu0
    %11433 = vdwg.mxu0
    %v11434 = vadd.f32 %v11402, %v11431
    %v11435 = vxor.u32 %v11434, 2147483648
    %v11436 = vmul.f32 %v11435, 1.442695
    %v11437 = vpow.pop %v11436
    %v11438 = vadd.f32 %v11437, 1.0
    %v11439 = vrcp.pop %v11438
    %v11440 = vmul.f32 %v11438, %v11439
    %v11441 = vsub.f32 1.0, %v11440
    %v11442 = vmul.f32 %v11439, %v11441
    %v11443 = vadd.f32 %v11439, %v11442
    %vm11444 = vweird.f32 %v11438
    %vm11445 = vweird.f32 %v11439
    %vm11446 = vmor %vm11444, %vm11445
    %v11447 = vsel %vm11446, %v11439, %v11443
    %v11448 = vand.u32 2147483647, %v11438
    %vm11449 = vcmp.eq.f32.partialorder %v11448, 8.507059e+37
    %v11450 = vand.u32 %v11438, 2147483648
    %v11451 = vor.u32 1.1754944e-38, %v11450
    %v11452 = vsel %vm11449, %v11451, %v11447
    %v11453 = vmul.f32 1.0, %v11452
    %11455 = vrot.lane.b32.xlu0 %v11431, 64
    %v11456 = vpop.permute.xlu0 %11455
    %v11458 = vmul.f32 %v11453, %v11456
    %11460 = vrot.lane.b32.xlu0 %v11458, 64
    %v11461 = vpop.permute.xlu0 %11460
    %v11463 = vadd.f32 %v11402, %v11461
    %v11464 = vtanh.pop %v11463
    %v11465 = vsub.f32 1.0, %v11453
    %11467 = vrot.lane.b32.xlu0 %v11464, 96
    %v11468 = vpop.permute.xlu0 %11467
    %v11470 = vmul.f32 %v11465, %v11468
    %v11471 = vmul.f32 %v11453, 0.0
    %v11472 = vadd.f32 %v11470, %v11471
    %s11473 = scalar_lea.vmem [#allocation2], 1
    %v11474 = vld [vmem:[%s11473] ss:$8 sm:$0xf]
    %v11475 = vld [vmem:[%s11473] ss:$8 sm:$0xf0]
    %v11476 = vor.u32 %v11474, %v11475
    %v11477 = vpack.c.bf16 %v11472, %v11472
    %11479 = vrot.lane.b32.xlu0 %v11477, 96
    %v11480 = vpop.permute.xlu0 %11479
    %v11482 = vsel %vm309, %v11480, 0
    %11484 = vmatpush.bf16.msra.mxu0 0
    %11485 = vmatpush.bf16.msra.mxu0 0
    %11486 = vmatpush.bf16.msra.mxu0 0
    %11487 = vmatpush.bf16.msra.mxu0 0
    %11488 = vmatpush.bf16.msra.mxu0 0
    %11489 = vmatpush.bf16.msra.mxu0 0
    %11490 = vmatpush.bf16.msra.mxu0 %v11415
    %11491 = vmatpush.bf16.msra.mxu0 %v11414
    %11492 = vmatmul.bf16.gmra.mxu0 %v11482
    %v11493 = vpop.f32.mrf.mxu0
    %v11494 = vadd.f32 %v11404, %v11493
    %v11495 = vpop.f32.mrf.mxu0
    %11496 = vdwg.mxu0
    %v11497 = vadd.f32 %v11476, %v11494
    %v11498 = vxor.u32 %v11497, 2147483648
    %v11499 = vmul.f32 %v11498, 1.442695
    %v11500 = vpow.pop %v11499
    %v11501 = vadd.f32 %v11500, 1.0
    %v11502 = vrcp.pop %v11501
    %v11503 = vmul.f32 %v11501, %v11502
    %v11504 = vsub.f32 1.0, %v11503
    %v11505 = vmul.f32 %v11502, %v11504
    %v11506 = vadd.f32 %v11502, %v11505
    %vm11507 = vweird.f32 %v11501
    %vm11508 = vweird.f32 %v11502
    %vm11509 = vmor %vm11507, %vm11508
    %v11510 = vsel %vm11509, %v11502, %v11506
    %v11511 = vand.u32 2147483647, %v11501
    %vm11512 = vcmp.eq.f32.partialorder %v11511, 8.507059e+37
    %v11513 = vand.u32 %v11501, 2147483648
    %v11514 = vor.u32 1.1754944e-38, %v11513
    %v11515 = vsel %vm11512, %v11514, %v11510
    %v11516 = vmul.f32 1.0, %v11515
    %11518 = vrot.lane.b32.xlu0 %v11494, 64
    %v11519 = vpop.permute.xlu0 %11518
    %v11521 = vmul.f32 %v11516, %v11519
    %11523 = vrot.lane.b32.xlu0 %v11521, 64
    %v11524 = vpop.permute.xlu0 %11523
    %v11526 = vadd.f32 %v11476, %v11524
    %v11527 = vtanh.pop %v11526
    %v11528 = vsub.f32 1.0, %v11516
    %11530 = vrot.lane.b32.xlu0 %v11527, 96
    %v11531 = vpop.permute.xlu0 %11530
    %v11533 = vmul.f32 %v11528, %v11531
    %v11534 = vmul.f32 %v11516, %v11472
    %v11535 = vadd.f32 %v11533, %v11534
    %s11536 = scalar_lea.vmem [#allocation2], 2
    %v11537 = vld [vmem:[%s11536] ss:$8 sm:$0xf]
    %v11538 = vld [vmem:[%s11536] ss:$8 sm:$0xf0]
    %v11539 = vor.u32 %v11537, %v11538
    %v11540 = vpack.c.bf16 %v11535, %v11535
    %11542 = vrot.lane.b32.xlu0 %v11540, 96
    %v11543 = vpop.permute.xlu0 %11542
    %v11545 = vsel %vm309, %v11543, 0
    %11547 = vmatpush.bf16.msra.mxu0 0
    %11548 = vmatpush.bf16.msra.mxu0 0
    %11549 = vmatpush.bf16.msra.mxu0 0
    %11550 = vmatpush.bf16.msra.mxu0 0
    %11551 = vmatpush.bf16.msra.mxu0 0
    %11552 = vmatpush.bf16.msra.mxu0 0
    %11553 = vmatpush.bf16.msra.mxu0 %v11415
    %11554 = vmatpush.bf16.msra.mxu0 %v11414
    %11555 = vmatmul.bf16.gmra.mxu0 %v11545
    %v11556 = vpop.f32.mrf.mxu0
    %v11557 = vadd.f32 %v11404, %v11556
    %v11558 = vpop.f32.mrf.mxu0
    %11559 = vdwg.mxu0
    %v11560 = vadd.f32 %v11539, %v11557
    %v11561 = vxor.u32 %v11560, 2147483648
    %v11562 = vmul.f32 %v11561, 1.442695
    %v11563 = vpow.pop %v11562
    %v11564 = vadd.f32 %v11563, 1.0
    %v11565 = vrcp.pop %v11564
    %v11566 = vmul.f32 %v11564, %v11565
    %v11567 = vsub.f32 1.0, %v11566
    %v11568 = vmul.f32 %v11565, %v11567
    %v11569 = vadd.f32 %v11565, %v11568
    %vm11570 = vweird.f32 %v11564
    %vm11571 = vweird.f32 %v11565
    %vm11572 = vmor %vm11570, %vm11571
    %v11573 = vsel %vm11572, %v11565, %v11569
    %v11574 = vand.u32 2147483647, %v11564
    %vm11575 = vcmp.eq.f32.partialorder %v11574, 8.507059e+37
    %v11576 = vand.u32 %v11564, 2147483648
    %v11577 = vor.u32 1.1754944e-38, %v11576
    %v11578 = vsel %vm11575, %v11577, %v11573
    %v11579 = vmul.f32 1.0, %v11578
    %11581 = vrot.lane.b32.xlu0 %v11557, 64
    %v11582 = vpop.permute.xlu0 %11581
    %v11584 = vmul.f32 %v11579, %v11582
    %11586 = vrot.lane.b32.xlu0 %v11584, 64
    %v11587 = vpop.permute.xlu0 %11586
    %v11589 = vadd.f32 %v11539, %v11587
    %v11590 = vtanh.pop %v11589
    %v11591 = vsub.f32 1.0, %v11579
    %11593 = vrot.lane.b32.xlu0 %v11590, 96
    %v11594 = vpop.permute.xlu0 %11593
    %v11596 = vmul.f32 %v11591, %v11594
    %v11597 = vmul.f32 %v11579, %v11535
    %v11598 = vadd.f32 %v11596, %v11597
    %s11599 = scalar_lea.vmem [#allocation2], 3
    %v11600 = vld [vmem:[%s11599] ss:$8 sm:$0xf]
    %v11601 = vld [vmem:[%s11599] ss:$8 sm:$0xf0]
    %v11602 = vor.u32 %v11600, %v11601
    %v11603 = vpack.c.bf16 %v11598, %v11598
    %11605 = vrot.lane.b32.xlu0 %v11603, 96
    %v11606 = vpop.permute.xlu0 %11605
    %v11608 = vsel %vm309, %v11606, 0
    %11610 = vmatpush.bf16.msra.mxu0 0
    %11611 = vmatpush.bf16.msra.mxu0 0
    %11612 = vmatpush.bf16.msra.mxu0 0
    %11613 = vmatpush.bf16.msra.mxu0 0
    %11614 = vmatpush.bf16.msra.mxu0 0
    %11615 = vmatpush.bf16.msra.mxu0 0
    %11616 = vmatpush.bf16.msra.mxu0 %v11415
    %11617 = vmatpush.bf16.msra.mxu0 %v11414
    %11618 = vmatmul.bf16.gmra.mxu0 %v11608
    %v11619 = vpop.f32.mrf.mxu0
    %v11620 = vadd.f32 %v11404, %v11619
    %v11621 = vpop.f32.mrf.mxu0
    %11622 = vdwg.mxu0
    %v11623 = vadd.f32 %v11602, %v11620
    %v11624 = vxor.u32 %v11623, 2147483648
    %v11625 = vmul.f32 %v11624, 1.442695
    %v11626 = vpow.pop %v11625
    %v11627 = vadd.f32 %v11626, 1.0
    %v11628 = vrcp.pop %v11627
    %v11629 = vmul.f32 %v11627, %v11628
    %v11630 = vsub.f32 1.0, %v11629
    %v11631 = vmul.f32 %v11628, %v11630
    %v11632 = vadd.f32 %v11628, %v11631
    %vm11633 = vweird.f32 %v11627
    %vm11634 = vweird.f32 %v11628
    %vm11635 = vmor %vm11633, %vm11634
    %v11636 = vsel %vm11635, %v11628, %v11632
    %v11637 = vand.u32 2147483647, %v11627
    %vm11638 = vcmp.eq.f32.partialorder %v11637, 8.507059e+37
    %v11639 = vand.u32 %v11627, 2147483648
    %v11640 = vor.u32 1.1754944e-38, %v11639
    %v11641 = vsel %vm11638, %v11640, %v11636
    %v11642 = vmul.f32 1.0, %v11641
    %11644 = vrot.lane.b32.xlu0 %v11620, 64
    %v11645 = vpop.permute.xlu0 %11644
    %v11647 = vmul.f32 %v11642, %v11645
    %11649 = vrot.lane.b32.xlu0 %v11647, 64
    %v11650 = vpop.permute.xlu0 %11649
    %v11652 = vadd.f32 %v11602, %v11650
    %v11653 = vtanh.pop %v11652
    %v11654 = vsub.f32 1.0, %v11642
    %11656 = vrot.lane.b32.xlu0 %v11653, 96
    %v11657 = vpop.permute.xlu0 %11656
    %v11659 = vmul.f32 %v11654, %v11657
    %v11660 = vmul.f32 %v11642, %v11598
    %v11661 = vadd.f32 %v11659, %v11660
    %s11662 = scalar_lea.vmem [#allocation2], 4
    %v11663 = vld [vmem:[%s11662] ss:$8 sm:$0xf]
    %v11664 = vld [vmem:[%s11662] ss:$8 sm:$0xf0]
    %v11665 = vor.u32 %v11663, %v11664
    %v11666 = vpack.c.bf16 %v11661, %v11661
    %11668 = vrot.lane.b32.xlu0 %v11666, 96
    %v11669 = vpop.permute.xlu0 %11668
    %v11671 = vsel %vm309, %v11669, 0
    %11673 = vmatpush.bf16.msra.mxu0 0
    %11674 = vmatpush.bf16.msra.mxu0 0
    %11675 = vmatpush.bf16.msra.mxu0 0
    %11676 = vmatpush.bf16.msra.mxu0 0
    %11677 = vmatpush.bf16.msra.mxu0 0
    %11678 = vmatpush.bf16.msra.mxu0 0
    %11679 = vmatpush.bf16.msra.mxu0 %v11415
    %11680 = vmatpush.bf16.msra.mxu0 %v11414
    %11681 = vmatmul.bf16.gmra.mxu0 %v11671
    %v11682 = vpop.f32.mrf.mxu0
    %v11683 = vadd.f32 %v11404, %v11682
    %v11684 = vpop.f32.mrf.mxu0
    %11685 = vdwg.mxu0
    %v11686 = vadd.f32 %v11665, %v11683
    %v11687 = vxor.u32 %v11686, 2147483648
    %v11688 = vmul.f32 %v11687, 1.442695
    %v11689 = vpow.pop %v11688
    %v11690 = vadd.f32 %v11689, 1.0
    %v11691 = vrcp.pop %v11690
    %v11692 = vmul.f32 %v11690, %v11691
    %v11693 = vsub.f32 1.0, %v11692
    %v11694 = vmul.f32 %v11691, %v11693
    %v11695 = vadd.f32 %v11691, %v11694
    %vm11696 = vweird.f32 %v11690
    %vm11697 = vweird.f32 %v11691
    %vm11698 = vmor %vm11696, %vm11697
    %v11699 = vsel %vm11698, %v11691, %v11695
    %v11700 = vand.u32 2147483647, %v11690
    %vm11701 = vcmp.eq.f32.partialorder %v11700, 8.507059e+37
    %v11702 = vand.u32 %v11690, 2147483648
    %v11703 = vor.u32 1.1754944e-38, %v11702
    %v11704 = vsel %vm11701, %v11703, %v11699
    %v11705 = vmul.f32 1.0, %v11704
    %11707 = vrot.lane.b32.xlu0 %v11683, 64
    %v11708 = vpop.permute.xlu0 %11707
    %v11710 = vmul.f32 %v11705, %v11708
    %11712 = vrot.lane.b32.xlu0 %v11710, 64
    %v11713 = vpop.permute.xlu0 %11712
    %v11715 = vadd.f32 %v11665, %v11713
    %v11716 = vtanh.pop %v11715
    %v11717 = vsub.f32 1.0, %v11705
    %11719 = vrot.lane.b32.xlu0 %v11716, 96
    %v11720 = vpop.permute.xlu0 %11719
    %v11722 = vmul.f32 %v11717, %v11720
    %v11723 = vmul.f32 %v11705, %v11661
    %v11724 = vadd.f32 %v11722, %v11723
    %s11725 = scalar_lea.vmem [#allocation2], 5
    %v11726 = vld [vmem:[%s11725] ss:$8 sm:$0xf]
    %v11727 = vld [vmem:[%s11725] ss:$8 sm:$0xf0]
    %v11728 = vor.u32 %v11726, %v11727
    %v11729 = vpack.c.bf16 %v11724, %v11724
    %11731 = vrot.lane.b32.xlu0 %v11729, 96
    %v11732 = vpop.permute.xlu0 %11731
    %v11734 = vsel %vm309, %v11732, 0
    %11736 = vmatpush.bf16.msra.mxu0 0
    %11737 = vmatpush.bf16.msra.mxu0 0
    %11738 = vmatpush.bf16.msra.mxu0 0
    %11739 = vmatpush.bf16.msra.mxu0 0
    %11740 = vmatpush.bf16.msra.mxu0 0
    %11741 = vmatpush.bf16.msra.mxu0 0
    %11742 = vmatpush.bf16.msra.mxu0 %v11415
    %11743 = vmatpush.bf16.msra.mxu0 %v11414
    %11744 = vmatmul.bf16.gmra.mxu0 %v11734
    %v11745 = vpop.f32.mrf.mxu0
    %v11746 = vadd.f32 %v11404, %v11745
    %v11747 = vpop.f32.mrf.mxu0
    %11748 = vdwg.mxu0
    %v11749 = vadd.f32 %v11728, %v11746
    %v11750 = vxor.u32 %v11749, 2147483648
    %v11751 = vmul.f32 %v11750, 1.442695
    %v11752 = vpow.pop %v11751
    %v11753 = vadd.f32 %v11752, 1.0
    %v11754 = vrcp.pop %v11753
    %v11755 = vmul.f32 %v11753, %v11754
    %v11756 = vsub.f32 1.0, %v11755
    %v11757 = vmul.f32 %v11754, %v11756
    %v11758 = vadd.f32 %v11754, %v11757
    %vm11759 = vweird.f32 %v11753
    %vm11760 = vweird.f32 %v11754
    %vm11761 = vmor %vm11759, %vm11760
    %v11762 = vsel %vm11761, %v11754, %v11758
    %v11763 = vand.u32 2147483647, %v11753
    %vm11764 = vcmp.eq.f32.partialorder %v11763, 8.507059e+37
    %v11765 = vand.u32 %v11753, 2147483648
    %v11766 = vor.u32 1.1754944e-38, %v11765
    %v11767 = vsel %vm11764, %v11766, %v11762
    %v11768 = vmul.f32 1.0, %v11767
    %11770 = vrot.lane.b32.xlu0 %v11746, 64
    %v11771 = vpop.permute.xlu0 %11770
    %v11773 = vmul.f32 %v11768, %v11771
    %11775 = vrot.lane.b32.xlu0 %v11773, 64
    %v11776 = vpop.permute.xlu0 %11775
    %v11778 = vadd.f32 %v11728, %v11776
    %v11779 = vtanh.pop %v11778
    %v11780 = vsub.f32 1.0, %v11768
    %11782 = vrot.lane.b32.xlu0 %v11779, 96
    %v11783 = vpop.permute.xlu0 %11782
    %v11785 = vmul.f32 %v11780, %v11783
    %v11786 = vmul.f32 %v11768, %v11724
    %v11787 = vadd.f32 %v11785, %v11786
    %s11788 = scalar_lea.vmem [#allocation2], 6
    %v11789 = vld [vmem:[%s11788] ss:$8 sm:$0xf]
    %v11790 = vld [vmem:[%s11788] ss:$8 sm:$0xf0]
    %v11791 = vor.u32 %v11789, %v11790
    %v11792 = vpack.c.bf16 %v11787, %v11787
    %11794 = vrot.lane.b32.xlu0 %v11792, 96
    %v11795 = vpop.permute.xlu0 %11794
    %v11797 = vsel %vm309, %v11795, 0
    %11799 = vmatpush.bf16.msra.mxu0 0
    %11800 = vmatpush.bf16.msra.mxu0 0
    %11801 = vmatpush.bf16.msra.mxu0 0
    %11802 = vmatpush.bf16.msra.mxu0 0
    %11803 = vmatpush.bf16.msra.mxu0 0
    %11804 = vmatpush.bf16.msra.mxu0 0
    %11805 = vmatpush.bf16.msra.mxu0 %v11415
    %11806 = vmatpush.bf16.msra.mxu0 %v11414
    %11807 = vmatmul.bf16.gmra.mxu0 %v11797
    %v11808 = vpop.f32.mrf.mxu0
    %v11809 = vadd.f32 %v11404, %v11808
    %v11810 = vpop.f32.mrf.mxu0
    %11811 = vdwg.mxu0
    %v11812 = vadd.f32 %v11791, %v11809
    %v11813 = vxor.u32 %v11812, 2147483648
    %v11814 = vmul.f32 %v11813, 1.442695
    %v11815 = vpow.pop %v11814
    %v11816 = vadd.f32 %v11815, 1.0
    %v11817 = vrcp.pop %v11816
    %v11818 = vmul.f32 %v11816, %v11817
    %v11819 = vsub.f32 1.0, %v11818
    %v11820 = vmul.f32 %v11817, %v11819
    %v11821 = vadd.f32 %v11817, %v11820
    %vm11822 = vweird.f32 %v11816
    %vm11823 = vweird.f32 %v11817
    %vm11824 = vmor %vm11822, %vm11823
    %v11825 = vsel %vm11824, %v11817, %v11821
    %v11826 = vand.u32 2147483647, %v11816
    %vm11827 = vcmp.eq.f32.partialorder %v11826, 8.507059e+37
    %v11828 = vand.u32 %v11816, 2147483648
    %v11829 = vor.u32 1.1754944e-38, %v11828
    %v11830 = vsel %vm11827, %v11829, %v11825
    %v11831 = vmul.f32 1.0, %v11830
    %11833 = vrot.lane.b32.xlu0 %v11809, 64
    %v11834 = vpop.permute.xlu0 %11833
    %v11836 = vmul.f32 %v11831, %v11834
    %11838 = vrot.lane.b32.xlu0 %v11836, 64
    %v11839 = vpop.permute.xlu0 %11838
    %v11841 = vadd.f32 %v11791, %v11839
    %v11842 = vtanh.pop %v11841
    %v11843 = vsub.f32 1.0, %v11831
    %11845 = vrot.lane.b32.xlu0 %v11842, 96
    %v11846 = vpop.permute.xlu0 %11845
    %v11848 = vmul.f32 %v11843, %v11846
    %v11849 = vmul.f32 %v11831, %v11787
    %v11850 = vadd.f32 %v11848, %v11849
    %s11851 = scalar_lea.vmem [#allocation2], 7
    %v11852 = vld [vmem:[%s11851] ss:$8 sm:$0xf]
    %v11853 = vld [vmem:[%s11851] ss:$8 sm:$0xf0]
    %v11854 = vor.u32 %v11852, %v11853
    %v11855 = vpack.c.bf16 %v11850, %v11850
    %11857 = vrot.lane.b32.xlu0 %v11855, 96
    %v11858 = vpop.permute.xlu0 %11857
    %v11860 = vsel %vm309, %v11858, 0
    %11862 = vmatpush.bf16.msra.mxu0 0
    %11863 = vmatpush.bf16.msra.mxu0 0
    %11864 = vmatpush.bf16.msra.mxu0 0
    %11865 = vmatpush.bf16.msra.mxu0 0
    %11866 = vmatpush.bf16.msra.mxu0 0
    %11867 = vmatpush.bf16.msra.mxu0 0
    %11868 = vmatpush.bf16.msra.mxu0 %v11415
    %11869 = vmatpush.bf16.msra.mxu0 %v11414
    %11870 = vmatmul.bf16.gmra.mxu0 %v11860
    %v11871 = vpop.f32.mrf.mxu0
    %v11872 = vadd.f32 %v11404, %v11871
    %v11873 = vpop.f32.mrf.mxu0
    %11874 = vdwg.mxu0
    %v11875 = vadd.f32 %v11854, %v11872
    %v11876 = vxor.u32 %v11875, 2147483648
    %v11877 = vmul.f32 %v11876, 1.442695
    %v11878 = vpow.pop %v11877
    %v11879 = vadd.f32 %v11878, 1.0
    %v11880 = vrcp.pop %v11879
    %v11881 = vmul.f32 %v11879, %v11880
    %v11882 = vsub.f32 1.0, %v11881
    %v11883 = vmul.f32 %v11880, %v11882
    %v11884 = vadd.f32 %v11880, %v11883
    %vm11885 = vweird.f32 %v11879
    %vm11886 = vweird.f32 %v11880
    %vm11887 = vmor %vm11885, %vm11886
    %v11888 = vsel %vm11887, %v11880, %v11884
    %v11889 = vand.u32 2147483647, %v11879
    %vm11890 = vcmp.eq.f32.partialorder %v11889, 8.507059e+37
    %v11891 = vand.u32 %v11879, 2147483648
    %v11892 = vor.u32 1.1754944e-38, %v11891
    %v11893 = vsel %vm11890, %v11892, %v11888
    %v11894 = vmul.f32 1.0, %v11893
    %11896 = vrot.lane.b32.xlu0 %v11872, 64
    %v11897 = vpop.permute.xlu0 %11896
    %v11899 = vmul.f32 %v11894, %v11897
    %11901 = vrot.lane.b32.xlu0 %v11899, 64
    %v11902 = vpop.permute.xlu0 %11901
    %v11904 = vadd.f32 %v11854, %v11902
    %v11905 = vtanh.pop %v11904
    %v11906 = vsub.f32 1.0, %v11894
    %11908 = vrot.lane.b32.xlu0 %v11905, 96
    %v11909 = vpop.permute.xlu0 %11908
    %v11911 = vmul.f32 %v11906, %v11909
    %v11912 = vmul.f32 %v11894, %v11850
    %v11913 = vadd.f32 %v11911, %v11912
    %11915 = vrot.lane.b32.xlu0 %v11724, 96
    %v11916 = vpop.permute.xlu0 %11915
    %11919 = vrot.lane.b32.xlu0 %v11850, 32
    %v11920 = vpop.permute.xlu0 %11919
    %11923 = vrot.lane.b32.xlu0 %v11913, 64
    %v11924 = vpop.permute.xlu0 %11923
    %v11926 = vsel %vm309, %v11916, %v11787
    %vm11927 = vcmask 523264
    %v11928 = vsel %vm11927, %v11926, %v11920
    %v11929 = vsel %vm11386, %v11928, %v11924
    %v11930 = vpack.c.bf16 %v11929, %v11929
    %v11931 = vld [vmem:[%s21] sm:$0xf]
    %v11932 = vld [vmem:[%s21 + $0x4] sm:$0xf]
    %v11933 = vld [vmem:[%s21 + $0x8] sm:$0xf]
    %v11934 = vld [vmem:[%s21 + $0xc] sm:$0xf]
    %v11935 = vld [vmem:[%s21 + $0x10] sm:$0xf]
    %v11936 = vld [vmem:[%s21 + $0x14] sm:$0xf]
    %v11937 = vld [vmem:[%s21 + $0x18] sm:$0xf]
    %v11938 = vld [vmem:[%s21 + $0x1c] sm:$0xf]
    %v11939 = vld [vmem:[%s21 + $0x20] sm:$0xf]
    %v11940 = vld [vmem:[%s21 + $0x24] sm:$0xf]
    %v11941 = vld [vmem:[%s21 + $0x28] sm:$0xf]
    %v11942 = vld [vmem:[%s21 + $0x2c] sm:$0xf]
    %v11943 = vld [vmem:[%s21 + $0x30] sm:$0xf]
    %v11944 = vld [vmem:[%s21 + $0x34] sm:$0xf]
    %v11945 = vld [vmem:[%s21 + $0x38] sm:$0xf]
    %v11946 = vld [vmem:[%s21 + $0x3c] sm:$0xf]
    %v11947 = vld [vmem:[%s22] sm:$0x1]
    %v11949 = vperm.slane %v11947, 0
    %v11967 = vunpack.c.l.b16 %v11931
    %v11968 = vunpack.c.l.b16 %v11932
    %v11969 = vunpack.c.l.b16 %v11933
    %v11970 = vunpack.c.l.b16 %v11934
    %v11971 = vunpack.c.l.b16 %v11935
    %v11972 = vunpack.c.l.b16 %v11936
    %v11973 = vunpack.c.l.b16 %v11937
    %v11974 = vunpack.c.l.b16 %v11938
    %v11975 = vunpack.c.l.b16 %v11939
    %v11976 = vunpack.c.l.b16 %v11940
    %v11977 = vunpack.c.l.b16 %v11941
    %v11978 = vunpack.c.l.b16 %v11942
    %v11979 = vunpack.c.l.b16 %v11943
    %v11980 = vunpack.c.l.b16 %v11944
    %v11981 = vunpack.c.l.b16 %v11945
    %v11982 = vunpack.c.l.b16 %v11946
    %v11983 = vpack.c.b16 %v11968, %v11967
    %v11984 = vpack.c.b16 %v11970, %v11969
    %v11985 = vpack.c.b16 %v11972, %v11971
    %v11986 = vpack.c.b16 %v11974, %v11973
    %v11987 = vpack.c.b16 %v11976, %v11975
    %v11988 = vpack.c.b16 %v11978, %v11977
    %v11989 = vpack.c.b16 %v11980, %v11979
    %v11990 = vpack.c.b16 %v11982, %v11981
    %11999 = vmatpush.bf16.msra.mxu0 %v11990
    %12000 = vmatpush.bf16.msra.mxu0 %v11989
    %12001 = vmatpush.bf16.msra.mxu0 %v11988
    %12002 = vmatpush.bf16.msra.mxu0 %v11987
    %12003 = vmatpush.bf16.msra.mxu0 %v11986
    %12004 = vmatpush.bf16.msra.mxu0 %v11985
    %12005 = vmatpush.bf16.msra.mxu0 %v11984
    %12006 = vmatpush.bf16.msra.mxu0 %v11983
    %12007 = vmatmul.bf16.gmra.mxu0 %v11930
    %v12008 = vpop.f32.mrf.mxu0
    %v12009 = vadd.f32 %v11949, %v12008
    %v12010 = vpop.f32.mrf.mxu0
    %12011 = vdwg.mxu0
    %12012 = vst.msk [vmem:[#allocation4] sm:$0xff] %vm2681, %v12009
    // Predicated region
    $region94: #{forward.1} parent=1 // pred_check
      _
    $region95: #{forward.1} parent=1 // pred_check_branch
      %12014 = sbr.rel (0) target = $region97
    $region96: #{forward.1} parent=1 // pred_region
      %12016 = vsyncadd [#allocation5], 0
      %s12018 = sshll.u32 [#allocation4], 4
      %s12019 = int_to_ptr.vmem [resolvable:$true] %s12018
      %s12020 = sshll.u32 %s23, 4
      %s12021 = int_to_ptr.hbm [resolvable:$true] %s12020
      %12023 = dma.vmem_to_hbm [thread:$0]  %s12019, 128, %s12021, [#allocation5]
    $region97: #{forward.1} parent=1 // pred_fallthru
      _
    // Predicated region
    $region98: #{forward.1} parent=1 // pred_check
      _
    $region99: #{forward.1} parent=1 // pred_check_branch
      %12025 = sbr.rel (0) target = $region101
    $region100: #{forward.1} parent=1 // pred_region
      %12027 = dma.done [#allocation5], 128
    $region101: #{forward.1} parent=1 // pred_fallthru
      _
    %12028 = vsyncpa [#allocation5], 1

</llo_original>
